<compile_context>
chip_gen: v7x
topology: tpu7x:2x2x1
jax: 0.10.0
libtpu: 0.0.40
codegen_flags: <defaults>
</compile_context>

<pallas_src>
import math
import functools

import jax
import jax.numpy as jnp
from jax.experimental import pallas as pl
from jax.experimental.pallas import tpu as pltpu


_NEG_BIG = -1e30          # mask value, applied on fp32 logits only
_C_PAD = 128              # lane-dense channel padding for all feature slabs


# ---------------------------------------------------------------------------
# GATv2 layer kernel (single head, dense int8 adjacency, online softmax).
#   e[i,j]  = att . leaky_relu(lin_r(x_i) + lin_l(x_j))   (PyG GATv2 convention)
#   alpha   = softmax over neighbors j of i
#   out_i   = sum_j alpha[i,j] * lin_l(x_j) + bias
# Grid: (i-tiles [parallel], j-tiles [arbitrary, innermost/reduction]).
# ---------------------------------------------------------------------------
def _gatv2_kernel(att_sref, xi_ref, xj_ref, adj_ref, wl_ref, wr_ref,
                  bl_ref, br_ref, bias_ref, o_ref,
                  hr_scr, hlt_scr, m_scr, l_scr, acc_scr, *, c_real):
    j = pl.program_id(1)

    @pl.when(j == 0)
    def _():
        # Query-side projection lin_r(x_i); resident across the whole j loop.
        hr_scr[...] = (jnp.dot(xi_ref[...].astype(jnp.bfloat16), wr_ref[...],
                               preferred_element_type=jnp.float32) + br_ref[...])
        m_scr[...] = jnp.full_like(m_scr, -jnp.inf)
        l_scr[...] = jnp.zeros_like(l_scr)
        acc_scr[...] = jnp.zeros_like(acc_scr)

    # Key/value-side projection lin_l(x_j) for this neighbor tile.  [TJ, CP] f32
    hl = (jnp.dot(xj_ref[...].astype(jnp.bfloat16), wl_ref[...],
                  preferred_element_type=jnp.float32) + bl_ref[...])

    # ---- attention logits: channels kept OFF the zero-padded 128 lanes -----
    # One XLU transpose per j-tile (materialized into VMEM scratch), then
    # c_real lane-dense [TI, TJ] broadcast-FMAs.  No [TI, TJ, C] intermediate.
    hlt_scr[...] = jnp.transpose(hl)                         # [CP, TJ]
    hr = hr_scr[...]                                         # [TI, CP]
    ti = hr.shape[0]
    tj = hl.shape[0]
    e = jnp.zeros((ti, tj), jnp.float32)
    for c in range(c_real):
        zc = hr[:, c:c + 1] + hlt_scr[c:c + 1, :]            # [TI, TJ] bcast add
        zc = jnp.maximum(zc, 0.2 * zc)                       # LeakyReLU(0.2)
        e = e + att_sref[c] * zc                             # att scalar (SMEM)

    maskf = adj_ref[...].astype(jnp.float32)                 # int8 adjacency tile
    e = jnp.where(maskf != 0.0, e, _NEG_BIG)                 # mask on fp32 logits

    # Online softmax update (fp32 statistics).
    m_prev = m_scr[...]
    m_new = jnp.maximum(m_prev, jnp.max(e, axis=-1, keepdims=True))   # [TI, 1]
    corr = jnp.exp(m_prev - m_new)
    p = jnp.exp(e - m_new) * maskf           # * maskf kills exp(0) of masked rows
    l_scr[...] = corr * l_scr[...] + jnp.sum(p, axis=-1, keepdims=True)
    acc_scr[...] = corr * acc_scr[...] + jnp.dot(
        p.astype(jnp.bfloat16), hl.astype(jnp.bfloat16),
        preferred_element_type=jnp.float32)
    m_scr[...] = m_new

    @pl.when(j == pl.num_programs(1) - 1)
    def _():
        inv_l = pl.reciprocal(jnp.maximum(l_scr[...], 1e-30), approx=True)
        o_ref[...] = acc_scr[...] * inv_l + bias_ref[...]


def gatv2_layer(x, adj, p, c_out, *, tile_i=128, tile_j=128):
    n, c_in = x.shape
    cp = p["wl"].shape[1]
    tile_i = min(tile_i, n)
    tile_j = min(tile_j, n)
    assert n % tile_i == 0 and n % tile_j == 0
    assert tile_j == n or tile_j % 128 == 0       # lane-dim tiling constraint
    assert tile_i == n or tile_i % 32 == 0        # int8 sublane packing for adj

    kernel = functools.partial(_gatv2_kernel, c_real=c_out)
    return pl.pallas_call(
        kernel,
        out_shape=jax.ShapeDtypeStruct((n, cp), jnp.float32),
        grid=(n // tile_i, n // tile_j),
        in_specs=[
            pl.BlockSpec(memory_space=pltpu.MemorySpace.SMEM),      # att (CP,)
            pl.BlockSpec((tile_i, c_in), lambda i, j: (i, 0)),      # x_i (queries)
            pl.BlockSpec((tile_j, c_in), lambda i, j: (j, 0)),      # x_j (keys/vals)
            pl.BlockSpec((tile_i, tile_j), lambda i, j: (i, j)),    # adj tile (int8)
            pl.BlockSpec((c_in, cp), lambda i, j: (0, 0)),          # wl (bf16)
            pl.BlockSpec((c_in, cp), lambda i, j: (0, 0)),          # wr (bf16)
            pl.BlockSpec((1, cp), lambda i, j: (0, 0)),             # bl
            pl.BlockSpec((1, cp), lambda i, j: (0, 0)),             # br
            pl.BlockSpec((1, cp), lambda i, j: (0, 0)),             # bias
        ],
        out_specs=pl.BlockSpec((tile_i, cp), lambda i, j: (i, 0)),
        scratch_shapes=[
            pltpu.VMEM((tile_i, cp), jnp.float32),    # hr (query projection)
            pltpu.VMEM((cp, tile_j), jnp.float32),    # hl transposed (per j-tile)
            pltpu.VMEM((tile_i, 1), jnp.float32),     # running max
            pltpu.VMEM((tile_i, 1), jnp.float32),     # running denominator
            pltpu.VMEM((tile_i, cp), jnp.float32),    # running numerator
        ],
        compiler_params=pltpu.CompilerParams(
            dimension_semantics=("parallel", "arbitrary")),
    )(p["att"], x, x, adj, p["wl"], p["wr"], p["bl"], p["br"], p["bias"])


# ---------------------------------------------------------------------------
# Shared MLP head: Linear->ReLU->Linear->ReLU->GeodLinear, tiled over nodes.
# Consumes the padded [N,128] feature slabs directly (w1 rows for padded
# channels are zero).  Output is a lane-dense [tile, 128] slab (3 valid lanes).
# ---------------------------------------------------------------------------
def _mlp_kernel(*refs, slope, n_slabs, slab_pad):
    x_refs = refs[:n_slabs]
    geod_ref = refs[n_slabs]
    w1_ref, b1_ref, w2_ref, b2_ref, w3_ref, b3_ref = refs[n_slabs + 1:n_slabs + 7]
    o_ref = refs[n_slabs + 7]

    h = b1_ref[...]                                            # [1, H1]
    for t, xr in enumerate(x_refs):
        h = h + jnp.dot(xr[...].astype(jnp.bfloat16),
                        w1_ref[t * slab_pad:(t + 1) * slab_pad, :],
                        preferred_element_type=jnp.float32)
    h = jnp.maximum(h, 0.0)
    h = jnp.dot(h.astype(jnp.bfloat16), w2_ref[...],
                preferred_element_type=jnp.float32) + b2_ref[...]
    h = jnp.maximum(h, 0.0)
    d = jnp.dot(h.astype(jnp.bfloat16), w3_ref[...],
                preferred_element_type=jnp.float32) + b3_ref[...]
    gate = 1.0 - jnp.exp(-slope * geod_ref[...])               # GeodLinear gate
    o_ref[...] = d * gate


def mlp_head(slabs, geod, p, slope, *, tile_n=128):
    n, slab_pad = slabs[0].shape
    n_slabs = len(slabs)
    h1 = p["w1"].shape[1]
    h2 = p["w2"].shape[1]
    op = p["w3"].shape[1]          # padded output width (128)
    tile_n = min(tile_n, n)
    assert n % tile_n == 0

    kernel = functools.partial(_mlp_kernel, slope=slope,
                               n_slabs=n_slabs, slab_pad=slab_pad)
    slab_spec = pl.BlockSpec((tile_n, slab_pad), lambda i: (i, 0))
    in_specs = ([slab_spec] * n_slabs + [
        pl.BlockSpec((tile_n, 1), lambda i: (i, 0)),            # geod
        pl.BlockSpec((n_slabs * slab_pad, h1), lambda i: (0, 0)),
        pl.BlockSpec((1, h1), lambda i: (0, 0)),
        pl.BlockSpec((h1, h2), lambda i: (0, 0)),
        pl.BlockSpec((1, h2), lambda i: (0, 0)),
        pl.BlockSpec((h2, op), lambda i: (0, 0)),
        pl.BlockSpec((1, op), lambda i: (0, 0)),
    ])
    return pl.pallas_call(
        kernel,
        out_shape=jax.ShapeDtypeStruct((n, op), jnp.float32),
        grid=(n // tile_n,),
        in_specs=in_specs,
        out_specs=pl.BlockSpec((tile_n, op), lambda i: (i, 0)),
        compiler_params=pltpu.CompilerParams(dimension_semantics=("parallel",)),
    )(*slabs, geod, p["w1"], p["b1"], p["w2"], p["b2"], p["w3"], p["b3"])


# ---------------------------------------------------------------------------
# Glue: graph construction, parameter init (padded / packed), full forward.
# ---------------------------------------------------------------------------
def knn_adjacency(pos, k):
    # TODO(synk): exact graph construction of GATv2Layer is external; kNN over
    #             node positions (incl. self-loop) is used here.  int8 storage.
    d2 = jnp.sum((pos[:, None, :] - pos[None, :, :]) ** 2, axis=-1)
    _, idx = jax.lax.top_k(-d2, k)                                    # [N, k]
    adj = jax.nn.one_hot(idx, pos.shape[0], dtype=jnp.float32).sum(1) > 0.0
    return adj.astype(jnp.int8)


def init_gatv2_params(key, c_in_real, c_out, c_pad=_C_PAD):
    """All arrays are padded to 128-wide slabs; padded rows/cols are exactly
    zero so the math matches the un-padded reference."""
    k1, k2, k3 = jax.random.split(key, 3)
    s = 1.0 / math.sqrt(c_in_real)
    u = lambda k, shape: jax.random.uniform(k, shape, jnp.float32, -s, s)
    wl = jnp.zeros((c_pad, c_pad), jnp.float32).at[:c_in_real, :c_out].set(
        u(k1, (c_in_real, c_out)))
    wr = jnp.zeros((c_pad, c_pad), jnp.float32).at[:c_in_real, :c_out].set(
        u(k2, (c_in_real, c_out)))
    att = jnp.zeros((c_pad,), jnp.float32).at[:c_out].set(u(k3, (c_out,)))
    zeros_row = jnp.zeros((1, c_pad), jnp.float32)
    return dict(wl=wl.astype(jnp.bfloat16), wr=wr.astype(jnp.bfloat16),
                att=att, bl=zeros_row, br=zeros_row, bias=zeros_row)


def init_mlp_params(key, slab_real, h1=256, h2_real=64, c_out=3,
                    slab_pad=_C_PAD, h2_pad=_C_PAD, c_out_pad=_C_PAD):
    """w1 consumes the padded feature slabs directly: rows that correspond to
    zero-padded channels are zero, so no slicing/concatenation is needed."""
    fan1 = sum(slab_real)
    k1, k2, k3 = jax.random.split(key, 3)
    s1 = 1.0 / math.sqrt(fan1)
    w1 = jnp.zeros((len(slab_real) * slab_pad, h1), jnp.float32)
    for t, r in enumerate(slab_real):
        kt = jax.random.fold_in(k1, t)
        w1 = w1.at[t * slab_pad:t * slab_pad + r, :].set(
            jax.random.uniform(kt, (r, h1), jnp.float32, -s1, s1))
    s2 = 1.0 / math.sqrt(h1)
    w2 = jnp.zeros((h1, h2_pad), jnp.float32).at[:, :h2_real].set(
        jax.random.uniform(k2, (h1, h2_real), jnp.float32, -s2, s2))
    s3 = 1.0 / math.sqrt(h2_real)
    w3 = jnp.zeros((h2_pad, c_out_pad), jnp.float32).at[:h2_real, :c_out].set(
        jax.random.uniform(k3, (h2_real, c_out), jnp.float32, -s3, s3))
    return dict(
        w1=w1.astype(jnp.bfloat16), b1=jnp.zeros((1, h1), jnp.float32),
        w2=w2.astype(jnp.bfloat16), b2=jnp.zeros((1, h2_pad), jnp.float32),
        w3=w3.astype(jnp.bfloat16), b3=jnp.zeros((1, c_out_pad), jnp.float32))


def displacer_net_forward(x, adj, geod, gat_params_list, mlp_params, slope,
                          out_channels_list):
    n, c_in = x.shape
    # Pad the raw features to 128 lanes once: lane-dense loads for layer 1 and
    # slab 0 of the MLP head (padded lanes stay exactly zero everywhere).
    x_pad = jnp.zeros((n, _C_PAD), x.dtype).at[:, :c_in].set(x)
    slabs = [x_pad]
    h = x_pad
    for p, c_out in zip(gat_params_list, out_channels_list):
        # TODO(synk): fuse the 4 layers into one pallas_call (adjacency + h
        #             resident in VMEM) to remove 3 launches + 3 adj re-reads.
        h = gatv2_layer(h, adj, p, c_out)        # [N, 128]; lanes >= c_out are 0
        slabs.append(h)
    disp = mlp_head(slabs, geod, mlp_params, slope)     # [N, 128] padded slab
    return disp[:, :3]


if __name__ == "__main__":
    key = jax.random.PRNGKey(0)
    k_x, k_geod, k_params = jax.random.split(key, 3)

    # Small, module-consistent shapes; N chosen so the GAT grid really tiles
    # (2 i-tiles -> one per v7x TensorCore, 2 j-tiles exercise the online softmax).
    N, C_IN, K = 256, 16, 8
    OUT_CHANNELS = [32, 32, 32, 32]              # out_channels_list (shrunk from 256)

    x = jax.random.normal(k_x, (N, C_IN), jnp.float32)
    pos = x[:, :3]
    adj = knn_adjacency(pos, K)                  # int8 [N, N]

    # synthetic mesh quantities used by GeodLinear's slope (see __init__)
    max_z_angle_incident_cosine = 0.5
    eps = 0.01
    boundary_incidence_scale_factor = max((1.0 + max_z_angle_incident_cosine) / 2.0, eps)
    max_edge_length = 0.1
    slope = -math.log(1.0 - 0.9 * boundary_incidence_scale_factor) / max_edge_length
    geod = jax.random.uniform(k_geod, (N, 1), jnp.float32, 0.0, 1.0)  # raw_geodesic_distance_firm

    # deterministic parameter init (in_feature_mask=None -> no FeatureTransformLayer)
    layer_keys = jax.random.split(k_params, len(OUT_CHANNELS) + 1)
    gat_params_list = []
    c_prev = C_IN
    for i, c_out in enumerate(OUT_CHANNELS):
        gat_params_list.append(init_gatv2_params(layer_keys[i], c_prev, c_out))
        c_prev = c_out
    mlp_params = init_mlp_params(layer_keys[-1], [C_IN] + OUT_CHANNELS)

    out = displacer_net_forward(x, adj, geod, gat_params_list, mlp_params, slope,
                                OUT_CHANNELS)
    out = jax.block_until_ready(out)
    assert out.shape == (N, 3) and out.dtype == jnp.float32
    assert bool(jnp.all(jnp.isfinite(out)))
    print("KERNEL_OK")
</pallas_src>

<mosaic_0001>
module attributes {stable_mosaic.version = 11 : i64} {
  func.func @_gatv2_kernel(%arg0: i32, %arg1: i32, %arg2: memref<128xf32, #tpu.memory_space<smem>>, %arg3: memref<128x128xf32, #tpu.memory_space<vmem>>, %arg4: memref<128x128xf32, #tpu.memory_space<vmem>>, %arg5: memref<128x128xi8, #tpu.memory_space<vmem>>, %arg6: memref<128x128xbf16, #tpu.memory_space<vmem>>, %arg7: memref<128x128xbf16, #tpu.memory_space<vmem>>, %arg8: memref<1x128xf32, #tpu.memory_space<vmem>>, %arg9: memref<1x128xf32, #tpu.memory_space<vmem>>, %arg10: memref<1x128xf32, #tpu.memory_space<vmem>>, %arg11: memref<128x128xf32, #tpu.memory_space<vmem>>, %arg12: memref<128x128xf32, #tpu.memory_space<vmem>>, %arg13: memref<128x128xf32, #tpu.memory_space<vmem>>, %arg14: memref<128x1xf32, #tpu.memory_space<vmem>>, %arg15: memref<128x1xf32, #tpu.memory_space<vmem>>, %arg16: memref<128x128xf32, #tpu.memory_space<vmem>>) attributes {dimension_semantics = [#tpu.dimension_semantics<parallel>, #tpu.dimension_semantics<arbitrary>], iteration_bounds = array<i64: 2, 2>, scalar_prefetch = 0 : i64, scratch_operands = 5 : i64, tpu.core_type = #tpu.core_type<tc>, window_params = [{transform_indices = @transform_0, window_bounds = array<i64: 128>}, {transform_indices = @transform_1, window_bounds = array<i64: 128, 128>}, {transform_indices = @transform_2, window_bounds = array<i64: 128, 128>}, {transform_indices = @transform_3, window_bounds = array<i64: 128, 128>}, {pipeline_mode = #tpu.pipeline_mode<synchronous>, transform_indices = @transform_4, window_bounds = array<i64: 128, 128>}, {pipeline_mode = #tpu.pipeline_mode<synchronous>, transform_indices = @transform_5, window_bounds = array<i64: 128, 128>}, {pipeline_mode = #tpu.pipeline_mode<synchronous>, transform_indices = @transform_6, window_bounds = array<i64: 1, 128>}, {pipeline_mode = #tpu.pipeline_mode<synchronous>, transform_indices = @transform_7, window_bounds = array<i64: 1, 128>}, {pipeline_mode = #tpu.pipeline_mode<synchronous>, transform_indices = @transform_8, window_bounds = array<i64: 1, 128>}, {transform_indices = @transform_9, window_bounds = array<i64: 128, 128>}]} {
    %c0_i32 = arith.constant 0 : i32
    %0 = arith.cmpi eq, %arg1, %c0_i32 : i32
    %1 = arith.extui %0 : i1 to i32
    %c0_i32_0 = arith.constant 0 : i32
    %2 = arith.cmpi ne, %1, %c0_i32_0 : i32
    scf.if %2 {
      %c0_128 = arith.constant 0 : index
      %c0_129 = arith.constant 0 : index
      %432 = vector.load %arg3[%c0_128, %c0_129] : memref<128x128xf32, #tpu.memory_space<vmem>>, vector<128x128xf32>
      %433 = arith.truncf %432 : vector<128x128xf32> to vector<128x128xbf16>
      %c0_130 = arith.constant 0 : index
      %c0_131 = arith.constant 0 : index
      %434 = vector.load %arg7[%c0_130, %c0_131] : memref<128x128xbf16, #tpu.memory_space<vmem>>, vector<128x128xbf16>
      %cst_132 = arith.constant dense<0.000000e+00> : vector<128x128xf32>
      %435 = tpu.matmul %433, %434, %cst_132 {dimension_numbers = #tpu.dot_dimension_numbers<[1], [0], [0], [1], [0, 0, 1, 1], [], []>} : vector<128x128xbf16>, vector<128x128xbf16>, vector<128x128xf32> -> vector<128x128xf32>
      %c0_133 = arith.constant 0 : index
      %c0_134 = arith.constant 0 : index
      %436 = vector.load %arg9[%c0_133, %c0_134] : memref<1x128xf32, #tpu.memory_space<vmem>>, vector<1x128xf32>
      %437 = vector.broadcast %436 : vector<1x128xf32> to vector<128x128xf32>
      %438 = arith.addf %435, %437 : vector<128x128xf32>
      %c0_135 = arith.constant 0 : index
      %c0_136 = arith.constant 0 : index
      %439 = vector.load %arg12[%c0_135, %c0_136] : memref<128x128xf32, #tpu.memory_space<vmem>>, vector<128x128xf32>
      tpu.vector_store %arg12[%c0_135, %c0_136], %438 {strides = array<i32>} : memref<128x128xf32, #tpu.memory_space<vmem>>, vector<128x128xf32>,
      %cst_137 = arith.constant 0xFF800000 : f32
      %440 = vector.broadcast %cst_137 : f32 to vector<128x1xf32>
      %c0_138 = arith.constant 0 : index
      %c0_139 = arith.constant 0 : index
      %441 = vector.load %arg14[%c0_138, %c0_139] : memref<128x1xf32, #tpu.memory_space<vmem>>, vector<128x1xf32>
      tpu.vector_store %arg14[%c0_138, %c0_139], %440 {strides = array<i32>} : memref<128x1xf32, #tpu.memory_space<vmem>>, vector<128x1xf32>,
      %cst_140 = arith.constant 0.000000e+00 : f32
      %442 = vector.broadcast %cst_140 : f32 to vector<128x1xf32>
      %c0_141 = arith.constant 0 : index
      %c0_142 = arith.constant 0 : index
      %443 = vector.load %arg15[%c0_141, %c0_142] : memref<128x1xf32, #tpu.memory_space<vmem>>, vector<128x1xf32>
      tpu.vector_store %arg15[%c0_141, %c0_142], %442 {strides = array<i32>} : memref<128x1xf32, #tpu.memory_space<vmem>>, vector<128x1xf32>,
      %cst_143 = arith.constant 0.000000e+00 : f32
      %444 = vector.broadcast %cst_143 : f32 to vector<128x128xf32>
      %c0_144 = arith.constant 0 : index
      %c0_145 = arith.constant 0 : index
      %445 = vector.load %arg16[%c0_144, %c0_145] : memref<128x128xf32, #tpu.memory_space<vmem>>, vector<128x128xf32>
      tpu.vector_store %arg16[%c0_144, %c0_145], %444 {strides = array<i32>} : memref<128x128xf32, #tpu.memory_space<vmem>>, vector<128x128xf32>,
    } else {
    }
    %c0 = arith.constant 0 : index
    %c0_1 = arith.constant 0 : index
    %3 = vector.load %arg4[%c0, %c0_1] : memref<128x128xf32, #tpu.memory_space<vmem>>, vector<128x128xf32>
    %4 = arith.truncf %3 : vector<128x128xf32> to vector<128x128xbf16>
    %c0_2 = arith.constant 0 : index
    %c0_3 = arith.constant 0 : index
    %5 = vector.load %arg6[%c0_2, %c0_3] : memref<128x128xbf16, #tpu.memory_space<vmem>>, vector<128x128xbf16>
    %cst = arith.constant dense<0.000000e+00> : vector<128x128xf32>
    %6 = tpu.matmul %4, %5, %cst {dimension_numbers = #tpu.dot_dimension_numbers<[1], [0], [0], [1], [0, 0, 1, 1], [], []>} : vector<128x128xbf16>, vector<128x128xbf16>, vector<128x128xf32> -> vector<128x128xf32>
    %c0_4 = arith.constant 0 : index
    %c0_5 = arith.constant 0 : index
    %7 = vector.load %arg8[%c0_4, %c0_5] : memref<1x128xf32, #tpu.memory_space<vmem>>, vector<1x128xf32>
    %8 = vector.broadcast %7 : vector<1x128xf32> to vector<128x128xf32>
    %9 = arith.addf %6, %8 : vector<128x128xf32>
    %10 = tpu.transpose %9, [1, 0] : vector<128x128xf32> -> vector<128x128xf32>
    %c0_6 = arith.constant 0 : index
    %c0_7 = arith.constant 0 : index
    %11 = vector.load %arg13[%c0_6, %c0_7] : memref<128x128xf32, #tpu.memory_space<vmem>>, vector<128x128xf32>
    tpu.vector_store %arg13[%c0_6, %c0_7], %10 {strides = array<i32>} : memref<128x128xf32, #tpu.memory_space<vmem>>, vector<128x128xf32>,
    %c0_8 = arith.constant 0 : index
    %c0_9 = arith.constant 0 : index
    %12 = vector.load %arg12[%c0_8, %c0_9] : memref<128x128xf32, #tpu.memory_space<vmem>>, vector<128x128xf32>
    %cst_10 = arith.constant 0.000000e+00 : f32
    %13 = vector.broadcast %cst_10 : f32 to vector<128x128xf32>
    %14 = vector.extract_strided_slice %12 {offsets = [0, 0], sizes = [128, 1], strides = [1, 1]} : vector<128x128xf32> to vector<128x1xf32>
    %c0_11 = arith.constant 0 : index
    %c0_12 = arith.constant 0 : index
    %15 = vector.load %arg13[%c0_11, %c0_12] : memref<128x128xf32, #tpu.memory_space<vmem>>, vector<1x128xf32>
    %16 = vector.broadcast %14 : vector<128x1xf32> to vector<128x128xf32>
    %17 = vector.broadcast %15 : vector<1x128xf32> to vector<128x128xf32>
    %18 = arith.addf %16, %17 : vector<128x128xf32>
    %cst_13 = arith.constant 2.000000e-01 : f32
    %19 = vector.broadcast %cst_13 : f32 to vector<128x128xf32>
    %20 = arith.mulf %19, %18 : vector<128x128xf32>
    %21 = arith.maximumf %18, %20 : vector<128x128xf32>
    %c0_14 = arith.constant 0 : index
    %22 = memref.load %arg2[%c0_14] : memref<128xf32, #tpu.memory_space<smem>>
    %23 = vector.broadcast %22 : f32 to vector<128x128xf32>
    %24 = arith.mulf %23, %21 : vector<128x128xf32>
    %25 = arith.addf %13, %24 : vector<128x128xf32>
    %26 = vector.extract_strided_slice %12 {offsets = [0, 1], sizes = [128, 1], strides = [1, 1]} : vector<128x128xf32> to vector<128x1xf32>
    %c1 = arith.constant 1 : index
    %c0_15 = arith.constant 0 : index
    %27 = vector.load %arg13[%c1, %c0_15] : memref<128x128xf32, #tpu.memory_space<vmem>>, vector<1x128xf32>
    %28 = vector.broadcast %26 : vector<128x1xf32> to vector<128x128xf32>
    %29 = vector.broadcast %27 : vector<1x128xf32> to vector<128x128xf32>
    %30 = arith.addf %28, %29 : vector<128x128xf32>
    %cst_16 = arith.constant 2.000000e-01 : f32
    %31 = vector.broadcast %cst_16 : f32 to vector<128x128xf32>
    %32 = arith.mulf %31, %30 : vector<128x128xf32>
    %33 = arith.maximumf %30, %32 : vector<128x128xf32>
    %c1_17 = arith.constant 1 : index
    %34 = memref.load %arg2[%c1_17] : memref<128xf32, #tpu.memory_space<smem>>
    %35 = vector.broadcast %34 : f32 to vector<128x128xf32>
    %36 = arith.mulf %35, %33 : vector<128x128xf32>
    %37 = arith.addf %25, %36 : vector<128x128xf32>
    %38 = vector.extract_strided_slice %12 {offsets = [0, 2], sizes = [128, 1], strides = [1, 1]} : vector<128x128xf32> to vector<128x1xf32>
    %c2 = arith.constant 2 : index
    %c0_18 = arith.constant 0 : index
    %39 = vector.load %arg13[%c2, %c0_18] : memref<128x128xf32, #tpu.memory_space<vmem>>, vector<1x128xf32>
    %40 = vector.broadcast %38 : vector<128x1xf32> to vector<128x128xf32>
    %41 = vector.broadcast %39 : vector<1x128xf32> to vector<128x128xf32>
    %42 = arith.addf %40, %41 : vector<128x128xf32>
    %cst_19 = arith.constant 2.000000e-01 : f32
    %43 = vector.broadcast %cst_19 : f32 to vector<128x128xf32>
    %44 = arith.mulf %43, %42 : vector<128x128xf32>
    %45 = arith.maximumf %42, %44 : vector<128x128xf32>
    %c2_20 = arith.constant 2 : index
    %46 = memref.load %arg2[%c2_20] : memref<128xf32, #tpu.memory_space<smem>>
    %47 = vector.broadcast %46 : f32 to vector<128x128xf32>
    %48 = arith.mulf %47, %45 : vector<128x128xf32>
    %49 = arith.addf %37, %48 : vector<128x128xf32>
    %50 = vector.extract_strided_slice %12 {offsets = [0, 3], sizes = [128, 1], strides = [1, 1]} : vector<128x128xf32> to vector<128x1xf32>
    %c3 = arith.constant 3 : index
    %c0_21 = arith.constant 0 : index
    %51 = vector.load %arg13[%c3, %c0_21] : memref<128x128xf32, #tpu.memory_space<vmem>>, vector<1x128xf32>
    %52 = vector.broadcast %50 : vector<128x1xf32> to vector<128x128xf32>
    %53 = vector.broadcast %51 : vector<1x128xf32> to vector<128x128xf32>
    %54 = arith.addf %52, %53 : vector<128x128xf32>
    %cst_22 = arith.constant 2.000000e-01 : f32
    %55 = vector.broadcast %cst_22 : f32 to vector<128x128xf32>
    %56 = arith.mulf %55, %54 : vector<128x128xf32>
    %57 = arith.maximumf %54, %56 : vector<128x128xf32>
    %c3_23 = arith.constant 3 : index
    %58 = memref.load %arg2[%c3_23] : memref<128xf32, #tpu.memory_space<smem>>
    %59 = vector.broadcast %58 : f32 to vector<128x128xf32>
    %60 = arith.mulf %59, %57 : vector<128x128xf32>
    %61 = arith.addf %49, %60 : vector<128x128xf32>
    %62 = vector.extract_strided_slice %12 {offsets = [0, 4], sizes = [128, 1], strides = [1, 1]} : vector<128x128xf32> to vector<128x1xf32>
    %c4 = arith.constant 4 : index
    %c0_24 = arith.constant 0 : index
    %63 = vector.load %arg13[%c4, %c0_24] : memref<128x128xf32, #tpu.memory_space<vmem>>, vector<1x128xf32>
    %64 = vector.broadcast %62 : vector<128x1xf32> to vector<128x128xf32>
    %65 = vector.broadcast %63 : vector<1x128xf32> to vector<128x128xf32>
    %66 = arith.addf %64, %65 : vector<128x128xf32>
    %cst_25 = arith.constant 2.000000e-01 : f32
    %67 = vector.broadcast %cst_25 : f32 to vector<128x128xf32>
    %68 = arith.mulf %67, %66 : vector<128x128xf32>
    %69 = arith.maximumf %66, %68 : vector<128x128xf32>
    %c4_26 = arith.constant 4 : index
    %70 = memref.load %arg2[%c4_26] : memref<128xf32, #tpu.memory_space<smem>>
    %71 = vector.broadcast %70 : f32 to vector<128x128xf32>
    %72 = arith.mulf %71, %69 : vector<128x128xf32>
    %73 = arith.addf %61, %72 : vector<128x128xf32>
    %74 = vector.extract_strided_slice %12 {offsets = [0, 5], sizes = [128, 1], strides = [1, 1]} : vector<128x128xf32> to vector<128x1xf32>
    %c5 = arith.constant 5 : index
    %c0_27 = arith.constant 0 : index
    %75 = vector.load %arg13[%c5, %c0_27] : memref<128x128xf32, #tpu.memory_space<vmem>>, vector<1x128xf32>
    %76 = vector.broadcast %74 : vector<128x1xf32> to vector<128x128xf32>
    %77 = vector.broadcast %75 : vector<1x128xf32> to vector<128x128xf32>
    %78 = arith.addf %76, %77 : vector<128x128xf32>
    %cst_28 = arith.constant 2.000000e-01 : f32
    %79 = vector.broadcast %cst_28 : f32 to vector<128x128xf32>
    %80 = arith.mulf %79, %78 : vector<128x128xf32>
    %81 = arith.maximumf %78, %80 : vector<128x128xf32>
    %c5_29 = arith.constant 5 : index
    %82 = memref.load %arg2[%c5_29] : memref<128xf32, #tpu.memory_space<smem>>
    %83 = vector.broadcast %82 : f32 to vector<128x128xf32>
    %84 = arith.mulf %83, %81 : vector<128x128xf32>
    %85 = arith.addf %73, %84 : vector<128x128xf32>
    %86 = vector.extract_strided_slice %12 {offsets = [0, 6], sizes = [128, 1], strides = [1, 1]} : vector<128x128xf32> to vector<128x1xf32>
    %c6 = arith.constant 6 : index
    %c0_30 = arith.constant 0 : index
    %87 = vector.load %arg13[%c6, %c0_30] : memref<128x128xf32, #tpu.memory_space<vmem>>, vector<1x128xf32>
    %88 = vector.broadcast %86 : vector<128x1xf32> to vector<128x128xf32>
    %89 = vector.broadcast %87 : vector<1x128xf32> to vector<128x128xf32>
    %90 = arith.addf %88, %89 : vector<128x128xf32>
    %cst_31 = arith.constant 2.000000e-01 : f32
    %91 = vector.broadcast %cst_31 : f32 to vector<128x128xf32>
    %92 = arith.mulf %91, %90 : vector<128x128xf32>
    %93 = arith.maximumf %90, %92 : vector<128x128xf32>
    %c6_32 = arith.constant 6 : index
    %94 = memref.load %arg2[%c6_32] : memref<128xf32, #tpu.memory_space<smem>>
    %95 = vector.broadcast %94 : f32 to vector<128x128xf32>
    %96 = arith.mulf %95, %93 : vector<128x128xf32>
    %97 = arith.addf %85, %96 : vector<128x128xf32>
    %98 = vector.extract_strided_slice %12 {offsets = [0, 7], sizes = [128, 1], strides = [1, 1]} : vector<128x128xf32> to vector<128x1xf32>
    %c7 = arith.constant 7 : index
    %c0_33 = arith.constant 0 : index
    %99 = vector.load %arg13[%c7, %c0_33] : memref<128x128xf32, #tpu.memory_space<vmem>>, vector<1x128xf32>
    %100 = vector.broadcast %98 : vector<128x1xf32> to vector<128x128xf32>
    %101 = vector.broadcast %99 : vector<1x128xf32> to vector<128x128xf32>
    %102 = arith.addf %100, %101 : vector<128x128xf32>
    %cst_34 = arith.constant 2.000000e-01 : f32
    %103 = vector.broadcast %cst_34 : f32 to vector<128x128xf32>
    %104 = arith.mulf %103, %102 : vector<128x128xf32>
    %105 = arith.maximumf %102, %104 : vector<128x128xf32>
    %c7_35 = arith.constant 7 : index
    %106 = memref.load %arg2[%c7_35] : memref<128xf32, #tpu.memory_space<smem>>
    %107 = vector.broadcast %106 : f32 to vector<128x128xf32>
    %108 = arith.mulf %107, %105 : vector<128x128xf32>
    %109 = arith.addf %97, %108 : vector<128x128xf32>
    %110 = vector.extract_strided_slice %12 {offsets = [0, 8], sizes = [128, 1], strides = [1, 1]} : vector<128x128xf32> to vector<128x1xf32>
    %c8 = arith.constant 8 : index
    %c0_36 = arith.constant 0 : index
    %111 = vector.load %arg13[%c8, %c0_36] : memref<128x128xf32, #tpu.memory_space<vmem>>, vector<1x128xf32>
    %112 = vector.broadcast %110 : vector<128x1xf32> to vector<128x128xf32>
    %113 = vector.broadcast %111 : vector<1x128xf32> to vector<128x128xf32>
    %114 = arith.addf %112, %113 : vector<128x128xf32>
    %cst_37 = arith.constant 2.000000e-01 : f32
    %115 = vector.broadcast %cst_37 : f32 to vector<128x128xf32>
    %116 = arith.mulf %115, %114 : vector<128x128xf32>
    %117 = arith.maximumf %114, %116 : vector<128x128xf32>
    %c8_38 = arith.constant 8 : index
    %118 = memref.load %arg2[%c8_38] : memref<128xf32, #tpu.memory_space<smem>>
    %119 = vector.broadcast %118 : f32 to vector<128x128xf32>
    %120 = arith.mulf %119, %117 : vector<128x128xf32>
    %121 = arith.addf %109, %120 : vector<128x128xf32>
    %122 = vector.extract_strided_slice %12 {offsets = [0, 9], sizes = [128, 1], strides = [1, 1]} : vector<128x128xf32> to vector<128x1xf32>
    %c9 = arith.constant 9 : index
    %c0_39 = arith.constant 0 : index
    %123 = vector.load %arg13[%c9, %c0_39] : memref<128x128xf32, #tpu.memory_space<vmem>>, vector<1x128xf32>
    %124 = vector.broadcast %122 : vector<128x1xf32> to vector<128x128xf32>
    %125 = vector.broadcast %123 : vector<1x128xf32> to vector<128x128xf32>
    %126 = arith.addf %124, %125 : vector<128x128xf32>
    %cst_40 = arith.constant 2.000000e-01 : f32
    %127 = vector.broadcast %cst_40 : f32 to vector<128x128xf32>
    %128 = arith.mulf %127, %126 : vector<128x128xf32>
    %129 = arith.maximumf %126, %128 : vector<128x128xf32>
    %c9_41 = arith.constant 9 : index
    %130 = memref.load %arg2[%c9_41] : memref<128xf32, #tpu.memory_space<smem>>
    %131 = vector.broadcast %130 : f32 to vector<128x128xf32>
    %132 = arith.mulf %131, %129 : vector<128x128xf32>
    %133 = arith.addf %121, %132 : vector<128x128xf32>
    %134 = vector.extract_strided_slice %12 {offsets = [0, 10], sizes = [128, 1], strides = [1, 1]} : vector<128x128xf32> to vector<128x1xf32>
    %c10 = arith.constant 10 : index
    %c0_42 = arith.constant 0 : index
    %135 = vector.load %arg13[%c10, %c0_42] : memref<128x128xf32, #tpu.memory_space<vmem>>, vector<1x128xf32>
    %136 = vector.broadcast %134 : vector<128x1xf32> to vector<128x128xf32>
    %137 = vector.broadcast %135 : vector<1x128xf32> to vector<128x128xf32>
    %138 = arith.addf %136, %137 : vector<128x128xf32>
    %cst_43 = arith.constant 2.000000e-01 : f32
    %139 = vector.broadcast %cst_43 : f32 to vector<128x128xf32>
    %140 = arith.mulf %139, %138 : vector<128x128xf32>
    %141 = arith.maximumf %138, %140 : vector<128x128xf32>
    %c10_44 = arith.constant 10 : index
    %142 = memref.load %arg2[%c10_44] : memref<128xf32, #tpu.memory_space<smem>>
    %143 = vector.broadcast %142 : f32 to vector<128x128xf32>
    %144 = arith.mulf %143, %141 : vector<128x128xf32>
    %145 = arith.addf %133, %144 : vector<128x128xf32>
    %146 = vector.extract_strided_slice %12 {offsets = [0, 11], sizes = [128, 1], strides = [1, 1]} : vector<128x128xf32> to vector<128x1xf32>
    %c11 = arith.constant 11 : index
    %c0_45 = arith.constant 0 : index
    %147 = vector.load %arg13[%c11, %c0_45] : memref<128x128xf32, #tpu.memory_space<vmem>>, vector<1x128xf32>
    %148 = vector.broadcast %146 : vector<128x1xf32> to vector<128x128xf32>
    %149 = vector.broadcast %147 : vector<1x128xf32> to vector<128x128xf32>
    %150 = arith.addf %148, %149 : vector<128x128xf32>
    %cst_46 = arith.constant 2.000000e-01 : f32
    %151 = vector.broadcast %cst_46 : f32 to vector<128x128xf32>
    %152 = arith.mulf %151, %150 : vector<128x128xf32>
    %153 = arith.maximumf %150, %152 : vector<128x128xf32>
    %c11_47 = arith.constant 11 : index
    %154 = memref.load %arg2[%c11_47] : memref<128xf32, #tpu.memory_space<smem>>
    %155 = vector.broadcast %154 : f32 to vector<128x128xf32>
    %156 = arith.mulf %155, %153 : vector<128x128xf32>
    %157 = arith.addf %145, %156 : vector<128x128xf32>
    %158 = vector.extract_strided_slice %12 {offsets = [0, 12], sizes = [128, 1], strides = [1, 1]} : vector<128x128xf32> to vector<128x1xf32>
    %c12 = arith.constant 12 : index
    %c0_48 = arith.constant 0 : index
    %159 = vector.load %arg13[%c12, %c0_48] : memref<128x128xf32, #tpu.memory_space<vmem>>, vector<1x128xf32>
    %160 = vector.broadcast %158 : vector<128x1xf32> to vector<128x128xf32>
    %161 = vector.broadcast %159 : vector<1x128xf32> to vector<128x128xf32>
    %162 = arith.addf %160, %161 : vector<128x128xf32>
    %cst_49 = arith.constant 2.000000e-01 : f32
    %163 = vector.broadcast %cst_49 : f32 to vector<128x128xf32>
    %164 = arith.mulf %163, %162 : vector<128x128xf32>
    %165 = arith.maximumf %162, %164 : vector<128x128xf32>
    %c12_50 = arith.constant 12 : index
    %166 = memref.load %arg2[%c12_50] : memref<128xf32, #tpu.memory_space<smem>>
    %167 = vector.broadcast %166 : f32 to vector<128x128xf32>
    %168 = arith.mulf %167, %165 : vector<128x128xf32>
    %169 = arith.addf %157, %168 : vector<128x128xf32>
    %170 = vector.extract_strided_slice %12 {offsets = [0, 13], sizes = [128, 1], strides = [1, 1]} : vector<128x128xf32> to vector<128x1xf32>
    %c13 = arith.constant 13 : index
    %c0_51 = arith.constant 0 : index
    %171 = vector.load %arg13[%c13, %c0_51] : memref<128x128xf32, #tpu.memory_space<vmem>>, vector<1x128xf32>
    %172 = vector.broadcast %170 : vector<128x1xf32> to vector<128x128xf32>
    %173 = vector.broadcast %171 : vector<1x128xf32> to vector<128x128xf32>
    %174 = arith.addf %172, %173 : vector<128x128xf32>
    %cst_52 = arith.constant 2.000000e-01 : f32
    %175 = vector.broadcast %cst_52 : f32 to vector<128x128xf32>
    %176 = arith.mulf %175, %174 : vector<128x128xf32>
    %177 = arith.maximumf %174, %176 : vector<128x128xf32>
    %c13_53 = arith.constant 13 : index
    %178 = memref.load %arg2[%c13_53] : memref<128xf32, #tpu.memory_space<smem>>
    %179 = vector.broadcast %178 : f32 to vector<128x128xf32>
    %180 = arith.mulf %179, %177 : vector<128x128xf32>
    %181 = arith.addf %169, %180 : vector<128x128xf32>
    %182 = vector.extract_strided_slice %12 {offsets = [0, 14], sizes = [128, 1], strides = [1, 1]} : vector<128x128xf32> to vector<128x1xf32>
    %c14 = arith.constant 14 : index
    %c0_54 = arith.constant 0 : index
    %183 = vector.load %arg13[%c14, %c0_54] : memref<128x128xf32, #tpu.memory_space<vmem>>, vector<1x128xf32>
    %184 = vector.broadcast %182 : vector<128x1xf32> to vector<128x128xf32>
    %185 = vector.broadcast %183 : vector<1x128xf32> to vector<128x128xf32>
    %186 = arith.addf %184, %185 : vector<128x128xf32>
    %cst_55 = arith.constant 2.000000e-01 : f32
    %187 = vector.broadcast %cst_55 : f32 to vector<128x128xf32>
    %188 = arith.mulf %187, %186 : vector<128x128xf32>
    %189 = arith.maximumf %186, %188 : vector<128x128xf32>
    %c14_56 = arith.constant 14 : index
    %190 = memref.load %arg2[%c14_56] : memref<128xf32, #tpu.memory_space<smem>>
    %191 = vector.broadcast %190 : f32 to vector<128x128xf32>
    %192 = arith.mulf %191, %189 : vector<128x128xf32>
    %193 = arith.addf %181, %192 : vector<128x128xf32>
    %194 = vector.extract_strided_slice %12 {offsets = [0, 15], sizes = [128, 1], strides = [1, 1]} : vector<128x128xf32> to vector<128x1xf32>
    %c15 = arith.constant 15 : index
    %c0_57 = arith.constant 0 : index
    %195 = vector.load %arg13[%c15, %c0_57] : memref<128x128xf32, #tpu.memory_space<vmem>>, vector<1x128xf32>
    %196 = vector.broadcast %194 : vector<128x1xf32> to vector<128x128xf32>
    %197 = vector.broadcast %195 : vector<1x128xf32> to vector<128x128xf32>
    %198 = arith.addf %196, %197 : vector<128x128xf32>
    %cst_58 = arith.constant 2.000000e-01 : f32
    %199 = vector.broadcast %cst_58 : f32 to vector<128x128xf32>
    %200 = arith.mulf %199, %198 : vector<128x128xf32>
    %201 = arith.maximumf %198, %200 : vector<128x128xf32>
    %c15_59 = arith.constant 15 : index
    %202 = memref.load %arg2[%c15_59] : memref<128xf32, #tpu.memory_space<smem>>
    %203 = vector.broadcast %202 : f32 to vector<128x128xf32>
    %204 = arith.mulf %203, %201 : vector<128x128xf32>
    %205 = arith.addf %193, %204 : vector<128x128xf32>
    %206 = vector.extract_strided_slice %12 {offsets = [0, 16], sizes = [128, 1], strides = [1, 1]} : vector<128x128xf32> to vector<128x1xf32>
    %c16 = arith.constant 16 : index
    %c0_60 = arith.constant 0 : index
    %207 = vector.load %arg13[%c16, %c0_60] : memref<128x128xf32, #tpu.memory_space<vmem>>, vector<1x128xf32>
    %208 = vector.broadcast %206 : vector<128x1xf32> to vector<128x128xf32>
    %209 = vector.broadcast %207 : vector<1x128xf32> to vector<128x128xf32>
    %210 = arith.addf %208, %209 : vector<128x128xf32>
    %cst_61 = arith.constant 2.000000e-01 : f32
    %211 = vector.broadcast %cst_61 : f32 to vector<128x128xf32>
    %212 = arith.mulf %211, %210 : vector<128x128xf32>
    %213 = arith.maximumf %210, %212 : vector<128x128xf32>
    %c16_62 = arith.constant 16 : index
    %214 = memref.load %arg2[%c16_62] : memref<128xf32, #tpu.memory_space<smem>>
    %215 = vector.broadcast %214 : f32 to vector<128x128xf32>
    %216 = arith.mulf %215, %213 : vector<128x128xf32>
    %217 = arith.addf %205, %216 : vector<128x128xf32>
    %218 = vector.extract_strided_slice %12 {offsets = [0, 17], sizes = [128, 1], strides = [1, 1]} : vector<128x128xf32> to vector<128x1xf32>
    %c17 = arith.constant 17 : index
    %c0_63 = arith.constant 0 : index
    %219 = vector.load %arg13[%c17, %c0_63] : memref<128x128xf32, #tpu.memory_space<vmem>>, vector<1x128xf32>
    %220 = vector.broadcast %218 : vector<128x1xf32> to vector<128x128xf32>
    %221 = vector.broadcast %219 : vector<1x128xf32> to vector<128x128xf32>
    %222 = arith.addf %220, %221 : vector<128x128xf32>
    %cst_64 = arith.constant 2.000000e-01 : f32
    %223 = vector.broadcast %cst_64 : f32 to vector<128x128xf32>
    %224 = arith.mulf %223, %222 : vector<128x128xf32>
    %225 = arith.maximumf %222, %224 : vector<128x128xf32>
    %c17_65 = arith.constant 17 : index
    %226 = memref.load %arg2[%c17_65] : memref<128xf32, #tpu.memory_space<smem>>
    %227 = vector.broadcast %226 : f32 to vector<128x128xf32>
    %228 = arith.mulf %227, %225 : vector<128x128xf32>
    %229 = arith.addf %217, %228 : vector<128x128xf32>
    %230 = vector.extract_strided_slice %12 {offsets = [0, 18], sizes = [128, 1], strides = [1, 1]} : vector<128x128xf32> to vector<128x1xf32>
    %c18 = arith.constant 18 : index
    %c0_66 = arith.constant 0 : index
    %231 = vector.load %arg13[%c18, %c0_66] : memref<128x128xf32, #tpu.memory_space<vmem>>, vector<1x128xf32>
    %232 = vector.broadcast %230 : vector<128x1xf32> to vector<128x128xf32>
    %233 = vector.broadcast %231 : vector<1x128xf32> to vector<128x128xf32>
    %234 = arith.addf %232, %233 : vector<128x128xf32>
    %cst_67 = arith.constant 2.000000e-01 : f32
    %235 = vector.broadcast %cst_67 : f32 to vector<128x128xf32>
    %236 = arith.mulf %235, %234 : vector<128x128xf32>
    %237 = arith.maximumf %234, %236 : vector<128x128xf32>
    %c18_68 = arith.constant 18 : index
    %238 = memref.load %arg2[%c18_68] : memref<128xf32, #tpu.memory_space<smem>>
    %239 = vector.broadcast %238 : f32 to vector<128x128xf32>
    %240 = arith.mulf %239, %237 : vector<128x128xf32>
    %241 = arith.addf %229, %240 : vector<128x128xf32>
    %242 = vector.extract_strided_slice %12 {offsets = [0, 19], sizes = [128, 1], strides = [1, 1]} : vector<128x128xf32> to vector<128x1xf32>
    %c19 = arith.constant 19 : index
    %c0_69 = arith.constant 0 : index
    %243 = vector.load %arg13[%c19, %c0_69] : memref<128x128xf32, #tpu.memory_space<vmem>>, vector<1x128xf32>
    %244 = vector.broadcast %242 : vector<128x1xf32> to vector<128x128xf32>
    %245 = vector.broadcast %243 : vector<1x128xf32> to vector<128x128xf32>
    %246 = arith.addf %244, %245 : vector<128x128xf32>
    %cst_70 = arith.constant 2.000000e-01 : f32
    %247 = vector.broadcast %cst_70 : f32 to vector<128x128xf32>
    %248 = arith.mulf %247, %246 : vector<128x128xf32>
    %249 = arith.maximumf %246, %248 : vector<128x128xf32>
    %c19_71 = arith.constant 19 : index
    %250 = memref.load %arg2[%c19_71] : memref<128xf32, #tpu.memory_space<smem>>
    %251 = vector.broadcast %250 : f32 to vector<128x128xf32>
    %252 = arith.mulf %251, %249 : vector<128x128xf32>
    %253 = arith.addf %241, %252 : vector<128x128xf32>
    %254 = vector.extract_strided_slice %12 {offsets = [0, 20], sizes = [128, 1], strides = [1, 1]} : vector<128x128xf32> to vector<128x1xf32>
    %c20 = arith.constant 20 : index
    %c0_72 = arith.constant 0 : index
    %255 = vector.load %arg13[%c20, %c0_72] : memref<128x128xf32, #tpu.memory_space<vmem>>, vector<1x128xf32>
    %256 = vector.broadcast %254 : vector<128x1xf32> to vector<128x128xf32>
    %257 = vector.broadcast %255 : vector<1x128xf32> to vector<128x128xf32>
    %258 = arith.addf %256, %257 : vector<128x128xf32>
    %cst_73 = arith.constant 2.000000e-01 : f32
    %259 = vector.broadcast %cst_73 : f32 to vector<128x128xf32>
    %260 = arith.mulf %259, %258 : vector<128x128xf32>
    %261 = arith.maximumf %258, %260 : vector<128x128xf32>
    %c20_74 = arith.constant 20 : index
    %262 = memref.load %arg2[%c20_74] : memref<128xf32, #tpu.memory_space<smem>>
    %263 = vector.broadcast %262 : f32 to vector<128x128xf32>
    %264 = arith.mulf %263, %261 : vector<128x128xf32>
    %265 = arith.addf %253, %264 : vector<128x128xf32>
    %266 = vector.extract_strided_slice %12 {offsets = [0, 21], sizes = [128, 1], strides = [1, 1]} : vector<128x128xf32> to vector<128x1xf32>
    %c21 = arith.constant 21 : index
    %c0_75 = arith.constant 0 : index
    %267 = vector.load %arg13[%c21, %c0_75] : memref<128x128xf32, #tpu.memory_space<vmem>>, vector<1x128xf32>
    %268 = vector.broadcast %266 : vector<128x1xf32> to vector<128x128xf32>
    %269 = vector.broadcast %267 : vector<1x128xf32> to vector<128x128xf32>
    %270 = arith.addf %268, %269 : vector<128x128xf32>
    %cst_76 = arith.constant 2.000000e-01 : f32
    %271 = vector.broadcast %cst_76 : f32 to vector<128x128xf32>
    %272 = arith.mulf %271, %270 : vector<128x128xf32>
    %273 = arith.maximumf %270, %272 : vector<128x128xf32>
    %c21_77 = arith.constant 21 : index
    %274 = memref.load %arg2[%c21_77] : memref<128xf32, #tpu.memory_space<smem>>
    %275 = vector.broadcast %274 : f32 to vector<128x128xf32>
    %276 = arith.mulf %275, %273 : vector<128x128xf32>
    %277 = arith.addf %265, %276 : vector<128x128xf32>
    %278 = vector.extract_strided_slice %12 {offsets = [0, 22], sizes = [128, 1], strides = [1, 1]} : vector<128x128xf32> to vector<128x1xf32>
    %c22 = arith.constant 22 : index
    %c0_78 = arith.constant 0 : index
    %279 = vector.load %arg13[%c22, %c0_78] : memref<128x128xf32, #tpu.memory_space<vmem>>, vector<1x128xf32>
    %280 = vector.broadcast %278 : vector<128x1xf32> to vector<128x128xf32>
    %281 = vector.broadcast %279 : vector<1x128xf32> to vector<128x128xf32>
    %282 = arith.addf %280, %281 : vector<128x128xf32>
    %cst_79 = arith.constant 2.000000e-01 : f32
    %283 = vector.broadcast %cst_79 : f32 to vector<128x128xf32>
    %284 = arith.mulf %283, %282 : vector<128x128xf32>
    %285 = arith.maximumf %282, %284 : vector<128x128xf32>
    %c22_80 = arith.constant 22 : index
    %286 = memref.load %arg2[%c22_80] : memref<128xf32, #tpu.memory_space<smem>>
    %287 = vector.broadcast %286 : f32 to vector<128x128xf32>
    %288 = arith.mulf %287, %285 : vector<128x128xf32>
    %289 = arith.addf %277, %288 : vector<128x128xf32>
    %290 = vector.extract_strided_slice %12 {offsets = [0, 23], sizes = [128, 1], strides = [1, 1]} : vector<128x128xf32> to vector<128x1xf32>
    %c23 = arith.constant 23 : index
    %c0_81 = arith.constant 0 : index
    %291 = vector.load %arg13[%c23, %c0_81] : memref<128x128xf32, #tpu.memory_space<vmem>>, vector<1x128xf32>
    %292 = vector.broadcast %290 : vector<128x1xf32> to vector<128x128xf32>
    %293 = vector.broadcast %291 : vector<1x128xf32> to vector<128x128xf32>
    %294 = arith.addf %292, %293 : vector<128x128xf32>
    %cst_82 = arith.constant 2.000000e-01 : f32
    %295 = vector.broadcast %cst_82 : f32 to vector<128x128xf32>
    %296 = arith.mulf %295, %294 : vector<128x128xf32>
    %297 = arith.maximumf %294, %296 : vector<128x128xf32>
    %c23_83 = arith.constant 23 : index
    %298 = memref.load %arg2[%c23_83] : memref<128xf32, #tpu.memory_space<smem>>
    %299 = vector.broadcast %298 : f32 to vector<128x128xf32>
    %300 = arith.mulf %299, %297 : vector<128x128xf32>
    %301 = arith.addf %289, %300 : vector<128x128xf32>
    %302 = vector.extract_strided_slice %12 {offsets = [0, 24], sizes = [128, 1], strides = [1, 1]} : vector<128x128xf32> to vector<128x1xf32>
    %c24 = arith.constant 24 : index
    %c0_84 = arith.constant 0 : index
    %303 = vector.load %arg13[%c24, %c0_84] : memref<128x128xf32, #tpu.memory_space<vmem>>, vector<1x128xf32>
    %304 = vector.broadcast %302 : vector<128x1xf32> to vector<128x128xf32>
    %305 = vector.broadcast %303 : vector<1x128xf32> to vector<128x128xf32>
    %306 = arith.addf %304, %305 : vector<128x128xf32>
    %cst_85 = arith.constant 2.000000e-01 : f32
    %307 = vector.broadcast %cst_85 : f32 to vector<128x128xf32>
    %308 = arith.mulf %307, %306 : vector<128x128xf32>
    %309 = arith.maximumf %306, %308 : vector<128x128xf32>
    %c24_86 = arith.constant 24 : index
    %310 = memref.load %arg2[%c24_86] : memref<128xf32, #tpu.memory_space<smem>>
    %311 = vector.broadcast %310 : f32 to vector<128x128xf32>
    %312 = arith.mulf %311, %309 : vector<128x128xf32>
    %313 = arith.addf %301, %312 : vector<128x128xf32>
    %314 = vector.extract_strided_slice %12 {offsets = [0, 25], sizes = [128, 1], strides = [1, 1]} : vector<128x128xf32> to vector<128x1xf32>
    %c25 = arith.constant 25 : index
    %c0_87 = arith.constant 0 : index
    %315 = vector.load %arg13[%c25, %c0_87] : memref<128x128xf32, #tpu.memory_space<vmem>>, vector<1x128xf32>
    %316 = vector.broadcast %314 : vector<128x1xf32> to vector<128x128xf32>
    %317 = vector.broadcast %315 : vector<1x128xf32> to vector<128x128xf32>
    %318 = arith.addf %316, %317 : vector<128x128xf32>
    %cst_88 = arith.constant 2.000000e-01 : f32
    %319 = vector.broadcast %cst_88 : f32 to vector<128x128xf32>
    %320 = arith.mulf %319, %318 : vector<128x128xf32>
    %321 = arith.maximumf %318, %320 : vector<128x128xf32>
    %c25_89 = arith.constant 25 : index
    %322 = memref.load %arg2[%c25_89] : memref<128xf32, #tpu.memory_space<smem>>
    %323 = vector.broadcast %322 : f32 to vector<128x128xf32>
    %324 = arith.mulf %323, %321 : vector<128x128xf32>
    %325 = arith.addf %313, %324 : vector<128x128xf32>
    %326 = vector.extract_strided_slice %12 {offsets = [0, 26], sizes = [128, 1], strides = [1, 1]} : vector<128x128xf32> to vector<128x1xf32>
    %c26 = arith.constant 26 : index
    %c0_90 = arith.constant 0 : index
    %327 = vector.load %arg13[%c26, %c0_90] : memref<128x128xf32, #tpu.memory_space<vmem>>, vector<1x128xf32>
    %328 = vector.broadcast %326 : vector<128x1xf32> to vector<128x128xf32>
    %329 = vector.broadcast %327 : vector<1x128xf32> to vector<128x128xf32>
    %330 = arith.addf %328, %329 : vector<128x128xf32>
    %cst_91 = arith.constant 2.000000e-01 : f32
    %331 = vector.broadcast %cst_91 : f32 to vector<128x128xf32>
    %332 = arith.mulf %331, %330 : vector<128x128xf32>
    %333 = arith.maximumf %330, %332 : vector<128x128xf32>
    %c26_92 = arith.constant 26 : index
    %334 = memref.load %arg2[%c26_92] : memref<128xf32, #tpu.memory_space<smem>>
    %335 = vector.broadcast %334 : f32 to vector<128x128xf32>
    %336 = arith.mulf %335, %333 : vector<128x128xf32>
    %337 = arith.addf %325, %336 : vector<128x128xf32>
    %338 = vector.extract_strided_slice %12 {offsets = [0, 27], sizes = [128, 1], strides = [1, 1]} : vector<128x128xf32> to vector<128x1xf32>
    %c27 = arith.constant 27 : index
    %c0_93 = arith.constant 0 : index
    %339 = vector.load %arg13[%c27, %c0_93] : memref<128x128xf32, #tpu.memory_space<vmem>>, vector<1x128xf32>
    %340 = vector.broadcast %338 : vector<128x1xf32> to vector<128x128xf32>
    %341 = vector.broadcast %339 : vector<1x128xf32> to vector<128x128xf32>
    %342 = arith.addf %340, %341 : vector<128x128xf32>
    %cst_94 = arith.constant 2.000000e-01 : f32
    %343 = vector.broadcast %cst_94 : f32 to vector<128x128xf32>
    %344 = arith.mulf %343, %342 : vector<128x128xf32>
    %345 = arith.maximumf %342, %344 : vector<128x128xf32>
    %c27_95 = arith.constant 27 : index
    %346 = memref.load %arg2[%c27_95] : memref<128xf32, #tpu.memory_space<smem>>
    %347 = vector.broadcast %346 : f32 to vector<128x128xf32>
    %348 = arith.mulf %347, %345 : vector<128x128xf32>
    %349 = arith.addf %337, %348 : vector<128x128xf32>
    %350 = vector.extract_strided_slice %12 {offsets = [0, 28], sizes = [128, 1], strides = [1, 1]} : vector<128x128xf32> to vector<128x1xf32>
    %c28 = arith.constant 28 : index
    %c0_96 = arith.constant 0 : index
    %351 = vector.load %arg13[%c28, %c0_96] : memref<128x128xf32, #tpu.memory_space<vmem>>, vector<1x128xf32>
    %352 = vector.broadcast %350 : vector<128x1xf32> to vector<128x128xf32>
    %353 = vector.broadcast %351 : vector<1x128xf32> to vector<128x128xf32>
    %354 = arith.addf %352, %353 : vector<128x128xf32>
    %cst_97 = arith.constant 2.000000e-01 : f32
    %355 = vector.broadcast %cst_97 : f32 to vector<128x128xf32>
    %356 = arith.mulf %355, %354 : vector<128x128xf32>
    %357 = arith.maximumf %354, %356 : vector<128x128xf32>
    %c28_98 = arith.constant 28 : index
    %358 = memref.load %arg2[%c28_98] : memref<128xf32, #tpu.memory_space<smem>>
    %359 = vector.broadcast %358 : f32 to vector<128x128xf32>
    %360 = arith.mulf %359, %357 : vector<128x128xf32>
    %361 = arith.addf %349, %360 : vector<128x128xf32>
    %362 = vector.extract_strided_slice %12 {offsets = [0, 29], sizes = [128, 1], strides = [1, 1]} : vector<128x128xf32> to vector<128x1xf32>
    %c29 = arith.constant 29 : index
    %c0_99 = arith.constant 0 : index
    %363 = vector.load %arg13[%c29, %c0_99] : memref<128x128xf32, #tpu.memory_space<vmem>>, vector<1x128xf32>
    %364 = vector.broadcast %362 : vector<128x1xf32> to vector<128x128xf32>
    %365 = vector.broadcast %363 : vector<1x128xf32> to vector<128x128xf32>
    %366 = arith.addf %364, %365 : vector<128x128xf32>
    %cst_100 = arith.constant 2.000000e-01 : f32
    %367 = vector.broadcast %cst_100 : f32 to vector<128x128xf32>
    %368 = arith.mulf %367, %366 : vector<128x128xf32>
    %369 = arith.maximumf %366, %368 : vector<128x128xf32>
    %c29_101 = arith.constant 29 : index
    %370 = memref.load %arg2[%c29_101] : memref<128xf32, #tpu.memory_space<smem>>
    %371 = vector.broadcast %370 : f32 to vector<128x128xf32>
    %372 = arith.mulf %371, %369 : vector<128x128xf32>
    %373 = arith.addf %361, %372 : vector<128x128xf32>
    %374 = vector.extract_strided_slice %12 {offsets = [0, 30], sizes = [128, 1], strides = [1, 1]} : vector<128x128xf32> to vector<128x1xf32>
    %c30 = arith.constant 30 : index
    %c0_102 = arith.constant 0 : index
    %375 = vector.load %arg13[%c30, %c0_102] : memref<128x128xf32, #tpu.memory_space<vmem>>, vector<1x128xf32>
    %376 = vector.broadcast %374 : vector<128x1xf32> to vector<128x128xf32>
    %377 = vector.broadcast %375 : vector<1x128xf32> to vector<128x128xf32>
    %378 = arith.addf %376, %377 : vector<128x128xf32>
    %cst_103 = arith.constant 2.000000e-01 : f32
    %379 = vector.broadcast %cst_103 : f32 to vector<128x128xf32>
    %380 = arith.mulf %379, %378 : vector<128x128xf32>
    %381 = arith.maximumf %378, %380 : vector<128x128xf32>
    %c30_104 = arith.constant 30 : index
    %382 = memref.load %arg2[%c30_104] : memref<128xf32, #tpu.memory_space<smem>>
    %383 = vector.broadcast %382 : f32 to vector<128x128xf32>
    %384 = arith.mulf %383, %381 : vector<128x128xf32>
    %385 = arith.addf %373, %384 : vector<128x128xf32>
    %386 = vector.extract_strided_slice %12 {offsets = [0, 31], sizes = [128, 1], strides = [1, 1]} : vector<128x128xf32> to vector<128x1xf32>
    %c31 = arith.constant 31 : index
    %c0_105 = arith.constant 0 : index
    %387 = vector.load %arg13[%c31, %c0_105] : memref<128x128xf32, #tpu.memory_space<vmem>>, vector<1x128xf32>
    %388 = vector.broadcast %386 : vector<128x1xf32> to vector<128x128xf32>
    %389 = vector.broadcast %387 : vector<1x128xf32> to vector<128x128xf32>
    %390 = arith.addf %388, %389 : vector<128x128xf32>
    %cst_106 = arith.constant 2.000000e-01 : f32
    %391 = vector.broadcast %cst_106 : f32 to vector<128x128xf32>
    %392 = arith.mulf %391, %390 : vector<128x128xf32>
    %393 = arith.maximumf %390, %392 : vector<128x128xf32>
    %c31_107 = arith.constant 31 : index
    %394 = memref.load %arg2[%c31_107] : memref<128xf32, #tpu.memory_space<smem>>
    %395 = vector.broadcast %394 : f32 to vector<128x128xf32>
    %396 = arith.mulf %395, %393 : vector<128x128xf32>
    %397 = arith.addf %385, %396 : vector<128x128xf32>
    %c0_108 = arith.constant 0 : index
    %c0_109 = arith.constant 0 : index
    %398 = vector.load %arg5[%c0_108, %c0_109] : memref<128x128xi8, #tpu.memory_space<vmem>>, vector<128x128xi8>
    %399 = arith.sitofp %398 : vector<128x128xi8> to vector<128x128xf32>
    %cst_110 = arith.constant 0.000000e+00 : f32
    %400 = vector.broadcast %cst_110 : f32 to vector<128x128xf32>
    %401 = arith.cmpf one, %399, %400 : vector<128x128xf32>
    %cst_111 = arith.constant -1.000000e+30 : f32
    %402 = vector.broadcast %cst_111 : f32 to vector<128x128xf32>
    %403 = arith.select %401, %397, %402 : vector<128x128xi1>, vector<128x128xf32>
    %c0_112 = arith.constant 0 : index
    %c0_113 = arith.constant 0 : index
    %404 = vector.load %arg14[%c0_112, %c0_113] : memref<128x1xf32, #tpu.memory_space<vmem>>, vector<128x1xf32>
    %cst_114 = arith.constant dense<0xFF800000> : vector<128xf32>
    %405 = vector.multi_reduction <maximumf>, %403, %cst_114 [1] : vector<128x128xf32> to vector<128xf32>
    %406 = vector.shape_cast %405 : vector<128xf32> to vector<128x1xf32>
    %407 = arith.maximumf %404, %406 : vector<128x1xf32>
    %408 = arith.subf %404, %407 : vector<128x1xf32>
    %409 = math.exp %408 : vector<128x1xf32>
    %410 = vector.broadcast %407 : vector<128x1xf32> to vector<128x128xf32>
    %411 = arith.subf %403, %410 : vector<128x128xf32>
    %412 = math.exp %411 : vector<128x128xf32>
    %413 = arith.mulf %412, %399 : vector<128x128xf32>
    %c0_115 = arith.constant 0 : index
    %c0_116 = arith.constant 0 : index
    %414 = vector.load %arg15[%c0_115, %c0_116] : memref<128x1xf32, #tpu.memory_space<vmem>>, vector<128x1xf32>
    %415 = arith.mulf %409, %414 : vector<128x1xf32>
    %cst_117 = arith.constant dense<0.000000e+00> : vector<128xf32>
    %416 = vector.multi_reduction <add>, %413, %cst_117 [1] : vector<128x128xf32> to vector<128xf32>
    %417 = vector.shape_cast %416 : vector<128xf32> to vector<128x1xf32>
    %418 = arith.addf %415, %417 : vector<128x1xf32>
    %c0_118 = arith.constant 0 : index
    %c0_119 = arith.constant 0 : index
    %419 = vector.load %arg15[%c0_118, %c0_119] : memref<128x1xf32, #tpu.memory_space<vmem>>, vector<128x1xf32>
    tpu.vector_store %arg15[%c0_118, %c0_119], %418 {strides = array<i32>} : memref<128x1xf32, #tpu.memory_space<vmem>>, vector<128x1xf32>,
    %c0_120 = arith.constant 0 : index
    %c0_121 = arith.constant 0 : index
    %420 = vector.load %arg16[%c0_120, %c0_121] : memref<128x128xf32, #tpu.memory_space<vmem>>, vector<128x128xf32>
    %421 = vector.broadcast %409 : vector<128x1xf32> to vector<128x128xf32>
    %422 = arith.mulf %421, %420 : vector<128x128xf32>
    %423 = arith.truncf %413 : vector<128x128xf32> to vector<128x128xbf16>
    %424 = arith.truncf %9 : vector<128x128xf32> to vector<128x128xbf16>
    %cst_122 = arith.constant dense<0.000000e+00> : vector<128x128xf32>
    %425 = tpu.matmul %423, %424, %cst_122 {dimension_numbers = #tpu.dot_dimension_numbers<[1], [0], [0], [1], [0, 0, 1, 1], [], []>} : vector<128x128xbf16>, vector<128x128xbf16>, vector<128x128xf32> -> vector<128x128xf32>
    %426 = arith.addf %422, %425 : vector<128x128xf32>
    %c0_123 = arith.constant 0 : index
    %c0_124 = arith.constant 0 : index
    %427 = vector.load %arg16[%c0_123, %c0_124] : memref<128x128xf32, #tpu.memory_space<vmem>>, vector<128x128xf32>
    tpu.vector_store %arg16[%c0_123, %c0_124], %426 {strides = array<i32>} : memref<128x128xf32, #tpu.memory_space<vmem>>, vector<128x128xf32>,
    %c0_125 = arith.constant 0 : index
    %c0_126 = arith.constant 0 : index
    %428 = vector.load %arg14[%c0_125, %c0_126] : memref<128x1xf32, #tpu.memory_space<vmem>>, vector<128x1xf32>
    tpu.vector_store %arg14[%c0_125, %c0_126], %407 {strides = array<i32>} : memref<128x1xf32, #tpu.memory_space<vmem>>, vector<128x1xf32>,
    %c1_i32 = arith.constant 1 : i32
    %429 = arith.cmpi eq, %arg1, %c1_i32 : i32
    %430 = arith.extui %429 : i1 to i32
    %c0_i32_127 = arith.constant 0 : i32
    %431 = arith.cmpi ne, %430, %c0_i32_127 : i32
    scf.if %431 {
      %c0_128 = arith.constant 0 : index
      %c0_129 = arith.constant 0 : index
      %432 = vector.load %arg15[%c0_128, %c0_129] : memref<128x1xf32, #tpu.memory_space<vmem>>, vector<128x1xf32>
      %cst_130 = arith.constant 1.000000e-30 : f32
      %433 = vector.broadcast %cst_130 : f32 to vector<128x1xf32>
      %434 = arith.maximumf %432, %433 : vector<128x1xf32>
      %435 = tpu.reciprocal %434 {approx = true} : vector<128x1xf32> -> vector<128x1xf32>
      %c0_131 = arith.constant 0 : index
      %c0_132 = arith.constant 0 : index
      %436 = vector.load %arg16[%c0_131, %c0_132] : memref<128x128xf32, #tpu.memory_space<vmem>>, vector<128x128xf32>
      %437 = vector.broadcast %435 : vector<128x1xf32> to vector<128x128xf32>
      %438 = arith.mulf %436, %437 : vector<128x128xf32>
      %c0_133 = arith.constant 0 : index
      %c0_134 = arith.constant 0 : index
      %439 = vector.load %arg10[%c0_133, %c0_134] : memref<1x128xf32, #tpu.memory_space<vmem>>, vector<1x128xf32>
      %440 = vector.broadcast %439 : vector<1x128xf32> to vector<128x128xf32>
      %441 = arith.addf %438, %440 : vector<128x128xf32>
      %c0_135 = arith.constant 0 : index
      %c0_136 = arith.constant 0 : index
      %442 = vector.load %arg11[%c0_135, %c0_136] : memref<128x128xf32, #tpu.memory_space<vmem>>, vector<128x128xf32>
      tpu.vector_store %arg11[%c0_135, %c0_136], %441 {strides = array<i32>} : memref<128x128xf32, #tpu.memory_space<vmem>>, vector<128x128xf32>,
    } else {
    }
    return
  }
  func.func @transform_0(%arg0: i32, %arg1: i32) -> i32 {
    %c0_i32 = arith.constant 0 : i32
    %c0_i32_0 = arith.constant 0 : i32
    return %c0_i32 : i32
  }
  func.func @transform_1(%arg0: i32, %arg1: i32) -> (i32, i32) {
    %c0_i32 = arith.constant 0 : i32
    %c0_i32_0 = arith.constant 0 : i32
    return %arg0, %c0_i32 : i32, i32
  }
  func.func @transform_2(%arg0: i32, %arg1: i32) -> (i32, i32) {
    %c0_i32 = arith.constant 0 : i32
    %c0_i32_0 = arith.constant 0 : i32
    return %arg1, %c0_i32 : i32, i32
  }
  func.func @transform_3(%arg0: i32, %arg1: i32) -> (i32, i32) {
    %c0_i32 = arith.constant 0 : i32
    return %arg0, %arg1 : i32, i32
  }
  func.func @transform_4(%arg0: i32, %arg1: i32) -> (i32, i32) {
    %c0_i32 = arith.constant 0 : i32
    %c0_i32_0 = arith.constant 0 : i32
    %c0_i32_1 = arith.constant 0 : i32
    return %c0_i32, %c0_i32_0 : i32, i32
  }
  func.func @transform_5(%arg0: i32, %arg1: i32) -> (i32, i32) {
    %c0_i32 = arith.constant 0 : i32
    %c0_i32_0 = arith.constant 0 : i32
    %c0_i32_1 = arith.constant 0 : i32
    return %c0_i32, %c0_i32_0 : i32, i32
  }
  func.func @transform_6(%arg0: i32, %arg1: i32) -> (i32, i32) {
    %c0_i32 = arith.constant 0 : i32
    %c0_i32_0 = arith.constant 0 : i32
    %c0_i32_1 = arith.constant 0 : i32
    return %c0_i32, %c0_i32_0 : i32, i32
  }
  func.func @transform_7(%arg0: i32, %arg1: i32) -> (i32, i32) {
    %c0_i32 = arith.constant 0 : i32
    %c0_i32_0 = arith.constant 0 : i32
    %c0_i32_1 = arith.constant 0 : i32
    return %c0_i32, %c0_i32_0 : i32, i32
  }
  func.func @transform_8(%arg0: i32, %arg1: i32) -> (i32, i32) {
    %c0_i32 = arith.constant 0 : i32
    %c0_i32_0 = arith.constant 0 : i32
    %c0_i32_1 = arith.constant 0 : i32
    return %c0_i32, %c0_i32_0 : i32, i32
  }
  func.func @transform_9(%arg0: i32, %arg1: i32) -> (i32, i32) {
    %c0_i32 = arith.constant 0 : i32
    %c0_i32_0 = arith.constant 0 : i32
    return %arg0, %c0_i32 : i32, i32
  }
}

</mosaic_0001>

<llo_original>
// kernel: tpu_custom_call.1
$region0: #{tpu_custom_call.1}
  #allocation0 [shape = 'u32[]', space=smem, size = 0x4, offset = 0x4, fixed_abs, tag = 'smem constant byte address 0x4 - core index']
  #allocation1 [shape = 'u32[144,128]{1,0:T(1,128)}', space=vmem, size = 0x12000, scoped, tag = 'internal scratch']
  #allocation2 [shape = 'f32[128,128]{1,0:T(8,128)}', space=vmem, size = 0x10000, scoped, tag = 'scratch operand']
  #allocation3 [shape = 'f32[128,128]{1,0:T(8,128)}', space=vmem, size = 0x10000, scoped, tag = 'scratch operand']
  #allocation4 [shape = 'f32[128,1]{1,0:T(8,128)}', space=vmem, size = 0x10000, scoped, tag = 'scratch operand']
  #allocation5 [shape = 'f32[128,1]{1,0:T(8,128)}', space=vmem, size = 0x10000, scoped, tag = 'scratch operand']
  #allocation6 [shape = 'f32[128,128]{1,0:T(8,128)}', space=vmem, size = 0x10000, scoped, tag = 'scratch operand']
  %s0 = inlined_call_operand.hbm [shape: f32[128], index: 0, kind: input, shape index: {}]
  %s1 = inlined_call_operand.hbm [shape: f32[256,128], index: 1, kind: input, shape index: {}]
  %s2 = inlined_call_operand.hbm [shape: f32[256,128], index: 2, kind: input, shape index: {}]
  %s3 = inlined_call_operand.hbm [shape: s8[256,256], index: 3, kind: input, shape index: {}]
  %s4 = inlined_call_operand.hbm [shape: bf16[128,128], index: 4, kind: input, shape index: {}]
  %s5 = inlined_call_operand.hbm [shape: bf16[128,128], index: 5, kind: input, shape index: {}]
  %s6 = inlined_call_operand.vmem [shape: f32[1,128], index: 6, kind: input, shape index: {}]
  %s7 = inlined_call_operand.vmem [shape: f32[1,128], index: 7, kind: input, shape index: {}]
  %s8 = inlined_call_operand.vmem [shape: f32[1,128], index: 8, kind: input, shape index: {}]
  %s9 = inlined_call_operand.hbm [shape: f32[256,128], index: 9, kind: output, shape index: {}]
  %s10 = sld [smem:[#allocation0]]
  $region101: #{tpu_custom_call.1} parent=0
    _
  %s12 = ssub.s32 1, %s10
  %s13 = scalar_select 0, %s12, %s10
  $region1: #{tpu_custom_call.1} parent=0
    #allocation7 [shape = 'u8[512]{0}', space=smem, size = 0x200, scoped, tag = 'input window, operand 0, single buffered']
    #allocation8 [shape = 's32[2]{0}', space=sflag, size = 0x8, scoped, tag = 'scoped memory for tpu_custom_call.1']
    #allocation9 [shape = 's32[2]{0}', space=sflag, size = 0x8, scoped, tag = 'scoped memory for tpu_custom_call.1']
    #allocation10 [shape = 's32[2]{0}', space=sflag, size = 0x8, scoped, tag = 'scoped memory for tpu_custom_call.1']
    #allocation11 [shape = 'u8[131072]{0}', space=vmem, size = 0x20000, scoped, tag = 'input window, operand 1']
    #allocation12 [shape = 'u8[131072]{0}', space=vmem, size = 0x20000, scoped, tag = 'input window, operand 2']
    #allocation13 [shape = 's32[2]{0}', space=sflag, size = 0x8, scoped, tag = 'scoped memory for tpu_custom_call.1']
    #allocation14 [shape = 'u8[32768]{0}', space=vmem, size = 0x8000, scoped, tag = 'input window, operand 3']
    #allocation15 [shape = 'u8[32768]{0}', space=vmem, size = 0x8000, scoped, tag = 'input window, operand 4, single buffered']
    #allocation16 [shape = 's32[1]{0}', space=sflag, size = 0x4, scoped, tag = 'scoped memory for tpu_custom_call.1']
    #allocation17 [shape = 'u8[32768]{0}', space=vmem, size = 0x8000, scoped, tag = 'input window, operand 5, single buffered']
    #allocation18 [shape = 'u8[131072]{0}', space=vmem, size = 0x20000, scoped, tag = 'output window, operand 0']
    %14 = vsyncpa [#allocation10], 0
    %15 = vsyncpa [#allocation8], 0
    %s16 = scalar_lea.sflag [#allocation8], 1
    %17 = vsyncpa %s16, 0
    %18 = vsyncpa [#allocation13], 0
    %s19 = scalar_lea.sflag [#allocation13], 1
    %20 = vsyncpa %s19, 0
    %21 = vsyncpa [#allocation16], 0
    %22 = vsyncpa [#allocation9], 0
    %s23 = scalar_lea.sflag [#allocation9], 1
    %24 = vsyncpa %s23, 0
    loop: start=0, step=1, limit=6
    $region2: #{tpu_custom_call.1} parent=1 // loop_pre_header
      _
    $region3: #{tpu_custom_call.1} parent=1 // loop_header
      %s26 = sphi 0, %s30
      %p27 = scmp.ge.s32.totalorder %s26, 6
      %s33 = sphi 0, %s45
      %s34 = sphi 0, %s41
      %s35 = sphi 0, %s33
      %s36 = sphi 0, %s34
      %s37 = sphi 0, %s35
      %s38 = sphi 0, %s36
      %s46 = sphi 0, %s46
      %s48 = sphi 0, %s46
      %s49 = sphi 0, %s48
      %s63 = sphi 0, %s49
      %s69 = sphi 0, %s71
      %s72 = sphi 0, %s69
      %s73 = sphi 0, %s72
      %s89 = sphi 0, %s73
      %s95 = sphi 0, %s97
      %s98 = sphi 0, %s95
      %s99 = sphi 0, %s98
      %s115 = sphi 0, %s99
      %s123 = sphi 0, %s125
      %s126 = sphi 0, %s123
      %s127 = sphi 0, %s126
      %s143 = sphi 0, %s127
      %s147 = sphi 0, %s147
      %s149 = sphi 0, %s147
      %s150 = sphi 0, %s149
      %s164 = sphi 0, %s150
      %s168 = sphi 0, %s168
      %s170 = sphi 0, %s168
      %s171 = sphi 0, %s170
      %s185 = sphi 0, %s171
      %s189 = sphi 0, %s189
      %s191 = sphi 0, %s189
      %s192 = sphi 0, %s191
      %s206 = sphi 0, %s192
      %s210 = sphi 0, %s210
      %s212 = sphi 0, %s210
      %s213 = sphi 0, %s212
      %s227 = sphi 0, %s213
      %s231 = sphi 0, %s231
      %s233 = sphi 0, %s231
      %s234 = sphi 0, %s233
      %s248 = sphi 0, %s234
      %s254 = sphi 0, %s256
      %s257 = sphi 0, %s254
      %s258 = sphi 0, %s257
      %s274 = sphi 0, %s258
    $region4: #{tpu_custom_call.1} parent=1 // loop_header_branch
      %29 = sbr.rel (%p27) target = $region8
    $region5: #{tpu_custom_call.1} parent=1 // loop_body
      %s31 = ssub.s32 %s26, 1
      %s32 = ssub.s32 %s26, 2
      %s39 = sadd.s32 1, %s34
      %p40 = scmp.ge.s32.totalorder %s39, 2
      %s41 = scalar_select %p40, 0, %s39
      %s42 = sadd.s32 1, %s33
      %s43 = scalar_select %p40, %s42, %s33
      %p44 = scmp.ge.s32.totalorder %s43, 2
      %s45 = scalar_select %p44, 0, %s43
      %s47 = sadd.s32 %s46, 1
      %p50 = scmp.eq.s32.totalorder %s26, 3
      %p51 = scmp.ne.s32.totalorder %s46, %s48
      %p52 = scmp.eq.s32.totalorder %s26, 0
      %p53 = por %p51, %p52
      %p54 = scmp.ne.s32.totalorder %s46, %s48
      %p55 = scmp.eq.s32.totalorder %s31, 3
      %p56 = por %p54, %p55
      %p57 = scmp.ne.s32.totalorder %s48, %s49
      %p58 = scmp.eq.s32.totalorder %s31, 0
      %p59 = por %p57, %p58
      %p60 = scmp.ne.s32.totalorder %s48, %s49
      %p61 = scmp.eq.s32.totalorder %s32, 3
      %p62 = por %p60, %p61
      %p64 = scmp.ne.s32.totalorder %s49, %s63
      %p65 = scmp.eq.s32.totalorder %s32, 0
      %p66 = por %p64, %p65
      %s67 = ssub.s32 %s33, %s45
      %p68 = scmp.eq.s32.totalorder %s67, 0
      %s70 = sadd.s32 %s69, 1
      %s71 = scalar_select %p68, %s69, %s70
      %p74 = pneg %p68
      %p75 = scmp.eq.s32.totalorder %s26, 3
      %p76 = por %p74, %p75
      %p77 = scmp.ne.s32.totalorder %s69, %s72
      %p78 = scmp.eq.s32.totalorder %s26, 0
      %p79 = por %p77, %p78
      %p80 = scmp.ne.s32.totalorder %s69, %s72
      %p81 = scmp.eq.s32.totalorder %s31, 3
      %p82 = por %p80, %p81
      %p83 = scmp.ne.s32.totalorder %s72, %s73
      %p84 = scmp.eq.s32.totalorder %s31, 0
      %p85 = por %p83, %p84
      %p86 = scmp.ne.s32.totalorder %s72, %s73
      %p87 = scmp.eq.s32.totalorder %s32, 3
      %p88 = por %p86, %p87
      %p90 = scmp.ne.s32.totalorder %s73, %s89
      %p91 = scmp.eq.s32.totalorder %s32, 0
      %p92 = por %p90, %p91
      %s93 = ssub.s32 %s34, %s41
      %p94 = scmp.eq.s32.totalorder %s93, 0
      %s96 = sadd.s32 %s95, 1
      %s97 = scalar_select %p94, %s95, %s96
      %p100 = pneg %p94
      %p101 = scmp.eq.s32.totalorder %s26, 3
      %p102 = por %p100, %p101
      %p103 = scmp.ne.s32.totalorder %s95, %s98
      %p104 = scmp.eq.s32.totalorder %s26, 0
      %p105 = por %p103, %p104
      %p106 = scmp.ne.s32.totalorder %s95, %s98
      %p107 = scmp.eq.s32.totalorder %s31, 3
      %p108 = por %p106, %p107
      %p109 = scmp.ne.s32.totalorder %s98, %s99
      %p110 = scmp.eq.s32.totalorder %s31, 0
      %p111 = por %p109, %p110
      %p112 = scmp.ne.s32.totalorder %s98, %s99
      %p113 = scmp.eq.s32.totalorder %s32, 3
      %p114 = por %p112, %p113
      %p116 = scmp.ne.s32.totalorder %s99, %s115
      %p117 = scmp.eq.s32.totalorder %s32, 0
      %p118 = por %p116, %p117
      %s119 = ssub.s32 %s33, %s45
      %s120 = ssub.s32 %s34, %s41
      %s121 = sor.u32 %s119, %s120
      %p122 = scmp.eq.s32.totalorder %s121, 0
      %s124 = sadd.s32 %s123, 1
      %s125 = scalar_select %p122, %s123, %s124
      %p128 = pneg %p122
      %p129 = scmp.eq.s32.totalorder %s26, 3
      %p130 = por %p128, %p129
      %p131 = scmp.ne.s32.totalorder %s123, %s126
      %p132 = scmp.eq.s32.totalorder %s26, 0
      %p133 = por %p131, %p132
      %p134 = scmp.ne.s32.totalorder %s123, %s126
      %p135 = scmp.eq.s32.totalorder %s31, 3
      %p136 = por %p134, %p135
      %p137 = scmp.ne.s32.totalorder %s126, %s127
      %p138 = scmp.eq.s32.totalorder %s31, 0
      %p139 = por %p137, %p138
      %p140 = scmp.ne.s32.totalorder %s126, %s127
      %p141 = scmp.eq.s32.totalorder %s32, 3
      %p142 = por %p140, %p141
      %p144 = scmp.ne.s32.totalorder %s127, %s143
      %p145 = scmp.eq.s32.totalorder %s32, 0
      %p146 = por %p144, %p145
      %s148 = sadd.s32 %s147, 1
      %p151 = scmp.eq.s32.totalorder %s26, 3
      %p152 = scmp.ne.s32.totalorder %s147, %s149
      %p153 = scmp.eq.s32.totalorder %s26, 0
      %p154 = por %p152, %p153
      %p155 = scmp.ne.s32.totalorder %s147, %s149
      %p156 = scmp.eq.s32.totalorder %s31, 3
      %p157 = por %p155, %p156
      %p158 = scmp.ne.s32.totalorder %s149, %s150
      %p159 = scmp.eq.s32.totalorder %s31, 0
      %p160 = por %p158, %p159
      %p161 = scmp.ne.s32.totalorder %s149, %s150
      %p162 = scmp.eq.s32.totalorder %s32, 3
      %p163 = por %p161, %p162
      %p165 = scmp.ne.s32.totalorder %s150, %s164
      %p166 = scmp.eq.s32.totalorder %s32, 0
      %p167 = por %p165, %p166
      %s169 = sadd.s32 %s168, 1
      %p172 = scmp.eq.s32.totalorder %s26, 3
      %p173 = scmp.ne.s32.totalorder %s168, %s170
      %p174 = scmp.eq.s32.totalorder %s26, 0
      %p175 = por %p173, %p174
      %p176 = scmp.ne.s32.totalorder %s168, %s170
      %p177 = scmp.eq.s32.totalorder %s31, 3
      %p178 = por %p176, %p177
      %p179 = scmp.ne.s32.totalorder %s170, %s171
      %p180 = scmp.eq.s32.totalorder %s31, 0
      %p181 = por %p179, %p180
      %p182 = scmp.ne.s32.totalorder %s170, %s171
      %p183 = scmp.eq.s32.totalorder %s32, 3
      %p184 = por %p182, %p183
      %p186 = scmp.ne.s32.totalorder %s171, %s185
      %p187 = scmp.eq.s32.totalorder %s32, 0
      %p188 = por %p186, %p187
      %s190 = sadd.s32 %s189, 1
      %p193 = scmp.eq.s32.totalorder %s26, 3
      %p194 = scmp.ne.s32.totalorder %s189, %s191
      %p195 = scmp.eq.s32.totalorder %s26, 0
      %p196 = por %p194, %p195
      %p197 = scmp.ne.s32.totalorder %s189, %s191
      %p198 = scmp.eq.s32.totalorder %s31, 3
      %p199 = por %p197, %p198
      %p200 = scmp.ne.s32.totalorder %s191, %s192
      %p201 = scmp.eq.s32.totalorder %s31, 0
      %p202 = por %p200, %p201
      %p203 = scmp.ne.s32.totalorder %s191, %s192
      %p204 = scmp.eq.s32.totalorder %s32, 3
      %p205 = por %p203, %p204
      %p207 = scmp.ne.s32.totalorder %s192, %s206
      %p208 = scmp.eq.s32.totalorder %s32, 0
      %p209 = por %p207, %p208
      %s211 = sadd.s32 %s210, 1
      %p214 = scmp.eq.s32.totalorder %s26, 3
      %p215 = scmp.ne.s32.totalorder %s210, %s212
      %p216 = scmp.eq.s32.totalorder %s26, 0
      %p217 = por %p215, %p216
      %p218 = scmp.ne.s32.totalorder %s210, %s212
      %p219 = scmp.eq.s32.totalorder %s31, 3
      %p220 = por %p218, %p219
      %p221 = scmp.ne.s32.totalorder %s212, %s213
      %p222 = scmp.eq.s32.totalorder %s31, 0
      %p223 = por %p221, %p222
      %p224 = scmp.ne.s32.totalorder %s212, %s213
      %p225 = scmp.eq.s32.totalorder %s32, 3
      %p226 = por %p224, %p225
      %p228 = scmp.ne.s32.totalorder %s213, %s227
      %p229 = scmp.eq.s32.totalorder %s32, 0
      %p230 = por %p228, %p229
      %s232 = sadd.s32 %s231, 1
      %p235 = scmp.eq.s32.totalorder %s26, 3
      %p236 = scmp.ne.s32.totalorder %s231, %s233
      %p237 = scmp.eq.s32.totalorder %s26, 0
      %p238 = por %p236, %p237
      %p239 = scmp.ne.s32.totalorder %s231, %s233
      %p240 = scmp.eq.s32.totalorder %s31, 3
      %p241 = por %p239, %p240
      %p242 = scmp.ne.s32.totalorder %s233, %s234
      %p243 = scmp.eq.s32.totalorder %s31, 0
      %p244 = por %p242, %p243
      %p245 = scmp.ne.s32.totalorder %s233, %s234
      %p246 = scmp.eq.s32.totalorder %s32, 3
      %p247 = por %p245, %p246
      %p249 = scmp.ne.s32.totalorder %s234, %s248
      %p250 = scmp.eq.s32.totalorder %s32, 0
      %p251 = por %p249, %p250
      %s252 = ssub.s32 %s33, %s45
      %p253 = scmp.eq.s32.totalorder %s252, 0
      %s255 = sadd.s32 %s254, 1
      %s256 = scalar_select %p253, %s254, %s255
      %p259 = pneg %p253
      %p260 = scmp.eq.s32.totalorder %s26, 3
      %p261 = por %p259, %p260
      %p262 = scmp.ne.s32.totalorder %s254, %s257
      %p263 = scmp.eq.s32.totalorder %s26, 0
      %p264 = por %p262, %p263
      %p265 = scmp.ne.s32.totalorder %s254, %s257
      %p266 = scmp.eq.s32.totalorder %s31, 3
      %p267 = por %p265, %p266
      %p268 = scmp.ne.s32.totalorder %s257, %s258
      %p269 = scmp.eq.s32.totalorder %s31, 0
      %p270 = por %p268, %p269
      %p271 = scmp.ne.s32.totalorder %s257, %s258
      %p272 = scmp.eq.s32.totalorder %s32, 3
      %p273 = por %p271, %p272
      %p275 = scmp.ne.s32.totalorder %s258, %s274
      %p276 = scmp.eq.s32.totalorder %s32, 0
      %p277 = por %p275, %p276
      %p278 = scmp.le.s32.totalorder 1, %s26
      %p279 = scmp.lt.s32.totalorder %s26, 5
      %p280 = pnand %p278, %p279
      %p281 = pneg %p280
      // Predicated region
      $region9: #{tpu_custom_call.1} parent=5 // pred_check
        _
      $region10: #{tpu_custom_call.1} parent=5 // pred_check_branch
        %283 = sbr.rel (%p280) target = $region12
      $region11: #{tpu_custom_call.1} parent=5 // pred_region
        %s284 = ssub.s32 %s26, 1
        // Predicated region
        $region13: #{tpu_custom_call.1} parent=11 // pred_check
          %p285 = pneg %p59
        $region14: #{tpu_custom_call.1} parent=11 // pred_check_branch
          %287 = sbr.rel (%p285) target = $region16
        $region15: #{tpu_custom_call.1} parent=11 // pred_region
          %s289 = ssub.s32 16, 16
          %290 = vsyncadd [#allocation10], %s289
          %293 = dma.hbm_to_smem %s0, 16, [#allocation7], [#allocation10]
        $region16: #{tpu_custom_call.1} parent=11 // pred_fallthru
          _
        // Predicated region
        $region17: #{tpu_custom_call.1} parent=11 // pred_check
          %p294 = pneg %p160
        $region18: #{tpu_custom_call.1} parent=11 // pred_check_branch
          %296 = sbr.rel (%p294) target = $region20
        $region19: #{tpu_custom_call.1} parent=11 // pred_region
          %s298 = ssub.s32 1024, 1024
          %299 = vsyncadd [#allocation16], %s298
          %s300 = sshll.u32 [#allocation15], 4
          %s301 = int_to_ptr.vmem [resolvable:$true] %s300
          %306 = dma.hbm_to_vmem [thread:$0]  %s4, 1024, %s301, [#allocation16], 64, 64, 4
        $region20: #{tpu_custom_call.1} parent=11 // pred_fallthru
          _
        // Predicated region
        $region21: #{tpu_custom_call.1} parent=11 // pred_check
          %p307 = pneg %p181
        $region22: #{tpu_custom_call.1} parent=11 // pred_check_branch
          %309 = sbr.rel (%p307) target = $region24
        $region23: #{tpu_custom_call.1} parent=11 // pred_region
          %s311 = ssub.s32 1024, 1024
          %312 = vsyncadd [#allocation16], %s311
          %s313 = sshll.u32 [#allocation17], 4
          %s314 = int_to_ptr.vmem [resolvable:$true] %s313
          %319 = dma.hbm_to_vmem [thread:$0]  %s5, 1024, %s314, [#allocation16], 64, 64, 4
        $region24: #{tpu_custom_call.1} parent=11 // pred_fallthru
          _
        // Predicated region
        $region25: #{tpu_custom_call.1} parent=11 // pred_check
          %p320 = pneg %p202
        $region26: #{tpu_custom_call.1} parent=11 // pred_check_branch
          %322 = sbr.rel (%p320) target = $region28
        $region27: #{tpu_custom_call.1} parent=11 // pred_region
          _
        $region28: #{tpu_custom_call.1} parent=11 // pred_fallthru
          _
        // Predicated region
        $region29: #{tpu_custom_call.1} parent=11 // pred_check
          %p323 = pneg %p223
        $region30: #{tpu_custom_call.1} parent=11 // pred_check_branch
          %325 = sbr.rel (%p323) target = $region32
        $region31: #{tpu_custom_call.1} parent=11 // pred_region
          _
        $region32: #{tpu_custom_call.1} parent=11 // pred_fallthru
          _
        // Predicated region
        $region33: #{tpu_custom_call.1} parent=11 // pred_check
          %p326 = pneg %p244
        $region34: #{tpu_custom_call.1} parent=11 // pred_check_branch
          %328 = sbr.rel (%p326) target = $region36
        $region35: #{tpu_custom_call.1} parent=11 // pred_region
          _
        $region36: #{tpu_custom_call.1} parent=11 // pred_fallthru
          _
      $region12: #{tpu_custom_call.1} parent=5 // pred_fallthru
        _
      %p329 = scmp.lt.s32.totalorder %s26, 4
      // Predicated region
      $region37: #{tpu_custom_call.1} parent=5 // pred_check
        %p330 = pneg %p329
      $region38: #{tpu_custom_call.1} parent=5 // pred_check_branch
        %332 = sbr.rel (%p330) target = $region40
      $region39: #{tpu_custom_call.1} parent=5 // pred_region
        // Predicated region
        $region41: #{tpu_custom_call.1} parent=39 // pred_check
          %p333 = pneg %p79
        $region42: #{tpu_custom_call.1} parent=39 // pred_check_branch
          %335 = sbr.rel (%p333) target = $region44
        $region43: #{tpu_custom_call.1} parent=39 // pred_region
          %s336 = sand.u32 %s69, 1
          %s337 = scalar_lea.sflag [#allocation8], %s336
          %s338 = sand.u32 %s69, 1
          %s339 = smul.addr %s338, 128
          %s340 = scalar_lea.vmem [#allocation11], %s339
          %s341 = smul.u32 16, %s33
          %s343 = ssub.s32 2048, 2048
          %344 = vsyncadd %s337, %s343
          %s345 = smul.addr %s341, 128
          %s346 = scalar_lea.hbm %s1, %s345
          %s347 = sshll.u32 %s340, 4
          %s348 = int_to_ptr.vmem [resolvable:$true] %s347
          %353 = dma.hbm_to_vmem [thread:$0]  %s346, 2048, %s348, %s337, 128, 128, 8
        $region44: #{tpu_custom_call.1} parent=39 // pred_fallthru
          _
        // Predicated region
        $region45: #{tpu_custom_call.1} parent=39 // pred_check
          %p354 = pneg %p105
        $region46: #{tpu_custom_call.1} parent=39 // pred_check_branch
          %356 = sbr.rel (%p354) target = $region48
        $region47: #{tpu_custom_call.1} parent=39 // pred_region
          %s357 = sand.u32 %s26, 1
          %s358 = scalar_lea.sflag [#allocation13], %s357
          %s359 = sand.u32 %s95, 1
          %s360 = smul.addr %s359, 128
          %s361 = scalar_lea.vmem [#allocation12], %s360
          %s362 = smul.u32 16, %s34
          %s364 = ssub.s32 2048, 2048
          %365 = vsyncadd %s358, %s364
          %s366 = smul.addr %s362, 128
          %s367 = scalar_lea.hbm %s2, %s366
          %s368 = sshll.u32 %s361, 4
          %s369 = int_to_ptr.vmem [resolvable:$true] %s368
          %374 = dma.hbm_to_vmem [thread:$0]  %s367, 2048, %s369, %s358, 128, 128, 8
        $region48: #{tpu_custom_call.1} parent=39 // pred_fallthru
          _
        // Predicated region
        $region49: #{tpu_custom_call.1} parent=39 // pred_check
          %p375 = pneg %p133
        $region50: #{tpu_custom_call.1} parent=39 // pred_check_branch
          %377 = sbr.rel (%p375) target = $region52
        $region51: #{tpu_custom_call.1} parent=39 // pred_region
          %s378 = sand.u32 %s26, 1
          %s379 = scalar_lea.sflag [#allocation13], %s378
          %s380 = sand.u32 %s123, 1
          %s381 = smul.addr %s380, 32
          %s382 = scalar_lea.vmem [#allocation14], %s381
          %s383 = smul.u32 4, %s33
          %s385 = ssub.s32 512, 512
          %386 = vsyncadd %s379, %s385
          %s387 = smul.addr %s383, 2
          %s388 = sadd.s32 %s34, %s387
          %s389 = smul.addr %s388, 128
          %s390 = scalar_lea.hbm %s3, %s389
          %s391 = sshll.u32 %s382, 4
          %s392 = int_to_ptr.vmem [resolvable:$true] %s391
          %397 = dma.hbm_to_vmem [thread:$0]  %s390, 512, %s392, %s379, 256, 128, 8
        $region52: #{tpu_custom_call.1} parent=39 // pred_fallthru
          _
      $region40: #{tpu_custom_call.1} parent=5 // pred_fallthru
        _
      %p398 = scmp.le.s32.totalorder 1, %s26
      %p399 = scmp.lt.s32.totalorder %s26, 5
      %p400 = pnand %p398, %p399
      %p401 = pneg %p400
      // Predicated region
      $region53: #{tpu_custom_call.1} parent=5 // pred_check
        _
      $region54: #{tpu_custom_call.1} parent=5 // pred_check_branch
        %403 = sbr.rel (%p400) target = $region56
      $region55: #{tpu_custom_call.1} parent=5 // pred_region
        %s404 = ssub.s32 %s26, 1
        // Predicated region
        $region57: #{tpu_custom_call.1} parent=55 // pred_check
          %p405 = pneg %p59
        $region58: #{tpu_custom_call.1} parent=55 // pred_check_branch
          %407 = sbr.rel (%p405) target = $region60
        $region59: #{tpu_custom_call.1} parent=55 // pred_region
          %408 = dma.done [#allocation10], 16
        $region60: #{tpu_custom_call.1} parent=55 // pred_fallthru
          _
        %s409 = sand.u32 %s72, 1
        %s410 = scalar_lea.sflag [#allocation8], %s409
        %s411 = sand.u32 %s72, 1
        %s412 = smul.addr %s411, 128
        %s413 = scalar_lea.vmem [#allocation11], %s412
        // Predicated region
        $region61: #{tpu_custom_call.1} parent=55 // pred_check
          %p414 = pneg %p85
        $region62: #{tpu_custom_call.1} parent=55 // pred_check_branch
          %416 = sbr.rel (%p414) target = $region64
        $region63: #{tpu_custom_call.1} parent=55 // pred_region
          %417 = dma.done %s410, 2048
        $region64: #{tpu_custom_call.1} parent=55 // pred_fallthru
          _
        %s418 = sand.u32 %s31, 1
        %s419 = scalar_lea.sflag [#allocation13], %s418
        %s420 = sand.u32 %s98, 1
        %s421 = smul.addr %s420, 128
        %s422 = scalar_lea.vmem [#allocation12], %s421
        // Predicated region
        $region65: #{tpu_custom_call.1} parent=55 // pred_check
          %p423 = pneg %p111
        $region66: #{tpu_custom_call.1} parent=55 // pred_check_branch
          %425 = sbr.rel (%p423) target = $region68
        $region67: #{tpu_custom_call.1} parent=55 // pred_region
          %426 = dma.done %s419, 2048
        $region68: #{tpu_custom_call.1} parent=55 // pred_fallthru
          _
        %s427 = sand.u32 %s31, 1
        %s428 = scalar_lea.sflag [#allocation13], %s427
        %s429 = sand.u32 %s126, 1
        %s430 = smul.addr %s429, 32
        %s431 = scalar_lea.vmem [#allocation14], %s430
        // Predicated region
        $region69: #{tpu_custom_call.1} parent=55 // pred_check
          %p432 = pneg %p139
        $region70: #{tpu_custom_call.1} parent=55 // pred_check_branch
          %434 = sbr.rel (%p432) target = $region72
        $region71: #{tpu_custom_call.1} parent=55 // pred_region
          %435 = dma.done %s428, 512
        $region72: #{tpu_custom_call.1} parent=55 // pred_fallthru
          _
        // Predicated region
        $region73: #{tpu_custom_call.1} parent=55 // pred_check
          %p436 = pneg %p160
        $region74: #{tpu_custom_call.1} parent=55 // pred_check_branch
          %438 = sbr.rel (%p436) target = $region76
        $region75: #{tpu_custom_call.1} parent=55 // pred_region
          %439 = dma.done [#allocation16], 1024
        $region76: #{tpu_custom_call.1} parent=55 // pred_fallthru
          _
        // Predicated region
        $region77: #{tpu_custom_call.1} parent=55 // pred_check
          %p440 = pneg %p181
        $region78: #{tpu_custom_call.1} parent=55 // pred_check_branch
          %442 = sbr.rel (%p440) target = $region80
        $region79: #{tpu_custom_call.1} parent=55 // pred_region
          %443 = dma.done [#allocation16], 1024
        $region80: #{tpu_custom_call.1} parent=55 // pred_fallthru
          _
        %444 = sfence
        %p445 = pneg %p59
        %p446 = pneg %p56
        %s447 = sand.u32 %s72, 1
        %s448 = scalar_lea.sflag [#allocation8], %s447
        %s449 = sand.u32 %s72, 1
        %s450 = smul.addr %s449, 128
        %s451 = scalar_lea.vmem [#allocation11], %s450
        %p452 = pneg %p85
        %p453 = pneg %p82
        %s454 = sand.u32 %s31, 1
        %s455 = scalar_lea.sflag [#allocation13], %s454
        %s456 = sand.u32 %s98, 1
        %s457 = smul.addr %s456, 128
        %s458 = scalar_lea.vmem [#allocation12], %s457
        %p459 = pneg %p111
        %p460 = pneg %p108
        %s461 = sand.u32 %s31, 1
        %s462 = scalar_lea.sflag [#allocation13], %s461
        %s463 = sand.u32 %s126, 1
        %s464 = smul.addr %s463, 32
        %s465 = scalar_lea.vmem [#allocation14], %s464
        %p466 = pneg %p139
        %p467 = pneg %p136
        %p468 = pneg %p160
        %p469 = pneg %p157
        %p470 = pneg %p181
        %p471 = pneg %p178
        %p472 = pneg %p202
        %p473 = pneg %p199
        %p474 = pneg %p223
        %p475 = pneg %p220
        %p476 = pneg %p244
        %p477 = pneg %p241
        %p478 = pneg %p270
        %p479 = pneg %p267
        %s480 = sand.u32 %s257, 1
        %s481 = scalar_lea.sflag [#allocation9], %s480
        %s482 = sand.u32 %s257, 1
        %s483 = smul.addr %s482, 128
        %s484 = scalar_lea.vmem [#allocation18], %s483
        %s485 = smul.u32 16, %s35
        %s486 = smul.u32 16, %s36
        %s487 = smul.u32 4, %s35
        %s488 = smul.u32 16, %s35
        %p490 = scmp.eq.s32.totalorder %s36, 0
        // Predicated region
        $region81: #{tpu_custom_call.1} parent=55 // pred_check
          %p491 = pneg %p490
        $region82: #{tpu_custom_call.1} parent=55 // pred_check_branch
          %493 = sbr.rel (%p491) target = $region84
        $region83: #{tpu_custom_call.1} parent=55 // pred_region
          %v494 = vld [vmem:[%s413] sm:$0xff]
          %v495 = vld [vmem:[%s413 + $0x8] sm:$0xff]
          %v496 = vld [vmem:[%s413 + $0x10] sm:$0xff]
          %v497 = vld [vmem:[%s413 + $0x18] sm:$0xff]
          %v498 = vld [vmem:[%s413 + $0x20] sm:$0xff]
          %v499 = vld [vmem:[%s413 + $0x28] sm:$0xff]
          %v500 = vld [vmem:[%s413 + $0x30] sm:$0xff]
          %v501 = vld [vmem:[%s413 + $0x38] sm:$0xff]
          %v502 = vld [vmem:[%s413 + $0x40] sm:$0xff]
          %v503 = vld [vmem:[%s413 + $0x48] sm:$0xff]
          %v504 = vld [vmem:[%s413 + $0x50] sm:$0xff]
          %v505 = vld [vmem:[%s413 + $0x58] sm:$0xff]
          %v506 = vld [vmem:[%s413 + $0x60] sm:$0xff]
          %v507 = vld [vmem:[%s413 + $0x68] sm:$0xff]
          %v508 = vld [vmem:[%s413 + $0x70] sm:$0xff]
          %v509 = vld [vmem:[%s413 + $0x78] sm:$0xff]
          %v510 = vpack.c.bf16 %v495, %v494
          %v511 = vpack.c.bf16 %v497, %v496
          %v512 = vpack.c.bf16 %v499, %v498
          %v513 = vpack.c.bf16 %v501, %v500
          %v514 = vpack.c.bf16 %v503, %v502
          %v515 = vpack.c.bf16 %v505, %v504
          %v516 = vpack.c.bf16 %v507, %v506
          %v517 = vpack.c.bf16 %v509, %v508
          %v518 = vld [vmem:[#allocation17] sm:$0xf]
          %v519 = vld [vmem:[#allocation17 + $0x4] sm:$0xf]
          %v520 = vld [vmem:[#allocation17 + $0x8] sm:$0xf]
          %v521 = vld [vmem:[#allocation17 + $0xc] sm:$0xf]
          %v522 = vld [vmem:[#allocation17 + $0x10] sm:$0xf]
          %v523 = vld [vmem:[#allocation17 + $0x14] sm:$0xf]
          %v524 = vld [vmem:[#allocation17 + $0x18] sm:$0xf]
          %v525 = vld [vmem:[#allocation17 + $0x1c] sm:$0xf]
          %v526 = vld [vmem:[#allocation17 + $0x20] sm:$0xf]
          %v527 = vld [vmem:[#allocation17 + $0x24] sm:$0xf]
          %v528 = vld [vmem:[#allocation17 + $0x28] sm:$0xf]
          %v529 = vld [vmem:[#allocation17 + $0x2c] sm:$0xf]
          %v530 = vld [vmem:[#allocation17 + $0x30] sm:$0xf]
          %v531 = vld [vmem:[#allocation17 + $0x34] sm:$0xf]
          %v532 = vld [vmem:[#allocation17 + $0x38] sm:$0xf]
          %v533 = vld [vmem:[#allocation17 + $0x3c] sm:$0xf]
          %v534 = vld [vmem:[%s7] sm:$0x1]
          %v536 = vlaneseq
          %v537 = vshrl.u32 %v536, 7
          %v538 = vsub.s32 0, %v537
          %v539 = vrot.slane %v534, %v538
          %v557 = vunpack.c.l.b16 %v518
          %v558 = vunpack.c.l.b16 %v519
          %v559 = vunpack.c.l.b16 %v520
          %v560 = vunpack.c.l.b16 %v521
          %v561 = vunpack.c.l.b16 %v522
          %v562 = vunpack.c.l.b16 %v523
          %v563 = vunpack.c.l.b16 %v524
          %v564 = vunpack.c.l.b16 %v525
          %v565 = vunpack.c.l.b16 %v526
          %v566 = vunpack.c.l.b16 %v527
          %v567 = vunpack.c.l.b16 %v528
          %v568 = vunpack.c.l.b16 %v529
          %v569 = vunpack.c.l.b16 %v530
          %v570 = vunpack.c.l.b16 %v531
          %v571 = vunpack.c.l.b16 %v532
          %v572 = vunpack.c.l.b16 %v533
          %v573 = vpack.c.b16 %v558, %v557
          %v574 = vpack.c.b16 %v560, %v559
          %v575 = vpack.c.b16 %v562, %v561
          %v576 = vpack.c.b16 %v564, %v563
          %v577 = vpack.c.b16 %v566, %v565
          %v578 = vpack.c.b16 %v568, %v567
          %v579 = vpack.c.b16 %v570, %v569
          %v580 = vpack.c.b16 %v572, %v571
          %589 = vmatprep.subr.bf16.mxu0 0
          %590 = vmatpush1.bf16.msra.mxu0 %v573
          %591 = vmatprep.subr.bf16.mxu0 0
          %592 = vmatpush1.bf16.msra.mxu0 %v574
          %593 = vmatprep.subr.bf16.mxu0 0
          %594 = vmatpush1.bf16.msra.mxu0 %v575
          %595 = vmatprep.subr.bf16.mxu0 0
          %596 = vmatpush1.bf16.msra.mxu0 %v576
          %597 = vmatprep.subr.bf16.mxu0 0
          %598 = vmatpush1.bf16.msra.mxu0 %v577
          %599 = vmatprep.subr.bf16.mxu0 0
          %600 = vmatpush1.bf16.msra.mxu0 %v578
          %601 = vmatprep.subr.bf16.mxu0 0
          %602 = vmatpush1.bf16.msra.mxu0 %v579
          %603 = vmatprep.subr.bf16.mxu0 0
          %604 = vmatpush1.bf16.msra.mxu0 %v580
          %605 = vmatprep.subr.bf16.mxu0 0
          %606 = vmatpush1.bf16.msra.mxu0 0
          %607 = vmatprep.subr.bf16.mxu0 0
          %608 = vmatpush1.bf16.msra.mxu0 0
          %609 = vmatprep.subr.bf16.mxu0 0
          %610 = vmatpush1.bf16.msra.mxu0 0
          %611 = vmatprep.subr.bf16.mxu0 0
          %612 = vmatpush1.bf16.msra.mxu0 0
          %613 = vmatprep.subr.bf16.mxu0 0
          %614 = vmatpush1.bf16.msra.mxu0 0
          %615 = vmatprep.subr.bf16.mxu0 0
          %616 = vmatpush1.bf16.msra.mxu0 0
          %617 = vmatprep.subr.bf16.mxu0 0
          %618 = vmatpush1.bf16.msra.mxu0 0
          %619 = vmatprep.subr.bf16.mxu0 0
          %620 = vmatpush1.bf16.msra.mxu0 0
          %621 = vmatprep.mubr.bf16.mxu0 0
          %622 = vmatmul.mubr.bf16.gmra.mrb[0].mxu0 %v510
          %v623 = vpop.f32.mrb[0].mxu0
          %v624 = vadd.f32 %v539, %v623
          %v625 = vpop.f32.mrb[0].mxu0
          %v626 = vpop.f32.mrb[0].mxu0
          %v627 = vadd.f32 %v539, %v626
          %v628 = vpop.f32.mrb[0].mxu0
          %629 = vmatprep.mubr.bf16.mxu0 0
          %630 = vmatmul.mubr.bf16.gmra.mrb[0].mxu0 %v511
          %v631 = vpop.f32.mrb[0].mxu0
          %v632 = vadd.f32 %v539, %v631
          %v633 = vpop.f32.mrb[0].mxu0
          %v634 = vpop.f32.mrb[0].mxu0
          %v635 = vadd.f32 %v539, %v634
          %v636 = vpop.f32.mrb[0].mxu0
          %637 = vmatprep.mubr.bf16.mxu0 0
          %638 = vmatmul.mubr.bf16.gmra.mrb[0].mxu0 %v512
          %v639 = vpop.f32.mrb[0].mxu0
          %v640 = vadd.f32 %v539, %v639
          %v641 = vpop.f32.mrb[0].mxu0
          %v642 = vpop.f32.mrb[0].mxu0
          %v643 = vadd.f32 %v539, %v642
          %v644 = vpop.f32.mrb[0].mxu0
          %645 = vmatprep.mubr.bf16.mxu0 0
          %646 = vmatmul.mubr.bf16.gmra.mrb[0].mxu0 %v513
          %v647 = vpop.f32.mrb[0].mxu0
          %v648 = vadd.f32 %v539, %v647
          %v649 = vpop.f32.mrb[0].mxu0
          %v650 = vpop.f32.mrb[0].mxu0
          %v651 = vadd.f32 %v539, %v650
          %v652 = vpop.f32.mrb[0].mxu0
          %653 = vmatprep.mubr.bf16.mxu0 0
          %654 = vmatmul.mubr.bf16.gmra.mrb[0].mxu0 %v514
          %v655 = vpop.f32.mrb[0].mxu0
          %v656 = vadd.f32 %v539, %v655
          %v657 = vpop.f32.mrb[0].mxu0
          %v658 = vpop.f32.mrb[0].mxu0
          %v659 = vadd.f32 %v539, %v658
          %v660 = vpop.f32.mrb[0].mxu0
          %661 = vmatprep.mubr.bf16.mxu0 0
          %662 = vmatmul.mubr.bf16.gmra.mrb[0].mxu0 %v515
          %v663 = vpop.f32.mrb[0].mxu0
          %v664 = vadd.f32 %v539, %v663
          %v665 = vpop.f32.mrb[0].mxu0
          %v666 = vpop.f32.mrb[0].mxu0
          %v667 = vadd.f32 %v539, %v666
          %v668 = vpop.f32.mrb[0].mxu0
          %669 = vmatprep.mubr.bf16.mxu0 0
          %670 = vmatmul.mubr.bf16.gmra.mrb[0].mxu0 %v516
          %v671 = vpop.f32.mrb[0].mxu0
          %v672 = vadd.f32 %v539, %v671
          %v673 = vpop.f32.mrb[0].mxu0
          %v674 = vpop.f32.mrb[0].mxu0
          %v675 = vadd.f32 %v539, %v674
          %v676 = vpop.f32.mrb[0].mxu0
          %677 = vmatprep.mubr.bf16.mxu0 0
          %678 = vmatmul.mubr.bf16.gmra.mrb[0].mxu0 %v517
          %v679 = vpop.f32.mrb[0].mxu0
          %v680 = vadd.f32 %v539, %v679
          %v681 = vpop.f32.mrb[0].mxu0
          %v682 = vpop.f32.mrb[0].mxu0
          %v683 = vadd.f32 %v539, %v682
          %v684 = vpop.f32.mrb[0].mxu0
          %685 = vdwg.mxu0
          %686 = vst [vmem:[#allocation2] sm:$0xff] %v624
          %687 = vst [vmem:[#allocation2 + $0x8] sm:$0xff] %v627
          %688 = vst [vmem:[#allocation2 + $0x10] sm:$0xff] %v632
          %689 = vst [vmem:[#allocation2 + $0x18] sm:$0xff] %v635
          %690 = vst [vmem:[#allocation2 + $0x20] sm:$0xff] %v640
          %691 = vst [vmem:[#allocation2 + $0x28] sm:$0xff] %v643
          %692 = vst [vmem:[#allocation2 + $0x30] sm:$0xff] %v648
          %693 = vst [vmem:[#allocation2 + $0x38] sm:$0xff] %v651
          %694 = vst [vmem:[#allocation2 + $0x40] sm:$0xff] %v656
          %695 = vst [vmem:[#allocation2 + $0x48] sm:$0xff] %v659
          %696 = vst [vmem:[#allocation2 + $0x50] sm:$0xff] %v664
          %697 = vst [vmem:[#allocation2 + $0x58] sm:$0xff] %v667
          %698 = vst [vmem:[#allocation2 + $0x60] sm:$0xff] %v672
          %699 = vst [vmem:[#allocation2 + $0x68] sm:$0xff] %v675
          %700 = vst [vmem:[#allocation2 + $0x70] sm:$0xff] %v680
          %701 = vst [vmem:[#allocation2 + $0x78] sm:$0xff] %v683
          %vm702 = vcmask 7168
          %703 = vst.msk [vmem:[#allocation4] sm:$0xff] %vm702, -inf
          %704 = vst.msk [vmem:[#allocation4 + $0x8] sm:$0xff] %vm702, -inf
          %705 = vst.msk [vmem:[#allocation4 + $0x10] sm:$0xff] %vm702, -inf
          %706 = vst.msk [vmem:[#allocation4 + $0x18] sm:$0xff] %vm702, -inf
          %707 = vst.msk [vmem:[#allocation4 + $0x20] sm:$0xff] %vm702, -inf
          %708 = vst.msk [vmem:[#allocation4 + $0x28] sm:$0xff] %vm702, -inf
          %709 = vst.msk [vmem:[#allocation4 + $0x30] sm:$0xff] %vm702, -inf
          %710 = vst.msk [vmem:[#allocation4 + $0x38] sm:$0xff] %vm702, -inf
          %711 = vst.msk [vmem:[#allocation4 + $0x40] sm:$0xff] %vm702, -inf
          %712 = vst.msk [vmem:[#allocation4 + $0x48] sm:$0xff] %vm702, -inf
          %713 = vst.msk [vmem:[#allocation4 + $0x50] sm:$0xff] %vm702, -inf
          %714 = vst.msk [vmem:[#allocation4 + $0x58] sm:$0xff] %vm702, -inf
          %715 = vst.msk [vmem:[#allocation4 + $0x60] sm:$0xff] %vm702, -inf
          %716 = vst.msk [vmem:[#allocation4 + $0x68] sm:$0xff] %vm702, -inf
          %717 = vst.msk [vmem:[#allocation4 + $0x70] sm:$0xff] %vm702, -inf
          %718 = vst.msk [vmem:[#allocation4 + $0x78] sm:$0xff] %vm702, -inf
          %719 = vst.msk [vmem:[#allocation5] sm:$0xff] %vm702, 0.0
          %720 = vst.msk [vmem:[#allocation5 + $0x8] sm:$0xff] %vm702, 0.0
          %721 = vst.msk [vmem:[#allocation5 + $0x10] sm:$0xff] %vm702, 0.0
          %722 = vst.msk [vmem:[#allocation5 + $0x18] sm:$0xff] %vm702, 0.0
          %723 = vst.msk [vmem:[#allocation5 + $0x20] sm:$0xff] %vm702, 0.0
          %724 = vst.msk [vmem:[#allocation5 + $0x28] sm:$0xff] %vm702, 0.0
          %725 = vst.msk [vmem:[#allocation5 + $0x30] sm:$0xff] %vm702, 0.0
          %726 = vst.msk [vmem:[#allocation5 + $0x38] sm:$0xff] %vm702, 0.0
          %727 = vst.msk [vmem:[#allocation5 + $0x40] sm:$0xff] %vm702, 0.0
          %728 = vst.msk [vmem:[#allocation5 + $0x48] sm:$0xff] %vm702, 0.0
          %729 = vst.msk [vmem:[#allocation5 + $0x50] sm:$0xff] %vm702, 0.0
          %730 = vst.msk [vmem:[#allocation5 + $0x58] sm:$0xff] %vm702, 0.0
          %731 = vst.msk [vmem:[#allocation5 + $0x60] sm:$0xff] %vm702, 0.0
          %732 = vst.msk [vmem:[#allocation5 + $0x68] sm:$0xff] %vm702, 0.0
          %733 = vst.msk [vmem:[#allocation5 + $0x70] sm:$0xff] %vm702, 0.0
          %734 = vst.msk [vmem:[#allocation5 + $0x78] sm:$0xff] %vm702, 0.0
          %735 = vst [vmem:[#allocation6] sm:$0xff] 0.0
          %736 = vst [vmem:[#allocation6 + $0x8] sm:$0xff] 0.0
          %737 = vst [vmem:[#allocation6 + $0x10] sm:$0xff] 0.0
          %738 = vst [vmem:[#allocation6 + $0x18] sm:$0xff] 0.0
          %739 = vst [vmem:[#allocation6 + $0x20] sm:$0xff] 0.0
          %740 = vst [vmem:[#allocation6 + $0x28] sm:$0xff] 0.0
          %741 = vst [vmem:[#allocation6 + $0x30] sm:$0xff] 0.0
          %742 = vst [vmem:[#allocation6 + $0x38] sm:$0xff] 0.0
          %743 = vst [vmem:[#allocation6 + $0x40] sm:$0xff] 0.0
          %744 = vst [vmem:[#allocation6 + $0x48] sm:$0xff] 0.0
          %745 = vst [vmem:[#allocation6 + $0x50] sm:$0xff] 0.0
          %746 = vst [vmem:[#allocation6 + $0x58] sm:$0xff] 0.0
          %747 = vst [vmem:[#allocation6 + $0x60] sm:$0xff] 0.0
          %748 = vst [vmem:[#allocation6 + $0x68] sm:$0xff] 0.0
          %749 = vst [vmem:[#allocation6 + $0x70] sm:$0xff] 0.0
          %750 = vst [vmem:[#allocation6 + $0x78] sm:$0xff] 0.0
        $region84: #{tpu_custom_call.1} parent=55 // pred_fallthru
          _
        %v751 = vld [vmem:[%s422] sm:$0xff]
        %v752 = vld [vmem:[%s422 + $0x8] sm:$0xff]
        %v753 = vld [vmem:[%s422 + $0x10] sm:$0xff]
        %v754 = vld [vmem:[%s422 + $0x18] sm:$0xff]
        %v755 = vld [vmem:[%s422 + $0x20] sm:$0xff]
        %v756 = vld [vmem:[%s422 + $0x28] sm:$0xff]
        %v757 = vld [vmem:[%s422 + $0x30] sm:$0xff]
        %v758 = vld [vmem:[%s422 + $0x38] sm:$0xff]
        %v759 = vld [vmem:[%s422 + $0x40] sm:$0xff]
        %v760 = vld [vmem:[%s422 + $0x48] sm:$0xff]
        %v761 = vld [vmem:[%s422 + $0x50] sm:$0xff]
        %v762 = vld [vmem:[%s422 + $0x58] sm:$0xff]
        %v763 = vld [vmem:[%s422 + $0x60] sm:$0xff]
        %v764 = vld [vmem:[%s422 + $0x68] sm:$0xff]
        %v765 = vld [vmem:[%s422 + $0x70] sm:$0xff]
        %v766 = vld [vmem:[%s422 + $0x78] sm:$0xff]
        %v767 = vpack.c.bf16 %v752, %v751
        %v768 = vpack.c.bf16 %v754, %v753
        %v769 = vpack.c.bf16 %v756, %v755
        %v770 = vpack.c.bf16 %v758, %v757
        %v771 = vpack.c.bf16 %v760, %v759
        %v772 = vpack.c.bf16 %v762, %v761
        %v773 = vpack.c.bf16 %v764, %v763
        %v774 = vpack.c.bf16 %v766, %v765
        %v775 = vld [vmem:[#allocation15] sm:$0xf]
        %v776 = vld [vmem:[#allocation15 + $0x4] sm:$0xf]
        %v777 = vld [vmem:[#allocation15 + $0x8] sm:$0xf]
        %v778 = vld [vmem:[#allocation15 + $0xc] sm:$0xf]
        %v779 = vld [vmem:[#allocation15 + $0x10] sm:$0xf]
        %v780 = vld [vmem:[#allocation15 + $0x14] sm:$0xf]
        %v781 = vld [vmem:[#allocation15 + $0x18] sm:$0xf]
        %v782 = vld [vmem:[#allocation15 + $0x1c] sm:$0xf]
        %v783 = vld [vmem:[#allocation15 + $0x20] sm:$0xf]
        %v784 = vld [vmem:[#allocation15 + $0x24] sm:$0xf]
        %v785 = vld [vmem:[#allocation15 + $0x28] sm:$0xf]
        %v786 = vld [vmem:[#allocation15 + $0x2c] sm:$0xf]
        %v787 = vld [vmem:[#allocation15 + $0x30] sm:$0xf]
        %v788 = vld [vmem:[#allocation15 + $0x34] sm:$0xf]
        %v789 = vld [vmem:[#allocation15 + $0x38] sm:$0xf]
        %v790 = vld [vmem:[#allocation15 + $0x3c] sm:$0xf]
        %v791 = vld [vmem:[%s6] sm:$0x1]
        %v793 = vlaneseq
        %v794 = vshrl.u32 %v793, 7
        %v795 = vsub.s32 0, %v794
        %v796 = vrot.slane %v791, %v795
        %v814 = vunpack.c.l.b16 %v775
        %v815 = vunpack.c.l.b16 %v776
        %v816 = vunpack.c.l.b16 %v777
        %v817 = vunpack.c.l.b16 %v778
        %v818 = vunpack.c.l.b16 %v779
        %v819 = vunpack.c.l.b16 %v780
        %v820 = vunpack.c.l.b16 %v781
        %v821 = vunpack.c.l.b16 %v782
        %v822 = vunpack.c.l.b16 %v783
        %v823 = vunpack.c.l.b16 %v784
        %v824 = vunpack.c.l.b16 %v785
        %v825 = vunpack.c.l.b16 %v786
        %v826 = vunpack.c.l.b16 %v787
        %v827 = vunpack.c.l.b16 %v788
        %v828 = vunpack.c.l.b16 %v789
        %v829 = vunpack.c.l.b16 %v790
        %v830 = vpack.c.b16 %v815, %v814
        %v831 = vpack.c.b16 %v817, %v816
        %v832 = vpack.c.b16 %v819, %v818
        %v833 = vpack.c.b16 %v821, %v820
        %v834 = vpack.c.b16 %v823, %v822
        %v835 = vpack.c.b16 %v825, %v824
        %v836 = vpack.c.b16 %v827, %v826
        %v837 = vpack.c.b16 %v829, %v828
        %846 = vmatprep.subr.bf16.mxu0 0
        %847 = vmatpush1.bf16.msra.mxu0 %v830
        %848 = vmatprep.subr.bf16.mxu0 0
        %849 = vmatpush1.bf16.msra.mxu0 %v831
        %850 = vmatprep.subr.bf16.mxu0 0
        %851 = vmatpush1.bf16.msra.mxu0 %v832
        %852 = vmatprep.subr.bf16.mxu0 0
        %853 = vmatpush1.bf16.msra.mxu0 %v833
        %854 = vmatprep.subr.bf16.mxu0 0
        %855 = vmatpush1.bf16.msra.mxu0 %v834
        %856 = vmatprep.subr.bf16.mxu0 0
        %857 = vmatpush1.bf16.msra.mxu0 %v835
        %858 = vmatprep.subr.bf16.mxu0 0
        %859 = vmatpush1.bf16.msra.mxu0 %v836
        %860 = vmatprep.subr.bf16.mxu0 0
        %861 = vmatpush1.bf16.msra.mxu0 %v837
        %862 = vmatprep.subr.bf16.mxu0 0
        %863 = vmatpush1.bf16.msra.mxu0 0
        %864 = vmatprep.subr.bf16.mxu0 0
        %865 = vmatpush1.bf16.msra.mxu0 0
        %866 = vmatprep.subr.bf16.mxu0 0
        %867 = vmatpush1.bf16.msra.mxu0 0
        %868 = vmatprep.subr.bf16.mxu0 0
        %869 = vmatpush1.bf16.msra.mxu0 0
        %870 = vmatprep.subr.bf16.mxu0 0
        %871 = vmatpush1.bf16.msra.mxu0 0
        %872 = vmatprep.subr.bf16.mxu0 0
        %873 = vmatpush1.bf16.msra.mxu0 0
        %874 = vmatprep.subr.bf16.mxu0 0
        %875 = vmatpush1.bf16.msra.mxu0 0
        %876 = vmatprep.subr.bf16.mxu0 0
        %877 = vmatpush1.bf16.msra.mxu0 0
        %878 = vmatprep.mubr.bf16.mxu0 0
        %879 = vmatmul.mubr.bf16.gmra.mrb[0].mxu0 %v767
        %v880 = vpop.f32.mrb[0].mxu0
        %v881 = vadd.f32 %v796, %v880
        %v882 = vpop.f32.mrb[0].mxu0
        %v883 = vpop.f32.mrb[0].mxu0
        %v884 = vadd.f32 %v796, %v883
        %v885 = vpop.f32.mrb[0].mxu0
        %886 = vmatprep.mubr.bf16.mxu0 0
        %887 = vmatmul.mubr.bf16.gmra.mrb[0].mxu0 %v768
        %v888 = vpop.f32.mrb[0].mxu0
        %v889 = vadd.f32 %v796, %v888
        %v890 = vpop.f32.mrb[0].mxu0
        %v891 = vpop.f32.mrb[0].mxu0
        %v892 = vadd.f32 %v796, %v891
        %v893 = vpop.f32.mrb[0].mxu0
        %894 = vmatprep.mubr.bf16.mxu0 0
        %895 = vmatmul.mubr.bf16.gmra.mrb[0].mxu0 %v769
        %v896 = vpop.f32.mrb[0].mxu0
        %v897 = vadd.f32 %v796, %v896
        %v898 = vpop.f32.mrb[0].mxu0
        %v899 = vpop.f32.mrb[0].mxu0
        %v900 = vadd.f32 %v796, %v899
        %v901 = vpop.f32.mrb[0].mxu0
        %902 = vmatprep.mubr.bf16.mxu0 0
        %903 = vmatmul.mubr.bf16.gmra.mrb[0].mxu0 %v770
        %v904 = vpop.f32.mrb[0].mxu0
        %v905 = vadd.f32 %v796, %v904
        %v906 = vpop.f32.mrb[0].mxu0
        %v907 = vpop.f32.mrb[0].mxu0
        %v908 = vadd.f32 %v796, %v907
        %v909 = vpop.f32.mrb[0].mxu0
        %910 = vmatprep.mubr.bf16.mxu0 0
        %911 = vmatmul.mubr.bf16.gmra.mrb[0].mxu0 %v771
        %v912 = vpop.f32.mrb[0].mxu0
        %v913 = vadd.f32 %v796, %v912
        %v914 = vpop.f32.mrb[0].mxu0
        %v915 = vpop.f32.mrb[0].mxu0
        %v916 = vadd.f32 %v796, %v915
        %v917 = vpop.f32.mrb[0].mxu0
        %918 = vmatprep.mubr.bf16.mxu0 0
        %919 = vmatmul.mubr.bf16.gmra.mrb[0].mxu0 %v772
        %v920 = vpop.f32.mrb[0].mxu0
        %v921 = vadd.f32 %v796, %v920
        %v922 = vpop.f32.mrb[0].mxu0
        %v923 = vpop.f32.mrb[0].mxu0
        %v924 = vadd.f32 %v796, %v923
        %v925 = vpop.f32.mrb[0].mxu0
        %926 = vmatprep.mubr.bf16.mxu0 0
        %927 = vmatmul.mubr.bf16.gmra.mrb[0].mxu0 %v773
        %v928 = vpop.f32.mrb[0].mxu0
        %v929 = vadd.f32 %v796, %v928
        %v930 = vpop.f32.mrb[0].mxu0
        %v931 = vpop.f32.mrb[0].mxu0
        %v932 = vadd.f32 %v796, %v931
        %v933 = vpop.f32.mrb[0].mxu0
        %934 = vmatprep.mubr.bf16.mxu0 0
        %935 = vmatmul.mubr.bf16.gmra.mrb[0].mxu0 %v774
        %v936 = vpop.f32.mrb[0].mxu0
        %v937 = vadd.f32 %v796, %v936
        %v938 = vpop.f32.mrb[0].mxu0
        %v939 = vpop.f32.mrb[0].mxu0
        %v940 = vadd.f32 %v796, %v939
        %v941 = vpop.f32.mrb[0].mxu0
        %942 = vdwg.mxu0
        %943 = vxpose.xlu0.b32.start [1/16] %v881, 128
        %944 = vxpose.xlu0.b32.cont [2/16] %v884, 128
        %945 = vxpose.xlu0.b32.cont [3/16] %v889, 128
        %946 = vxpose.xlu0.b32.cont [4/16] %v892, 128
        %947 = vxpose.xlu0.b32.cont [5/16] %v897, 128
        %948 = vxpose.xlu0.b32.cont [6/16] %v900, 128
        %949 = vxpose.xlu0.b32.cont [7/16] %v905, 128
        %950 = vxpose.xlu0.b32.cont [8/16] %v908, 128
        %951 = vxpose.xlu0.b32.cont [9/16] %v913, 128
        %952 = vxpose.xlu0.b32.cont [10/16] %v916, 128
        %953 = vxpose.xlu0.b32.cont [11/16] %v921, 128
        %954 = vxpose.xlu0.b32.cont [12/16] %v924, 128
        %955 = vxpose.xlu0.b32.cont [13/16] %v929, 128
        %956 = vxpose.xlu0.b32.cont [14/16] %v932, 128
        %957 = vxpose.xlu0.b32.cont [15/16] %v937, 128
        %958 = vxpose.xlu0.b32.end [16/16] %v940, 128
        %v959 = vpop.trf.xlu0
        %v960 = vpop.trf.xlu0
        %v961 = vpop.trf.xlu0
        %v962 = vpop.trf.xlu0
        %v963 = vpop.trf.xlu0
        %v964 = vpop.trf.xlu0
        %v965 = vpop.trf.xlu0
        %v966 = vpop.trf.xlu0
        %v967 = vpop.trf.xlu0
        %v968 = vpop.trf.xlu0
        %v969 = vpop.trf.xlu0
        %v970 = vpop.trf.xlu0
        %v971 = vpop.trf.xlu0
        %v972 = vpop.trf.xlu0
        %v973 = vpop.trf.xlu0
        %v974 = vpop.trf.xlu0
        %975 = vst [vmem:[#allocation3] sm:$0xff] %v959
        %976 = vst [vmem:[#allocation3 + $0x8] sm:$0xff] %v960
        %977 = vst [vmem:[#allocation3 + $0x10] sm:$0xff] %v961
        %978 = vst [vmem:[#allocation3 + $0x18] sm:$0xff] %v962
        %979 = vst [vmem:[#allocation3 + $0x20] sm:$0xff] %v963
        %980 = vst [vmem:[#allocation3 + $0x28] sm:$0xff] %v964
        %981 = vst [vmem:[#allocation3 + $0x30] sm:$0xff] %v965
        %982 = vst [vmem:[#allocation3 + $0x38] sm:$0xff] %v966
        %983 = vst [vmem:[#allocation3 + $0x40] sm:$0xff] %v967
        %984 = vst [vmem:[#allocation3 + $0x48] sm:$0xff] %v968
        %985 = vst [vmem:[#allocation3 + $0x50] sm:$0xff] %v969
        %986 = vst [vmem:[#allocation3 + $0x58] sm:$0xff] %v970
        %987 = vst [vmem:[#allocation3 + $0x60] sm:$0xff] %v971
        %988 = vst [vmem:[#allocation3 + $0x68] sm:$0xff] %v972
        %989 = vst [vmem:[#allocation3 + $0x70] sm:$0xff] %v973
        %990 = vst [vmem:[#allocation3 + $0x78] sm:$0xff] %v974
        %v991 = vld [vmem:[#allocation2] sm:$0xff]
        %v992 = vld [vmem:[#allocation2 + $0x8] sm:$0xff]
        %v993 = vld [vmem:[#allocation2 + $0x10] sm:$0xff]
        %v994 = vld [vmem:[#allocation2 + $0x18] sm:$0xff]
        %v995 = vld [vmem:[#allocation2 + $0x20] sm:$0xff]
        %v996 = vld [vmem:[#allocation2 + $0x28] sm:$0xff]
        %v997 = vld [vmem:[#allocation2 + $0x30] sm:$0xff]
        %v998 = vld [vmem:[#allocation2 + $0x38] sm:$0xff]
        %v999 = vld [vmem:[#allocation2 + $0x40] sm:$0xff]
        %v1000 = vld [vmem:[#allocation2 + $0x48] sm:$0xff]
        %v1001 = vld [vmem:[#allocation2 + $0x50] sm:$0xff]
        %v1002 = vld [vmem:[#allocation2 + $0x58] sm:$0xff]
        %v1003 = vld [vmem:[#allocation2 + $0x60] sm:$0xff]
        %v1004 = vld [vmem:[#allocation2 + $0x68] sm:$0xff]
        %v1005 = vld [vmem:[#allocation2 + $0x70] sm:$0xff]
        %v1006 = vld [vmem:[#allocation2 + $0x78] sm:$0xff]
        %v1007 = vld [vmem:[#allocation3] sm:$0x1]
        %1009 = vset.pattern.permute.xlu0 0
        %1010 = vperm.xlu0 %1009, %v991
        %v1011 = vpop.permute.xlu0 %1010
        %1014 = vset.pattern.permute.xlu0 0
        %1015 = vperm.xlu0 %1014, %v992
        %v1016 = vpop.permute.xlu0 %1015
        %1019 = vset.pattern.permute.xlu0 0
        %1020 = vperm.xlu0 %1019, %v993
        %v1021 = vpop.permute.xlu0 %1020
        %1024 = vset.pattern.permute.xlu0 0
        %1025 = vperm.xlu0 %1024, %v994
        %v1026 = vpop.permute.xlu0 %1025
        %1029 = vset.pattern.permute.xlu0 0
        %1030 = vperm.xlu0 %1029, %v995
        %v1031 = vpop.permute.xlu0 %1030
        %1034 = vset.pattern.permute.xlu0 0
        %1035 = vperm.xlu0 %1034, %v996
        %v1036 = vpop.permute.xlu0 %1035
        %1039 = vset.pattern.permute.xlu0 0
        %1040 = vperm.xlu0 %1039, %v997
        %v1041 = vpop.permute.xlu0 %1040
        %1044 = vset.pattern.permute.xlu0 0
        %1045 = vperm.xlu0 %1044, %v998
        %v1046 = vpop.permute.xlu0 %1045
        %1049 = vset.pattern.permute.xlu0 0
        %1050 = vperm.xlu0 %1049, %v999
        %v1051 = vpop.permute.xlu0 %1050
        %1054 = vset.pattern.permute.xlu0 0
        %1055 = vperm.xlu0 %1054, %v1000
        %v1056 = vpop.permute.xlu0 %1055
        %1059 = vset.pattern.permute.xlu0 0
        %1060 = vperm.xlu0 %1059, %v1001
        %v1061 = vpop.permute.xlu0 %1060
        %1064 = vset.pattern.permute.xlu0 0
        %1065 = vperm.xlu0 %1064, %v1002
        %v1066 = vpop.permute.xlu0 %1065
        %1069 = vset.pattern.permute.xlu0 0
        %1070 = vperm.xlu0 %1069, %v1003
        %v1071 = vpop.permute.xlu0 %1070
        %1074 = vset.pattern.permute.xlu0 0
        %1075 = vperm.xlu0 %1074, %v1004
        %v1076 = vpop.permute.xlu0 %1075
        %1079 = vset.pattern.permute.xlu0 0
        %1080 = vperm.xlu0 %1079, %v1005
        %v1081 = vpop.permute.xlu0 %1080
        %1084 = vset.pattern.permute.xlu0 0
        %1085 = vperm.xlu0 %1084, %v1006
        %v1086 = vpop.permute.xlu0 %1085
        %v1088 = vlaneseq
        %v1089 = vshrl.u32 %v1088, 7
        %v1090 = vsub.s32 0, %v1089
        %v1091 = vrot.slane %v1007, %v1090
        %v1092 = vadd.f32 %v1011, %v1091
        %v1093 = vadd.f32 %v1016, %v1091
        %v1094 = vadd.f32 %v1021, %v1091
        %v1095 = vadd.f32 %v1026, %v1091
        %v1096 = vadd.f32 %v1031, %v1091
        %v1097 = vadd.f32 %v1036, %v1091
        %v1098 = vadd.f32 %v1041, %v1091
        %v1099 = vadd.f32 %v1046, %v1091
        %v1100 = vadd.f32 %v1051, %v1091
        %v1101 = vadd.f32 %v1056, %v1091
        %v1102 = vadd.f32 %v1061, %v1091
        %v1103 = vadd.f32 %v1066, %v1091
        %v1104 = vadd.f32 %v1071, %v1091
        %v1105 = vadd.f32 %v1076, %v1091
        %v1106 = vadd.f32 %v1081, %v1091
        %v1107 = vadd.f32 %v1086, %v1091
        %v1108 = vmul.f32 %v1092, 0.2
        %v1109 = vmul.f32 %v1093, 0.2
        %v1110 = vmul.f32 %v1094, 0.2
        %v1111 = vmul.f32 %v1095, 0.2
        %v1112 = vmul.f32 %v1096, 0.2
        %v1113 = vmul.f32 %v1097, 0.2
        %v1114 = vmul.f32 %v1098, 0.2
        %v1115 = vmul.f32 %v1099, 0.2
        %v1116 = vmul.f32 %v1100, 0.2
        %v1117 = vmul.f32 %v1101, 0.2
        %v1118 = vmul.f32 %v1102, 0.2
        %v1119 = vmul.f32 %v1103, 0.2
        %v1120 = vmul.f32 %v1104, 0.2
        %v1121 = vmul.f32 %v1105, 0.2
        %v1122 = vmul.f32 %v1106, 0.2
        %v1123 = vmul.f32 %v1107, 0.2
        %v1124 = vmax.f32 %v1092, %v1108
        %v1125 = vmax.f32 %v1093, %v1109
        %v1126 = vmax.f32 %v1094, %v1110
        %v1127 = vmax.f32 %v1095, %v1111
        %v1128 = vmax.f32 %v1096, %v1112
        %v1129 = vmax.f32 %v1097, %v1113
        %v1130 = vmax.f32 %v1098, %v1114
        %v1131 = vmax.f32 %v1099, %v1115
        %v1132 = vmax.f32 %v1100, %v1116
        %v1133 = vmax.f32 %v1101, %v1117
        %v1134 = vmax.f32 %v1102, %v1118
        %v1135 = vmax.f32 %v1103, %v1119
        %v1136 = vmax.f32 %v1104, %v1120
        %v1137 = vmax.f32 %v1105, %v1121
        %v1138 = vmax.f32 %v1106, %v1122
        %v1139 = vmax.f32 %v1107, %v1123
        %s1140 = sld [smem:[#allocation7]]
        %v1141 = vstv %s1140
        %v1142 = vmul.f32 %v1141, %v1124
        %v1143 = vmul.f32 %v1141, %v1125
        %v1144 = vmul.f32 %v1141, %v1126
        %v1145 = vmul.f32 %v1141, %v1127
        %v1146 = vmul.f32 %v1141, %v1128
        %v1147 = vmul.f32 %v1141, %v1129
        %v1148 = vmul.f32 %v1141, %v1130
        %v1149 = vmul.f32 %v1141, %v1131
        %v1150 = vmul.f32 %v1141, %v1132
        %v1151 = vmul.f32 %v1141, %v1133
        %v1152 = vmul.f32 %v1141, %v1134
        %v1153 = vmul.f32 %v1141, %v1135
        %v1154 = vmul.f32 %v1141, %v1136
        %v1155 = vmul.f32 %v1141, %v1137
        %v1156 = vmul.f32 %v1141, %v1138
        %v1157 = vmul.f32 %v1141, %v1139
        %v1158 = vadd.f32 %v1142, 0.0
        %v1159 = vadd.f32 %v1143, 0.0
        %v1160 = vadd.f32 %v1144, 0.0
        %v1161 = vadd.f32 %v1145, 0.0
        %v1162 = vadd.f32 %v1146, 0.0
        %v1163 = vadd.f32 %v1147, 0.0
        %v1164 = vadd.f32 %v1148, 0.0
        %v1165 = vadd.f32 %v1149, 0.0
        %v1166 = vadd.f32 %v1150, 0.0
        %v1167 = vadd.f32 %v1151, 0.0
        %v1168 = vadd.f32 %v1152, 0.0
        %v1169 = vadd.f32 %v1153, 0.0
        %v1170 = vadd.f32 %v1154, 0.0
        %v1171 = vadd.f32 %v1155, 0.0
        %v1172 = vadd.f32 %v1156, 0.0
        %v1173 = vadd.f32 %v1157, 0.0
        %v1174 = vld [vmem:[#allocation3 + $0x1] sm:$0x1]
        %1175 = vset.pattern.permute.xlu0 1
        %1176 = vperm.xlu0 %1175, %v991
        %v1177 = vpop.permute.xlu0 %1176
        %1179 = vset.pattern.permute.xlu0 1
        %1180 = vperm.xlu0 %1179, %v992
        %v1181 = vpop.permute.xlu0 %1180
        %1183 = vset.pattern.permute.xlu0 1
        %1184 = vperm.xlu0 %1183, %v993
        %v1185 = vpop.permute.xlu0 %1184
        %1187 = vset.pattern.permute.xlu0 1
        %1188 = vperm.xlu0 %1187, %v994
        %v1189 = vpop.permute.xlu0 %1188
        %1191 = vset.pattern.permute.xlu0 1
        %1192 = vperm.xlu0 %1191, %v995
        %v1193 = vpop.permute.xlu0 %1192
        %1195 = vset.pattern.permute.xlu0 1
        %1196 = vperm.xlu0 %1195, %v996
        %v1197 = vpop.permute.xlu0 %1196
        %1199 = vset.pattern.permute.xlu0 1
        %1200 = vperm.xlu0 %1199, %v997
        %v1201 = vpop.permute.xlu0 %1200
        %1203 = vset.pattern.permute.xlu0 1
        %1204 = vperm.xlu0 %1203, %v998
        %v1205 = vpop.permute.xlu0 %1204
        %1207 = vset.pattern.permute.xlu0 1
        %1208 = vperm.xlu0 %1207, %v999
        %v1209 = vpop.permute.xlu0 %1208
        %1211 = vset.pattern.permute.xlu0 1
        %1212 = vperm.xlu0 %1211, %v1000
        %v1213 = vpop.permute.xlu0 %1212
        %1215 = vset.pattern.permute.xlu0 1
        %1216 = vperm.xlu0 %1215, %v1001
        %v1217 = vpop.permute.xlu0 %1216
        %1219 = vset.pattern.permute.xlu0 1
        %1220 = vperm.xlu0 %1219, %v1002
        %v1221 = vpop.permute.xlu0 %1220
        %1223 = vset.pattern.permute.xlu0 1
        %1224 = vperm.xlu0 %1223, %v1003
        %v1225 = vpop.permute.xlu0 %1224
        %1227 = vset.pattern.permute.xlu0 1
        %1228 = vperm.xlu0 %1227, %v1004
        %v1229 = vpop.permute.xlu0 %1228
        %1231 = vset.pattern.permute.xlu0 1
        %1232 = vperm.xlu0 %1231, %v1005
        %v1233 = vpop.permute.xlu0 %1232
        %1235 = vset.pattern.permute.xlu0 1
        %1236 = vperm.xlu0 %1235, %v1006
        %v1237 = vpop.permute.xlu0 %1236
        %v1239 = vlaneseq
        %v1240 = vshrl.u32 %v1239, 7
        %v1241 = vsub.s32 0, %v1240
        %v1242 = vrot.slane %v1174, %v1241
        %v1243 = vadd.f32 %v1177, %v1242
        %v1244 = vadd.f32 %v1181, %v1242
        %v1245 = vadd.f32 %v1185, %v1242
        %v1246 = vadd.f32 %v1189, %v1242
        %v1247 = vadd.f32 %v1193, %v1242
        %v1248 = vadd.f32 %v1197, %v1242
        %v1249 = vadd.f32 %v1201, %v1242
        %v1250 = vadd.f32 %v1205, %v1242
        %v1251 = vadd.f32 %v1209, %v1242
        %v1252 = vadd.f32 %v1213, %v1242
        %v1253 = vadd.f32 %v1217, %v1242
        %v1254 = vadd.f32 %v1221, %v1242
        %v1255 = vadd.f32 %v1225, %v1242
        %v1256 = vadd.f32 %v1229, %v1242
        %v1257 = vadd.f32 %v1233, %v1242
        %v1258 = vadd.f32 %v1237, %v1242
        %v1259 = vmul.f32 %v1243, 0.2
        %v1260 = vmul.f32 %v1244, 0.2
        %v1261 = vmul.f32 %v1245, 0.2
        %v1262 = vmul.f32 %v1246, 0.2
        %v1263 = vmul.f32 %v1247, 0.2
        %v1264 = vmul.f32 %v1248, 0.2
        %v1265 = vmul.f32 %v1249, 0.2
        %v1266 = vmul.f32 %v1250, 0.2
        %v1267 = vmul.f32 %v1251, 0.2
        %v1268 = vmul.f32 %v1252, 0.2
        %v1269 = vmul.f32 %v1253, 0.2
        %v1270 = vmul.f32 %v1254, 0.2
        %v1271 = vmul.f32 %v1255, 0.2
        %v1272 = vmul.f32 %v1256, 0.2
        %v1273 = vmul.f32 %v1257, 0.2
        %v1274 = vmul.f32 %v1258, 0.2
        %v1275 = vmax.f32 %v1243, %v1259
        %v1276 = vmax.f32 %v1244, %v1260
        %v1277 = vmax.f32 %v1245, %v1261
        %v1278 = vmax.f32 %v1246, %v1262
        %v1279 = vmax.f32 %v1247, %v1263
        %v1280 = vmax.f32 %v1248, %v1264
        %v1281 = vmax.f32 %v1249, %v1265
        %v1282 = vmax.f32 %v1250, %v1266
        %v1283 = vmax.f32 %v1251, %v1267
        %v1284 = vmax.f32 %v1252, %v1268
        %v1285 = vmax.f32 %v1253, %v1269
        %v1286 = vmax.f32 %v1254, %v1270
        %v1287 = vmax.f32 %v1255, %v1271
        %v1288 = vmax.f32 %v1256, %v1272
        %v1289 = vmax.f32 %v1257, %v1273
        %v1290 = vmax.f32 %v1258, %v1274
        %s1291 = sld [smem:[#allocation7 + $0x1]]
        %v1292 = vstv %s1291
        %v1293 = vmul.f32 %v1292, %v1275
        %v1294 = vmul.f32 %v1292, %v1276
        %v1295 = vmul.f32 %v1292, %v1277
        %v1296 = vmul.f32 %v1292, %v1278
        %v1297 = vmul.f32 %v1292, %v1279
        %v1298 = vmul.f32 %v1292, %v1280
        %v1299 = vmul.f32 %v1292, %v1281
        %v1300 = vmul.f32 %v1292, %v1282
        %v1301 = vmul.f32 %v1292, %v1283
        %v1302 = vmul.f32 %v1292, %v1284
        %v1303 = vmul.f32 %v1292, %v1285
        %v1304 = vmul.f32 %v1292, %v1286
        %v1305 = vmul.f32 %v1292, %v1287
        %v1306 = vmul.f32 %v1292, %v1288
        %v1307 = vmul.f32 %v1292, %v1289
        %v1308 = vmul.f32 %v1292, %v1290
        %v1309 = vadd.f32 %v1158, %v1293
        %v1310 = vadd.f32 %v1159, %v1294
        %v1311 = vadd.f32 %v1160, %v1295
        %v1312 = vadd.f32 %v1161, %v1296
        %v1313 = vadd.f32 %v1162, %v1297
        %v1314 = vadd.f32 %v1163, %v1298
        %v1315 = vadd.f32 %v1164, %v1299
        %v1316 = vadd.f32 %v1165, %v1300
        %v1317 = vadd.f32 %v1166, %v1301
        %v1318 = vadd.f32 %v1167, %v1302
        %v1319 = vadd.f32 %v1168, %v1303
        %v1320 = vadd.f32 %v1169, %v1304
        %v1321 = vadd.f32 %v1170, %v1305
        %v1322 = vadd.f32 %v1171, %v1306
        %v1323 = vadd.f32 %v1172, %v1307
        %v1324 = vadd.f32 %v1173, %v1308
        %v1325 = vld [vmem:[#allocation3 + $0x2] sm:$0x1]
        %1326 = vset.pattern.permute.xlu0 2
        %1327 = vperm.xlu0 %1326, %v991
        %v1328 = vpop.permute.xlu0 %1327
        %1330 = vset.pattern.permute.xlu0 2
        %1331 = vperm.xlu0 %1330, %v992
        %v1332 = vpop.permute.xlu0 %1331
        %1334 = vset.pattern.permute.xlu0 2
        %1335 = vperm.xlu0 %1334, %v993
        %v1336 = vpop.permute.xlu0 %1335
        %1338 = vset.pattern.permute.xlu0 2
        %1339 = vperm.xlu0 %1338, %v994
        %v1340 = vpop.permute.xlu0 %1339
        %1342 = vset.pattern.permute.xlu0 2
        %1343 = vperm.xlu0 %1342, %v995
        %v1344 = vpop.permute.xlu0 %1343
        %1346 = vset.pattern.permute.xlu0 2
        %1347 = vperm.xlu0 %1346, %v996
        %v1348 = vpop.permute.xlu0 %1347
        %1350 = vset.pattern.permute.xlu0 2
        %1351 = vperm.xlu0 %1350, %v997
        %v1352 = vpop.permute.xlu0 %1351
        %1354 = vset.pattern.permute.xlu0 2
        %1355 = vperm.xlu0 %1354, %v998
        %v1356 = vpop.permute.xlu0 %1355
        %1358 = vset.pattern.permute.xlu0 2
        %1359 = vperm.xlu0 %1358, %v999
        %v1360 = vpop.permute.xlu0 %1359
        %1362 = vset.pattern.permute.xlu0 2
        %1363 = vperm.xlu0 %1362, %v1000
        %v1364 = vpop.permute.xlu0 %1363
        %1366 = vset.pattern.permute.xlu0 2
        %1367 = vperm.xlu0 %1366, %v1001
        %v1368 = vpop.permute.xlu0 %1367
        %1370 = vset.pattern.permute.xlu0 2
        %1371 = vperm.xlu0 %1370, %v1002
        %v1372 = vpop.permute.xlu0 %1371
        %1374 = vset.pattern.permute.xlu0 2
        %1375 = vperm.xlu0 %1374, %v1003
        %v1376 = vpop.permute.xlu0 %1375
        %1378 = vset.pattern.permute.xlu0 2
        %1379 = vperm.xlu0 %1378, %v1004
        %v1380 = vpop.permute.xlu0 %1379
        %1382 = vset.pattern.permute.xlu0 2
        %1383 = vperm.xlu0 %1382, %v1005
        %v1384 = vpop.permute.xlu0 %1383
        %1386 = vset.pattern.permute.xlu0 2
        %1387 = vperm.xlu0 %1386, %v1006
        %v1388 = vpop.permute.xlu0 %1387
        %v1390 = vlaneseq
        %v1391 = vshrl.u32 %v1390, 7
        %v1392 = vsub.s32 0, %v1391
        %v1393 = vrot.slane %v1325, %v1392
        %v1394 = vadd.f32 %v1328, %v1393
        %v1395 = vadd.f32 %v1332, %v1393
        %v1396 = vadd.f32 %v1336, %v1393
        %v1397 = vadd.f32 %v1340, %v1393
        %v1398 = vadd.f32 %v1344, %v1393
        %v1399 = vadd.f32 %v1348, %v1393
        %v1400 = vadd.f32 %v1352, %v1393
        %v1401 = vadd.f32 %v1356, %v1393
        %v1402 = vadd.f32 %v1360, %v1393
        %v1403 = vadd.f32 %v1364, %v1393
        %v1404 = vadd.f32 %v1368, %v1393
        %v1405 = vadd.f32 %v1372, %v1393
        %v1406 = vadd.f32 %v1376, %v1393
        %v1407 = vadd.f32 %v1380, %v1393
        %v1408 = vadd.f32 %v1384, %v1393
        %v1409 = vadd.f32 %v1388, %v1393
        %v1410 = vmul.f32 %v1394, 0.2
        %v1411 = vmul.f32 %v1395, 0.2
        %v1412 = vmul.f32 %v1396, 0.2
        %v1413 = vmul.f32 %v1397, 0.2
        %v1414 = vmul.f32 %v1398, 0.2
        %v1415 = vmul.f32 %v1399, 0.2
        %v1416 = vmul.f32 %v1400, 0.2
        %v1417 = vmul.f32 %v1401, 0.2
        %v1418 = vmul.f32 %v1402, 0.2
        %v1419 = vmul.f32 %v1403, 0.2
        %v1420 = vmul.f32 %v1404, 0.2
        %v1421 = vmul.f32 %v1405, 0.2
        %v1422 = vmul.f32 %v1406, 0.2
        %v1423 = vmul.f32 %v1407, 0.2
        %v1424 = vmul.f32 %v1408, 0.2
        %v1425 = vmul.f32 %v1409, 0.2
        %v1426 = vmax.f32 %v1394, %v1410
        %v1427 = vmax.f32 %v1395, %v1411
        %v1428 = vmax.f32 %v1396, %v1412
        %v1429 = vmax.f32 %v1397, %v1413
        %v1430 = vmax.f32 %v1398, %v1414
        %v1431 = vmax.f32 %v1399, %v1415
        %v1432 = vmax.f32 %v1400, %v1416
        %v1433 = vmax.f32 %v1401, %v1417
        %v1434 = vmax.f32 %v1402, %v1418
        %v1435 = vmax.f32 %v1403, %v1419
        %v1436 = vmax.f32 %v1404, %v1420
        %v1437 = vmax.f32 %v1405, %v1421
        %v1438 = vmax.f32 %v1406, %v1422
        %v1439 = vmax.f32 %v1407, %v1423
        %v1440 = vmax.f32 %v1408, %v1424
        %v1441 = vmax.f32 %v1409, %v1425
        %s1442 = sld [smem:[#allocation7 + $0x2]]
        %v1443 = vstv %s1442
        %v1444 = vmul.f32 %v1443, %v1426
        %v1445 = vmul.f32 %v1443, %v1427
        %v1446 = vmul.f32 %v1443, %v1428
        %v1447 = vmul.f32 %v1443, %v1429
        %v1448 = vmul.f32 %v1443, %v1430
        %v1449 = vmul.f32 %v1443, %v1431
        %v1450 = vmul.f32 %v1443, %v1432
        %v1451 = vmul.f32 %v1443, %v1433
        %v1452 = vmul.f32 %v1443, %v1434
        %v1453 = vmul.f32 %v1443, %v1435
        %v1454 = vmul.f32 %v1443, %v1436
        %v1455 = vmul.f32 %v1443, %v1437
        %v1456 = vmul.f32 %v1443, %v1438
        %v1457 = vmul.f32 %v1443, %v1439
        %v1458 = vmul.f32 %v1443, %v1440
        %v1459 = vmul.f32 %v1443, %v1441
        %v1460 = vadd.f32 %v1309, %v1444
        %v1461 = vadd.f32 %v1310, %v1445
        %v1462 = vadd.f32 %v1311, %v1446
        %v1463 = vadd.f32 %v1312, %v1447
        %v1464 = vadd.f32 %v1313, %v1448
        %v1465 = vadd.f32 %v1314, %v1449
        %v1466 = vadd.f32 %v1315, %v1450
        %v1467 = vadd.f32 %v1316, %v1451
        %v1468 = vadd.f32 %v1317, %v1452
        %v1469 = vadd.f32 %v1318, %v1453
        %v1470 = vadd.f32 %v1319, %v1454
        %v1471 = vadd.f32 %v1320, %v1455
        %v1472 = vadd.f32 %v1321, %v1456
        %v1473 = vadd.f32 %v1322, %v1457
        %v1474 = vadd.f32 %v1323, %v1458
        %v1475 = vadd.f32 %v1324, %v1459
        %v1476 = vld [vmem:[#allocation3 + $0x3] sm:$0x1]
        %1477 = vset.pattern.permute.xlu0 3
        %1478 = vperm.xlu0 %1477, %v991
        %v1479 = vpop.permute.xlu0 %1478
        %1481 = vset.pattern.permute.xlu0 3
        %1482 = vperm.xlu0 %1481, %v992
        %v1483 = vpop.permute.xlu0 %1482
        %1485 = vset.pattern.permute.xlu0 3
        %1486 = vperm.xlu0 %1485, %v993
        %v1487 = vpop.permute.xlu0 %1486
        %1489 = vset.pattern.permute.xlu0 3
        %1490 = vperm.xlu0 %1489, %v994
        %v1491 = vpop.permute.xlu0 %1490
        %1493 = vset.pattern.permute.xlu0 3
        %1494 = vperm.xlu0 %1493, %v995
        %v1495 = vpop.permute.xlu0 %1494
        %1497 = vset.pattern.permute.xlu0 3
        %1498 = vperm.xlu0 %1497, %v996
        %v1499 = vpop.permute.xlu0 %1498
        %1501 = vset.pattern.permute.xlu0 3
        %1502 = vperm.xlu0 %1501, %v997
        %v1503 = vpop.permute.xlu0 %1502
        %1505 = vset.pattern.permute.xlu0 3
        %1506 = vperm.xlu0 %1505, %v998
        %v1507 = vpop.permute.xlu0 %1506
        %1509 = vset.pattern.permute.xlu0 3
        %1510 = vperm.xlu0 %1509, %v999
        %v1511 = vpop.permute.xlu0 %1510
        %1513 = vset.pattern.permute.xlu0 3
        %1514 = vperm.xlu0 %1513, %v1000
        %v1515 = vpop.permute.xlu0 %1514
        %1517 = vset.pattern.permute.xlu0 3
        %1518 = vperm.xlu0 %1517, %v1001
        %v1519 = vpop.permute.xlu0 %1518
        %1521 = vset.pattern.permute.xlu0 3
        %1522 = vperm.xlu0 %1521, %v1002
        %v1523 = vpop.permute.xlu0 %1522
        %1525 = vset.pattern.permute.xlu0 3
        %1526 = vperm.xlu0 %1525, %v1003
        %v1527 = vpop.permute.xlu0 %1526
        %1529 = vset.pattern.permute.xlu0 3
        %1530 = vperm.xlu0 %1529, %v1004
        %v1531 = vpop.permute.xlu0 %1530
        %1533 = vset.pattern.permute.xlu0 3
        %1534 = vperm.xlu0 %1533, %v1005
        %v1535 = vpop.permute.xlu0 %1534
        %1537 = vset.pattern.permute.xlu0 3
        %1538 = vperm.xlu0 %1537, %v1006
        %v1539 = vpop.permute.xlu0 %1538
        %v1541 = vlaneseq
        %v1542 = vshrl.u32 %v1541, 7
        %v1543 = vsub.s32 0, %v1542
        %v1544 = vrot.slane %v1476, %v1543
        %v1545 = vadd.f32 %v1479, %v1544
        %v1546 = vadd.f32 %v1483, %v1544
        %v1547 = vadd.f32 %v1487, %v1544
        %v1548 = vadd.f32 %v1491, %v1544
        %v1549 = vadd.f32 %v1495, %v1544
        %v1550 = vadd.f32 %v1499, %v1544
        %v1551 = vadd.f32 %v1503, %v1544
        %v1552 = vadd.f32 %v1507, %v1544
        %v1553 = vadd.f32 %v1511, %v1544
        %v1554 = vadd.f32 %v1515, %v1544
        %v1555 = vadd.f32 %v1519, %v1544
        %v1556 = vadd.f32 %v1523, %v1544
        %v1557 = vadd.f32 %v1527, %v1544
        %v1558 = vadd.f32 %v1531, %v1544
        %v1559 = vadd.f32 %v1535, %v1544
        %v1560 = vadd.f32 %v1539, %v1544
        %v1561 = vmul.f32 %v1545, 0.2
        %v1562 = vmul.f32 %v1546, 0.2
        %v1563 = vmul.f32 %v1547, 0.2
        %v1564 = vmul.f32 %v1548, 0.2
        %v1565 = vmul.f32 %v1549, 0.2
        %v1566 = vmul.f32 %v1550, 0.2
        %v1567 = vmul.f32 %v1551, 0.2
        %v1568 = vmul.f32 %v1552, 0.2
        %v1569 = vmul.f32 %v1553, 0.2
        %v1570 = vmul.f32 %v1554, 0.2
        %v1571 = vmul.f32 %v1555, 0.2
        %v1572 = vmul.f32 %v1556, 0.2
        %v1573 = vmul.f32 %v1557, 0.2
        %v1574 = vmul.f32 %v1558, 0.2
        %v1575 = vmul.f32 %v1559, 0.2
        %v1576 = vmul.f32 %v1560, 0.2
        %v1577 = vmax.f32 %v1545, %v1561
        %v1578 = vmax.f32 %v1546, %v1562
        %v1579 = vmax.f32 %v1547, %v1563
        %v1580 = vmax.f32 %v1548, %v1564
        %v1581 = vmax.f32 %v1549, %v1565
        %v1582 = vmax.f32 %v1550, %v1566
        %v1583 = vmax.f32 %v1551, %v1567
        %v1584 = vmax.f32 %v1552, %v1568
        %v1585 = vmax.f32 %v1553, %v1569
        %v1586 = vmax.f32 %v1554, %v1570
        %v1587 = vmax.f32 %v1555, %v1571
        %v1588 = vmax.f32 %v1556, %v1572
        %v1589 = vmax.f32 %v1557, %v1573
        %v1590 = vmax.f32 %v1558, %v1574
        %v1591 = vmax.f32 %v1559, %v1575
        %v1592 = vmax.f32 %v1560, %v1576
        %s1593 = sld [smem:[#allocation7 + $0x3]]
        %v1594 = vstv %s1593
        %v1595 = vmul.f32 %v1594, %v1577
        %v1596 = vmul.f32 %v1594, %v1578
        %v1597 = vmul.f32 %v1594, %v1579
        %v1598 = vmul.f32 %v1594, %v1580
        %v1599 = vmul.f32 %v1594, %v1581
        %v1600 = vmul.f32 %v1594, %v1582
        %v1601 = vmul.f32 %v1594, %v1583
        %v1602 = vmul.f32 %v1594, %v1584
        %v1603 = vmul.f32 %v1594, %v1585
        %v1604 = vmul.f32 %v1594, %v1586
        %v1605 = vmul.f32 %v1594, %v1587
        %v1606 = vmul.f32 %v1594, %v1588
        %v1607 = vmul.f32 %v1594, %v1589
        %v1608 = vmul.f32 %v1594, %v1590
        %v1609 = vmul.f32 %v1594, %v1591
        %v1610 = vmul.f32 %v1594, %v1592
        %v1611 = vadd.f32 %v1460, %v1595
        %v1612 = vadd.f32 %v1461, %v1596
        %v1613 = vadd.f32 %v1462, %v1597
        %v1614 = vadd.f32 %v1463, %v1598
        %v1615 = vadd.f32 %v1464, %v1599
        %v1616 = vadd.f32 %v1465, %v1600
        %v1617 = vadd.f32 %v1466, %v1601
        %v1618 = vadd.f32 %v1467, %v1602
        %v1619 = vadd.f32 %v1468, %v1603
        %v1620 = vadd.f32 %v1469, %v1604
        %v1621 = vadd.f32 %v1470, %v1605
        %v1622 = vadd.f32 %v1471, %v1606
        %v1623 = vadd.f32 %v1472, %v1607
        %v1624 = vadd.f32 %v1473, %v1608
        %v1625 = vadd.f32 %v1474, %v1609
        %v1626 = vadd.f32 %v1475, %v1610
        %v1627 = vld [vmem:[#allocation3 + $0x4] sm:$0x1]
        %1628 = vset.pattern.permute.xlu0 4
        %1629 = vperm.xlu0 %1628, %v991
        %v1630 = vpop.permute.xlu0 %1629
        %1632 = vset.pattern.permute.xlu0 4
        %1633 = vperm.xlu0 %1632, %v992
        %v1634 = vpop.permute.xlu0 %1633
        %1636 = vset.pattern.permute.xlu0 4
        %1637 = vperm.xlu0 %1636, %v993
        %v1638 = vpop.permute.xlu0 %1637
        %1640 = vset.pattern.permute.xlu0 4
        %1641 = vperm.xlu0 %1640, %v994
        %v1642 = vpop.permute.xlu0 %1641
        %1644 = vset.pattern.permute.xlu0 4
        %1645 = vperm.xlu0 %1644, %v995
        %v1646 = vpop.permute.xlu0 %1645
        %1648 = vset.pattern.permute.xlu0 4
        %1649 = vperm.xlu0 %1648, %v996
        %v1650 = vpop.permute.xlu0 %1649
        %1652 = vset.pattern.permute.xlu0 4
        %1653 = vperm.xlu0 %1652, %v997
        %v1654 = vpop.permute.xlu0 %1653
        %1656 = vset.pattern.permute.xlu0 4
        %1657 = vperm.xlu0 %1656, %v998
        %v1658 = vpop.permute.xlu0 %1657
        %1660 = vset.pattern.permute.xlu0 4
        %1661 = vperm.xlu0 %1660, %v999
        %v1662 = vpop.permute.xlu0 %1661
        %1664 = vset.pattern.permute.xlu0 4
        %1665 = vperm.xlu0 %1664, %v1000
        %v1666 = vpop.permute.xlu0 %1665
        %1668 = vset.pattern.permute.xlu0 4
        %1669 = vperm.xlu0 %1668, %v1001
        %v1670 = vpop.permute.xlu0 %1669
        %1672 = vset.pattern.permute.xlu0 4
        %1673 = vperm.xlu0 %1672, %v1002
        %v1674 = vpop.permute.xlu0 %1673
        %1676 = vset.pattern.permute.xlu0 4
        %1677 = vperm.xlu0 %1676, %v1003
        %v1678 = vpop.permute.xlu0 %1677
        %1680 = vset.pattern.permute.xlu0 4
        %1681 = vperm.xlu0 %1680, %v1004
        %v1682 = vpop.permute.xlu0 %1681
        %1684 = vset.pattern.permute.xlu0 4
        %1685 = vperm.xlu0 %1684, %v1005
        %v1686 = vpop.permute.xlu0 %1685
        %1688 = vset.pattern.permute.xlu0 4
        %1689 = vperm.xlu0 %1688, %v1006
        %v1690 = vpop.permute.xlu0 %1689
        %v1692 = vlaneseq
        %v1693 = vshrl.u32 %v1692, 7
        %v1694 = vsub.s32 0, %v1693
        %v1695 = vrot.slane %v1627, %v1694
        %v1696 = vadd.f32 %v1630, %v1695
        %v1697 = vadd.f32 %v1634, %v1695
        %v1698 = vadd.f32 %v1638, %v1695
        %v1699 = vadd.f32 %v1642, %v1695
        %v1700 = vadd.f32 %v1646, %v1695
        %v1701 = vadd.f32 %v1650, %v1695
        %v1702 = vadd.f32 %v1654, %v1695
        %v1703 = vadd.f32 %v1658, %v1695
        %v1704 = vadd.f32 %v1662, %v1695
        %v1705 = vadd.f32 %v1666, %v1695
        %v1706 = vadd.f32 %v1670, %v1695
        %v1707 = vadd.f32 %v1674, %v1695
        %v1708 = vadd.f32 %v1678, %v1695
        %v1709 = vadd.f32 %v1682, %v1695
        %v1710 = vadd.f32 %v1686, %v1695
        %v1711 = vadd.f32 %v1690, %v1695
        %v1712 = vmul.f32 %v1696, 0.2
        %v1713 = vmul.f32 %v1697, 0.2
        %v1714 = vmul.f32 %v1698, 0.2
        %v1715 = vmul.f32 %v1699, 0.2
        %v1716 = vmul.f32 %v1700, 0.2
        %v1717 = vmul.f32 %v1701, 0.2
        %v1718 = vmul.f32 %v1702, 0.2
        %v1719 = vmul.f32 %v1703, 0.2
        %v1720 = vmul.f32 %v1704, 0.2
        %v1721 = vmul.f32 %v1705, 0.2
        %v1722 = vmul.f32 %v1706, 0.2
        %v1723 = vmul.f32 %v1707, 0.2
        %v1724 = vmul.f32 %v1708, 0.2
        %v1725 = vmul.f32 %v1709, 0.2
        %v1726 = vmul.f32 %v1710, 0.2
        %v1727 = vmul.f32 %v1711, 0.2
        %v1728 = vmax.f32 %v1696, %v1712
        %v1729 = vmax.f32 %v1697, %v1713
        %v1730 = vmax.f32 %v1698, %v1714
        %v1731 = vmax.f32 %v1699, %v1715
        %v1732 = vmax.f32 %v1700, %v1716
        %v1733 = vmax.f32 %v1701, %v1717
        %v1734 = vmax.f32 %v1702, %v1718
        %v1735 = vmax.f32 %v1703, %v1719
        %v1736 = vmax.f32 %v1704, %v1720
        %v1737 = vmax.f32 %v1705, %v1721
        %v1738 = vmax.f32 %v1706, %v1722
        %v1739 = vmax.f32 %v1707, %v1723
        %v1740 = vmax.f32 %v1708, %v1724
        %v1741 = vmax.f32 %v1709, %v1725
        %v1742 = vmax.f32 %v1710, %v1726
        %v1743 = vmax.f32 %v1711, %v1727
        %s1744 = sld [smem:[#allocation7 + $0x4]]
        %v1745 = vstv %s1744
        %v1746 = vmul.f32 %v1745, %v1728
        %v1747 = vmul.f32 %v1745, %v1729
        %v1748 = vmul.f32 %v1745, %v1730
        %v1749 = vmul.f32 %v1745, %v1731
        %v1750 = vmul.f32 %v1745, %v1732
        %v1751 = vmul.f32 %v1745, %v1733
        %v1752 = vmul.f32 %v1745, %v1734
        %v1753 = vmul.f32 %v1745, %v1735
        %v1754 = vmul.f32 %v1745, %v1736
        %v1755 = vmul.f32 %v1745, %v1737
        %v1756 = vmul.f32 %v1745, %v1738
        %v1757 = vmul.f32 %v1745, %v1739
        %v1758 = vmul.f32 %v1745, %v1740
        %v1759 = vmul.f32 %v1745, %v1741
        %v1760 = vmul.f32 %v1745, %v1742
        %v1761 = vmul.f32 %v1745, %v1743
        %v1762 = vadd.f32 %v1611, %v1746
        %v1763 = vadd.f32 %v1612, %v1747
        %v1764 = vadd.f32 %v1613, %v1748
        %v1765 = vadd.f32 %v1614, %v1749
        %v1766 = vadd.f32 %v1615, %v1750
        %v1767 = vadd.f32 %v1616, %v1751
        %v1768 = vadd.f32 %v1617, %v1752
        %v1769 = vadd.f32 %v1618, %v1753
        %v1770 = vadd.f32 %v1619, %v1754
        %v1771 = vadd.f32 %v1620, %v1755
        %v1772 = vadd.f32 %v1621, %v1756
        %v1773 = vadd.f32 %v1622, %v1757
        %v1774 = vadd.f32 %v1623, %v1758
        %v1775 = vadd.f32 %v1624, %v1759
        %v1776 = vadd.f32 %v1625, %v1760
        %v1777 = vadd.f32 %v1626, %v1761
        %v1778 = vld [vmem:[#allocation3 + $0x5] sm:$0x1]
        %1779 = vset.pattern.permute.xlu0 5
        %1780 = vperm.xlu0 %1779, %v991
        %v1781 = vpop.permute.xlu0 %1780
        %1783 = vset.pattern.permute.xlu0 5
        %1784 = vperm.xlu0 %1783, %v992
        %v1785 = vpop.permute.xlu0 %1784
        %1787 = vset.pattern.permute.xlu0 5
        %1788 = vperm.xlu0 %1787, %v993
        %v1789 = vpop.permute.xlu0 %1788
        %1791 = vset.pattern.permute.xlu0 5
        %1792 = vperm.xlu0 %1791, %v994
        %v1793 = vpop.permute.xlu0 %1792
        %1795 = vset.pattern.permute.xlu0 5
        %1796 = vperm.xlu0 %1795, %v995
        %v1797 = vpop.permute.xlu0 %1796
        %1799 = vset.pattern.permute.xlu0 5
        %1800 = vperm.xlu0 %1799, %v996
        %v1801 = vpop.permute.xlu0 %1800
        %1803 = vset.pattern.permute.xlu0 5
        %1804 = vperm.xlu0 %1803, %v997
        %v1805 = vpop.permute.xlu0 %1804
        %1807 = vset.pattern.permute.xlu0 5
        %1808 = vperm.xlu0 %1807, %v998
        %v1809 = vpop.permute.xlu0 %1808
        %1811 = vset.pattern.permute.xlu0 5
        %1812 = vperm.xlu0 %1811, %v999
        %v1813 = vpop.permute.xlu0 %1812
        %1815 = vset.pattern.permute.xlu0 5
        %1816 = vperm.xlu0 %1815, %v1000
        %v1817 = vpop.permute.xlu0 %1816
        %1819 = vset.pattern.permute.xlu0 5
        %1820 = vperm.xlu0 %1819, %v1001
        %v1821 = vpop.permute.xlu0 %1820
        %1823 = vset.pattern.permute.xlu0 5
        %1824 = vperm.xlu0 %1823, %v1002
        %v1825 = vpop.permute.xlu0 %1824
        %1827 = vset.pattern.permute.xlu0 5
        %1828 = vperm.xlu0 %1827, %v1003
        %v1829 = vpop.permute.xlu0 %1828
        %1831 = vset.pattern.permute.xlu0 5
        %1832 = vperm.xlu0 %1831, %v1004
        %v1833 = vpop.permute.xlu0 %1832
        %1835 = vset.pattern.permute.xlu0 5
        %1836 = vperm.xlu0 %1835, %v1005
        %v1837 = vpop.permute.xlu0 %1836
        %1839 = vset.pattern.permute.xlu0 5
        %1840 = vperm.xlu0 %1839, %v1006
        %v1841 = vpop.permute.xlu0 %1840
        %v1843 = vlaneseq
        %v1844 = vshrl.u32 %v1843, 7
        %v1845 = vsub.s32 0, %v1844
        %v1846 = vrot.slane %v1778, %v1845
        %v1847 = vadd.f32 %v1781, %v1846
        %v1848 = vadd.f32 %v1785, %v1846
        %v1849 = vadd.f32 %v1789, %v1846
        %v1850 = vadd.f32 %v1793, %v1846
        %v1851 = vadd.f32 %v1797, %v1846
        %v1852 = vadd.f32 %v1801, %v1846
        %v1853 = vadd.f32 %v1805, %v1846
        %v1854 = vadd.f32 %v1809, %v1846
        %v1855 = vadd.f32 %v1813, %v1846
        %v1856 = vadd.f32 %v1817, %v1846
        %v1857 = vadd.f32 %v1821, %v1846
        %v1858 = vadd.f32 %v1825, %v1846
        %v1859 = vadd.f32 %v1829, %v1846
        %v1860 = vadd.f32 %v1833, %v1846
        %v1861 = vadd.f32 %v1837, %v1846
        %v1862 = vadd.f32 %v1841, %v1846
        %v1863 = vmul.f32 %v1847, 0.2
        %v1864 = vmul.f32 %v1848, 0.2
        %v1865 = vmul.f32 %v1849, 0.2
        %v1866 = vmul.f32 %v1850, 0.2
        %v1867 = vmul.f32 %v1851, 0.2
        %v1868 = vmul.f32 %v1852, 0.2
        %v1869 = vmul.f32 %v1853, 0.2
        %v1870 = vmul.f32 %v1854, 0.2
        %v1871 = vmul.f32 %v1855, 0.2
        %v1872 = vmul.f32 %v1856, 0.2
        %v1873 = vmul.f32 %v1857, 0.2
        %v1874 = vmul.f32 %v1858, 0.2
        %v1875 = vmul.f32 %v1859, 0.2
        %v1876 = vmul.f32 %v1860, 0.2
        %v1877 = vmul.f32 %v1861, 0.2
        %v1878 = vmul.f32 %v1862, 0.2
        %v1879 = vmax.f32 %v1847, %v1863
        %v1880 = vmax.f32 %v1848, %v1864
        %v1881 = vmax.f32 %v1849, %v1865
        %v1882 = vmax.f32 %v1850, %v1866
        %v1883 = vmax.f32 %v1851, %v1867
        %v1884 = vmax.f32 %v1852, %v1868
        %v1885 = vmax.f32 %v1853, %v1869
        %v1886 = vmax.f32 %v1854, %v1870
        %v1887 = vmax.f32 %v1855, %v1871
        %v1888 = vmax.f32 %v1856, %v1872
        %v1889 = vmax.f32 %v1857, %v1873
        %v1890 = vmax.f32 %v1858, %v1874
        %v1891 = vmax.f32 %v1859, %v1875
        %v1892 = vmax.f32 %v1860, %v1876
        %v1893 = vmax.f32 %v1861, %v1877
        %v1894 = vmax.f32 %v1862, %v1878
        %s1895 = sld [smem:[#allocation7 + $0x5]]
        %v1896 = vstv %s1895
        %v1897 = vmul.f32 %v1896, %v1879
        %v1898 = vmul.f32 %v1896, %v1880
        %v1899 = vmul.f32 %v1896, %v1881
        %v1900 = vmul.f32 %v1896, %v1882
        %v1901 = vmul.f32 %v1896, %v1883
        %v1902 = vmul.f32 %v1896, %v1884
        %v1903 = vmul.f32 %v1896, %v1885
        %v1904 = vmul.f32 %v1896, %v1886
        %v1905 = vmul.f32 %v1896, %v1887
        %v1906 = vmul.f32 %v1896, %v1888
        %v1907 = vmul.f32 %v1896, %v1889
        %v1908 = vmul.f32 %v1896, %v1890
        %v1909 = vmul.f32 %v1896, %v1891
        %v1910 = vmul.f32 %v1896, %v1892
        %v1911 = vmul.f32 %v1896, %v1893
        %v1912 = vmul.f32 %v1896, %v1894
        %v1913 = vadd.f32 %v1762, %v1897
        %v1914 = vadd.f32 %v1763, %v1898
        %v1915 = vadd.f32 %v1764, %v1899
        %v1916 = vadd.f32 %v1765, %v1900
        %v1917 = vadd.f32 %v1766, %v1901
        %v1918 = vadd.f32 %v1767, %v1902
        %v1919 = vadd.f32 %v1768, %v1903
        %v1920 = vadd.f32 %v1769, %v1904
        %v1921 = vadd.f32 %v1770, %v1905
        %v1922 = vadd.f32 %v1771, %v1906
        %v1923 = vadd.f32 %v1772, %v1907
        %v1924 = vadd.f32 %v1773, %v1908
        %v1925 = vadd.f32 %v1774, %v1909
        %v1926 = vadd.f32 %v1775, %v1910
        %v1927 = vadd.f32 %v1776, %v1911
        %v1928 = vadd.f32 %v1777, %v1912
        %v1929 = vld [vmem:[#allocation3 + $0x6] sm:$0x1]
        %1930 = vset.pattern.permute.xlu0 6
        %1931 = vperm.xlu0 %1930, %v991
        %v1932 = vpop.permute.xlu0 %1931
        %1934 = vset.pattern.permute.xlu0 6
        %1935 = vperm.xlu0 %1934, %v992
        %v1936 = vpop.permute.xlu0 %1935
        %1938 = vset.pattern.permute.xlu0 6
        %1939 = vperm.xlu0 %1938, %v993
        %v1940 = vpop.permute.xlu0 %1939
        %1942 = vset.pattern.permute.xlu0 6
        %1943 = vperm.xlu0 %1942, %v994
        %v1944 = vpop.permute.xlu0 %1943
        %1946 = vset.pattern.permute.xlu0 6
        %1947 = vperm.xlu0 %1946, %v995
        %v1948 = vpop.permute.xlu0 %1947
        %1950 = vset.pattern.permute.xlu0 6
        %1951 = vperm.xlu0 %1950, %v996
        %v1952 = vpop.permute.xlu0 %1951
        %1954 = vset.pattern.permute.xlu0 6
        %1955 = vperm.xlu0 %1954, %v997
        %v1956 = vpop.permute.xlu0 %1955
        %1958 = vset.pattern.permute.xlu0 6
        %1959 = vperm.xlu0 %1958, %v998
        %v1960 = vpop.permute.xlu0 %1959
        %1962 = vset.pattern.permute.xlu0 6
        %1963 = vperm.xlu0 %1962, %v999
        %v1964 = vpop.permute.xlu0 %1963
        %1966 = vset.pattern.permute.xlu0 6
        %1967 = vperm.xlu0 %1966, %v1000
        %v1968 = vpop.permute.xlu0 %1967
        %1970 = vset.pattern.permute.xlu0 6
        %1971 = vperm.xlu0 %1970, %v1001
        %v1972 = vpop.permute.xlu0 %1971
        %1974 = vset.pattern.permute.xlu0 6
        %1975 = vperm.xlu0 %1974, %v1002
        %v1976 = vpop.permute.xlu0 %1975
        %1978 = vset.pattern.permute.xlu0 6
        %1979 = vperm.xlu0 %1978, %v1003
        %v1980 = vpop.permute.xlu0 %1979
        %1982 = vset.pattern.permute.xlu0 6
        %1983 = vperm.xlu0 %1982, %v1004
        %v1984 = vpop.permute.xlu0 %1983
        %1986 = vset.pattern.permute.xlu0 6
        %1987 = vperm.xlu0 %1986, %v1005
        %v1988 = vpop.permute.xlu0 %1987
        %1990 = vset.pattern.permute.xlu0 6
        %1991 = vperm.xlu0 %1990, %v1006
        %v1992 = vpop.permute.xlu0 %1991
        %v1994 = vlaneseq
        %v1995 = vshrl.u32 %v1994, 7
        %v1996 = vsub.s32 0, %v1995
        %v1997 = vrot.slane %v1929, %v1996
        %v1998 = vadd.f32 %v1932, %v1997
        %v1999 = vadd.f32 %v1936, %v1997
        %v2000 = vadd.f32 %v1940, %v1997
        %v2001 = vadd.f32 %v1944, %v1997
        %v2002 = vadd.f32 %v1948, %v1997
        %v2003 = vadd.f32 %v1952, %v1997
        %v2004 = vadd.f32 %v1956, %v1997
        %v2005 = vadd.f32 %v1960, %v1997
        %v2006 = vadd.f32 %v1964, %v1997
        %v2007 = vadd.f32 %v1968, %v1997
        %v2008 = vadd.f32 %v1972, %v1997
        %v2009 = vadd.f32 %v1976, %v1997
        %v2010 = vadd.f32 %v1980, %v1997
        %v2011 = vadd.f32 %v1984, %v1997
        %v2012 = vadd.f32 %v1988, %v1997
        %v2013 = vadd.f32 %v1992, %v1997
        %v2014 = vmul.f32 %v1998, 0.2
        %v2015 = vmul.f32 %v1999, 0.2
        %v2016 = vmul.f32 %v2000, 0.2
        %v2017 = vmul.f32 %v2001, 0.2
        %v2018 = vmul.f32 %v2002, 0.2
        %v2019 = vmul.f32 %v2003, 0.2
        %v2020 = vmul.f32 %v2004, 0.2
        %v2021 = vmul.f32 %v2005, 0.2
        %v2022 = vmul.f32 %v2006, 0.2
        %v2023 = vmul.f32 %v2007, 0.2
        %v2024 = vmul.f32 %v2008, 0.2
        %v2025 = vmul.f32 %v2009, 0.2
        %v2026 = vmul.f32 %v2010, 0.2
        %v2027 = vmul.f32 %v2011, 0.2
        %v2028 = vmul.f32 %v2012, 0.2
        %v2029 = vmul.f32 %v2013, 0.2
        %v2030 = vmax.f32 %v1998, %v2014
        %v2031 = vmax.f32 %v1999, %v2015
        %v2032 = vmax.f32 %v2000, %v2016
        %v2033 = vmax.f32 %v2001, %v2017
        %v2034 = vmax.f32 %v2002, %v2018
        %v2035 = vmax.f32 %v2003, %v2019
        %v2036 = vmax.f32 %v2004, %v2020
        %v2037 = vmax.f32 %v2005, %v2021
        %v2038 = vmax.f32 %v2006, %v2022
        %v2039 = vmax.f32 %v2007, %v2023
        %v2040 = vmax.f32 %v2008, %v2024
        %v2041 = vmax.f32 %v2009, %v2025
        %v2042 = vmax.f32 %v2010, %v2026
        %v2043 = vmax.f32 %v2011, %v2027
        %v2044 = vmax.f32 %v2012, %v2028
        %v2045 = vmax.f32 %v2013, %v2029
        %s2046 = sld [smem:[#allocation7 + $0x6]]
        %v2047 = vstv %s2046
        %v2048 = vmul.f32 %v2047, %v2030
        %v2049 = vmul.f32 %v2047, %v2031
        %v2050 = vmul.f32 %v2047, %v2032
        %v2051 = vmul.f32 %v2047, %v2033
        %v2052 = vmul.f32 %v2047, %v2034
        %v2053 = vmul.f32 %v2047, %v2035
        %v2054 = vmul.f32 %v2047, %v2036
        %v2055 = vmul.f32 %v2047, %v2037
        %v2056 = vmul.f32 %v2047, %v2038
        %v2057 = vmul.f32 %v2047, %v2039
        %v2058 = vmul.f32 %v2047, %v2040
        %v2059 = vmul.f32 %v2047, %v2041
        %v2060 = vmul.f32 %v2047, %v2042
        %v2061 = vmul.f32 %v2047, %v2043
        %v2062 = vmul.f32 %v2047, %v2044
        %v2063 = vmul.f32 %v2047, %v2045
        %v2064 = vadd.f32 %v1913, %v2048
        %v2065 = vadd.f32 %v1914, %v2049
        %v2066 = vadd.f32 %v1915, %v2050
        %v2067 = vadd.f32 %v1916, %v2051
        %v2068 = vadd.f32 %v1917, %v2052
        %v2069 = vadd.f32 %v1918, %v2053
        %v2070 = vadd.f32 %v1919, %v2054
        %v2071 = vadd.f32 %v1920, %v2055
        %v2072 = vadd.f32 %v1921, %v2056
        %v2073 = vadd.f32 %v1922, %v2057
        %v2074 = vadd.f32 %v1923, %v2058
        %v2075 = vadd.f32 %v1924, %v2059
        %v2076 = vadd.f32 %v1925, %v2060
        %v2077 = vadd.f32 %v1926, %v2061
        %v2078 = vadd.f32 %v1927, %v2062
        %v2079 = vadd.f32 %v1928, %v2063
        %v2080 = vld [vmem:[#allocation3 + $0x7] sm:$0x1]
        %2081 = vset.pattern.permute.xlu0 7
        %2082 = vperm.xlu0 %2081, %v991
        %v2083 = vpop.permute.xlu0 %2082
        %2085 = vset.pattern.permute.xlu0 7
        %2086 = vperm.xlu0 %2085, %v992
        %v2087 = vpop.permute.xlu0 %2086
        %2089 = vset.pattern.permute.xlu0 7
        %2090 = vperm.xlu0 %2089, %v993
        %v2091 = vpop.permute.xlu0 %2090
        %2093 = vset.pattern.permute.xlu0 7
        %2094 = vperm.xlu0 %2093, %v994
        %v2095 = vpop.permute.xlu0 %2094
        %2097 = vset.pattern.permute.xlu0 7
        %2098 = vperm.xlu0 %2097, %v995
        %v2099 = vpop.permute.xlu0 %2098
        %2101 = vset.pattern.permute.xlu0 7
        %2102 = vperm.xlu0 %2101, %v996
        %v2103 = vpop.permute.xlu0 %2102
        %2105 = vset.pattern.permute.xlu0 7
        %2106 = vperm.xlu0 %2105, %v997
        %v2107 = vpop.permute.xlu0 %2106
        %2109 = vset.pattern.permute.xlu0 7
        %2110 = vperm.xlu0 %2109, %v998
        %v2111 = vpop.permute.xlu0 %2110
        %2113 = vset.pattern.permute.xlu0 7
        %2114 = vperm.xlu0 %2113, %v999
        %v2115 = vpop.permute.xlu0 %2114
        %2117 = vset.pattern.permute.xlu0 7
        %2118 = vperm.xlu0 %2117, %v1000
        %v2119 = vpop.permute.xlu0 %2118
        %2121 = vset.pattern.permute.xlu0 7
        %2122 = vperm.xlu0 %2121, %v1001
        %v2123 = vpop.permute.xlu0 %2122
        %2125 = vset.pattern.permute.xlu0 7
        %2126 = vperm.xlu0 %2125, %v1002
        %v2127 = vpop.permute.xlu0 %2126
        %2129 = vset.pattern.permute.xlu0 7
        %2130 = vperm.xlu0 %2129, %v1003
        %v2131 = vpop.permute.xlu0 %2130
        %2133 = vset.pattern.permute.xlu0 7
        %2134 = vperm.xlu0 %2133, %v1004
        %v2135 = vpop.permute.xlu0 %2134
        %2137 = vset.pattern.permute.xlu0 7
        %2138 = vperm.xlu0 %2137, %v1005
        %v2139 = vpop.permute.xlu0 %2138
        %2141 = vset.pattern.permute.xlu0 7
        %2142 = vperm.xlu0 %2141, %v1006
        %v2143 = vpop.permute.xlu0 %2142
        %v2145 = vlaneseq
        %v2146 = vshrl.u32 %v2145, 7
        %v2147 = vsub.s32 0, %v2146
        %v2148 = vrot.slane %v2080, %v2147
        %v2149 = vadd.f32 %v2083, %v2148
        %v2150 = vadd.f32 %v2087, %v2148
        %v2151 = vadd.f32 %v2091, %v2148
        %v2152 = vadd.f32 %v2095, %v2148
        %v2153 = vadd.f32 %v2099, %v2148
        %v2154 = vadd.f32 %v2103, %v2148
        %v2155 = vadd.f32 %v2107, %v2148
        %v2156 = vadd.f32 %v2111, %v2148
        %v2157 = vadd.f32 %v2115, %v2148
        %v2158 = vadd.f32 %v2119, %v2148
        %v2159 = vadd.f32 %v2123, %v2148
        %v2160 = vadd.f32 %v2127, %v2148
        %v2161 = vadd.f32 %v2131, %v2148
        %v2162 = vadd.f32 %v2135, %v2148
        %v2163 = vadd.f32 %v2139, %v2148
        %v2164 = vadd.f32 %v2143, %v2148
        %v2165 = vmul.f32 %v2149, 0.2
        %v2166 = vmul.f32 %v2150, 0.2
        %v2167 = vmul.f32 %v2151, 0.2
        %v2168 = vmul.f32 %v2152, 0.2
        %v2169 = vmul.f32 %v2153, 0.2
        %v2170 = vmul.f32 %v2154, 0.2
        %v2171 = vmul.f32 %v2155, 0.2
        %v2172 = vmul.f32 %v2156, 0.2
        %v2173 = vmul.f32 %v2157, 0.2
        %v2174 = vmul.f32 %v2158, 0.2
        %v2175 = vmul.f32 %v2159, 0.2
        %v2176 = vmul.f32 %v2160, 0.2
        %v2177 = vmul.f32 %v2161, 0.2
        %v2178 = vmul.f32 %v2162, 0.2
        %v2179 = vmul.f32 %v2163, 0.2
        %v2180 = vmul.f32 %v2164, 0.2
        %v2181 = vmax.f32 %v2149, %v2165
        %v2182 = vmax.f32 %v2150, %v2166
        %v2183 = vmax.f32 %v2151, %v2167
        %v2184 = vmax.f32 %v2152, %v2168
        %v2185 = vmax.f32 %v2153, %v2169
        %v2186 = vmax.f32 %v2154, %v2170
        %v2187 = vmax.f32 %v2155, %v2171
        %v2188 = vmax.f32 %v2156, %v2172
        %v2189 = vmax.f32 %v2157, %v2173
        %v2190 = vmax.f32 %v2158, %v2174
        %v2191 = vmax.f32 %v2159, %v2175
        %v2192 = vmax.f32 %v2160, %v2176
        %v2193 = vmax.f32 %v2161, %v2177
        %v2194 = vmax.f32 %v2162, %v2178
        %v2195 = vmax.f32 %v2163, %v2179
        %v2196 = vmax.f32 %v2164, %v2180
        %s2197 = sld [smem:[#allocation7 + $0x7]]
        %v2198 = vstv %s2197
        %v2199 = vmul.f32 %v2198, %v2181
        %v2200 = vmul.f32 %v2198, %v2182
        %v2201 = vmul.f32 %v2198, %v2183
        %v2202 = vmul.f32 %v2198, %v2184
        %v2203 = vmul.f32 %v2198, %v2185
        %v2204 = vmul.f32 %v2198, %v2186
        %v2205 = vmul.f32 %v2198, %v2187
        %v2206 = vmul.f32 %v2198, %v2188
        %v2207 = vmul.f32 %v2198, %v2189
        %v2208 = vmul.f32 %v2198, %v2190
        %v2209 = vmul.f32 %v2198, %v2191
        %v2210 = vmul.f32 %v2198, %v2192
        %v2211 = vmul.f32 %v2198, %v2193
        %v2212 = vmul.f32 %v2198, %v2194
        %v2213 = vmul.f32 %v2198, %v2195
        %v2214 = vmul.f32 %v2198, %v2196
        %v2215 = vadd.f32 %v2064, %v2199
        %v2216 = vadd.f32 %v2065, %v2200
        %v2217 = vadd.f32 %v2066, %v2201
        %v2218 = vadd.f32 %v2067, %v2202
        %v2219 = vadd.f32 %v2068, %v2203
        %v2220 = vadd.f32 %v2069, %v2204
        %v2221 = vadd.f32 %v2070, %v2205
        %v2222 = vadd.f32 %v2071, %v2206
        %v2223 = vadd.f32 %v2072, %v2207
        %v2224 = vadd.f32 %v2073, %v2208
        %v2225 = vadd.f32 %v2074, %v2209
        %v2226 = vadd.f32 %v2075, %v2210
        %v2227 = vadd.f32 %v2076, %v2211
        %v2228 = vadd.f32 %v2077, %v2212
        %v2229 = vadd.f32 %v2078, %v2213
        %v2230 = vadd.f32 %v2079, %v2214
        %v2231 = vld [vmem:[#allocation3 + $0x8] sm:$0x1]
        %2232 = vset.pattern.permute.xlu0 8
        %2233 = vperm.xlu0 %2232, %v991
        %v2234 = vpop.permute.xlu0 %2233
        %2236 = vset.pattern.permute.xlu0 8
        %2237 = vperm.xlu0 %2236, %v992
        %v2238 = vpop.permute.xlu0 %2237
        %2240 = vset.pattern.permute.xlu0 8
        %2241 = vperm.xlu0 %2240, %v993
        %v2242 = vpop.permute.xlu0 %2241
        %2244 = vset.pattern.permute.xlu0 8
        %2245 = vperm.xlu0 %2244, %v994
        %v2246 = vpop.permute.xlu0 %2245
        %2248 = vset.pattern.permute.xlu0 8
        %2249 = vperm.xlu0 %2248, %v995
        %v2250 = vpop.permute.xlu0 %2249
        %2252 = vset.pattern.permute.xlu0 8
        %2253 = vperm.xlu0 %2252, %v996
        %v2254 = vpop.permute.xlu0 %2253
        %2256 = vset.pattern.permute.xlu0 8
        %2257 = vperm.xlu0 %2256, %v997
        %v2258 = vpop.permute.xlu0 %2257
        %2260 = vset.pattern.permute.xlu0 8
        %2261 = vperm.xlu0 %2260, %v998
        %v2262 = vpop.permute.xlu0 %2261
        %2264 = vset.pattern.permute.xlu0 8
        %2265 = vperm.xlu0 %2264, %v999
        %v2266 = vpop.permute.xlu0 %2265
        %2268 = vset.pattern.permute.xlu0 8
        %2269 = vperm.xlu0 %2268, %v1000
        %v2270 = vpop.permute.xlu0 %2269
        %2272 = vset.pattern.permute.xlu0 8
        %2273 = vperm.xlu0 %2272, %v1001
        %v2274 = vpop.permute.xlu0 %2273
        %2276 = vset.pattern.permute.xlu0 8
        %2277 = vperm.xlu0 %2276, %v1002
        %v2278 = vpop.permute.xlu0 %2277
        %2280 = vset.pattern.permute.xlu0 8
        %2281 = vperm.xlu0 %2280, %v1003
        %v2282 = vpop.permute.xlu0 %2281
        %2284 = vset.pattern.permute.xlu0 8
        %2285 = vperm.xlu0 %2284, %v1004
        %v2286 = vpop.permute.xlu0 %2285
        %2288 = vset.pattern.permute.xlu0 8
        %2289 = vperm.xlu0 %2288, %v1005
        %v2290 = vpop.permute.xlu0 %2289
        %2292 = vset.pattern.permute.xlu0 8
        %2293 = vperm.xlu0 %2292, %v1006
        %v2294 = vpop.permute.xlu0 %2293
        %v2296 = vlaneseq
        %v2297 = vshrl.u32 %v2296, 7
        %v2298 = vsub.s32 0, %v2297
        %v2299 = vrot.slane %v2231, %v2298
        %v2300 = vadd.f32 %v2234, %v2299
        %v2301 = vadd.f32 %v2238, %v2299
        %v2302 = vadd.f32 %v2242, %v2299
        %v2303 = vadd.f32 %v2246, %v2299
        %v2304 = vadd.f32 %v2250, %v2299
        %v2305 = vadd.f32 %v2254, %v2299
        %v2306 = vadd.f32 %v2258, %v2299
        %v2307 = vadd.f32 %v2262, %v2299
        %v2308 = vadd.f32 %v2266, %v2299
        %v2309 = vadd.f32 %v2270, %v2299
        %v2310 = vadd.f32 %v2274, %v2299
        %v2311 = vadd.f32 %v2278, %v2299
        %v2312 = vadd.f32 %v2282, %v2299
        %v2313 = vadd.f32 %v2286, %v2299
        %v2314 = vadd.f32 %v2290, %v2299
        %v2315 = vadd.f32 %v2294, %v2299
        %v2316 = vmul.f32 %v2300, 0.2
        %v2317 = vmul.f32 %v2301, 0.2
        %v2318 = vmul.f32 %v2302, 0.2
        %v2319 = vmul.f32 %v2303, 0.2
        %v2320 = vmul.f32 %v2304, 0.2
        %v2321 = vmul.f32 %v2305, 0.2
        %v2322 = vmul.f32 %v2306, 0.2
        %v2323 = vmul.f32 %v2307, 0.2
        %v2324 = vmul.f32 %v2308, 0.2
        %v2325 = vmul.f32 %v2309, 0.2
        %v2326 = vmul.f32 %v2310, 0.2
        %v2327 = vmul.f32 %v2311, 0.2
        %v2328 = vmul.f32 %v2312, 0.2
        %v2329 = vmul.f32 %v2313, 0.2
        %v2330 = vmul.f32 %v2314, 0.2
        %v2331 = vmul.f32 %v2315, 0.2
        %v2332 = vmax.f32 %v2300, %v2316
        %v2333 = vmax.f32 %v2301, %v2317
        %v2334 = vmax.f32 %v2302, %v2318
        %v2335 = vmax.f32 %v2303, %v2319
        %v2336 = vmax.f32 %v2304, %v2320
        %v2337 = vmax.f32 %v2305, %v2321
        %v2338 = vmax.f32 %v2306, %v2322
        %v2339 = vmax.f32 %v2307, %v2323
        %v2340 = vmax.f32 %v2308, %v2324
        %v2341 = vmax.f32 %v2309, %v2325
        %v2342 = vmax.f32 %v2310, %v2326
        %v2343 = vmax.f32 %v2311, %v2327
        %v2344 = vmax.f32 %v2312, %v2328
        %v2345 = vmax.f32 %v2313, %v2329
        %v2346 = vmax.f32 %v2314, %v2330
        %v2347 = vmax.f32 %v2315, %v2331
        %s2348 = sld [smem:[#allocation7 + $0x8]]
        %v2349 = vstv %s2348
        %v2350 = vmul.f32 %v2349, %v2332
        %v2351 = vmul.f32 %v2349, %v2333
        %v2352 = vmul.f32 %v2349, %v2334
        %v2353 = vmul.f32 %v2349, %v2335
        %v2354 = vmul.f32 %v2349, %v2336
        %v2355 = vmul.f32 %v2349, %v2337
        %v2356 = vmul.f32 %v2349, %v2338
        %v2357 = vmul.f32 %v2349, %v2339
        %v2358 = vmul.f32 %v2349, %v2340
        %v2359 = vmul.f32 %v2349, %v2341
        %v2360 = vmul.f32 %v2349, %v2342
        %v2361 = vmul.f32 %v2349, %v2343
        %v2362 = vmul.f32 %v2349, %v2344
        %v2363 = vmul.f32 %v2349, %v2345
        %v2364 = vmul.f32 %v2349, %v2346
        %v2365 = vmul.f32 %v2349, %v2347
        %v2366 = vadd.f32 %v2215, %v2350
        %v2367 = vadd.f32 %v2216, %v2351
        %v2368 = vadd.f32 %v2217, %v2352
        %v2369 = vadd.f32 %v2218, %v2353
        %v2370 = vadd.f32 %v2219, %v2354
        %v2371 = vadd.f32 %v2220, %v2355
        %v2372 = vadd.f32 %v2221, %v2356
        %v2373 = vadd.f32 %v2222, %v2357
        %v2374 = vadd.f32 %v2223, %v2358
        %v2375 = vadd.f32 %v2224, %v2359
        %v2376 = vadd.f32 %v2225, %v2360
        %v2377 = vadd.f32 %v2226, %v2361
        %v2378 = vadd.f32 %v2227, %v2362
        %v2379 = vadd.f32 %v2228, %v2363
        %v2380 = vadd.f32 %v2229, %v2364
        %v2381 = vadd.f32 %v2230, %v2365
        %v2382 = vld [vmem:[#allocation3 + $0x9] sm:$0x1]
        %2383 = vset.pattern.permute.xlu0 9
        %2384 = vperm.xlu0 %2383, %v991
        %v2385 = vpop.permute.xlu0 %2384
        %2387 = vset.pattern.permute.xlu0 9
        %2388 = vperm.xlu0 %2387, %v992
        %v2389 = vpop.permute.xlu0 %2388
        %2391 = vset.pattern.permute.xlu0 9
        %2392 = vperm.xlu0 %2391, %v993
        %v2393 = vpop.permute.xlu0 %2392
        %2395 = vset.pattern.permute.xlu0 9
        %2396 = vperm.xlu0 %2395, %v994
        %v2397 = vpop.permute.xlu0 %2396
        %2399 = vset.pattern.permute.xlu0 9
        %2400 = vperm.xlu0 %2399, %v995
        %v2401 = vpop.permute.xlu0 %2400
        %2403 = vset.pattern.permute.xlu0 9
        %2404 = vperm.xlu0 %2403, %v996
        %v2405 = vpop.permute.xlu0 %2404
        %2407 = vset.pattern.permute.xlu0 9
        %2408 = vperm.xlu0 %2407, %v997
        %v2409 = vpop.permute.xlu0 %2408
        %2411 = vset.pattern.permute.xlu0 9
        %2412 = vperm.xlu0 %2411, %v998
        %v2413 = vpop.permute.xlu0 %2412
        %2415 = vset.pattern.permute.xlu0 9
        %2416 = vperm.xlu0 %2415, %v999
        %v2417 = vpop.permute.xlu0 %2416
        %2419 = vset.pattern.permute.xlu0 9
        %2420 = vperm.xlu0 %2419, %v1000
        %v2421 = vpop.permute.xlu0 %2420
        %2423 = vset.pattern.permute.xlu0 9
        %2424 = vperm.xlu0 %2423, %v1001
        %v2425 = vpop.permute.xlu0 %2424
        %2427 = vset.pattern.permute.xlu0 9
        %2428 = vperm.xlu0 %2427, %v1002
        %v2429 = vpop.permute.xlu0 %2428
        %2431 = vset.pattern.permute.xlu0 9
        %2432 = vperm.xlu0 %2431, %v1003
        %v2433 = vpop.permute.xlu0 %2432
        %2435 = vset.pattern.permute.xlu0 9
        %2436 = vperm.xlu0 %2435, %v1004
        %v2437 = vpop.permute.xlu0 %2436
        %2439 = vset.pattern.permute.xlu0 9
        %2440 = vperm.xlu0 %2439, %v1005
        %v2441 = vpop.permute.xlu0 %2440
        %2443 = vset.pattern.permute.xlu0 9
        %2444 = vperm.xlu0 %2443, %v1006
        %v2445 = vpop.permute.xlu0 %2444
        %v2447 = vlaneseq
        %v2448 = vshrl.u32 %v2447, 7
        %v2449 = vsub.s32 0, %v2448
        %v2450 = vrot.slane %v2382, %v2449
        %v2451 = vadd.f32 %v2385, %v2450
        %v2452 = vadd.f32 %v2389, %v2450
        %v2453 = vadd.f32 %v2393, %v2450
        %v2454 = vadd.f32 %v2397, %v2450
        %v2455 = vadd.f32 %v2401, %v2450
        %v2456 = vadd.f32 %v2405, %v2450
        %v2457 = vadd.f32 %v2409, %v2450
        %v2458 = vadd.f32 %v2413, %v2450
        %v2459 = vadd.f32 %v2417, %v2450
        %v2460 = vadd.f32 %v2421, %v2450
        %v2461 = vadd.f32 %v2425, %v2450
        %v2462 = vadd.f32 %v2429, %v2450
        %v2463 = vadd.f32 %v2433, %v2450
        %v2464 = vadd.f32 %v2437, %v2450
        %v2465 = vadd.f32 %v2441, %v2450
        %v2466 = vadd.f32 %v2445, %v2450
        %v2467 = vmul.f32 %v2451, 0.2
        %v2468 = vmul.f32 %v2452, 0.2
        %v2469 = vmul.f32 %v2453, 0.2
        %v2470 = vmul.f32 %v2454, 0.2
        %v2471 = vmul.f32 %v2455, 0.2
        %v2472 = vmul.f32 %v2456, 0.2
        %v2473 = vmul.f32 %v2457, 0.2
        %v2474 = vmul.f32 %v2458, 0.2
        %v2475 = vmul.f32 %v2459, 0.2
        %v2476 = vmul.f32 %v2460, 0.2
        %v2477 = vmul.f32 %v2461, 0.2
        %v2478 = vmul.f32 %v2462, 0.2
        %v2479 = vmul.f32 %v2463, 0.2
        %v2480 = vmul.f32 %v2464, 0.2
        %v2481 = vmul.f32 %v2465, 0.2
        %v2482 = vmul.f32 %v2466, 0.2
        %v2483 = vmax.f32 %v2451, %v2467
        %v2484 = vmax.f32 %v2452, %v2468
        %v2485 = vmax.f32 %v2453, %v2469
        %v2486 = vmax.f32 %v2454, %v2470
        %v2487 = vmax.f32 %v2455, %v2471
        %v2488 = vmax.f32 %v2456, %v2472
        %v2489 = vmax.f32 %v2457, %v2473
        %v2490 = vmax.f32 %v2458, %v2474
        %v2491 = vmax.f32 %v2459, %v2475
        %v2492 = vmax.f32 %v2460, %v2476
        %v2493 = vmax.f32 %v2461, %v2477
        %v2494 = vmax.f32 %v2462, %v2478
        %v2495 = vmax.f32 %v2463, %v2479
        %v2496 = vmax.f32 %v2464, %v2480
        %v2497 = vmax.f32 %v2465, %v2481
        %v2498 = vmax.f32 %v2466, %v2482
        %s2499 = sld [smem:[#allocation7 + $0x9]]
        %v2500 = vstv %s2499
        %v2501 = vmul.f32 %v2500, %v2483
        %v2502 = vmul.f32 %v2500, %v2484
        %v2503 = vmul.f32 %v2500, %v2485
        %v2504 = vmul.f32 %v2500, %v2486
        %v2505 = vmul.f32 %v2500, %v2487
        %v2506 = vmul.f32 %v2500, %v2488
        %v2507 = vmul.f32 %v2500, %v2489
        %v2508 = vmul.f32 %v2500, %v2490
        %v2509 = vmul.f32 %v2500, %v2491
        %v2510 = vmul.f32 %v2500, %v2492
        %v2511 = vmul.f32 %v2500, %v2493
        %v2512 = vmul.f32 %v2500, %v2494
        %v2513 = vmul.f32 %v2500, %v2495
        %v2514 = vmul.f32 %v2500, %v2496
        %v2515 = vmul.f32 %v2500, %v2497
        %v2516 = vmul.f32 %v2500, %v2498
        %v2517 = vadd.f32 %v2366, %v2501
        %v2518 = vadd.f32 %v2367, %v2502
        %v2519 = vadd.f32 %v2368, %v2503
        %v2520 = vadd.f32 %v2369, %v2504
        %v2521 = vadd.f32 %v2370, %v2505
        %v2522 = vadd.f32 %v2371, %v2506
        %v2523 = vadd.f32 %v2372, %v2507
        %v2524 = vadd.f32 %v2373, %v2508
        %v2525 = vadd.f32 %v2374, %v2509
        %v2526 = vadd.f32 %v2375, %v2510
        %v2527 = vadd.f32 %v2376, %v2511
        %v2528 = vadd.f32 %v2377, %v2512
        %v2529 = vadd.f32 %v2378, %v2513
        %v2530 = vadd.f32 %v2379, %v2514
        %v2531 = vadd.f32 %v2380, %v2515
        %v2532 = vadd.f32 %v2381, %v2516
        %v2533 = vld [vmem:[#allocation3 + $0xa] sm:$0x1]
        %2534 = vset.pattern.permute.xlu0 10
        %2535 = vperm.xlu0 %2534, %v991
        %v2536 = vpop.permute.xlu0 %2535
        %2538 = vset.pattern.permute.xlu0 10
        %2539 = vperm.xlu0 %2538, %v992
        %v2540 = vpop.permute.xlu0 %2539
        %2542 = vset.pattern.permute.xlu0 10
        %2543 = vperm.xlu0 %2542, %v993
        %v2544 = vpop.permute.xlu0 %2543
        %2546 = vset.pattern.permute.xlu0 10
        %2547 = vperm.xlu0 %2546, %v994
        %v2548 = vpop.permute.xlu0 %2547
        %2550 = vset.pattern.permute.xlu0 10
        %2551 = vperm.xlu0 %2550, %v995
        %v2552 = vpop.permute.xlu0 %2551
        %2554 = vset.pattern.permute.xlu0 10
        %2555 = vperm.xlu0 %2554, %v996
        %v2556 = vpop.permute.xlu0 %2555
        %2558 = vset.pattern.permute.xlu0 10
        %2559 = vperm.xlu0 %2558, %v997
        %v2560 = vpop.permute.xlu0 %2559
        %2562 = vset.pattern.permute.xlu0 10
        %2563 = vperm.xlu0 %2562, %v998
        %v2564 = vpop.permute.xlu0 %2563
        %2566 = vset.pattern.permute.xlu0 10
        %2567 = vperm.xlu0 %2566, %v999
        %v2568 = vpop.permute.xlu0 %2567
        %2570 = vset.pattern.permute.xlu0 10
        %2571 = vperm.xlu0 %2570, %v1000
        %v2572 = vpop.permute.xlu0 %2571
        %2574 = vset.pattern.permute.xlu0 10
        %2575 = vperm.xlu0 %2574, %v1001
        %v2576 = vpop.permute.xlu0 %2575
        %2578 = vset.pattern.permute.xlu0 10
        %2579 = vperm.xlu0 %2578, %v1002
        %v2580 = vpop.permute.xlu0 %2579
        %2582 = vset.pattern.permute.xlu0 10
        %2583 = vperm.xlu0 %2582, %v1003
        %v2584 = vpop.permute.xlu0 %2583
        %2586 = vset.pattern.permute.xlu0 10
        %2587 = vperm.xlu0 %2586, %v1004
        %v2588 = vpop.permute.xlu0 %2587
        %2590 = vset.pattern.permute.xlu0 10
        %2591 = vperm.xlu0 %2590, %v1005
        %v2592 = vpop.permute.xlu0 %2591
        %2594 = vset.pattern.permute.xlu0 10
        %2595 = vperm.xlu0 %2594, %v1006
        %v2596 = vpop.permute.xlu0 %2595
        %v2598 = vlaneseq
        %v2599 = vshrl.u32 %v2598, 7
        %v2600 = vsub.s32 0, %v2599
        %v2601 = vrot.slane %v2533, %v2600
        %v2602 = vadd.f32 %v2536, %v2601
        %v2603 = vadd.f32 %v2540, %v2601
        %v2604 = vadd.f32 %v2544, %v2601
        %v2605 = vadd.f32 %v2548, %v2601
        %v2606 = vadd.f32 %v2552, %v2601
        %v2607 = vadd.f32 %v2556, %v2601
        %v2608 = vadd.f32 %v2560, %v2601
        %v2609 = vadd.f32 %v2564, %v2601
        %v2610 = vadd.f32 %v2568, %v2601
        %v2611 = vadd.f32 %v2572, %v2601
        %v2612 = vadd.f32 %v2576, %v2601
        %v2613 = vadd.f32 %v2580, %v2601
        %v2614 = vadd.f32 %v2584, %v2601
        %v2615 = vadd.f32 %v2588, %v2601
        %v2616 = vadd.f32 %v2592, %v2601
        %v2617 = vadd.f32 %v2596, %v2601
        %v2618 = vmul.f32 %v2602, 0.2
        %v2619 = vmul.f32 %v2603, 0.2
        %v2620 = vmul.f32 %v2604, 0.2
        %v2621 = vmul.f32 %v2605, 0.2
        %v2622 = vmul.f32 %v2606, 0.2
        %v2623 = vmul.f32 %v2607, 0.2
        %v2624 = vmul.f32 %v2608, 0.2
        %v2625 = vmul.f32 %v2609, 0.2
        %v2626 = vmul.f32 %v2610, 0.2
        %v2627 = vmul.f32 %v2611, 0.2
        %v2628 = vmul.f32 %v2612, 0.2
        %v2629 = vmul.f32 %v2613, 0.2
        %v2630 = vmul.f32 %v2614, 0.2
        %v2631 = vmul.f32 %v2615, 0.2
        %v2632 = vmul.f32 %v2616, 0.2
        %v2633 = vmul.f32 %v2617, 0.2
        %v2634 = vmax.f32 %v2602, %v2618
        %v2635 = vmax.f32 %v2603, %v2619
        %v2636 = vmax.f32 %v2604, %v2620
        %v2637 = vmax.f32 %v2605, %v2621
        %v2638 = vmax.f32 %v2606, %v2622
        %v2639 = vmax.f32 %v2607, %v2623
        %v2640 = vmax.f32 %v2608, %v2624
        %v2641 = vmax.f32 %v2609, %v2625
        %v2642 = vmax.f32 %v2610, %v2626
        %v2643 = vmax.f32 %v2611, %v2627
        %v2644 = vmax.f32 %v2612, %v2628
        %v2645 = vmax.f32 %v2613, %v2629
        %v2646 = vmax.f32 %v2614, %v2630
        %v2647 = vmax.f32 %v2615, %v2631
        %v2648 = vmax.f32 %v2616, %v2632
        %v2649 = vmax.f32 %v2617, %v2633
        %s2650 = sld [smem:[#allocation7 + $0xa]]
        %v2651 = vstv %s2650
        %v2652 = vmul.f32 %v2651, %v2634
        %v2653 = vmul.f32 %v2651, %v2635
        %v2654 = vmul.f32 %v2651, %v2636
        %v2655 = vmul.f32 %v2651, %v2637
        %v2656 = vmul.f32 %v2651, %v2638
        %v2657 = vmul.f32 %v2651, %v2639
        %v2658 = vmul.f32 %v2651, %v2640
        %v2659 = vmul.f32 %v2651, %v2641
        %v2660 = vmul.f32 %v2651, %v2642
        %v2661 = vmul.f32 %v2651, %v2643
        %v2662 = vmul.f32 %v2651, %v2644
        %v2663 = vmul.f32 %v2651, %v2645
        %v2664 = vmul.f32 %v2651, %v2646
        %v2665 = vmul.f32 %v2651, %v2647
        %v2666 = vmul.f32 %v2651, %v2648
        %v2667 = vmul.f32 %v2651, %v2649
        %v2668 = vadd.f32 %v2517, %v2652
        %v2669 = vadd.f32 %v2518, %v2653
        %v2670 = vadd.f32 %v2519, %v2654
        %v2671 = vadd.f32 %v2520, %v2655
        %v2672 = vadd.f32 %v2521, %v2656
        %v2673 = vadd.f32 %v2522, %v2657
        %v2674 = vadd.f32 %v2523, %v2658
        %v2675 = vadd.f32 %v2524, %v2659
        %v2676 = vadd.f32 %v2525, %v2660
        %v2677 = vadd.f32 %v2526, %v2661
        %v2678 = vadd.f32 %v2527, %v2662
        %v2679 = vadd.f32 %v2528, %v2663
        %v2680 = vadd.f32 %v2529, %v2664
        %v2681 = vadd.f32 %v2530, %v2665
        %v2682 = vadd.f32 %v2531, %v2666
        %v2683 = vadd.f32 %v2532, %v2667
        %v2684 = vld [vmem:[#allocation3 + $0xb] sm:$0x1]
        %2685 = vset.pattern.permute.xlu0 11
        %2686 = vperm.xlu0 %2685, %v991
        %v2687 = vpop.permute.xlu0 %2686
        %2689 = vset.pattern.permute.xlu0 11
        %2690 = vperm.xlu0 %2689, %v992
        %v2691 = vpop.permute.xlu0 %2690
        %2693 = vset.pattern.permute.xlu0 11
        %2694 = vperm.xlu0 %2693, %v993
        %v2695 = vpop.permute.xlu0 %2694
        %2697 = vset.pattern.permute.xlu0 11
        %2698 = vperm.xlu0 %2697, %v994
        %v2699 = vpop.permute.xlu0 %2698
        %2701 = vset.pattern.permute.xlu0 11
        %2702 = vperm.xlu0 %2701, %v995
        %v2703 = vpop.permute.xlu0 %2702
        %2705 = vset.pattern.permute.xlu0 11
        %2706 = vperm.xlu0 %2705, %v996
        %v2707 = vpop.permute.xlu0 %2706
        %2709 = vset.pattern.permute.xlu0 11
        %2710 = vperm.xlu0 %2709, %v997
        %v2711 = vpop.permute.xlu0 %2710
        %2713 = vset.pattern.permute.xlu0 11
        %2714 = vperm.xlu0 %2713, %v998
        %v2715 = vpop.permute.xlu0 %2714
        %2717 = vset.pattern.permute.xlu0 11
        %2718 = vperm.xlu0 %2717, %v999
        %v2719 = vpop.permute.xlu0 %2718
        %2721 = vset.pattern.permute.xlu0 11
        %2722 = vperm.xlu0 %2721, %v1000
        %v2723 = vpop.permute.xlu0 %2722
        %2725 = vset.pattern.permute.xlu0 11
        %2726 = vperm.xlu0 %2725, %v1001
        %v2727 = vpop.permute.xlu0 %2726
        %2729 = vset.pattern.permute.xlu0 11
        %2730 = vperm.xlu0 %2729, %v1002
        %v2731 = vpop.permute.xlu0 %2730
        %2733 = vset.pattern.permute.xlu0 11
        %2734 = vperm.xlu0 %2733, %v1003
        %v2735 = vpop.permute.xlu0 %2734
        %2737 = vset.pattern.permute.xlu0 11
        %2738 = vperm.xlu0 %2737, %v1004
        %v2739 = vpop.permute.xlu0 %2738
        %2741 = vset.pattern.permute.xlu0 11
        %2742 = vperm.xlu0 %2741, %v1005
        %v2743 = vpop.permute.xlu0 %2742
        %2745 = vset.pattern.permute.xlu0 11
        %2746 = vperm.xlu0 %2745, %v1006
        %v2747 = vpop.permute.xlu0 %2746
        %v2749 = vlaneseq
        %v2750 = vshrl.u32 %v2749, 7
        %v2751 = vsub.s32 0, %v2750
        %v2752 = vrot.slane %v2684, %v2751
        %v2753 = vadd.f32 %v2687, %v2752
        %v2754 = vadd.f32 %v2691, %v2752
        %v2755 = vadd.f32 %v2695, %v2752
        %v2756 = vadd.f32 %v2699, %v2752
        %v2757 = vadd.f32 %v2703, %v2752
        %v2758 = vadd.f32 %v2707, %v2752
        %v2759 = vadd.f32 %v2711, %v2752
        %v2760 = vadd.f32 %v2715, %v2752
        %v2761 = vadd.f32 %v2719, %v2752
        %v2762 = vadd.f32 %v2723, %v2752
        %v2763 = vadd.f32 %v2727, %v2752
        %v2764 = vadd.f32 %v2731, %v2752
        %v2765 = vadd.f32 %v2735, %v2752
        %v2766 = vadd.f32 %v2739, %v2752
        %v2767 = vadd.f32 %v2743, %v2752
        %v2768 = vadd.f32 %v2747, %v2752
        %v2769 = vmul.f32 %v2753, 0.2
        %v2770 = vmul.f32 %v2754, 0.2
        %v2771 = vmul.f32 %v2755, 0.2
        %v2772 = vmul.f32 %v2756, 0.2
        %v2773 = vmul.f32 %v2757, 0.2
        %v2774 = vmul.f32 %v2758, 0.2
        %v2775 = vmul.f32 %v2759, 0.2
        %v2776 = vmul.f32 %v2760, 0.2
        %v2777 = vmul.f32 %v2761, 0.2
        %v2778 = vmul.f32 %v2762, 0.2
        %v2779 = vmul.f32 %v2763, 0.2
        %v2780 = vmul.f32 %v2764, 0.2
        %v2781 = vmul.f32 %v2765, 0.2
        %v2782 = vmul.f32 %v2766, 0.2
        %v2783 = vmul.f32 %v2767, 0.2
        %v2784 = vmul.f32 %v2768, 0.2
        %v2785 = vmax.f32 %v2753, %v2769
        %v2786 = vmax.f32 %v2754, %v2770
        %v2787 = vmax.f32 %v2755, %v2771
        %v2788 = vmax.f32 %v2756, %v2772
        %v2789 = vmax.f32 %v2757, %v2773
        %v2790 = vmax.f32 %v2758, %v2774
        %v2791 = vmax.f32 %v2759, %v2775
        %v2792 = vmax.f32 %v2760, %v2776
        %v2793 = vmax.f32 %v2761, %v2777
        %v2794 = vmax.f32 %v2762, %v2778
        %v2795 = vmax.f32 %v2763, %v2779
        %v2796 = vmax.f32 %v2764, %v2780
        %v2797 = vmax.f32 %v2765, %v2781
        %v2798 = vmax.f32 %v2766, %v2782
        %v2799 = vmax.f32 %v2767, %v2783
        %v2800 = vmax.f32 %v2768, %v2784
        %s2801 = sld [smem:[#allocation7 + $0xb]]
        %v2802 = vstv %s2801
        %v2803 = vmul.f32 %v2802, %v2785
        %v2804 = vmul.f32 %v2802, %v2786
        %v2805 = vmul.f32 %v2802, %v2787
        %v2806 = vmul.f32 %v2802, %v2788
        %v2807 = vmul.f32 %v2802, %v2789
        %v2808 = vmul.f32 %v2802, %v2790
        %v2809 = vmul.f32 %v2802, %v2791
        %v2810 = vmul.f32 %v2802, %v2792
        %v2811 = vmul.f32 %v2802, %v2793
        %v2812 = vmul.f32 %v2802, %v2794
        %v2813 = vmul.f32 %v2802, %v2795
        %v2814 = vmul.f32 %v2802, %v2796
        %v2815 = vmul.f32 %v2802, %v2797
        %v2816 = vmul.f32 %v2802, %v2798
        %v2817 = vmul.f32 %v2802, %v2799
        %v2818 = vmul.f32 %v2802, %v2800
        %v2819 = vadd.f32 %v2668, %v2803
        %v2820 = vadd.f32 %v2669, %v2804
        %v2821 = vadd.f32 %v2670, %v2805
        %v2822 = vadd.f32 %v2671, %v2806
        %v2823 = vadd.f32 %v2672, %v2807
        %v2824 = vadd.f32 %v2673, %v2808
        %v2825 = vadd.f32 %v2674, %v2809
        %v2826 = vadd.f32 %v2675, %v2810
        %v2827 = vadd.f32 %v2676, %v2811
        %v2828 = vadd.f32 %v2677, %v2812
        %v2829 = vadd.f32 %v2678, %v2813
        %v2830 = vadd.f32 %v2679, %v2814
        %v2831 = vadd.f32 %v2680, %v2815
        %v2832 = vadd.f32 %v2681, %v2816
        %v2833 = vadd.f32 %v2682, %v2817
        %v2834 = vadd.f32 %v2683, %v2818
        %v2835 = vld [vmem:[#allocation3 + $0xc] sm:$0x1]
        %2836 = vset.pattern.permute.xlu0 12
        %2837 = vperm.xlu0 %2836, %v991
        %v2838 = vpop.permute.xlu0 %2837
        %2840 = vset.pattern.permute.xlu0 12
        %2841 = vperm.xlu0 %2840, %v992
        %v2842 = vpop.permute.xlu0 %2841
        %2844 = vset.pattern.permute.xlu0 12
        %2845 = vperm.xlu0 %2844, %v993
        %v2846 = vpop.permute.xlu0 %2845
        %2848 = vset.pattern.permute.xlu0 12
        %2849 = vperm.xlu0 %2848, %v994
        %v2850 = vpop.permute.xlu0 %2849
        %2852 = vset.pattern.permute.xlu0 12
        %2853 = vperm.xlu0 %2852, %v995
        %v2854 = vpop.permute.xlu0 %2853
        %2856 = vset.pattern.permute.xlu0 12
        %2857 = vperm.xlu0 %2856, %v996
        %v2858 = vpop.permute.xlu0 %2857
        %2860 = vset.pattern.permute.xlu0 12
        %2861 = vperm.xlu0 %2860, %v997
        %v2862 = vpop.permute.xlu0 %2861
        %2864 = vset.pattern.permute.xlu0 12
        %2865 = vperm.xlu0 %2864, %v998
        %v2866 = vpop.permute.xlu0 %2865
        %2868 = vset.pattern.permute.xlu0 12
        %2869 = vperm.xlu0 %2868, %v999
        %v2870 = vpop.permute.xlu0 %2869
        %2872 = vset.pattern.permute.xlu0 12
        %2873 = vperm.xlu0 %2872, %v1000
        %v2874 = vpop.permute.xlu0 %2873
        %2876 = vset.pattern.permute.xlu0 12
        %2877 = vperm.xlu0 %2876, %v1001
        %v2878 = vpop.permute.xlu0 %2877
        %2880 = vset.pattern.permute.xlu0 12
        %2881 = vperm.xlu0 %2880, %v1002
        %v2882 = vpop.permute.xlu0 %2881
        %2884 = vset.pattern.permute.xlu0 12
        %2885 = vperm.xlu0 %2884, %v1003
        %v2886 = vpop.permute.xlu0 %2885
        %2888 = vset.pattern.permute.xlu0 12
        %2889 = vperm.xlu0 %2888, %v1004
        %v2890 = vpop.permute.xlu0 %2889
        %2892 = vset.pattern.permute.xlu0 12
        %2893 = vperm.xlu0 %2892, %v1005
        %v2894 = vpop.permute.xlu0 %2893
        %2896 = vset.pattern.permute.xlu0 12
        %2897 = vperm.xlu0 %2896, %v1006
        %v2898 = vpop.permute.xlu0 %2897
        %v2900 = vlaneseq
        %v2901 = vshrl.u32 %v2900, 7
        %v2902 = vsub.s32 0, %v2901
        %v2903 = vrot.slane %v2835, %v2902
        %v2904 = vadd.f32 %v2838, %v2903
        %v2905 = vadd.f32 %v2842, %v2903
        %v2906 = vadd.f32 %v2846, %v2903
        %v2907 = vadd.f32 %v2850, %v2903
        %v2908 = vadd.f32 %v2854, %v2903
        %v2909 = vadd.f32 %v2858, %v2903
        %v2910 = vadd.f32 %v2862, %v2903
        %v2911 = vadd.f32 %v2866, %v2903
        %v2912 = vadd.f32 %v2870, %v2903
        %v2913 = vadd.f32 %v2874, %v2903
        %v2914 = vadd.f32 %v2878, %v2903
        %v2915 = vadd.f32 %v2882, %v2903
        %v2916 = vadd.f32 %v2886, %v2903
        %v2917 = vadd.f32 %v2890, %v2903
        %v2918 = vadd.f32 %v2894, %v2903
        %v2919 = vadd.f32 %v2898, %v2903
        %v2920 = vmul.f32 %v2904, 0.2
        %v2921 = vmul.f32 %v2905, 0.2
        %v2922 = vmul.f32 %v2906, 0.2
        %v2923 = vmul.f32 %v2907, 0.2
        %v2924 = vmul.f32 %v2908, 0.2
        %v2925 = vmul.f32 %v2909, 0.2
        %v2926 = vmul.f32 %v2910, 0.2
        %v2927 = vmul.f32 %v2911, 0.2
        %v2928 = vmul.f32 %v2912, 0.2
        %v2929 = vmul.f32 %v2913, 0.2
        %v2930 = vmul.f32 %v2914, 0.2
        %v2931 = vmul.f32 %v2915, 0.2
        %v2932 = vmul.f32 %v2916, 0.2
        %v2933 = vmul.f32 %v2917, 0.2
        %v2934 = vmul.f32 %v2918, 0.2
        %v2935 = vmul.f32 %v2919, 0.2
        %v2936 = vmax.f32 %v2904, %v2920
        %v2937 = vmax.f32 %v2905, %v2921
        %v2938 = vmax.f32 %v2906, %v2922
        %v2939 = vmax.f32 %v2907, %v2923
        %v2940 = vmax.f32 %v2908, %v2924
        %v2941 = vmax.f32 %v2909, %v2925
        %v2942 = vmax.f32 %v2910, %v2926
        %v2943 = vmax.f32 %v2911, %v2927
        %v2944 = vmax.f32 %v2912, %v2928
        %v2945 = vmax.f32 %v2913, %v2929
        %v2946 = vmax.f32 %v2914, %v2930
        %v2947 = vmax.f32 %v2915, %v2931
        %v2948 = vmax.f32 %v2916, %v2932
        %v2949 = vmax.f32 %v2917, %v2933
        %v2950 = vmax.f32 %v2918, %v2934
        %v2951 = vmax.f32 %v2919, %v2935
        %s2952 = sld [smem:[#allocation7 + $0xc]]
        %v2953 = vstv %s2952
        %v2954 = vmul.f32 %v2953, %v2936
        %v2955 = vmul.f32 %v2953, %v2937
        %v2956 = vmul.f32 %v2953, %v2938
        %v2957 = vmul.f32 %v2953, %v2939
        %v2958 = vmul.f32 %v2953, %v2940
        %v2959 = vmul.f32 %v2953, %v2941
        %v2960 = vmul.f32 %v2953, %v2942
        %v2961 = vmul.f32 %v2953, %v2943
        %v2962 = vmul.f32 %v2953, %v2944
        %v2963 = vmul.f32 %v2953, %v2945
        %v2964 = vmul.f32 %v2953, %v2946
        %v2965 = vmul.f32 %v2953, %v2947
        %v2966 = vmul.f32 %v2953, %v2948
        %v2967 = vmul.f32 %v2953, %v2949
        %v2968 = vmul.f32 %v2953, %v2950
        %v2969 = vmul.f32 %v2953, %v2951
        %v2970 = vadd.f32 %v2819, %v2954
        %v2971 = vadd.f32 %v2820, %v2955
        %v2972 = vadd.f32 %v2821, %v2956
        %v2973 = vadd.f32 %v2822, %v2957
        %v2974 = vadd.f32 %v2823, %v2958
        %v2975 = vadd.f32 %v2824, %v2959
        %v2976 = vadd.f32 %v2825, %v2960
        %v2977 = vadd.f32 %v2826, %v2961
        %v2978 = vadd.f32 %v2827, %v2962
        %v2979 = vadd.f32 %v2828, %v2963
        %v2980 = vadd.f32 %v2829, %v2964
        %v2981 = vadd.f32 %v2830, %v2965
        %v2982 = vadd.f32 %v2831, %v2966
        %v2983 = vadd.f32 %v2832, %v2967
        %v2984 = vadd.f32 %v2833, %v2968
        %v2985 = vadd.f32 %v2834, %v2969
        %v2986 = vld [vmem:[#allocation3 + $0xd] sm:$0x1]
        %2987 = vset.pattern.permute.xlu0 13
        %2988 = vperm.xlu0 %2987, %v991
        %v2989 = vpop.permute.xlu0 %2988
        %2991 = vset.pattern.permute.xlu0 13
        %2992 = vperm.xlu0 %2991, %v992
        %v2993 = vpop.permute.xlu0 %2992
        %2995 = vset.pattern.permute.xlu0 13
        %2996 = vperm.xlu0 %2995, %v993
        %v2997 = vpop.permute.xlu0 %2996
        %2999 = vset.pattern.permute.xlu0 13
        %3000 = vperm.xlu0 %2999, %v994
        %v3001 = vpop.permute.xlu0 %3000
        %3003 = vset.pattern.permute.xlu0 13
        %3004 = vperm.xlu0 %3003, %v995
        %v3005 = vpop.permute.xlu0 %3004
        %3007 = vset.pattern.permute.xlu0 13
        %3008 = vperm.xlu0 %3007, %v996
        %v3009 = vpop.permute.xlu0 %3008
        %3011 = vset.pattern.permute.xlu0 13
        %3012 = vperm.xlu0 %3011, %v997
        %v3013 = vpop.permute.xlu0 %3012
        %3015 = vset.pattern.permute.xlu0 13
        %3016 = vperm.xlu0 %3015, %v998
        %v3017 = vpop.permute.xlu0 %3016
        %3019 = vset.pattern.permute.xlu0 13
        %3020 = vperm.xlu0 %3019, %v999
        %v3021 = vpop.permute.xlu0 %3020
        %3023 = vset.pattern.permute.xlu0 13
        %3024 = vperm.xlu0 %3023, %v1000
        %v3025 = vpop.permute.xlu0 %3024
        %3027 = vset.pattern.permute.xlu0 13
        %3028 = vperm.xlu0 %3027, %v1001
        %v3029 = vpop.permute.xlu0 %3028
        %3031 = vset.pattern.permute.xlu0 13
        %3032 = vperm.xlu0 %3031, %v1002
        %v3033 = vpop.permute.xlu0 %3032
        %3035 = vset.pattern.permute.xlu0 13
        %3036 = vperm.xlu0 %3035, %v1003
        %v3037 = vpop.permute.xlu0 %3036
        %3039 = vset.pattern.permute.xlu0 13
        %3040 = vperm.xlu0 %3039, %v1004
        %v3041 = vpop.permute.xlu0 %3040
        %3043 = vset.pattern.permute.xlu0 13
        %3044 = vperm.xlu0 %3043, %v1005
        %v3045 = vpop.permute.xlu0 %3044
        %3047 = vset.pattern.permute.xlu0 13
        %3048 = vperm.xlu0 %3047, %v1006
        %v3049 = vpop.permute.xlu0 %3048
        %v3051 = vlaneseq
        %v3052 = vshrl.u32 %v3051, 7
        %v3053 = vsub.s32 0, %v3052
        %v3054 = vrot.slane %v2986, %v3053
        %v3055 = vadd.f32 %v2989, %v3054
        %v3056 = vadd.f32 %v2993, %v3054
        %v3057 = vadd.f32 %v2997, %v3054
        %v3058 = vadd.f32 %v3001, %v3054
        %v3059 = vadd.f32 %v3005, %v3054
        %v3060 = vadd.f32 %v3009, %v3054
        %v3061 = vadd.f32 %v3013, %v3054
        %v3062 = vadd.f32 %v3017, %v3054
        %v3063 = vadd.f32 %v3021, %v3054
        %v3064 = vadd.f32 %v3025, %v3054
        %v3065 = vadd.f32 %v3029, %v3054
        %v3066 = vadd.f32 %v3033, %v3054
        %v3067 = vadd.f32 %v3037, %v3054
        %v3068 = vadd.f32 %v3041, %v3054
        %v3069 = vadd.f32 %v3045, %v3054
        %v3070 = vadd.f32 %v3049, %v3054
        %v3071 = vmul.f32 %v3055, 0.2
        %v3072 = vmul.f32 %v3056, 0.2
        %v3073 = vmul.f32 %v3057, 0.2
        %v3074 = vmul.f32 %v3058, 0.2
        %v3075 = vmul.f32 %v3059, 0.2
        %v3076 = vmul.f32 %v3060, 0.2
        %v3077 = vmul.f32 %v3061, 0.2
        %v3078 = vmul.f32 %v3062, 0.2
        %v3079 = vmul.f32 %v3063, 0.2
        %v3080 = vmul.f32 %v3064, 0.2
        %v3081 = vmul.f32 %v3065, 0.2
        %v3082 = vmul.f32 %v3066, 0.2
        %v3083 = vmul.f32 %v3067, 0.2
        %v3084 = vmul.f32 %v3068, 0.2
        %v3085 = vmul.f32 %v3069, 0.2
        %v3086 = vmul.f32 %v3070, 0.2
        %v3087 = vmax.f32 %v3055, %v3071
        %v3088 = vmax.f32 %v3056, %v3072
        %v3089 = vmax.f32 %v3057, %v3073
        %v3090 = vmax.f32 %v3058, %v3074
        %v3091 = vmax.f32 %v3059, %v3075
        %v3092 = vmax.f32 %v3060, %v3076
        %v3093 = vmax.f32 %v3061, %v3077
        %v3094 = vmax.f32 %v3062, %v3078
        %v3095 = vmax.f32 %v3063, %v3079
        %v3096 = vmax.f32 %v3064, %v3080
        %v3097 = vmax.f32 %v3065, %v3081
        %v3098 = vmax.f32 %v3066, %v3082
        %v3099 = vmax.f32 %v3067, %v3083
        %v3100 = vmax.f32 %v3068, %v3084
        %v3101 = vmax.f32 %v3069, %v3085
        %v3102 = vmax.f32 %v3070, %v3086
        %s3103 = sld [smem:[#allocation7 + $0xd]]
        %v3104 = vstv %s3103
        %v3105 = vmul.f32 %v3104, %v3087
        %v3106 = vmul.f32 %v3104, %v3088
        %v3107 = vmul.f32 %v3104, %v3089
        %v3108 = vmul.f32 %v3104, %v3090
        %v3109 = vmul.f32 %v3104, %v3091
        %v3110 = vmul.f32 %v3104, %v3092
        %v3111 = vmul.f32 %v3104, %v3093
        %v3112 = vmul.f32 %v3104, %v3094
        %v3113 = vmul.f32 %v3104, %v3095
        %v3114 = vmul.f32 %v3104, %v3096
        %v3115 = vmul.f32 %v3104, %v3097
        %v3116 = vmul.f32 %v3104, %v3098
        %v3117 = vmul.f32 %v3104, %v3099
        %v3118 = vmul.f32 %v3104, %v3100
        %v3119 = vmul.f32 %v3104, %v3101
        %v3120 = vmul.f32 %v3104, %v3102
        %v3121 = vadd.f32 %v2970, %v3105
        %v3122 = vadd.f32 %v2971, %v3106
        %v3123 = vadd.f32 %v2972, %v3107
        %v3124 = vadd.f32 %v2973, %v3108
        %v3125 = vadd.f32 %v2974, %v3109
        %v3126 = vadd.f32 %v2975, %v3110
        %v3127 = vadd.f32 %v2976, %v3111
        %v3128 = vadd.f32 %v2977, %v3112
        %v3129 = vadd.f32 %v2978, %v3113
        %v3130 = vadd.f32 %v2979, %v3114
        %v3131 = vadd.f32 %v2980, %v3115
        %v3132 = vadd.f32 %v2981, %v3116
        %v3133 = vadd.f32 %v2982, %v3117
        %v3134 = vadd.f32 %v2983, %v3118
        %v3135 = vadd.f32 %v2984, %v3119
        %v3136 = vadd.f32 %v2985, %v3120
        %v3137 = vld [vmem:[#allocation3 + $0xe] sm:$0x1]
        %3138 = vset.pattern.permute.xlu0 14
        %3139 = vperm.xlu0 %3138, %v991
        %v3140 = vpop.permute.xlu0 %3139
        %3142 = vset.pattern.permute.xlu0 14
        %3143 = vperm.xlu0 %3142, %v992
        %v3144 = vpop.permute.xlu0 %3143
        %3146 = vset.pattern.permute.xlu0 14
        %3147 = vperm.xlu0 %3146, %v993
        %v3148 = vpop.permute.xlu0 %3147
        %3150 = vset.pattern.permute.xlu0 14
        %3151 = vperm.xlu0 %3150, %v994
        %v3152 = vpop.permute.xlu0 %3151
        %3154 = vset.pattern.permute.xlu0 14
        %3155 = vperm.xlu0 %3154, %v995
        %v3156 = vpop.permute.xlu0 %3155
        %3158 = vset.pattern.permute.xlu0 14
        %3159 = vperm.xlu0 %3158, %v996
        %v3160 = vpop.permute.xlu0 %3159
        %3162 = vset.pattern.permute.xlu0 14
        %3163 = vperm.xlu0 %3162, %v997
        %v3164 = vpop.permute.xlu0 %3163
        %3166 = vset.pattern.permute.xlu0 14
        %3167 = vperm.xlu0 %3166, %v998
        %v3168 = vpop.permute.xlu0 %3167
        %3170 = vset.pattern.permute.xlu0 14
        %3171 = vperm.xlu0 %3170, %v999
        %v3172 = vpop.permute.xlu0 %3171
        %3174 = vset.pattern.permute.xlu0 14
        %3175 = vperm.xlu0 %3174, %v1000
        %v3176 = vpop.permute.xlu0 %3175
        %3178 = vset.pattern.permute.xlu0 14
        %3179 = vperm.xlu0 %3178, %v1001
        %v3180 = vpop.permute.xlu0 %3179
        %3182 = vset.pattern.permute.xlu0 14
        %3183 = vperm.xlu0 %3182, %v1002
        %v3184 = vpop.permute.xlu0 %3183
        %3186 = vset.pattern.permute.xlu0 14
        %3187 = vperm.xlu0 %3186, %v1003
        %v3188 = vpop.permute.xlu0 %3187
        %3190 = vset.pattern.permute.xlu0 14
        %3191 = vperm.xlu0 %3190, %v1004
        %v3192 = vpop.permute.xlu0 %3191
        %3194 = vset.pattern.permute.xlu0 14
        %3195 = vperm.xlu0 %3194, %v1005
        %v3196 = vpop.permute.xlu0 %3195
        %3198 = vset.pattern.permute.xlu0 14
        %3199 = vperm.xlu0 %3198, %v1006
        %v3200 = vpop.permute.xlu0 %3199
        %v3202 = vlaneseq
        %v3203 = vshrl.u32 %v3202, 7
        %v3204 = vsub.s32 0, %v3203
        %v3205 = vrot.slane %v3137, %v3204
        %v3206 = vadd.f32 %v3140, %v3205
        %v3207 = vadd.f32 %v3144, %v3205
        %v3208 = vadd.f32 %v3148, %v3205
        %v3209 = vadd.f32 %v3152, %v3205
        %v3210 = vadd.f32 %v3156, %v3205
        %v3211 = vadd.f32 %v3160, %v3205
        %v3212 = vadd.f32 %v3164, %v3205
        %v3213 = vadd.f32 %v3168, %v3205
        %v3214 = vadd.f32 %v3172, %v3205
        %v3215 = vadd.f32 %v3176, %v3205
        %v3216 = vadd.f32 %v3180, %v3205
        %v3217 = vadd.f32 %v3184, %v3205
        %v3218 = vadd.f32 %v3188, %v3205
        %v3219 = vadd.f32 %v3192, %v3205
        %v3220 = vadd.f32 %v3196, %v3205
        %v3221 = vadd.f32 %v3200, %v3205
        %v3222 = vmul.f32 %v3206, 0.2
        %v3223 = vmul.f32 %v3207, 0.2
        %v3224 = vmul.f32 %v3208, 0.2
        %v3225 = vmul.f32 %v3209, 0.2
        %v3226 = vmul.f32 %v3210, 0.2
        %v3227 = vmul.f32 %v3211, 0.2
        %v3228 = vmul.f32 %v3212, 0.2
        %v3229 = vmul.f32 %v3213, 0.2
        %v3230 = vmul.f32 %v3214, 0.2
        %v3231 = vmul.f32 %v3215, 0.2
        %v3232 = vmul.f32 %v3216, 0.2
        %v3233 = vmul.f32 %v3217, 0.2
        %v3234 = vmul.f32 %v3218, 0.2
        %v3235 = vmul.f32 %v3219, 0.2
        %v3236 = vmul.f32 %v3220, 0.2
        %v3237 = vmul.f32 %v3221, 0.2
        %v3238 = vmax.f32 %v3206, %v3222
        %v3239 = vmax.f32 %v3207, %v3223
        %v3240 = vmax.f32 %v3208, %v3224
        %v3241 = vmax.f32 %v3209, %v3225
        %v3242 = vmax.f32 %v3210, %v3226
        %v3243 = vmax.f32 %v3211, %v3227
        %v3244 = vmax.f32 %v3212, %v3228
        %v3245 = vmax.f32 %v3213, %v3229
        %v3246 = vmax.f32 %v3214, %v3230
        %v3247 = vmax.f32 %v3215, %v3231
        %v3248 = vmax.f32 %v3216, %v3232
        %v3249 = vmax.f32 %v3217, %v3233
        %v3250 = vmax.f32 %v3218, %v3234
        %v3251 = vmax.f32 %v3219, %v3235
        %v3252 = vmax.f32 %v3220, %v3236
        %v3253 = vmax.f32 %v3221, %v3237
        %s3254 = sld [smem:[#allocation7 + $0xe]]
        %v3255 = vstv %s3254
        %v3256 = vmul.f32 %v3255, %v3238
        %v3257 = vmul.f32 %v3255, %v3239
        %v3258 = vmul.f32 %v3255, %v3240
        %v3259 = vmul.f32 %v3255, %v3241
        %v3260 = vmul.f32 %v3255, %v3242
        %v3261 = vmul.f32 %v3255, %v3243
        %v3262 = vmul.f32 %v3255, %v3244
        %v3263 = vmul.f32 %v3255, %v3245
        %v3264 = vmul.f32 %v3255, %v3246
        %v3265 = vmul.f32 %v3255, %v3247
        %v3266 = vmul.f32 %v3255, %v3248
        %v3267 = vmul.f32 %v3255, %v3249
        %v3268 = vmul.f32 %v3255, %v3250
        %v3269 = vmul.f32 %v3255, %v3251
        %v3270 = vmul.f32 %v3255, %v3252
        %v3271 = vmul.f32 %v3255, %v3253
        %v3272 = vadd.f32 %v3121, %v3256
        %v3273 = vadd.f32 %v3122, %v3257
        %v3274 = vadd.f32 %v3123, %v3258
        %v3275 = vadd.f32 %v3124, %v3259
        %v3276 = vadd.f32 %v3125, %v3260
        %v3277 = vadd.f32 %v3126, %v3261
        %v3278 = vadd.f32 %v3127, %v3262
        %v3279 = vadd.f32 %v3128, %v3263
        %v3280 = vadd.f32 %v3129, %v3264
        %v3281 = vadd.f32 %v3130, %v3265
        %v3282 = vadd.f32 %v3131, %v3266
        %v3283 = vadd.f32 %v3132, %v3267
        %v3284 = vadd.f32 %v3133, %v3268
        %v3285 = vadd.f32 %v3134, %v3269
        %v3286 = vadd.f32 %v3135, %v3270
        %v3287 = vadd.f32 %v3136, %v3271
        %v3288 = vld [vmem:[#allocation3 + $0xf] sm:$0x1]
        %3289 = vset.pattern.permute.xlu0 15
        %3290 = vperm.xlu0 %3289, %v991
        %v3291 = vpop.permute.xlu0 %3290
        %3293 = vset.pattern.permute.xlu0 15
        %3294 = vperm.xlu0 %3293, %v992
        %v3295 = vpop.permute.xlu0 %3294
        %3297 = vset.pattern.permute.xlu0 15
        %3298 = vperm.xlu0 %3297, %v993
        %v3299 = vpop.permute.xlu0 %3298
        %3301 = vset.pattern.permute.xlu0 15
        %3302 = vperm.xlu0 %3301, %v994
        %v3303 = vpop.permute.xlu0 %3302
        %3305 = vset.pattern.permute.xlu0 15
        %3306 = vperm.xlu0 %3305, %v995
        %v3307 = vpop.permute.xlu0 %3306
        %3309 = vset.pattern.permute.xlu0 15
        %3310 = vperm.xlu0 %3309, %v996
        %v3311 = vpop.permute.xlu0 %3310
        %3313 = vset.pattern.permute.xlu0 15
        %3314 = vperm.xlu0 %3313, %v997
        %v3315 = vpop.permute.xlu0 %3314
        %3317 = vset.pattern.permute.xlu0 15
        %3318 = vperm.xlu0 %3317, %v998
        %v3319 = vpop.permute.xlu0 %3318
        %3321 = vset.pattern.permute.xlu0 15
        %3322 = vperm.xlu0 %3321, %v999
        %v3323 = vpop.permute.xlu0 %3322
        %3325 = vset.pattern.permute.xlu0 15
        %3326 = vperm.xlu0 %3325, %v1000
        %v3327 = vpop.permute.xlu0 %3326
        %3329 = vset.pattern.permute.xlu0 15
        %3330 = vperm.xlu0 %3329, %v1001
        %v3331 = vpop.permute.xlu0 %3330
        %3333 = vset.pattern.permute.xlu0 15
        %3334 = vperm.xlu0 %3333, %v1002
        %v3335 = vpop.permute.xlu0 %3334
        %3337 = vset.pattern.permute.xlu0 15
        %3338 = vperm.xlu0 %3337, %v1003
        %v3339 = vpop.permute.xlu0 %3338
        %3341 = vset.pattern.permute.xlu0 15
        %3342 = vperm.xlu0 %3341, %v1004
        %v3343 = vpop.permute.xlu0 %3342
        %3345 = vset.pattern.permute.xlu0 15
        %3346 = vperm.xlu0 %3345, %v1005
        %v3347 = vpop.permute.xlu0 %3346
        %3349 = vset.pattern.permute.xlu0 15
        %3350 = vperm.xlu0 %3349, %v1006
        %v3351 = vpop.permute.xlu0 %3350
        %v3353 = vlaneseq
        %v3354 = vshrl.u32 %v3353, 7
        %v3355 = vsub.s32 0, %v3354
        %v3356 = vrot.slane %v3288, %v3355
        %v3357 = vadd.f32 %v3291, %v3356
        %v3358 = vadd.f32 %v3295, %v3356
        %v3359 = vadd.f32 %v3299, %v3356
        %v3360 = vadd.f32 %v3303, %v3356
        %v3361 = vadd.f32 %v3307, %v3356
        %v3362 = vadd.f32 %v3311, %v3356
        %v3363 = vadd.f32 %v3315, %v3356
        %v3364 = vadd.f32 %v3319, %v3356
        %v3365 = vadd.f32 %v3323, %v3356
        %v3366 = vadd.f32 %v3327, %v3356
        %v3367 = vadd.f32 %v3331, %v3356
        %v3368 = vadd.f32 %v3335, %v3356
        %v3369 = vadd.f32 %v3339, %v3356
        %v3370 = vadd.f32 %v3343, %v3356
        %v3371 = vadd.f32 %v3347, %v3356
        %v3372 = vadd.f32 %v3351, %v3356
        %v3373 = vmul.f32 %v3357, 0.2
        %v3374 = vmul.f32 %v3358, 0.2
        %v3375 = vmul.f32 %v3359, 0.2
        %v3376 = vmul.f32 %v3360, 0.2
        %v3377 = vmul.f32 %v3361, 0.2
        %v3378 = vmul.f32 %v3362, 0.2
        %v3379 = vmul.f32 %v3363, 0.2
        %v3380 = vmul.f32 %v3364, 0.2
        %v3381 = vmul.f32 %v3365, 0.2
        %v3382 = vmul.f32 %v3366, 0.2
        %v3383 = vmul.f32 %v3367, 0.2
        %v3384 = vmul.f32 %v3368, 0.2
        %v3385 = vmul.f32 %v3369, 0.2
        %v3386 = vmul.f32 %v3370, 0.2
        %v3387 = vmul.f32 %v3371, 0.2
        %v3388 = vmul.f32 %v3372, 0.2
        %v3389 = vmax.f32 %v3357, %v3373
        %v3390 = vmax.f32 %v3358, %v3374
        %v3391 = vmax.f32 %v3359, %v3375
        %v3392 = vmax.f32 %v3360, %v3376
        %v3393 = vmax.f32 %v3361, %v3377
        %v3394 = vmax.f32 %v3362, %v3378
        %v3395 = vmax.f32 %v3363, %v3379
        %v3396 = vmax.f32 %v3364, %v3380
        %v3397 = vmax.f32 %v3365, %v3381
        %v3398 = vmax.f32 %v3366, %v3382
        %v3399 = vmax.f32 %v3367, %v3383
        %v3400 = vmax.f32 %v3368, %v3384
        %v3401 = vmax.f32 %v3369, %v3385
        %v3402 = vmax.f32 %v3370, %v3386
        %v3403 = vmax.f32 %v3371, %v3387
        %v3404 = vmax.f32 %v3372, %v3388
        %s3405 = sld [smem:[#allocation7 + $0xf]]
        %v3406 = vstv %s3405
        %v3407 = vmul.f32 %v3406, %v3389
        %v3408 = vmul.f32 %v3406, %v3390
        %v3409 = vmul.f32 %v3406, %v3391
        %v3410 = vmul.f32 %v3406, %v3392
        %v3411 = vmul.f32 %v3406, %v3393
        %v3412 = vmul.f32 %v3406, %v3394
        %v3413 = vmul.f32 %v3406, %v3395
        %v3414 = vmul.f32 %v3406, %v3396
        %v3415 = vmul.f32 %v3406, %v3397
        %v3416 = vmul.f32 %v3406, %v3398
        %v3417 = vmul.f32 %v3406, %v3399
        %v3418 = vmul.f32 %v3406, %v3400
        %v3419 = vmul.f32 %v3406, %v3401
        %v3420 = vmul.f32 %v3406, %v3402
        %v3421 = vmul.f32 %v3406, %v3403
        %v3422 = vmul.f32 %v3406, %v3404
        %v3423 = vadd.f32 %v3272, %v3407
        %v3424 = vadd.f32 %v3273, %v3408
        %v3425 = vadd.f32 %v3274, %v3409
        %v3426 = vadd.f32 %v3275, %v3410
        %v3427 = vadd.f32 %v3276, %v3411
        %v3428 = vadd.f32 %v3277, %v3412
        %v3429 = vadd.f32 %v3278, %v3413
        %v3430 = vadd.f32 %v3279, %v3414
        %v3431 = vadd.f32 %v3280, %v3415
        %v3432 = vadd.f32 %v3281, %v3416
        %v3433 = vadd.f32 %v3282, %v3417
        %v3434 = vadd.f32 %v3283, %v3418
        %v3435 = vadd.f32 %v3284, %v3419
        %v3436 = vadd.f32 %v3285, %v3420
        %v3437 = vadd.f32 %v3286, %v3421
        %v3438 = vadd.f32 %v3287, %v3422
        %v3439 = vld [vmem:[#allocation3 + $0x10] sm:$0x1]
        %3440 = vset.pattern.permute.xlu0 16
        %3441 = vperm.xlu0 %3440, %v991
        %v3442 = vpop.permute.xlu0 %3441
        %3444 = vset.pattern.permute.xlu0 16
        %3445 = vperm.xlu0 %3444, %v992
        %v3446 = vpop.permute.xlu0 %3445
        %3448 = vset.pattern.permute.xlu0 16
        %3449 = vperm.xlu0 %3448, %v993
        %v3450 = vpop.permute.xlu0 %3449
        %3452 = vset.pattern.permute.xlu0 16
        %3453 = vperm.xlu0 %3452, %v994
        %v3454 = vpop.permute.xlu0 %3453
        %3456 = vset.pattern.permute.xlu0 16
        %3457 = vperm.xlu0 %3456, %v995
        %v3458 = vpop.permute.xlu0 %3457
        %3460 = vset.pattern.permute.xlu0 16
        %3461 = vperm.xlu0 %3460, %v996
        %v3462 = vpop.permute.xlu0 %3461
        %3464 = vset.pattern.permute.xlu0 16
        %3465 = vperm.xlu0 %3464, %v997
        %v3466 = vpop.permute.xlu0 %3465
        %3468 = vset.pattern.permute.xlu0 16
        %3469 = vperm.xlu0 %3468, %v998
        %v3470 = vpop.permute.xlu0 %3469
        %3472 = vset.pattern.permute.xlu0 16
        %3473 = vperm.xlu0 %3472, %v999
        %v3474 = vpop.permute.xlu0 %3473
        %3476 = vset.pattern.permute.xlu0 16
        %3477 = vperm.xlu0 %3476, %v1000
        %v3478 = vpop.permute.xlu0 %3477
        %3480 = vset.pattern.permute.xlu0 16
        %3481 = vperm.xlu0 %3480, %v1001
        %v3482 = vpop.permute.xlu0 %3481
        %3484 = vset.pattern.permute.xlu0 16
        %3485 = vperm.xlu0 %3484, %v1002
        %v3486 = vpop.permute.xlu0 %3485
        %3488 = vset.pattern.permute.xlu0 16
        %3489 = vperm.xlu0 %3488, %v1003
        %v3490 = vpop.permute.xlu0 %3489
        %3492 = vset.pattern.permute.xlu0 16
        %3493 = vperm.xlu0 %3492, %v1004
        %v3494 = vpop.permute.xlu0 %3493
        %3496 = vset.pattern.permute.xlu0 16
        %3497 = vperm.xlu0 %3496, %v1005
        %v3498 = vpop.permute.xlu0 %3497
        %3500 = vset.pattern.permute.xlu0 16
        %3501 = vperm.xlu0 %3500, %v1006
        %v3502 = vpop.permute.xlu0 %3501
        %v3504 = vlaneseq
        %v3505 = vshrl.u32 %v3504, 7
        %v3506 = vsub.s32 0, %v3505
        %v3507 = vrot.slane %v3439, %v3506
        %v3508 = vadd.f32 %v3442, %v3507
        %v3509 = vadd.f32 %v3446, %v3507
        %v3510 = vadd.f32 %v3450, %v3507
        %v3511 = vadd.f32 %v3454, %v3507
        %v3512 = vadd.f32 %v3458, %v3507
        %v3513 = vadd.f32 %v3462, %v3507
        %v3514 = vadd.f32 %v3466, %v3507
        %v3515 = vadd.f32 %v3470, %v3507
        %v3516 = vadd.f32 %v3474, %v3507
        %v3517 = vadd.f32 %v3478, %v3507
        %v3518 = vadd.f32 %v3482, %v3507
        %v3519 = vadd.f32 %v3486, %v3507
        %v3520 = vadd.f32 %v3490, %v3507
        %v3521 = vadd.f32 %v3494, %v3507
        %v3522 = vadd.f32 %v3498, %v3507
        %v3523 = vadd.f32 %v3502, %v3507
        %v3524 = vmul.f32 %v3508, 0.2
        %v3525 = vmul.f32 %v3509, 0.2
        %v3526 = vmul.f32 %v3510, 0.2
        %v3527 = vmul.f32 %v3511, 0.2
        %v3528 = vmul.f32 %v3512, 0.2
        %v3529 = vmul.f32 %v3513, 0.2
        %v3530 = vmul.f32 %v3514, 0.2
        %v3531 = vmul.f32 %v3515, 0.2
        %v3532 = vmul.f32 %v3516, 0.2
        %v3533 = vmul.f32 %v3517, 0.2
        %v3534 = vmul.f32 %v3518, 0.2
        %v3535 = vmul.f32 %v3519, 0.2
        %v3536 = vmul.f32 %v3520, 0.2
        %v3537 = vmul.f32 %v3521, 0.2
        %v3538 = vmul.f32 %v3522, 0.2
        %v3539 = vmul.f32 %v3523, 0.2
        %v3540 = vmax.f32 %v3508, %v3524
        %v3541 = vmax.f32 %v3509, %v3525
        %v3542 = vmax.f32 %v3510, %v3526
        %v3543 = vmax.f32 %v3511, %v3527
        %v3544 = vmax.f32 %v3512, %v3528
        %v3545 = vmax.f32 %v3513, %v3529
        %v3546 = vmax.f32 %v3514, %v3530
        %v3547 = vmax.f32 %v3515, %v3531
        %v3548 = vmax.f32 %v3516, %v3532
        %v3549 = vmax.f32 %v3517, %v3533
        %v3550 = vmax.f32 %v3518, %v3534
        %v3551 = vmax.f32 %v3519, %v3535
        %v3552 = vmax.f32 %v3520, %v3536
        %v3553 = vmax.f32 %v3521, %v3537
        %v3554 = vmax.f32 %v3522, %v3538
        %v3555 = vmax.f32 %v3523, %v3539
        %s3556 = sld [smem:[#allocation7 + $0x10]]
        %v3557 = vstv %s3556
        %v3558 = vmul.f32 %v3557, %v3540
        %v3559 = vmul.f32 %v3557, %v3541
        %v3560 = vmul.f32 %v3557, %v3542
        %v3561 = vmul.f32 %v3557, %v3543
        %v3562 = vmul.f32 %v3557, %v3544
        %v3563 = vmul.f32 %v3557, %v3545
        %v3564 = vmul.f32 %v3557, %v3546
        %v3565 = vmul.f32 %v3557, %v3547
        %v3566 = vmul.f32 %v3557, %v3548
        %v3567 = vmul.f32 %v3557, %v3549
        %v3568 = vmul.f32 %v3557, %v3550
        %v3569 = vmul.f32 %v3557, %v3551
        %v3570 = vmul.f32 %v3557, %v3552
        %v3571 = vmul.f32 %v3557, %v3553
        %v3572 = vmul.f32 %v3557, %v3554
        %v3573 = vmul.f32 %v3557, %v3555
        %v3574 = vadd.f32 %v3423, %v3558
        %v3575 = vadd.f32 %v3424, %v3559
        %v3576 = vadd.f32 %v3425, %v3560
        %v3577 = vadd.f32 %v3426, %v3561
        %v3578 = vadd.f32 %v3427, %v3562
        %v3579 = vadd.f32 %v3428, %v3563
        %v3580 = vadd.f32 %v3429, %v3564
        %v3581 = vadd.f32 %v3430, %v3565
        %v3582 = vadd.f32 %v3431, %v3566
        %v3583 = vadd.f32 %v3432, %v3567
        %v3584 = vadd.f32 %v3433, %v3568
        %v3585 = vadd.f32 %v3434, %v3569
        %v3586 = vadd.f32 %v3435, %v3570
        %v3587 = vadd.f32 %v3436, %v3571
        %v3588 = vadd.f32 %v3437, %v3572
        %v3589 = vadd.f32 %v3438, %v3573
        %v3590 = vld [vmem:[#allocation3 + $0x11] sm:$0x1]
        %3591 = vset.pattern.permute.xlu0 17
        %3592 = vperm.xlu0 %3591, %v991
        %v3593 = vpop.permute.xlu0 %3592
        %3595 = vset.pattern.permute.xlu0 17
        %3596 = vperm.xlu0 %3595, %v992
        %v3597 = vpop.permute.xlu0 %3596
        %3599 = vset.pattern.permute.xlu0 17
        %3600 = vperm.xlu0 %3599, %v993
        %v3601 = vpop.permute.xlu0 %3600
        %3603 = vset.pattern.permute.xlu0 17
        %3604 = vperm.xlu0 %3603, %v994
        %v3605 = vpop.permute.xlu0 %3604
        %3607 = vset.pattern.permute.xlu0 17
        %3608 = vperm.xlu0 %3607, %v995
        %v3609 = vpop.permute.xlu0 %3608
        %3611 = vset.pattern.permute.xlu0 17
        %3612 = vperm.xlu0 %3611, %v996
        %v3613 = vpop.permute.xlu0 %3612
        %3615 = vset.pattern.permute.xlu0 17
        %3616 = vperm.xlu0 %3615, %v997
        %v3617 = vpop.permute.xlu0 %3616
        %3619 = vset.pattern.permute.xlu0 17
        %3620 = vperm.xlu0 %3619, %v998
        %v3621 = vpop.permute.xlu0 %3620
        %3623 = vset.pattern.permute.xlu0 17
        %3624 = vperm.xlu0 %3623, %v999
        %v3625 = vpop.permute.xlu0 %3624
        %3627 = vset.pattern.permute.xlu0 17
        %3628 = vperm.xlu0 %3627, %v1000
        %v3629 = vpop.permute.xlu0 %3628
        %3631 = vset.pattern.permute.xlu0 17
        %3632 = vperm.xlu0 %3631, %v1001
        %v3633 = vpop.permute.xlu0 %3632
        %3635 = vset.pattern.permute.xlu0 17
        %3636 = vperm.xlu0 %3635, %v1002
        %v3637 = vpop.permute.xlu0 %3636
        %3639 = vset.pattern.permute.xlu0 17
        %3640 = vperm.xlu0 %3639, %v1003
        %v3641 = vpop.permute.xlu0 %3640
        %3643 = vset.pattern.permute.xlu0 17
        %3644 = vperm.xlu0 %3643, %v1004
        %v3645 = vpop.permute.xlu0 %3644
        %3647 = vset.pattern.permute.xlu0 17
        %3648 = vperm.xlu0 %3647, %v1005
        %v3649 = vpop.permute.xlu0 %3648
        %3651 = vset.pattern.permute.xlu0 17
        %3652 = vperm.xlu0 %3651, %v1006
        %v3653 = vpop.permute.xlu0 %3652
        %v3655 = vlaneseq
        %v3656 = vshrl.u32 %v3655, 7
        %v3657 = vsub.s32 0, %v3656
        %v3658 = vrot.slane %v3590, %v3657
        %v3659 = vadd.f32 %v3593, %v3658
        %v3660 = vadd.f32 %v3597, %v3658
        %v3661 = vadd.f32 %v3601, %v3658
        %v3662 = vadd.f32 %v3605, %v3658
        %v3663 = vadd.f32 %v3609, %v3658
        %v3664 = vadd.f32 %v3613, %v3658
        %v3665 = vadd.f32 %v3617, %v3658
        %v3666 = vadd.f32 %v3621, %v3658
        %v3667 = vadd.f32 %v3625, %v3658
        %v3668 = vadd.f32 %v3629, %v3658
        %v3669 = vadd.f32 %v3633, %v3658
        %v3670 = vadd.f32 %v3637, %v3658
        %v3671 = vadd.f32 %v3641, %v3658
        %v3672 = vadd.f32 %v3645, %v3658
        %v3673 = vadd.f32 %v3649, %v3658
        %v3674 = vadd.f32 %v3653, %v3658
        %v3675 = vmul.f32 %v3659, 0.2
        %v3676 = vmul.f32 %v3660, 0.2
        %v3677 = vmul.f32 %v3661, 0.2
        %v3678 = vmul.f32 %v3662, 0.2
        %v3679 = vmul.f32 %v3663, 0.2
        %v3680 = vmul.f32 %v3664, 0.2
        %v3681 = vmul.f32 %v3665, 0.2
        %v3682 = vmul.f32 %v3666, 0.2
        %v3683 = vmul.f32 %v3667, 0.2
        %v3684 = vmul.f32 %v3668, 0.2
        %v3685 = vmul.f32 %v3669, 0.2
        %v3686 = vmul.f32 %v3670, 0.2
        %v3687 = vmul.f32 %v3671, 0.2
        %v3688 = vmul.f32 %v3672, 0.2
        %v3689 = vmul.f32 %v3673, 0.2
        %v3690 = vmul.f32 %v3674, 0.2
        %v3691 = vmax.f32 %v3659, %v3675
        %v3692 = vmax.f32 %v3660, %v3676
        %v3693 = vmax.f32 %v3661, %v3677
        %v3694 = vmax.f32 %v3662, %v3678
        %v3695 = vmax.f32 %v3663, %v3679
        %v3696 = vmax.f32 %v3664, %v3680
        %v3697 = vmax.f32 %v3665, %v3681
        %v3698 = vmax.f32 %v3666, %v3682
        %v3699 = vmax.f32 %v3667, %v3683
        %v3700 = vmax.f32 %v3668, %v3684
        %v3701 = vmax.f32 %v3669, %v3685
        %v3702 = vmax.f32 %v3670, %v3686
        %v3703 = vmax.f32 %v3671, %v3687
        %v3704 = vmax.f32 %v3672, %v3688
        %v3705 = vmax.f32 %v3673, %v3689
        %v3706 = vmax.f32 %v3674, %v3690
        %s3707 = sld [smem:[#allocation7 + $0x11]]
        %v3708 = vstv %s3707
        %v3709 = vmul.f32 %v3708, %v3691
        %v3710 = vmul.f32 %v3708, %v3692
        %v3711 = vmul.f32 %v3708, %v3693
        %v3712 = vmul.f32 %v3708, %v3694
        %v3713 = vmul.f32 %v3708, %v3695
        %v3714 = vmul.f32 %v3708, %v3696
        %v3715 = vmul.f32 %v3708, %v3697
        %v3716 = vmul.f32 %v3708, %v3698
        %v3717 = vmul.f32 %v3708, %v3699
        %v3718 = vmul.f32 %v3708, %v3700
        %v3719 = vmul.f32 %v3708, %v3701
        %v3720 = vmul.f32 %v3708, %v3702
        %v3721 = vmul.f32 %v3708, %v3703
        %v3722 = vmul.f32 %v3708, %v3704
        %v3723 = vmul.f32 %v3708, %v3705
        %v3724 = vmul.f32 %v3708, %v3706
        %v3725 = vadd.f32 %v3574, %v3709
        %v3726 = vadd.f32 %v3575, %v3710
        %v3727 = vadd.f32 %v3576, %v3711
        %v3728 = vadd.f32 %v3577, %v3712
        %v3729 = vadd.f32 %v3578, %v3713
        %v3730 = vadd.f32 %v3579, %v3714
        %v3731 = vadd.f32 %v3580, %v3715
        %v3732 = vadd.f32 %v3581, %v3716
        %v3733 = vadd.f32 %v3582, %v3717
        %v3734 = vadd.f32 %v3583, %v3718
        %v3735 = vadd.f32 %v3584, %v3719
        %v3736 = vadd.f32 %v3585, %v3720
        %v3737 = vadd.f32 %v3586, %v3721
        %v3738 = vadd.f32 %v3587, %v3722
        %v3739 = vadd.f32 %v3588, %v3723
        %v3740 = vadd.f32 %v3589, %v3724
        %v3741 = vld [vmem:[#allocation3 + $0x12] sm:$0x1]
        %3742 = vset.pattern.permute.xlu0 18
        %3743 = vperm.xlu0 %3742, %v991
        %v3744 = vpop.permute.xlu0 %3743
        %3746 = vset.pattern.permute.xlu0 18
        %3747 = vperm.xlu0 %3746, %v992
        %v3748 = vpop.permute.xlu0 %3747
        %3750 = vset.pattern.permute.xlu0 18
        %3751 = vperm.xlu0 %3750, %v993
        %v3752 = vpop.permute.xlu0 %3751
        %3754 = vset.pattern.permute.xlu0 18
        %3755 = vperm.xlu0 %3754, %v994
        %v3756 = vpop.permute.xlu0 %3755
        %3758 = vset.pattern.permute.xlu0 18
        %3759 = vperm.xlu0 %3758, %v995
        %v3760 = vpop.permute.xlu0 %3759
        %3762 = vset.pattern.permute.xlu0 18
        %3763 = vperm.xlu0 %3762, %v996
        %v3764 = vpop.permute.xlu0 %3763
        %3766 = vset.pattern.permute.xlu0 18
        %3767 = vperm.xlu0 %3766, %v997
        %v3768 = vpop.permute.xlu0 %3767
        %3770 = vset.pattern.permute.xlu0 18
        %3771 = vperm.xlu0 %3770, %v998
        %v3772 = vpop.permute.xlu0 %3771
        %3774 = vset.pattern.permute.xlu0 18
        %3775 = vperm.xlu0 %3774, %v999
        %v3776 = vpop.permute.xlu0 %3775
        %3778 = vset.pattern.permute.xlu0 18
        %3779 = vperm.xlu0 %3778, %v1000
        %v3780 = vpop.permute.xlu0 %3779
        %3782 = vset.pattern.permute.xlu0 18
        %3783 = vperm.xlu0 %3782, %v1001
        %v3784 = vpop.permute.xlu0 %3783
        %3786 = vset.pattern.permute.xlu0 18
        %3787 = vperm.xlu0 %3786, %v1002
        %v3788 = vpop.permute.xlu0 %3787
        %3790 = vset.pattern.permute.xlu0 18
        %3791 = vperm.xlu0 %3790, %v1003
        %v3792 = vpop.permute.xlu0 %3791
        %3794 = vset.pattern.permute.xlu0 18
        %3795 = vperm.xlu0 %3794, %v1004
        %v3796 = vpop.permute.xlu0 %3795
        %3798 = vset.pattern.permute.xlu0 18
        %3799 = vperm.xlu0 %3798, %v1005
        %v3800 = vpop.permute.xlu0 %3799
        %3802 = vset.pattern.permute.xlu0 18
        %3803 = vperm.xlu0 %3802, %v1006
        %v3804 = vpop.permute.xlu0 %3803
        %v3806 = vlaneseq
        %v3807 = vshrl.u32 %v3806, 7
        %v3808 = vsub.s32 0, %v3807
        %v3809 = vrot.slane %v3741, %v3808
        %v3810 = vadd.f32 %v3744, %v3809
        %v3811 = vadd.f32 %v3748, %v3809
        %v3812 = vadd.f32 %v3752, %v3809
        %v3813 = vadd.f32 %v3756, %v3809
        %v3814 = vadd.f32 %v3760, %v3809
        %v3815 = vadd.f32 %v3764, %v3809
        %v3816 = vadd.f32 %v3768, %v3809
        %v3817 = vadd.f32 %v3772, %v3809
        %v3818 = vadd.f32 %v3776, %v3809
        %v3819 = vadd.f32 %v3780, %v3809
        %v3820 = vadd.f32 %v3784, %v3809
        %v3821 = vadd.f32 %v3788, %v3809
        %v3822 = vadd.f32 %v3792, %v3809
        %v3823 = vadd.f32 %v3796, %v3809
        %v3824 = vadd.f32 %v3800, %v3809
        %v3825 = vadd.f32 %v3804, %v3809
        %v3826 = vmul.f32 %v3810, 0.2
        %v3827 = vmul.f32 %v3811, 0.2
        %v3828 = vmul.f32 %v3812, 0.2
        %v3829 = vmul.f32 %v3813, 0.2
        %v3830 = vmul.f32 %v3814, 0.2
        %v3831 = vmul.f32 %v3815, 0.2
        %v3832 = vmul.f32 %v3816, 0.2
        %v3833 = vmul.f32 %v3817, 0.2
        %v3834 = vmul.f32 %v3818, 0.2
        %v3835 = vmul.f32 %v3819, 0.2
        %v3836 = vmul.f32 %v3820, 0.2
        %v3837 = vmul.f32 %v3821, 0.2
        %v3838 = vmul.f32 %v3822, 0.2
        %v3839 = vmul.f32 %v3823, 0.2
        %v3840 = vmul.f32 %v3824, 0.2
        %v3841 = vmul.f32 %v3825, 0.2
        %v3842 = vmax.f32 %v3810, %v3826
        %v3843 = vmax.f32 %v3811, %v3827
        %v3844 = vmax.f32 %v3812, %v3828
        %v3845 = vmax.f32 %v3813, %v3829
        %v3846 = vmax.f32 %v3814, %v3830
        %v3847 = vmax.f32 %v3815, %v3831
        %v3848 = vmax.f32 %v3816, %v3832
        %v3849 = vmax.f32 %v3817, %v3833
        %v3850 = vmax.f32 %v3818, %v3834
        %v3851 = vmax.f32 %v3819, %v3835
        %v3852 = vmax.f32 %v3820, %v3836
        %v3853 = vmax.f32 %v3821, %v3837
        %v3854 = vmax.f32 %v3822, %v3838
        %v3855 = vmax.f32 %v3823, %v3839
        %v3856 = vmax.f32 %v3824, %v3840
        %v3857 = vmax.f32 %v3825, %v3841
        %s3858 = sld [smem:[#allocation7 + $0x12]]
        %v3859 = vstv %s3858
        %v3860 = vmul.f32 %v3859, %v3842
        %v3861 = vmul.f32 %v3859, %v3843
        %v3862 = vmul.f32 %v3859, %v3844
        %v3863 = vmul.f32 %v3859, %v3845
        %v3864 = vmul.f32 %v3859, %v3846
        %v3865 = vmul.f32 %v3859, %v3847
        %v3866 = vmul.f32 %v3859, %v3848
        %v3867 = vmul.f32 %v3859, %v3849
        %v3868 = vmul.f32 %v3859, %v3850
        %v3869 = vmul.f32 %v3859, %v3851
        %v3870 = vmul.f32 %v3859, %v3852
        %v3871 = vmul.f32 %v3859, %v3853
        %v3872 = vmul.f32 %v3859, %v3854
        %v3873 = vmul.f32 %v3859, %v3855
        %v3874 = vmul.f32 %v3859, %v3856
        %v3875 = vmul.f32 %v3859, %v3857
        %v3876 = vadd.f32 %v3725, %v3860
        %v3877 = vadd.f32 %v3726, %v3861
        %v3878 = vadd.f32 %v3727, %v3862
        %v3879 = vadd.f32 %v3728, %v3863
        %v3880 = vadd.f32 %v3729, %v3864
        %v3881 = vadd.f32 %v3730, %v3865
        %v3882 = vadd.f32 %v3731, %v3866
        %v3883 = vadd.f32 %v3732, %v3867
        %v3884 = vadd.f32 %v3733, %v3868
        %v3885 = vadd.f32 %v3734, %v3869
        %v3886 = vadd.f32 %v3735, %v3870
        %v3887 = vadd.f32 %v3736, %v3871
        %v3888 = vadd.f32 %v3737, %v3872
        %v3889 = vadd.f32 %v3738, %v3873
        %v3890 = vadd.f32 %v3739, %v3874
        %v3891 = vadd.f32 %v3740, %v3875
        %v3892 = vld [vmem:[#allocation3 + $0x13] sm:$0x1]
        %3893 = vset.pattern.permute.xlu0 19
        %3894 = vperm.xlu0 %3893, %v991
        %v3895 = vpop.permute.xlu0 %3894
        %3897 = vset.pattern.permute.xlu0 19
        %3898 = vperm.xlu0 %3897, %v992
        %v3899 = vpop.permute.xlu0 %3898
        %3901 = vset.pattern.permute.xlu0 19
        %3902 = vperm.xlu0 %3901, %v993
        %v3903 = vpop.permute.xlu0 %3902
        %3905 = vset.pattern.permute.xlu0 19
        %3906 = vperm.xlu0 %3905, %v994
        %v3907 = vpop.permute.xlu0 %3906
        %3909 = vset.pattern.permute.xlu0 19
        %3910 = vperm.xlu0 %3909, %v995
        %v3911 = vpop.permute.xlu0 %3910
        %3913 = vset.pattern.permute.xlu0 19
        %3914 = vperm.xlu0 %3913, %v996
        %v3915 = vpop.permute.xlu0 %3914
        %3917 = vset.pattern.permute.xlu0 19
        %3918 = vperm.xlu0 %3917, %v997
        %v3919 = vpop.permute.xlu0 %3918
        %3921 = vset.pattern.permute.xlu0 19
        %3922 = vperm.xlu0 %3921, %v998
        %v3923 = vpop.permute.xlu0 %3922
        %3925 = vset.pattern.permute.xlu0 19
        %3926 = vperm.xlu0 %3925, %v999
        %v3927 = vpop.permute.xlu0 %3926
        %3929 = vset.pattern.permute.xlu0 19
        %3930 = vperm.xlu0 %3929, %v1000
        %v3931 = vpop.permute.xlu0 %3930
        %3933 = vset.pattern.permute.xlu0 19
        %3934 = vperm.xlu0 %3933, %v1001
        %v3935 = vpop.permute.xlu0 %3934
        %3937 = vset.pattern.permute.xlu0 19
        %3938 = vperm.xlu0 %3937, %v1002
        %v3939 = vpop.permute.xlu0 %3938
        %3941 = vset.pattern.permute.xlu0 19
        %3942 = vperm.xlu0 %3941, %v1003
        %v3943 = vpop.permute.xlu0 %3942
        %3945 = vset.pattern.permute.xlu0 19
        %3946 = vperm.xlu0 %3945, %v1004
        %v3947 = vpop.permute.xlu0 %3946
        %3949 = vset.pattern.permute.xlu0 19
        %3950 = vperm.xlu0 %3949, %v1005
        %v3951 = vpop.permute.xlu0 %3950
        %3953 = vset.pattern.permute.xlu0 19
        %3954 = vperm.xlu0 %3953, %v1006
        %v3955 = vpop.permute.xlu0 %3954
        %v3957 = vlaneseq
        %v3958 = vshrl.u32 %v3957, 7
        %v3959 = vsub.s32 0, %v3958
        %v3960 = vrot.slane %v3892, %v3959
        %v3961 = vadd.f32 %v3895, %v3960
        %v3962 = vadd.f32 %v3899, %v3960
        %v3963 = vadd.f32 %v3903, %v3960
        %v3964 = vadd.f32 %v3907, %v3960
        %v3965 = vadd.f32 %v3911, %v3960
        %v3966 = vadd.f32 %v3915, %v3960
        %v3967 = vadd.f32 %v3919, %v3960
        %v3968 = vadd.f32 %v3923, %v3960
        %v3969 = vadd.f32 %v3927, %v3960
        %v3970 = vadd.f32 %v3931, %v3960
        %v3971 = vadd.f32 %v3935, %v3960
        %v3972 = vadd.f32 %v3939, %v3960
        %v3973 = vadd.f32 %v3943, %v3960
        %v3974 = vadd.f32 %v3947, %v3960
        %v3975 = vadd.f32 %v3951, %v3960
        %v3976 = vadd.f32 %v3955, %v3960
        %v3977 = vmul.f32 %v3961, 0.2
        %v3978 = vmul.f32 %v3962, 0.2
        %v3979 = vmul.f32 %v3963, 0.2
        %v3980 = vmul.f32 %v3964, 0.2
        %v3981 = vmul.f32 %v3965, 0.2
        %v3982 = vmul.f32 %v3966, 0.2
        %v3983 = vmul.f32 %v3967, 0.2
        %v3984 = vmul.f32 %v3968, 0.2
        %v3985 = vmul.f32 %v3969, 0.2
        %v3986 = vmul.f32 %v3970, 0.2
        %v3987 = vmul.f32 %v3971, 0.2
        %v3988 = vmul.f32 %v3972, 0.2
        %v3989 = vmul.f32 %v3973, 0.2
        %v3990 = vmul.f32 %v3974, 0.2
        %v3991 = vmul.f32 %v3975, 0.2
        %v3992 = vmul.f32 %v3976, 0.2
        %v3993 = vmax.f32 %v3961, %v3977
        %v3994 = vmax.f32 %v3962, %v3978
        %v3995 = vmax.f32 %v3963, %v3979
        %v3996 = vmax.f32 %v3964, %v3980
        %v3997 = vmax.f32 %v3965, %v3981
        %v3998 = vmax.f32 %v3966, %v3982
        %v3999 = vmax.f32 %v3967, %v3983
        %v4000 = vmax.f32 %v3968, %v3984
        %v4001 = vmax.f32 %v3969, %v3985
        %v4002 = vmax.f32 %v3970, %v3986
        %v4003 = vmax.f32 %v3971, %v3987
        %v4004 = vmax.f32 %v3972, %v3988
        %v4005 = vmax.f32 %v3973, %v3989
        %v4006 = vmax.f32 %v3974, %v3990
        %v4007 = vmax.f32 %v3975, %v3991
        %v4008 = vmax.f32 %v3976, %v3992
        %s4009 = sld [smem:[#allocation7 + $0x13]]
        %v4010 = vstv %s4009
        %v4011 = vmul.f32 %v4010, %v3993
        %v4012 = vmul.f32 %v4010, %v3994
        %v4013 = vmul.f32 %v4010, %v3995
        %v4014 = vmul.f32 %v4010, %v3996
        %v4015 = vmul.f32 %v4010, %v3997
        %v4016 = vmul.f32 %v4010, %v3998
        %v4017 = vmul.f32 %v4010, %v3999
        %v4018 = vmul.f32 %v4010, %v4000
        %v4019 = vmul.f32 %v4010, %v4001
        %v4020 = vmul.f32 %v4010, %v4002
        %v4021 = vmul.f32 %v4010, %v4003
        %v4022 = vmul.f32 %v4010, %v4004
        %v4023 = vmul.f32 %v4010, %v4005
        %v4024 = vmul.f32 %v4010, %v4006
        %v4025 = vmul.f32 %v4010, %v4007
        %v4026 = vmul.f32 %v4010, %v4008
        %v4027 = vadd.f32 %v3876, %v4011
        %v4028 = vadd.f32 %v3877, %v4012
        %v4029 = vadd.f32 %v3878, %v4013
        %v4030 = vadd.f32 %v3879, %v4014
        %v4031 = vadd.f32 %v3880, %v4015
        %v4032 = vadd.f32 %v3881, %v4016
        %v4033 = vadd.f32 %v3882, %v4017
        %v4034 = vadd.f32 %v3883, %v4018
        %v4035 = vadd.f32 %v3884, %v4019
        %v4036 = vadd.f32 %v3885, %v4020
        %v4037 = vadd.f32 %v3886, %v4021
        %v4038 = vadd.f32 %v3887, %v4022
        %v4039 = vadd.f32 %v3888, %v4023
        %v4040 = vadd.f32 %v3889, %v4024
        %v4041 = vadd.f32 %v3890, %v4025
        %v4042 = vadd.f32 %v3891, %v4026
        %v4043 = vld [vmem:[#allocation3 + $0x14] sm:$0x1]
        %4044 = vset.pattern.permute.xlu0 20
        %4045 = vperm.xlu0 %4044, %v991
        %v4046 = vpop.permute.xlu0 %4045
        %4048 = vset.pattern.permute.xlu0 20
        %4049 = vperm.xlu0 %4048, %v992
        %v4050 = vpop.permute.xlu0 %4049
        %4052 = vset.pattern.permute.xlu0 20
        %4053 = vperm.xlu0 %4052, %v993
        %v4054 = vpop.permute.xlu0 %4053
        %4056 = vset.pattern.permute.xlu0 20
        %4057 = vperm.xlu0 %4056, %v994
        %v4058 = vpop.permute.xlu0 %4057
        %4060 = vset.pattern.permute.xlu0 20
        %4061 = vperm.xlu0 %4060, %v995
        %v4062 = vpop.permute.xlu0 %4061
        %4064 = vset.pattern.permute.xlu0 20
        %4065 = vperm.xlu0 %4064, %v996
        %v4066 = vpop.permute.xlu0 %4065
        %4068 = vset.pattern.permute.xlu0 20
        %4069 = vperm.xlu0 %4068, %v997
        %v4070 = vpop.permute.xlu0 %4069
        %4072 = vset.pattern.permute.xlu0 20
        %4073 = vperm.xlu0 %4072, %v998
        %v4074 = vpop.permute.xlu0 %4073
        %4076 = vset.pattern.permute.xlu0 20
        %4077 = vperm.xlu0 %4076, %v999
        %v4078 = vpop.permute.xlu0 %4077
        %4080 = vset.pattern.permute.xlu0 20
        %4081 = vperm.xlu0 %4080, %v1000
        %v4082 = vpop.permute.xlu0 %4081
        %4084 = vset.pattern.permute.xlu0 20
        %4085 = vperm.xlu0 %4084, %v1001
        %v4086 = vpop.permute.xlu0 %4085
        %4088 = vset.pattern.permute.xlu0 20
        %4089 = vperm.xlu0 %4088, %v1002
        %v4090 = vpop.permute.xlu0 %4089
        %4092 = vset.pattern.permute.xlu0 20
        %4093 = vperm.xlu0 %4092, %v1003
        %v4094 = vpop.permute.xlu0 %4093
        %4096 = vset.pattern.permute.xlu0 20
        %4097 = vperm.xlu0 %4096, %v1004
        %v4098 = vpop.permute.xlu0 %4097
        %4100 = vset.pattern.permute.xlu0 20
        %4101 = vperm.xlu0 %4100, %v1005
        %v4102 = vpop.permute.xlu0 %4101
        %4104 = vset.pattern.permute.xlu0 20
        %4105 = vperm.xlu0 %4104, %v1006
        %v4106 = vpop.permute.xlu0 %4105
        %v4108 = vlaneseq
        %v4109 = vshrl.u32 %v4108, 7
        %v4110 = vsub.s32 0, %v4109
        %v4111 = vrot.slane %v4043, %v4110
        %v4112 = vadd.f32 %v4046, %v4111
        %v4113 = vadd.f32 %v4050, %v4111
        %v4114 = vadd.f32 %v4054, %v4111
        %v4115 = vadd.f32 %v4058, %v4111
        %v4116 = vadd.f32 %v4062, %v4111
        %v4117 = vadd.f32 %v4066, %v4111
        %v4118 = vadd.f32 %v4070, %v4111
        %v4119 = vadd.f32 %v4074, %v4111
        %v4120 = vadd.f32 %v4078, %v4111
        %v4121 = vadd.f32 %v4082, %v4111
        %v4122 = vadd.f32 %v4086, %v4111
        %v4123 = vadd.f32 %v4090, %v4111
        %v4124 = vadd.f32 %v4094, %v4111
        %v4125 = vadd.f32 %v4098, %v4111
        %v4126 = vadd.f32 %v4102, %v4111
        %v4127 = vadd.f32 %v4106, %v4111
        %v4128 = vmul.f32 %v4112, 0.2
        %v4129 = vmul.f32 %v4113, 0.2
        %v4130 = vmul.f32 %v4114, 0.2
        %v4131 = vmul.f32 %v4115, 0.2
        %v4132 = vmul.f32 %v4116, 0.2
        %v4133 = vmul.f32 %v4117, 0.2
        %v4134 = vmul.f32 %v4118, 0.2
        %v4135 = vmul.f32 %v4119, 0.2
        %v4136 = vmul.f32 %v4120, 0.2
        %v4137 = vmul.f32 %v4121, 0.2
        %v4138 = vmul.f32 %v4122, 0.2
        %v4139 = vmul.f32 %v4123, 0.2
        %v4140 = vmul.f32 %v4124, 0.2
        %v4141 = vmul.f32 %v4125, 0.2
        %v4142 = vmul.f32 %v4126, 0.2
        %v4143 = vmul.f32 %v4127, 0.2
        %v4144 = vmax.f32 %v4112, %v4128
        %v4145 = vmax.f32 %v4113, %v4129
        %v4146 = vmax.f32 %v4114, %v4130
        %v4147 = vmax.f32 %v4115, %v4131
        %v4148 = vmax.f32 %v4116, %v4132
        %v4149 = vmax.f32 %v4117, %v4133
        %v4150 = vmax.f32 %v4118, %v4134
        %v4151 = vmax.f32 %v4119, %v4135
        %v4152 = vmax.f32 %v4120, %v4136
        %v4153 = vmax.f32 %v4121, %v4137
        %v4154 = vmax.f32 %v4122, %v4138
        %v4155 = vmax.f32 %v4123, %v4139
        %v4156 = vmax.f32 %v4124, %v4140
        %v4157 = vmax.f32 %v4125, %v4141
        %v4158 = vmax.f32 %v4126, %v4142
        %v4159 = vmax.f32 %v4127, %v4143
        %s4160 = sld [smem:[#allocation7 + $0x14]]
        %v4161 = vstv %s4160
        %v4162 = vmul.f32 %v4161, %v4144
        %v4163 = vmul.f32 %v4161, %v4145
        %v4164 = vmul.f32 %v4161, %v4146
        %v4165 = vmul.f32 %v4161, %v4147
        %v4166 = vmul.f32 %v4161, %v4148
        %v4167 = vmul.f32 %v4161, %v4149
        %v4168 = vmul.f32 %v4161, %v4150
        %v4169 = vmul.f32 %v4161, %v4151
        %v4170 = vmul.f32 %v4161, %v4152
        %v4171 = vmul.f32 %v4161, %v4153
        %v4172 = vmul.f32 %v4161, %v4154
        %v4173 = vmul.f32 %v4161, %v4155
        %v4174 = vmul.f32 %v4161, %v4156
        %v4175 = vmul.f32 %v4161, %v4157
        %v4176 = vmul.f32 %v4161, %v4158
        %v4177 = vmul.f32 %v4161, %v4159
        %v4178 = vadd.f32 %v4027, %v4162
        %v4179 = vadd.f32 %v4028, %v4163
        %v4180 = vadd.f32 %v4029, %v4164
        %v4181 = vadd.f32 %v4030, %v4165
        %v4182 = vadd.f32 %v4031, %v4166
        %v4183 = vadd.f32 %v4032, %v4167
        %v4184 = vadd.f32 %v4033, %v4168
        %v4185 = vadd.f32 %v4034, %v4169
        %v4186 = vadd.f32 %v4035, %v4170
        %v4187 = vadd.f32 %v4036, %v4171
        %v4188 = vadd.f32 %v4037, %v4172
        %v4189 = vadd.f32 %v4038, %v4173
        %v4190 = vadd.f32 %v4039, %v4174
        %v4191 = vadd.f32 %v4040, %v4175
        %v4192 = vadd.f32 %v4041, %v4176
        %v4193 = vadd.f32 %v4042, %v4177
        %v4194 = vld [vmem:[#allocation3 + $0x15] sm:$0x1]
        %4195 = vset.pattern.permute.xlu0 21
        %4196 = vperm.xlu0 %4195, %v991
        %v4197 = vpop.permute.xlu0 %4196
        %4199 = vset.pattern.permute.xlu0 21
        %4200 = vperm.xlu0 %4199, %v992
        %v4201 = vpop.permute.xlu0 %4200
        %4203 = vset.pattern.permute.xlu0 21
        %4204 = vperm.xlu0 %4203, %v993
        %v4205 = vpop.permute.xlu0 %4204
        %4207 = vset.pattern.permute.xlu0 21
        %4208 = vperm.xlu0 %4207, %v994
        %v4209 = vpop.permute.xlu0 %4208
        %4211 = vset.pattern.permute.xlu0 21
        %4212 = vperm.xlu0 %4211, %v995
        %v4213 = vpop.permute.xlu0 %4212
        %4215 = vset.pattern.permute.xlu0 21
        %4216 = vperm.xlu0 %4215, %v996
        %v4217 = vpop.permute.xlu0 %4216
        %4219 = vset.pattern.permute.xlu0 21
        %4220 = vperm.xlu0 %4219, %v997
        %v4221 = vpop.permute.xlu0 %4220
        %4223 = vset.pattern.permute.xlu0 21
        %4224 = vperm.xlu0 %4223, %v998
        %v4225 = vpop.permute.xlu0 %4224
        %4227 = vset.pattern.permute.xlu0 21
        %4228 = vperm.xlu0 %4227, %v999
        %v4229 = vpop.permute.xlu0 %4228
        %4231 = vset.pattern.permute.xlu0 21
        %4232 = vperm.xlu0 %4231, %v1000
        %v4233 = vpop.permute.xlu0 %4232
        %4235 = vset.pattern.permute.xlu0 21
        %4236 = vperm.xlu0 %4235, %v1001
        %v4237 = vpop.permute.xlu0 %4236
        %4239 = vset.pattern.permute.xlu0 21
        %4240 = vperm.xlu0 %4239, %v1002
        %v4241 = vpop.permute.xlu0 %4240
        %4243 = vset.pattern.permute.xlu0 21
        %4244 = vperm.xlu0 %4243, %v1003
        %v4245 = vpop.permute.xlu0 %4244
        %4247 = vset.pattern.permute.xlu0 21
        %4248 = vperm.xlu0 %4247, %v1004
        %v4249 = vpop.permute.xlu0 %4248
        %4251 = vset.pattern.permute.xlu0 21
        %4252 = vperm.xlu0 %4251, %v1005
        %v4253 = vpop.permute.xlu0 %4252
        %4255 = vset.pattern.permute.xlu0 21
        %4256 = vperm.xlu0 %4255, %v1006
        %v4257 = vpop.permute.xlu0 %4256
        %v4259 = vlaneseq
        %v4260 = vshrl.u32 %v4259, 7
        %v4261 = vsub.s32 0, %v4260
        %v4262 = vrot.slane %v4194, %v4261
        %v4263 = vadd.f32 %v4197, %v4262
        %v4264 = vadd.f32 %v4201, %v4262
        %v4265 = vadd.f32 %v4205, %v4262
        %v4266 = vadd.f32 %v4209, %v4262
        %v4267 = vadd.f32 %v4213, %v4262
        %v4268 = vadd.f32 %v4217, %v4262
        %v4269 = vadd.f32 %v4221, %v4262
        %v4270 = vadd.f32 %v4225, %v4262
        %v4271 = vadd.f32 %v4229, %v4262
        %v4272 = vadd.f32 %v4233, %v4262
        %v4273 = vadd.f32 %v4237, %v4262
        %v4274 = vadd.f32 %v4241, %v4262
        %v4275 = vadd.f32 %v4245, %v4262
        %v4276 = vadd.f32 %v4249, %v4262
        %v4277 = vadd.f32 %v4253, %v4262
        %v4278 = vadd.f32 %v4257, %v4262
        %v4279 = vmul.f32 %v4263, 0.2
        %v4280 = vmul.f32 %v4264, 0.2
        %v4281 = vmul.f32 %v4265, 0.2
        %v4282 = vmul.f32 %v4266, 0.2
        %v4283 = vmul.f32 %v4267, 0.2
        %v4284 = vmul.f32 %v4268, 0.2
        %v4285 = vmul.f32 %v4269, 0.2
        %v4286 = vmul.f32 %v4270, 0.2
        %v4287 = vmul.f32 %v4271, 0.2
        %v4288 = vmul.f32 %v4272, 0.2
        %v4289 = vmul.f32 %v4273, 0.2
        %v4290 = vmul.f32 %v4274, 0.2
        %v4291 = vmul.f32 %v4275, 0.2
        %v4292 = vmul.f32 %v4276, 0.2
        %v4293 = vmul.f32 %v4277, 0.2
        %v4294 = vmul.f32 %v4278, 0.2
        %v4295 = vmax.f32 %v4263, %v4279
        %v4296 = vmax.f32 %v4264, %v4280
        %v4297 = vmax.f32 %v4265, %v4281
        %v4298 = vmax.f32 %v4266, %v4282
        %v4299 = vmax.f32 %v4267, %v4283
        %v4300 = vmax.f32 %v4268, %v4284
        %v4301 = vmax.f32 %v4269, %v4285
        %v4302 = vmax.f32 %v4270, %v4286
        %v4303 = vmax.f32 %v4271, %v4287
        %v4304 = vmax.f32 %v4272, %v4288
        %v4305 = vmax.f32 %v4273, %v4289
        %v4306 = vmax.f32 %v4274, %v4290
        %v4307 = vmax.f32 %v4275, %v4291
        %v4308 = vmax.f32 %v4276, %v4292
        %v4309 = vmax.f32 %v4277, %v4293
        %v4310 = vmax.f32 %v4278, %v4294
        %s4311 = sld [smem:[#allocation7 + $0x15]]
        %v4312 = vstv %s4311
        %v4313 = vmul.f32 %v4312, %v4295
        %v4314 = vmul.f32 %v4312, %v4296
        %v4315 = vmul.f32 %v4312, %v4297
        %v4316 = vmul.f32 %v4312, %v4298
        %v4317 = vmul.f32 %v4312, %v4299
        %v4318 = vmul.f32 %v4312, %v4300
        %v4319 = vmul.f32 %v4312, %v4301
        %v4320 = vmul.f32 %v4312, %v4302
        %v4321 = vmul.f32 %v4312, %v4303
        %v4322 = vmul.f32 %v4312, %v4304
        %v4323 = vmul.f32 %v4312, %v4305
        %v4324 = vmul.f32 %v4312, %v4306
        %v4325 = vmul.f32 %v4312, %v4307
        %v4326 = vmul.f32 %v4312, %v4308
        %v4327 = vmul.f32 %v4312, %v4309
        %v4328 = vmul.f32 %v4312, %v4310
        %v4329 = vadd.f32 %v4178, %v4313
        %v4330 = vadd.f32 %v4179, %v4314
        %v4331 = vadd.f32 %v4180, %v4315
        %v4332 = vadd.f32 %v4181, %v4316
        %v4333 = vadd.f32 %v4182, %v4317
        %v4334 = vadd.f32 %v4183, %v4318
        %v4335 = vadd.f32 %v4184, %v4319
        %v4336 = vadd.f32 %v4185, %v4320
        %v4337 = vadd.f32 %v4186, %v4321
        %v4338 = vadd.f32 %v4187, %v4322
        %v4339 = vadd.f32 %v4188, %v4323
        %v4340 = vadd.f32 %v4189, %v4324
        %v4341 = vadd.f32 %v4190, %v4325
        %v4342 = vadd.f32 %v4191, %v4326
        %v4343 = vadd.f32 %v4192, %v4327
        %v4344 = vadd.f32 %v4193, %v4328
        %v4345 = vld [vmem:[#allocation3 + $0x16] sm:$0x1]
        %4346 = vset.pattern.permute.xlu0 22
        %4347 = vperm.xlu0 %4346, %v991
        %v4348 = vpop.permute.xlu0 %4347
        %4350 = vset.pattern.permute.xlu0 22
        %4351 = vperm.xlu0 %4350, %v992
        %v4352 = vpop.permute.xlu0 %4351
        %4354 = vset.pattern.permute.xlu0 22
        %4355 = vperm.xlu0 %4354, %v993
        %v4356 = vpop.permute.xlu0 %4355
        %4358 = vset.pattern.permute.xlu0 22
        %4359 = vperm.xlu0 %4358, %v994
        %v4360 = vpop.permute.xlu0 %4359
        %4362 = vset.pattern.permute.xlu0 22
        %4363 = vperm.xlu0 %4362, %v995
        %v4364 = vpop.permute.xlu0 %4363
        %4366 = vset.pattern.permute.xlu0 22
        %4367 = vperm.xlu0 %4366, %v996
        %v4368 = vpop.permute.xlu0 %4367
        %4370 = vset.pattern.permute.xlu0 22
        %4371 = vperm.xlu0 %4370, %v997
        %v4372 = vpop.permute.xlu0 %4371
        %4374 = vset.pattern.permute.xlu0 22
        %4375 = vperm.xlu0 %4374, %v998
        %v4376 = vpop.permute.xlu0 %4375
        %4378 = vset.pattern.permute.xlu0 22
        %4379 = vperm.xlu0 %4378, %v999
        %v4380 = vpop.permute.xlu0 %4379
        %4382 = vset.pattern.permute.xlu0 22
        %4383 = vperm.xlu0 %4382, %v1000
        %v4384 = vpop.permute.xlu0 %4383
        %4386 = vset.pattern.permute.xlu0 22
        %4387 = vperm.xlu0 %4386, %v1001
        %v4388 = vpop.permute.xlu0 %4387
        %4390 = vset.pattern.permute.xlu0 22
        %4391 = vperm.xlu0 %4390, %v1002
        %v4392 = vpop.permute.xlu0 %4391
        %4394 = vset.pattern.permute.xlu0 22
        %4395 = vperm.xlu0 %4394, %v1003
        %v4396 = vpop.permute.xlu0 %4395
        %4398 = vset.pattern.permute.xlu0 22
        %4399 = vperm.xlu0 %4398, %v1004
        %v4400 = vpop.permute.xlu0 %4399
        %4402 = vset.pattern.permute.xlu0 22
        %4403 = vperm.xlu0 %4402, %v1005
        %v4404 = vpop.permute.xlu0 %4403
        %4406 = vset.pattern.permute.xlu0 22
        %4407 = vperm.xlu0 %4406, %v1006
        %v4408 = vpop.permute.xlu0 %4407
        %v4410 = vlaneseq
        %v4411 = vshrl.u32 %v4410, 7
        %v4412 = vsub.s32 0, %v4411
        %v4413 = vrot.slane %v4345, %v4412
        %v4414 = vadd.f32 %v4348, %v4413
        %v4415 = vadd.f32 %v4352, %v4413
        %v4416 = vadd.f32 %v4356, %v4413
        %v4417 = vadd.f32 %v4360, %v4413
        %v4418 = vadd.f32 %v4364, %v4413
        %v4419 = vadd.f32 %v4368, %v4413
        %v4420 = vadd.f32 %v4372, %v4413
        %v4421 = vadd.f32 %v4376, %v4413
        %v4422 = vadd.f32 %v4380, %v4413
        %v4423 = vadd.f32 %v4384, %v4413
        %v4424 = vadd.f32 %v4388, %v4413
        %v4425 = vadd.f32 %v4392, %v4413
        %v4426 = vadd.f32 %v4396, %v4413
        %v4427 = vadd.f32 %v4400, %v4413
        %v4428 = vadd.f32 %v4404, %v4413
        %v4429 = vadd.f32 %v4408, %v4413
        %v4430 = vmul.f32 %v4414, 0.2
        %v4431 = vmul.f32 %v4415, 0.2
        %v4432 = vmul.f32 %v4416, 0.2
        %v4433 = vmul.f32 %v4417, 0.2
        %v4434 = vmul.f32 %v4418, 0.2
        %v4435 = vmul.f32 %v4419, 0.2
        %v4436 = vmul.f32 %v4420, 0.2
        %v4437 = vmul.f32 %v4421, 0.2
        %v4438 = vmul.f32 %v4422, 0.2
        %v4439 = vmul.f32 %v4423, 0.2
        %v4440 = vmul.f32 %v4424, 0.2
        %v4441 = vmul.f32 %v4425, 0.2
        %v4442 = vmul.f32 %v4426, 0.2
        %v4443 = vmul.f32 %v4427, 0.2
        %v4444 = vmul.f32 %v4428, 0.2
        %v4445 = vmul.f32 %v4429, 0.2
        %v4446 = vmax.f32 %v4414, %v4430
        %v4447 = vmax.f32 %v4415, %v4431
        %v4448 = vmax.f32 %v4416, %v4432
        %v4449 = vmax.f32 %v4417, %v4433
        %v4450 = vmax.f32 %v4418, %v4434
        %v4451 = vmax.f32 %v4419, %v4435
        %v4452 = vmax.f32 %v4420, %v4436
        %v4453 = vmax.f32 %v4421, %v4437
        %v4454 = vmax.f32 %v4422, %v4438
        %v4455 = vmax.f32 %v4423, %v4439
        %v4456 = vmax.f32 %v4424, %v4440
        %v4457 = vmax.f32 %v4425, %v4441
        %v4458 = vmax.f32 %v4426, %v4442
        %v4459 = vmax.f32 %v4427, %v4443
        %v4460 = vmax.f32 %v4428, %v4444
        %v4461 = vmax.f32 %v4429, %v4445
        %s4462 = sld [smem:[#allocation7 + $0x16]]
        %v4463 = vstv %s4462
        %v4464 = vmul.f32 %v4463, %v4446
        %v4465 = vmul.f32 %v4463, %v4447
        %v4466 = vmul.f32 %v4463, %v4448
        %v4467 = vmul.f32 %v4463, %v4449
        %v4468 = vmul.f32 %v4463, %v4450
        %v4469 = vmul.f32 %v4463, %v4451
        %v4470 = vmul.f32 %v4463, %v4452
        %v4471 = vmul.f32 %v4463, %v4453
        %v4472 = vmul.f32 %v4463, %v4454
        %v4473 = vmul.f32 %v4463, %v4455
        %v4474 = vmul.f32 %v4463, %v4456
        %v4475 = vmul.f32 %v4463, %v4457
        %v4476 = vmul.f32 %v4463, %v4458
        %v4477 = vmul.f32 %v4463, %v4459
        %v4478 = vmul.f32 %v4463, %v4460
        %v4479 = vmul.f32 %v4463, %v4461
        %v4480 = vadd.f32 %v4329, %v4464
        %v4481 = vadd.f32 %v4330, %v4465
        %v4482 = vadd.f32 %v4331, %v4466
        %v4483 = vadd.f32 %v4332, %v4467
        %v4484 = vadd.f32 %v4333, %v4468
        %v4485 = vadd.f32 %v4334, %v4469
        %v4486 = vadd.f32 %v4335, %v4470
        %v4487 = vadd.f32 %v4336, %v4471
        %v4488 = vadd.f32 %v4337, %v4472
        %v4489 = vadd.f32 %v4338, %v4473
        %v4490 = vadd.f32 %v4339, %v4474
        %v4491 = vadd.f32 %v4340, %v4475
        %v4492 = vadd.f32 %v4341, %v4476
        %v4493 = vadd.f32 %v4342, %v4477
        %v4494 = vadd.f32 %v4343, %v4478
        %v4495 = vadd.f32 %v4344, %v4479
        %v4496 = vld [vmem:[#allocation3 + $0x17] sm:$0x1]
        %4497 = vset.pattern.permute.xlu0 23
        %4498 = vperm.xlu0 %4497, %v991
        %v4499 = vpop.permute.xlu0 %4498
        %4501 = vset.pattern.permute.xlu0 23
        %4502 = vperm.xlu0 %4501, %v992
        %v4503 = vpop.permute.xlu0 %4502
        %4505 = vset.pattern.permute.xlu0 23
        %4506 = vperm.xlu0 %4505, %v993
        %v4507 = vpop.permute.xlu0 %4506
        %4509 = vset.pattern.permute.xlu0 23
        %4510 = vperm.xlu0 %4509, %v994
        %v4511 = vpop.permute.xlu0 %4510
        %4513 = vset.pattern.permute.xlu0 23
        %4514 = vperm.xlu0 %4513, %v995
        %v4515 = vpop.permute.xlu0 %4514
        %4517 = vset.pattern.permute.xlu0 23
        %4518 = vperm.xlu0 %4517, %v996
        %v4519 = vpop.permute.xlu0 %4518
        %4521 = vset.pattern.permute.xlu0 23
        %4522 = vperm.xlu0 %4521, %v997
        %v4523 = vpop.permute.xlu0 %4522
        %4525 = vset.pattern.permute.xlu0 23
        %4526 = vperm.xlu0 %4525, %v998
        %v4527 = vpop.permute.xlu0 %4526
        %4529 = vset.pattern.permute.xlu0 23
        %4530 = vperm.xlu0 %4529, %v999
        %v4531 = vpop.permute.xlu0 %4530
        %4533 = vset.pattern.permute.xlu0 23
        %4534 = vperm.xlu0 %4533, %v1000
        %v4535 = vpop.permute.xlu0 %4534
        %4537 = vset.pattern.permute.xlu0 23
        %4538 = vperm.xlu0 %4537, %v1001
        %v4539 = vpop.permute.xlu0 %4538
        %4541 = vset.pattern.permute.xlu0 23
        %4542 = vperm.xlu0 %4541, %v1002
        %v4543 = vpop.permute.xlu0 %4542
        %4545 = vset.pattern.permute.xlu0 23
        %4546 = vperm.xlu0 %4545, %v1003
        %v4547 = vpop.permute.xlu0 %4546
        %4549 = vset.pattern.permute.xlu0 23
        %4550 = vperm.xlu0 %4549, %v1004
        %v4551 = vpop.permute.xlu0 %4550
        %4553 = vset.pattern.permute.xlu0 23
        %4554 = vperm.xlu0 %4553, %v1005
        %v4555 = vpop.permute.xlu0 %4554
        %4557 = vset.pattern.permute.xlu0 23
        %4558 = vperm.xlu0 %4557, %v1006
        %v4559 = vpop.permute.xlu0 %4558
        %v4561 = vlaneseq
        %v4562 = vshrl.u32 %v4561, 7
        %v4563 = vsub.s32 0, %v4562
        %v4564 = vrot.slane %v4496, %v4563
        %v4565 = vadd.f32 %v4499, %v4564
        %v4566 = vadd.f32 %v4503, %v4564
        %v4567 = vadd.f32 %v4507, %v4564
        %v4568 = vadd.f32 %v4511, %v4564
        %v4569 = vadd.f32 %v4515, %v4564
        %v4570 = vadd.f32 %v4519, %v4564
        %v4571 = vadd.f32 %v4523, %v4564
        %v4572 = vadd.f32 %v4527, %v4564
        %v4573 = vadd.f32 %v4531, %v4564
        %v4574 = vadd.f32 %v4535, %v4564
        %v4575 = vadd.f32 %v4539, %v4564
        %v4576 = vadd.f32 %v4543, %v4564
        %v4577 = vadd.f32 %v4547, %v4564
        %v4578 = vadd.f32 %v4551, %v4564
        %v4579 = vadd.f32 %v4555, %v4564
        %v4580 = vadd.f32 %v4559, %v4564
        %v4581 = vmul.f32 %v4565, 0.2
        %v4582 = vmul.f32 %v4566, 0.2
        %v4583 = vmul.f32 %v4567, 0.2
        %v4584 = vmul.f32 %v4568, 0.2
        %v4585 = vmul.f32 %v4569, 0.2
        %v4586 = vmul.f32 %v4570, 0.2
        %v4587 = vmul.f32 %v4571, 0.2
        %v4588 = vmul.f32 %v4572, 0.2
        %v4589 = vmul.f32 %v4573, 0.2
        %v4590 = vmul.f32 %v4574, 0.2
        %v4591 = vmul.f32 %v4575, 0.2
        %v4592 = vmul.f32 %v4576, 0.2
        %v4593 = vmul.f32 %v4577, 0.2
        %v4594 = vmul.f32 %v4578, 0.2
        %v4595 = vmul.f32 %v4579, 0.2
        %v4596 = vmul.f32 %v4580, 0.2
        %v4597 = vmax.f32 %v4565, %v4581
        %v4598 = vmax.f32 %v4566, %v4582
        %v4599 = vmax.f32 %v4567, %v4583
        %v4600 = vmax.f32 %v4568, %v4584
        %v4601 = vmax.f32 %v4569, %v4585
        %v4602 = vmax.f32 %v4570, %v4586
        %v4603 = vmax.f32 %v4571, %v4587
        %v4604 = vmax.f32 %v4572, %v4588
        %v4605 = vmax.f32 %v4573, %v4589
        %v4606 = vmax.f32 %v4574, %v4590
        %v4607 = vmax.f32 %v4575, %v4591
        %v4608 = vmax.f32 %v4576, %v4592
        %v4609 = vmax.f32 %v4577, %v4593
        %v4610 = vmax.f32 %v4578, %v4594
        %v4611 = vmax.f32 %v4579, %v4595
        %v4612 = vmax.f32 %v4580, %v4596
        %s4613 = sld [smem:[#allocation7 + $0x17]]
        %v4614 = vstv %s4613
        %v4615 = vmul.f32 %v4614, %v4597
        %v4616 = vmul.f32 %v4614, %v4598
        %v4617 = vmul.f32 %v4614, %v4599
        %v4618 = vmul.f32 %v4614, %v4600
        %v4619 = vmul.f32 %v4614, %v4601
        %v4620 = vmul.f32 %v4614, %v4602
        %v4621 = vmul.f32 %v4614, %v4603
        %v4622 = vmul.f32 %v4614, %v4604
        %v4623 = vmul.f32 %v4614, %v4605
        %v4624 = vmul.f32 %v4614, %v4606
        %v4625 = vmul.f32 %v4614, %v4607
        %v4626 = vmul.f32 %v4614, %v4608
        %v4627 = vmul.f32 %v4614, %v4609
        %v4628 = vmul.f32 %v4614, %v4610
        %v4629 = vmul.f32 %v4614, %v4611
        %v4630 = vmul.f32 %v4614, %v4612
        %v4631 = vadd.f32 %v4480, %v4615
        %v4632 = vadd.f32 %v4481, %v4616
        %v4633 = vadd.f32 %v4482, %v4617
        %v4634 = vadd.f32 %v4483, %v4618
        %v4635 = vadd.f32 %v4484, %v4619
        %v4636 = vadd.f32 %v4485, %v4620
        %v4637 = vadd.f32 %v4486, %v4621
        %v4638 = vadd.f32 %v4487, %v4622
        %v4639 = vadd.f32 %v4488, %v4623
        %v4640 = vadd.f32 %v4489, %v4624
        %v4641 = vadd.f32 %v4490, %v4625
        %v4642 = vadd.f32 %v4491, %v4626
        %v4643 = vadd.f32 %v4492, %v4627
        %v4644 = vadd.f32 %v4493, %v4628
        %v4645 = vadd.f32 %v4494, %v4629
        %v4646 = vadd.f32 %v4495, %v4630
        %v4647 = vld [vmem:[#allocation3 + $0x18] sm:$0x1]
        %4648 = vset.pattern.permute.xlu0 24
        %4649 = vperm.xlu0 %4648, %v991
        %v4650 = vpop.permute.xlu0 %4649
        %4652 = vset.pattern.permute.xlu0 24
        %4653 = vperm.xlu0 %4652, %v992
        %v4654 = vpop.permute.xlu0 %4653
        %4656 = vset.pattern.permute.xlu0 24
        %4657 = vperm.xlu0 %4656, %v993
        %v4658 = vpop.permute.xlu0 %4657
        %4660 = vset.pattern.permute.xlu0 24
        %4661 = vperm.xlu0 %4660, %v994
        %v4662 = vpop.permute.xlu0 %4661
        %4664 = vset.pattern.permute.xlu0 24
        %4665 = vperm.xlu0 %4664, %v995
        %v4666 = vpop.permute.xlu0 %4665
        %4668 = vset.pattern.permute.xlu0 24
        %4669 = vperm.xlu0 %4668, %v996
        %v4670 = vpop.permute.xlu0 %4669
        %4672 = vset.pattern.permute.xlu0 24
        %4673 = vperm.xlu0 %4672, %v997
        %v4674 = vpop.permute.xlu0 %4673
        %4676 = vset.pattern.permute.xlu0 24
        %4677 = vperm.xlu0 %4676, %v998
        %v4678 = vpop.permute.xlu0 %4677
        %4680 = vset.pattern.permute.xlu0 24
        %4681 = vperm.xlu0 %4680, %v999
        %v4682 = vpop.permute.xlu0 %4681
        %4684 = vset.pattern.permute.xlu0 24
        %4685 = vperm.xlu0 %4684, %v1000
        %v4686 = vpop.permute.xlu0 %4685
        %4688 = vset.pattern.permute.xlu0 24
        %4689 = vperm.xlu0 %4688, %v1001
        %v4690 = vpop.permute.xlu0 %4689
        %4692 = vset.pattern.permute.xlu0 24
        %4693 = vperm.xlu0 %4692, %v1002
        %v4694 = vpop.permute.xlu0 %4693
        %4696 = vset.pattern.permute.xlu0 24
        %4697 = vperm.xlu0 %4696, %v1003
        %v4698 = vpop.permute.xlu0 %4697
        %4700 = vset.pattern.permute.xlu0 24
        %4701 = vperm.xlu0 %4700, %v1004
        %v4702 = vpop.permute.xlu0 %4701
        %4704 = vset.pattern.permute.xlu0 24
        %4705 = vperm.xlu0 %4704, %v1005
        %v4706 = vpop.permute.xlu0 %4705
        %4708 = vset.pattern.permute.xlu0 24
        %4709 = vperm.xlu0 %4708, %v1006
        %v4710 = vpop.permute.xlu0 %4709
        %v4712 = vlaneseq
        %v4713 = vshrl.u32 %v4712, 7
        %v4714 = vsub.s32 0, %v4713
        %v4715 = vrot.slane %v4647, %v4714
        %v4716 = vadd.f32 %v4650, %v4715
        %v4717 = vadd.f32 %v4654, %v4715
        %v4718 = vadd.f32 %v4658, %v4715
        %v4719 = vadd.f32 %v4662, %v4715
        %v4720 = vadd.f32 %v4666, %v4715
        %v4721 = vadd.f32 %v4670, %v4715
        %v4722 = vadd.f32 %v4674, %v4715
        %v4723 = vadd.f32 %v4678, %v4715
        %v4724 = vadd.f32 %v4682, %v4715
        %v4725 = vadd.f32 %v4686, %v4715
        %v4726 = vadd.f32 %v4690, %v4715
        %v4727 = vadd.f32 %v4694, %v4715
        %v4728 = vadd.f32 %v4698, %v4715
        %v4729 = vadd.f32 %v4702, %v4715
        %v4730 = vadd.f32 %v4706, %v4715
        %v4731 = vadd.f32 %v4710, %v4715
        %v4732 = vmul.f32 %v4716, 0.2
        %v4733 = vmul.f32 %v4717, 0.2
        %v4734 = vmul.f32 %v4718, 0.2
        %v4735 = vmul.f32 %v4719, 0.2
        %v4736 = vmul.f32 %v4720, 0.2
        %v4737 = vmul.f32 %v4721, 0.2
        %v4738 = vmul.f32 %v4722, 0.2
        %v4739 = vmul.f32 %v4723, 0.2
        %v4740 = vmul.f32 %v4724, 0.2
        %v4741 = vmul.f32 %v4725, 0.2
        %v4742 = vmul.f32 %v4726, 0.2
        %v4743 = vmul.f32 %v4727, 0.2
        %v4744 = vmul.f32 %v4728, 0.2
        %v4745 = vmul.f32 %v4729, 0.2
        %v4746 = vmul.f32 %v4730, 0.2
        %v4747 = vmul.f32 %v4731, 0.2
        %v4748 = vmax.f32 %v4716, %v4732
        %v4749 = vmax.f32 %v4717, %v4733
        %v4750 = vmax.f32 %v4718, %v4734
        %v4751 = vmax.f32 %v4719, %v4735
        %v4752 = vmax.f32 %v4720, %v4736
        %v4753 = vmax.f32 %v4721, %v4737
        %v4754 = vmax.f32 %v4722, %v4738
        %v4755 = vmax.f32 %v4723, %v4739
        %v4756 = vmax.f32 %v4724, %v4740
        %v4757 = vmax.f32 %v4725, %v4741
        %v4758 = vmax.f32 %v4726, %v4742
        %v4759 = vmax.f32 %v4727, %v4743
        %v4760 = vmax.f32 %v4728, %v4744
        %v4761 = vmax.f32 %v4729, %v4745
        %v4762 = vmax.f32 %v4730, %v4746
        %v4763 = vmax.f32 %v4731, %v4747
        %s4764 = sld [smem:[#allocation7 + $0x18]]
        %v4765 = vstv %s4764
        %v4766 = vmul.f32 %v4765, %v4748
        %v4767 = vmul.f32 %v4765, %v4749
        %v4768 = vmul.f32 %v4765, %v4750
        %v4769 = vmul.f32 %v4765, %v4751
        %v4770 = vmul.f32 %v4765, %v4752
        %v4771 = vmul.f32 %v4765, %v4753
        %v4772 = vmul.f32 %v4765, %v4754
        %v4773 = vmul.f32 %v4765, %v4755
        %v4774 = vmul.f32 %v4765, %v4756
        %v4775 = vmul.f32 %v4765, %v4757
        %v4776 = vmul.f32 %v4765, %v4758
        %v4777 = vmul.f32 %v4765, %v4759
        %v4778 = vmul.f32 %v4765, %v4760
        %v4779 = vmul.f32 %v4765, %v4761
        %v4780 = vmul.f32 %v4765, %v4762
        %v4781 = vmul.f32 %v4765, %v4763
        %v4782 = vadd.f32 %v4631, %v4766
        %v4783 = vadd.f32 %v4632, %v4767
        %v4784 = vadd.f32 %v4633, %v4768
        %v4785 = vadd.f32 %v4634, %v4769
        %v4786 = vadd.f32 %v4635, %v4770
        %v4787 = vadd.f32 %v4636, %v4771
        %v4788 = vadd.f32 %v4637, %v4772
        %v4789 = vadd.f32 %v4638, %v4773
        %v4790 = vadd.f32 %v4639, %v4774
        %v4791 = vadd.f32 %v4640, %v4775
        %v4792 = vadd.f32 %v4641, %v4776
        %v4793 = vadd.f32 %v4642, %v4777
        %v4794 = vadd.f32 %v4643, %v4778
        %v4795 = vadd.f32 %v4644, %v4779
        %v4796 = vadd.f32 %v4645, %v4780
        %v4797 = vadd.f32 %v4646, %v4781
        %v4798 = vld [vmem:[#allocation3 + $0x19] sm:$0x1]
        %4799 = vset.pattern.permute.xlu0 25
        %4800 = vperm.xlu0 %4799, %v991
        %v4801 = vpop.permute.xlu0 %4800
        %4803 = vset.pattern.permute.xlu0 25
        %4804 = vperm.xlu0 %4803, %v992
        %v4805 = vpop.permute.xlu0 %4804
        %4807 = vset.pattern.permute.xlu0 25
        %4808 = vperm.xlu0 %4807, %v993
        %v4809 = vpop.permute.xlu0 %4808
        %4811 = vset.pattern.permute.xlu0 25
        %4812 = vperm.xlu0 %4811, %v994
        %v4813 = vpop.permute.xlu0 %4812
        %4815 = vset.pattern.permute.xlu0 25
        %4816 = vperm.xlu0 %4815, %v995
        %v4817 = vpop.permute.xlu0 %4816
        %4819 = vset.pattern.permute.xlu0 25
        %4820 = vperm.xlu0 %4819, %v996
        %v4821 = vpop.permute.xlu0 %4820
        %4823 = vset.pattern.permute.xlu0 25
        %4824 = vperm.xlu0 %4823, %v997
        %v4825 = vpop.permute.xlu0 %4824
        %4827 = vset.pattern.permute.xlu0 25
        %4828 = vperm.xlu0 %4827, %v998
        %v4829 = vpop.permute.xlu0 %4828
        %4831 = vset.pattern.permute.xlu0 25
        %4832 = vperm.xlu0 %4831, %v999
        %v4833 = vpop.permute.xlu0 %4832
        %4835 = vset.pattern.permute.xlu0 25
        %4836 = vperm.xlu0 %4835, %v1000
        %v4837 = vpop.permute.xlu0 %4836
        %4839 = vset.pattern.permute.xlu0 25
        %4840 = vperm.xlu0 %4839, %v1001
        %v4841 = vpop.permute.xlu0 %4840
        %4843 = vset.pattern.permute.xlu0 25
        %4844 = vperm.xlu0 %4843, %v1002
        %v4845 = vpop.permute.xlu0 %4844
        %4847 = vset.pattern.permute.xlu0 25
        %4848 = vperm.xlu0 %4847, %v1003
        %v4849 = vpop.permute.xlu0 %4848
        %4851 = vset.pattern.permute.xlu0 25
        %4852 = vperm.xlu0 %4851, %v1004
        %v4853 = vpop.permute.xlu0 %4852
        %4855 = vset.pattern.permute.xlu0 25
        %4856 = vperm.xlu0 %4855, %v1005
        %v4857 = vpop.permute.xlu0 %4856
        %4859 = vset.pattern.permute.xlu0 25
        %4860 = vperm.xlu0 %4859, %v1006
        %v4861 = vpop.permute.xlu0 %4860
        %v4863 = vlaneseq
        %v4864 = vshrl.u32 %v4863, 7
        %v4865 = vsub.s32 0, %v4864
        %v4866 = vrot.slane %v4798, %v4865
        %v4867 = vadd.f32 %v4801, %v4866
        %v4868 = vadd.f32 %v4805, %v4866
        %v4869 = vadd.f32 %v4809, %v4866
        %v4870 = vadd.f32 %v4813, %v4866
        %v4871 = vadd.f32 %v4817, %v4866
        %v4872 = vadd.f32 %v4821, %v4866
        %v4873 = vadd.f32 %v4825, %v4866
        %v4874 = vadd.f32 %v4829, %v4866
        %v4875 = vadd.f32 %v4833, %v4866
        %v4876 = vadd.f32 %v4837, %v4866
        %v4877 = vadd.f32 %v4841, %v4866
        %v4878 = vadd.f32 %v4845, %v4866
        %v4879 = vadd.f32 %v4849, %v4866
        %v4880 = vadd.f32 %v4853, %v4866
        %v4881 = vadd.f32 %v4857, %v4866
        %v4882 = vadd.f32 %v4861, %v4866
        %v4883 = vmul.f32 %v4867, 0.2
        %v4884 = vmul.f32 %v4868, 0.2
        %v4885 = vmul.f32 %v4869, 0.2
        %v4886 = vmul.f32 %v4870, 0.2
        %v4887 = vmul.f32 %v4871, 0.2
        %v4888 = vmul.f32 %v4872, 0.2
        %v4889 = vmul.f32 %v4873, 0.2
        %v4890 = vmul.f32 %v4874, 0.2
        %v4891 = vmul.f32 %v4875, 0.2
        %v4892 = vmul.f32 %v4876, 0.2
        %v4893 = vmul.f32 %v4877, 0.2
        %v4894 = vmul.f32 %v4878, 0.2
        %v4895 = vmul.f32 %v4879, 0.2
        %v4896 = vmul.f32 %v4880, 0.2
        %v4897 = vmul.f32 %v4881, 0.2
        %v4898 = vmul.f32 %v4882, 0.2
        %v4899 = vmax.f32 %v4867, %v4883
        %v4900 = vmax.f32 %v4868, %v4884
        %v4901 = vmax.f32 %v4869, %v4885
        %v4902 = vmax.f32 %v4870, %v4886
        %v4903 = vmax.f32 %v4871, %v4887
        %v4904 = vmax.f32 %v4872, %v4888
        %v4905 = vmax.f32 %v4873, %v4889
        %v4906 = vmax.f32 %v4874, %v4890
        %v4907 = vmax.f32 %v4875, %v4891
        %v4908 = vmax.f32 %v4876, %v4892
        %v4909 = vmax.f32 %v4877, %v4893
        %v4910 = vmax.f32 %v4878, %v4894
        %v4911 = vmax.f32 %v4879, %v4895
        %v4912 = vmax.f32 %v4880, %v4896
        %v4913 = vmax.f32 %v4881, %v4897
        %v4914 = vmax.f32 %v4882, %v4898
        %s4915 = sld [smem:[#allocation7 + $0x19]]
        %v4916 = vstv %s4915
        %v4917 = vmul.f32 %v4916, %v4899
        %v4918 = vmul.f32 %v4916, %v4900
        %v4919 = vmul.f32 %v4916, %v4901
        %v4920 = vmul.f32 %v4916, %v4902
        %v4921 = vmul.f32 %v4916, %v4903
        %v4922 = vmul.f32 %v4916, %v4904
        %v4923 = vmul.f32 %v4916, %v4905
        %v4924 = vmul.f32 %v4916, %v4906
        %v4925 = vmul.f32 %v4916, %v4907
        %v4926 = vmul.f32 %v4916, %v4908
        %v4927 = vmul.f32 %v4916, %v4909
        %v4928 = vmul.f32 %v4916, %v4910
        %v4929 = vmul.f32 %v4916, %v4911
        %v4930 = vmul.f32 %v4916, %v4912
        %v4931 = vmul.f32 %v4916, %v4913
        %v4932 = vmul.f32 %v4916, %v4914
        %v4933 = vadd.f32 %v4782, %v4917
        %v4934 = vadd.f32 %v4783, %v4918
        %v4935 = vadd.f32 %v4784, %v4919
        %v4936 = vadd.f32 %v4785, %v4920
        %v4937 = vadd.f32 %v4786, %v4921
        %v4938 = vadd.f32 %v4787, %v4922
        %v4939 = vadd.f32 %v4788, %v4923
        %v4940 = vadd.f32 %v4789, %v4924
        %v4941 = vadd.f32 %v4790, %v4925
        %v4942 = vadd.f32 %v4791, %v4926
        %v4943 = vadd.f32 %v4792, %v4927
        %v4944 = vadd.f32 %v4793, %v4928
        %v4945 = vadd.f32 %v4794, %v4929
        %v4946 = vadd.f32 %v4795, %v4930
        %v4947 = vadd.f32 %v4796, %v4931
        %v4948 = vadd.f32 %v4797, %v4932
        %v4949 = vld [vmem:[#allocation3 + $0x1a] sm:$0x1]
        %4950 = vset.pattern.permute.xlu0 26
        %4951 = vperm.xlu0 %4950, %v991
        %v4952 = vpop.permute.xlu0 %4951
        %4954 = vset.pattern.permute.xlu0 26
        %4955 = vperm.xlu0 %4954, %v992
        %v4956 = vpop.permute.xlu0 %4955
        %4958 = vset.pattern.permute.xlu0 26
        %4959 = vperm.xlu0 %4958, %v993
        %v4960 = vpop.permute.xlu0 %4959
        %4962 = vset.pattern.permute.xlu0 26
        %4963 = vperm.xlu0 %4962, %v994
        %v4964 = vpop.permute.xlu0 %4963
        %4966 = vset.pattern.permute.xlu0 26
        %4967 = vperm.xlu0 %4966, %v995
        %v4968 = vpop.permute.xlu0 %4967
        %4970 = vset.pattern.permute.xlu0 26
        %4971 = vperm.xlu0 %4970, %v996
        %v4972 = vpop.permute.xlu0 %4971
        %4974 = vset.pattern.permute.xlu0 26
        %4975 = vperm.xlu0 %4974, %v997
        %v4976 = vpop.permute.xlu0 %4975
        %4978 = vset.pattern.permute.xlu0 26
        %4979 = vperm.xlu0 %4978, %v998
        %v4980 = vpop.permute.xlu0 %4979
        %4982 = vset.pattern.permute.xlu0 26
        %4983 = vperm.xlu0 %4982, %v999
        %v4984 = vpop.permute.xlu0 %4983
        %4986 = vset.pattern.permute.xlu0 26
        %4987 = vperm.xlu0 %4986, %v1000
        %v4988 = vpop.permute.xlu0 %4987
        %4990 = vset.pattern.permute.xlu0 26
        %4991 = vperm.xlu0 %4990, %v1001
        %v4992 = vpop.permute.xlu0 %4991
        %4994 = vset.pattern.permute.xlu0 26
        %4995 = vperm.xlu0 %4994, %v1002
        %v4996 = vpop.permute.xlu0 %4995
        %4998 = vset.pattern.permute.xlu0 26
        %4999 = vperm.xlu0 %4998, %v1003
        %v5000 = vpop.permute.xlu0 %4999
        %5002 = vset.pattern.permute.xlu0 26
        %5003 = vperm.xlu0 %5002, %v1004
        %v5004 = vpop.permute.xlu0 %5003
        %5006 = vset.pattern.permute.xlu0 26
        %5007 = vperm.xlu0 %5006, %v1005
        %v5008 = vpop.permute.xlu0 %5007
        %5010 = vset.pattern.permute.xlu0 26
        %5011 = vperm.xlu0 %5010, %v1006
        %v5012 = vpop.permute.xlu0 %5011
        %v5014 = vlaneseq
        %v5015 = vshrl.u32 %v5014, 7
        %v5016 = vsub.s32 0, %v5015
        %v5017 = vrot.slane %v4949, %v5016
        %v5018 = vadd.f32 %v4952, %v5017
        %v5019 = vadd.f32 %v4956, %v5017
        %v5020 = vadd.f32 %v4960, %v5017
        %v5021 = vadd.f32 %v4964, %v5017
        %v5022 = vadd.f32 %v4968, %v5017
        %v5023 = vadd.f32 %v4972, %v5017
        %v5024 = vadd.f32 %v4976, %v5017
        %v5025 = vadd.f32 %v4980, %v5017
        %v5026 = vadd.f32 %v4984, %v5017
        %v5027 = vadd.f32 %v4988, %v5017
        %v5028 = vadd.f32 %v4992, %v5017
        %v5029 = vadd.f32 %v4996, %v5017
        %v5030 = vadd.f32 %v5000, %v5017
        %v5031 = vadd.f32 %v5004, %v5017
        %v5032 = vadd.f32 %v5008, %v5017
        %v5033 = vadd.f32 %v5012, %v5017
        %v5034 = vmul.f32 %v5018, 0.2
        %v5035 = vmul.f32 %v5019, 0.2
        %v5036 = vmul.f32 %v5020, 0.2
        %v5037 = vmul.f32 %v5021, 0.2
        %v5038 = vmul.f32 %v5022, 0.2
        %v5039 = vmul.f32 %v5023, 0.2
        %v5040 = vmul.f32 %v5024, 0.2
        %v5041 = vmul.f32 %v5025, 0.2
        %v5042 = vmul.f32 %v5026, 0.2
        %v5043 = vmul.f32 %v5027, 0.2
        %v5044 = vmul.f32 %v5028, 0.2
        %v5045 = vmul.f32 %v5029, 0.2
        %v5046 = vmul.f32 %v5030, 0.2
        %v5047 = vmul.f32 %v5031, 0.2
        %v5048 = vmul.f32 %v5032, 0.2
        %v5049 = vmul.f32 %v5033, 0.2
        %v5050 = vmax.f32 %v5018, %v5034
        %v5051 = vmax.f32 %v5019, %v5035
        %v5052 = vmax.f32 %v5020, %v5036
        %v5053 = vmax.f32 %v5021, %v5037
        %v5054 = vmax.f32 %v5022, %v5038
        %v5055 = vmax.f32 %v5023, %v5039
        %v5056 = vmax.f32 %v5024, %v5040
        %v5057 = vmax.f32 %v5025, %v5041
        %v5058 = vmax.f32 %v5026, %v5042
        %v5059 = vmax.f32 %v5027, %v5043
        %v5060 = vmax.f32 %v5028, %v5044
        %v5061 = vmax.f32 %v5029, %v5045
        %v5062 = vmax.f32 %v5030, %v5046
        %v5063 = vmax.f32 %v5031, %v5047
        %v5064 = vmax.f32 %v5032, %v5048
        %v5065 = vmax.f32 %v5033, %v5049
        %s5066 = sld [smem:[#allocation7 + $0x1a]]
        %v5067 = vstv %s5066
        %v5068 = vmul.f32 %v5067, %v5050
        %v5069 = vmul.f32 %v5067, %v5051
        %v5070 = vmul.f32 %v5067, %v5052
        %v5071 = vmul.f32 %v5067, %v5053
        %v5072 = vmul.f32 %v5067, %v5054
        %v5073 = vmul.f32 %v5067, %v5055
        %v5074 = vmul.f32 %v5067, %v5056
        %v5075 = vmul.f32 %v5067, %v5057
        %v5076 = vmul.f32 %v5067, %v5058
        %v5077 = vmul.f32 %v5067, %v5059
        %v5078 = vmul.f32 %v5067, %v5060
        %v5079 = vmul.f32 %v5067, %v5061
        %v5080 = vmul.f32 %v5067, %v5062
        %v5081 = vmul.f32 %v5067, %v5063
        %v5082 = vmul.f32 %v5067, %v5064
        %v5083 = vmul.f32 %v5067, %v5065
        %v5084 = vadd.f32 %v4933, %v5068
        %v5085 = vadd.f32 %v4934, %v5069
        %v5086 = vadd.f32 %v4935, %v5070
        %v5087 = vadd.f32 %v4936, %v5071
        %v5088 = vadd.f32 %v4937, %v5072
        %v5089 = vadd.f32 %v4938, %v5073
        %v5090 = vadd.f32 %v4939, %v5074
        %v5091 = vadd.f32 %v4940, %v5075
        %v5092 = vadd.f32 %v4941, %v5076
        %v5093 = vadd.f32 %v4942, %v5077
        %v5094 = vadd.f32 %v4943, %v5078
        %v5095 = vadd.f32 %v4944, %v5079
        %v5096 = vadd.f32 %v4945, %v5080
        %v5097 = vadd.f32 %v4946, %v5081
        %v5098 = vadd.f32 %v4947, %v5082
        %v5099 = vadd.f32 %v4948, %v5083
        %v5100 = vld [vmem:[#allocation3 + $0x1b] sm:$0x1]
        %5101 = vset.pattern.permute.xlu0 27
        %5102 = vperm.xlu0 %5101, %v991
        %v5103 = vpop.permute.xlu0 %5102
        %5105 = vset.pattern.permute.xlu0 27
        %5106 = vperm.xlu0 %5105, %v992
        %v5107 = vpop.permute.xlu0 %5106
        %5109 = vset.pattern.permute.xlu0 27
        %5110 = vperm.xlu0 %5109, %v993
        %v5111 = vpop.permute.xlu0 %5110
        %5113 = vset.pattern.permute.xlu0 27
        %5114 = vperm.xlu0 %5113, %v994
        %v5115 = vpop.permute.xlu0 %5114
        %5117 = vset.pattern.permute.xlu0 27
        %5118 = vperm.xlu0 %5117, %v995
        %v5119 = vpop.permute.xlu0 %5118
        %5121 = vset.pattern.permute.xlu0 27
        %5122 = vperm.xlu0 %5121, %v996
        %v5123 = vpop.permute.xlu0 %5122
        %5125 = vset.pattern.permute.xlu0 27
        %5126 = vperm.xlu0 %5125, %v997
        %v5127 = vpop.permute.xlu0 %5126
        %5129 = vset.pattern.permute.xlu0 27
        %5130 = vperm.xlu0 %5129, %v998
        %v5131 = vpop.permute.xlu0 %5130
        %5133 = vset.pattern.permute.xlu0 27
        %5134 = vperm.xlu0 %5133, %v999
        %v5135 = vpop.permute.xlu0 %5134
        %5137 = vset.pattern.permute.xlu0 27
        %5138 = vperm.xlu0 %5137, %v1000
        %v5139 = vpop.permute.xlu0 %5138
        %5141 = vset.pattern.permute.xlu0 27
        %5142 = vperm.xlu0 %5141, %v1001
        %v5143 = vpop.permute.xlu0 %5142
        %5145 = vset.pattern.permute.xlu0 27
        %5146 = vperm.xlu0 %5145, %v1002
        %v5147 = vpop.permute.xlu0 %5146
        %5149 = vset.pattern.permute.xlu0 27
        %5150 = vperm.xlu0 %5149, %v1003
        %v5151 = vpop.permute.xlu0 %5150
        %5153 = vset.pattern.permute.xlu0 27
        %5154 = vperm.xlu0 %5153, %v1004
        %v5155 = vpop.permute.xlu0 %5154
        %5157 = vset.pattern.permute.xlu0 27
        %5158 = vperm.xlu0 %5157, %v1005
        %v5159 = vpop.permute.xlu0 %5158
        %5161 = vset.pattern.permute.xlu0 27
        %5162 = vperm.xlu0 %5161, %v1006
        %v5163 = vpop.permute.xlu0 %5162
        %v5165 = vlaneseq
        %v5166 = vshrl.u32 %v5165, 7
        %v5167 = vsub.s32 0, %v5166
        %v5168 = vrot.slane %v5100, %v5167
        %v5169 = vadd.f32 %v5103, %v5168
        %v5170 = vadd.f32 %v5107, %v5168
        %v5171 = vadd.f32 %v5111, %v5168
        %v5172 = vadd.f32 %v5115, %v5168
        %v5173 = vadd.f32 %v5119, %v5168
        %v5174 = vadd.f32 %v5123, %v5168
        %v5175 = vadd.f32 %v5127, %v5168
        %v5176 = vadd.f32 %v5131, %v5168
        %v5177 = vadd.f32 %v5135, %v5168
        %v5178 = vadd.f32 %v5139, %v5168
        %v5179 = vadd.f32 %v5143, %v5168
        %v5180 = vadd.f32 %v5147, %v5168
        %v5181 = vadd.f32 %v5151, %v5168
        %v5182 = vadd.f32 %v5155, %v5168
        %v5183 = vadd.f32 %v5159, %v5168
        %v5184 = vadd.f32 %v5163, %v5168
        %v5185 = vmul.f32 %v5169, 0.2
        %v5186 = vmul.f32 %v5170, 0.2
        %v5187 = vmul.f32 %v5171, 0.2
        %v5188 = vmul.f32 %v5172, 0.2
        %v5189 = vmul.f32 %v5173, 0.2
        %v5190 = vmul.f32 %v5174, 0.2
        %v5191 = vmul.f32 %v5175, 0.2
        %v5192 = vmul.f32 %v5176, 0.2
        %v5193 = vmul.f32 %v5177, 0.2
        %v5194 = vmul.f32 %v5178, 0.2
        %v5195 = vmul.f32 %v5179, 0.2
        %v5196 = vmul.f32 %v5180, 0.2
        %v5197 = vmul.f32 %v5181, 0.2
        %v5198 = vmul.f32 %v5182, 0.2
        %v5199 = vmul.f32 %v5183, 0.2
        %v5200 = vmul.f32 %v5184, 0.2
        %v5201 = vmax.f32 %v5169, %v5185
        %v5202 = vmax.f32 %v5170, %v5186
        %v5203 = vmax.f32 %v5171, %v5187
        %v5204 = vmax.f32 %v5172, %v5188
        %v5205 = vmax.f32 %v5173, %v5189
        %v5206 = vmax.f32 %v5174, %v5190
        %v5207 = vmax.f32 %v5175, %v5191
        %v5208 = vmax.f32 %v5176, %v5192
        %v5209 = vmax.f32 %v5177, %v5193
        %v5210 = vmax.f32 %v5178, %v5194
        %v5211 = vmax.f32 %v5179, %v5195
        %v5212 = vmax.f32 %v5180, %v5196
        %v5213 = vmax.f32 %v5181, %v5197
        %v5214 = vmax.f32 %v5182, %v5198
        %v5215 = vmax.f32 %v5183, %v5199
        %v5216 = vmax.f32 %v5184, %v5200
        %s5217 = sld [smem:[#allocation7 + $0x1b]]
        %v5218 = vstv %s5217
        %v5219 = vmul.f32 %v5218, %v5201
        %v5220 = vmul.f32 %v5218, %v5202
        %v5221 = vmul.f32 %v5218, %v5203
        %v5222 = vmul.f32 %v5218, %v5204
        %v5223 = vmul.f32 %v5218, %v5205
        %v5224 = vmul.f32 %v5218, %v5206
        %v5225 = vmul.f32 %v5218, %v5207
        %v5226 = vmul.f32 %v5218, %v5208
        %v5227 = vmul.f32 %v5218, %v5209
        %v5228 = vmul.f32 %v5218, %v5210
        %v5229 = vmul.f32 %v5218, %v5211
        %v5230 = vmul.f32 %v5218, %v5212
        %v5231 = vmul.f32 %v5218, %v5213
        %v5232 = vmul.f32 %v5218, %v5214
        %v5233 = vmul.f32 %v5218, %v5215
        %v5234 = vmul.f32 %v5218, %v5216
        %v5235 = vadd.f32 %v5084, %v5219
        %v5236 = vadd.f32 %v5085, %v5220
        %v5237 = vadd.f32 %v5086, %v5221
        %v5238 = vadd.f32 %v5087, %v5222
        %v5239 = vadd.f32 %v5088, %v5223
        %v5240 = vadd.f32 %v5089, %v5224
        %v5241 = vadd.f32 %v5090, %v5225
        %v5242 = vadd.f32 %v5091, %v5226
        %v5243 = vadd.f32 %v5092, %v5227
        %v5244 = vadd.f32 %v5093, %v5228
        %v5245 = vadd.f32 %v5094, %v5229
        %v5246 = vadd.f32 %v5095, %v5230
        %v5247 = vadd.f32 %v5096, %v5231
        %v5248 = vadd.f32 %v5097, %v5232
        %v5249 = vadd.f32 %v5098, %v5233
        %v5250 = vadd.f32 %v5099, %v5234
        %v5251 = vld [vmem:[#allocation3 + $0x1c] sm:$0x1]
        %5252 = vset.pattern.permute.xlu0 28
        %5253 = vperm.xlu0 %5252, %v991
        %v5254 = vpop.permute.xlu0 %5253
        %5256 = vset.pattern.permute.xlu0 28
        %5257 = vperm.xlu0 %5256, %v992
        %v5258 = vpop.permute.xlu0 %5257
        %5260 = vset.pattern.permute.xlu0 28
        %5261 = vperm.xlu0 %5260, %v993
        %v5262 = vpop.permute.xlu0 %5261
        %5264 = vset.pattern.permute.xlu0 28
        %5265 = vperm.xlu0 %5264, %v994
        %v5266 = vpop.permute.xlu0 %5265
        %5268 = vset.pattern.permute.xlu0 28
        %5269 = vperm.xlu0 %5268, %v995
        %v5270 = vpop.permute.xlu0 %5269
        %5272 = vset.pattern.permute.xlu0 28
        %5273 = vperm.xlu0 %5272, %v996
        %v5274 = vpop.permute.xlu0 %5273
        %5276 = vset.pattern.permute.xlu0 28
        %5277 = vperm.xlu0 %5276, %v997
        %v5278 = vpop.permute.xlu0 %5277
        %5280 = vset.pattern.permute.xlu0 28
        %5281 = vperm.xlu0 %5280, %v998
        %v5282 = vpop.permute.xlu0 %5281
        %5284 = vset.pattern.permute.xlu0 28
        %5285 = vperm.xlu0 %5284, %v999
        %v5286 = vpop.permute.xlu0 %5285
        %5288 = vset.pattern.permute.xlu0 28
        %5289 = vperm.xlu0 %5288, %v1000
        %v5290 = vpop.permute.xlu0 %5289
        %5292 = vset.pattern.permute.xlu0 28
        %5293 = vperm.xlu0 %5292, %v1001
        %v5294 = vpop.permute.xlu0 %5293
        %5296 = vset.pattern.permute.xlu0 28
        %5297 = vperm.xlu0 %5296, %v1002
        %v5298 = vpop.permute.xlu0 %5297
        %5300 = vset.pattern.permute.xlu0 28
        %5301 = vperm.xlu0 %5300, %v1003
        %v5302 = vpop.permute.xlu0 %5301
        %5304 = vset.pattern.permute.xlu0 28
        %5305 = vperm.xlu0 %5304, %v1004
        %v5306 = vpop.permute.xlu0 %5305
        %5308 = vset.pattern.permute.xlu0 28
        %5309 = vperm.xlu0 %5308, %v1005
        %v5310 = vpop.permute.xlu0 %5309
        %5312 = vset.pattern.permute.xlu0 28
        %5313 = vperm.xlu0 %5312, %v1006
        %v5314 = vpop.permute.xlu0 %5313
        %v5316 = vlaneseq
        %v5317 = vshrl.u32 %v5316, 7
        %v5318 = vsub.s32 0, %v5317
        %v5319 = vrot.slane %v5251, %v5318
        %v5320 = vadd.f32 %v5254, %v5319
        %v5321 = vadd.f32 %v5258, %v5319
        %v5322 = vadd.f32 %v5262, %v5319
        %v5323 = vadd.f32 %v5266, %v5319
        %v5324 = vadd.f32 %v5270, %v5319
        %v5325 = vadd.f32 %v5274, %v5319
        %v5326 = vadd.f32 %v5278, %v5319
        %v5327 = vadd.f32 %v5282, %v5319
        %v5328 = vadd.f32 %v5286, %v5319
        %v5329 = vadd.f32 %v5290, %v5319
        %v5330 = vadd.f32 %v5294, %v5319
        %v5331 = vadd.f32 %v5298, %v5319
        %v5332 = vadd.f32 %v5302, %v5319
        %v5333 = vadd.f32 %v5306, %v5319
        %v5334 = vadd.f32 %v5310, %v5319
        %v5335 = vadd.f32 %v5314, %v5319
        %v5336 = vmul.f32 %v5320, 0.2
        %v5337 = vmul.f32 %v5321, 0.2
        %v5338 = vmul.f32 %v5322, 0.2
        %v5339 = vmul.f32 %v5323, 0.2
        %v5340 = vmul.f32 %v5324, 0.2
        %v5341 = vmul.f32 %v5325, 0.2
        %v5342 = vmul.f32 %v5326, 0.2
        %v5343 = vmul.f32 %v5327, 0.2
        %v5344 = vmul.f32 %v5328, 0.2
        %v5345 = vmul.f32 %v5329, 0.2
        %v5346 = vmul.f32 %v5330, 0.2
        %v5347 = vmul.f32 %v5331, 0.2
        %v5348 = vmul.f32 %v5332, 0.2
        %v5349 = vmul.f32 %v5333, 0.2
        %v5350 = vmul.f32 %v5334, 0.2
        %v5351 = vmul.f32 %v5335, 0.2
        %v5352 = vmax.f32 %v5320, %v5336
        %v5353 = vmax.f32 %v5321, %v5337
        %v5354 = vmax.f32 %v5322, %v5338
        %v5355 = vmax.f32 %v5323, %v5339
        %v5356 = vmax.f32 %v5324, %v5340
        %v5357 = vmax.f32 %v5325, %v5341
        %v5358 = vmax.f32 %v5326, %v5342
        %v5359 = vmax.f32 %v5327, %v5343
        %v5360 = vmax.f32 %v5328, %v5344
        %v5361 = vmax.f32 %v5329, %v5345
        %v5362 = vmax.f32 %v5330, %v5346
        %v5363 = vmax.f32 %v5331, %v5347
        %v5364 = vmax.f32 %v5332, %v5348
        %v5365 = vmax.f32 %v5333, %v5349
        %v5366 = vmax.f32 %v5334, %v5350
        %v5367 = vmax.f32 %v5335, %v5351
        %s5368 = sld [smem:[#allocation7 + $0x1c]]
        %v5369 = vstv %s5368
        %v5370 = vmul.f32 %v5369, %v5352
        %v5371 = vmul.f32 %v5369, %v5353
        %v5372 = vmul.f32 %v5369, %v5354
        %v5373 = vmul.f32 %v5369, %v5355
        %v5374 = vmul.f32 %v5369, %v5356
        %v5375 = vmul.f32 %v5369, %v5357
        %v5376 = vmul.f32 %v5369, %v5358
        %v5377 = vmul.f32 %v5369, %v5359
        %v5378 = vmul.f32 %v5369, %v5360
        %v5379 = vmul.f32 %v5369, %v5361
        %v5380 = vmul.f32 %v5369, %v5362
        %v5381 = vmul.f32 %v5369, %v5363
        %v5382 = vmul.f32 %v5369, %v5364
        %v5383 = vmul.f32 %v5369, %v5365
        %v5384 = vmul.f32 %v5369, %v5366
        %v5385 = vmul.f32 %v5369, %v5367
        %v5386 = vadd.f32 %v5235, %v5370
        %v5387 = vadd.f32 %v5236, %v5371
        %v5388 = vadd.f32 %v5237, %v5372
        %v5389 = vadd.f32 %v5238, %v5373
        %v5390 = vadd.f32 %v5239, %v5374
        %v5391 = vadd.f32 %v5240, %v5375
        %v5392 = vadd.f32 %v5241, %v5376
        %v5393 = vadd.f32 %v5242, %v5377
        %v5394 = vadd.f32 %v5243, %v5378
        %v5395 = vadd.f32 %v5244, %v5379
        %v5396 = vadd.f32 %v5245, %v5380
        %v5397 = vadd.f32 %v5246, %v5381
        %v5398 = vadd.f32 %v5247, %v5382
        %v5399 = vadd.f32 %v5248, %v5383
        %v5400 = vadd.f32 %v5249, %v5384
        %v5401 = vadd.f32 %v5250, %v5385
        %v5402 = vld [vmem:[#allocation3 + $0x1d] sm:$0x1]
        %5403 = vset.pattern.permute.xlu0 29
        %5404 = vperm.xlu0 %5403, %v991
        %v5405 = vpop.permute.xlu0 %5404
        %5407 = vset.pattern.permute.xlu0 29
        %5408 = vperm.xlu0 %5407, %v992
        %v5409 = vpop.permute.xlu0 %5408
        %5411 = vset.pattern.permute.xlu0 29
        %5412 = vperm.xlu0 %5411, %v993
        %v5413 = vpop.permute.xlu0 %5412
        %5415 = vset.pattern.permute.xlu0 29
        %5416 = vperm.xlu0 %5415, %v994
        %v5417 = vpop.permute.xlu0 %5416
        %5419 = vset.pattern.permute.xlu0 29
        %5420 = vperm.xlu0 %5419, %v995
        %v5421 = vpop.permute.xlu0 %5420
        %5423 = vset.pattern.permute.xlu0 29
        %5424 = vperm.xlu0 %5423, %v996
        %v5425 = vpop.permute.xlu0 %5424
        %5427 = vset.pattern.permute.xlu0 29
        %5428 = vperm.xlu0 %5427, %v997
        %v5429 = vpop.permute.xlu0 %5428
        %5431 = vset.pattern.permute.xlu0 29
        %5432 = vperm.xlu0 %5431, %v998
        %v5433 = vpop.permute.xlu0 %5432
        %5435 = vset.pattern.permute.xlu0 29
        %5436 = vperm.xlu0 %5435, %v999
        %v5437 = vpop.permute.xlu0 %5436
        %5439 = vset.pattern.permute.xlu0 29
        %5440 = vperm.xlu0 %5439, %v1000
        %v5441 = vpop.permute.xlu0 %5440
        %5443 = vset.pattern.permute.xlu0 29
        %5444 = vperm.xlu0 %5443, %v1001
        %v5445 = vpop.permute.xlu0 %5444
        %5447 = vset.pattern.permute.xlu0 29
        %5448 = vperm.xlu0 %5447, %v1002
        %v5449 = vpop.permute.xlu0 %5448
        %5451 = vset.pattern.permute.xlu0 29
        %5452 = vperm.xlu0 %5451, %v1003
        %v5453 = vpop.permute.xlu0 %5452
        %5455 = vset.pattern.permute.xlu0 29
        %5456 = vperm.xlu0 %5455, %v1004
        %v5457 = vpop.permute.xlu0 %5456
        %5459 = vset.pattern.permute.xlu0 29
        %5460 = vperm.xlu0 %5459, %v1005
        %v5461 = vpop.permute.xlu0 %5460
        %5463 = vset.pattern.permute.xlu0 29
        %5464 = vperm.xlu0 %5463, %v1006
        %v5465 = vpop.permute.xlu0 %5464
        %v5467 = vlaneseq
        %v5468 = vshrl.u32 %v5467, 7
        %v5469 = vsub.s32 0, %v5468
        %v5470 = vrot.slane %v5402, %v5469
        %v5471 = vadd.f32 %v5405, %v5470
        %v5472 = vadd.f32 %v5409, %v5470
        %v5473 = vadd.f32 %v5413, %v5470
        %v5474 = vadd.f32 %v5417, %v5470
        %v5475 = vadd.f32 %v5421, %v5470
        %v5476 = vadd.f32 %v5425, %v5470
        %v5477 = vadd.f32 %v5429, %v5470
        %v5478 = vadd.f32 %v5433, %v5470
        %v5479 = vadd.f32 %v5437, %v5470
        %v5480 = vadd.f32 %v5441, %v5470
        %v5481 = vadd.f32 %v5445, %v5470
        %v5482 = vadd.f32 %v5449, %v5470
        %v5483 = vadd.f32 %v5453, %v5470
        %v5484 = vadd.f32 %v5457, %v5470
        %v5485 = vadd.f32 %v5461, %v5470
        %v5486 = vadd.f32 %v5465, %v5470
        %v5487 = vmul.f32 %v5471, 0.2
        %v5488 = vmul.f32 %v5472, 0.2
        %v5489 = vmul.f32 %v5473, 0.2
        %v5490 = vmul.f32 %v5474, 0.2
        %v5491 = vmul.f32 %v5475, 0.2
        %v5492 = vmul.f32 %v5476, 0.2
        %v5493 = vmul.f32 %v5477, 0.2
        %v5494 = vmul.f32 %v5478, 0.2
        %v5495 = vmul.f32 %v5479, 0.2
        %v5496 = vmul.f32 %v5480, 0.2
        %v5497 = vmul.f32 %v5481, 0.2
        %v5498 = vmul.f32 %v5482, 0.2
        %v5499 = vmul.f32 %v5483, 0.2
        %v5500 = vmul.f32 %v5484, 0.2
        %v5501 = vmul.f32 %v5485, 0.2
        %v5502 = vmul.f32 %v5486, 0.2
        %v5503 = vmax.f32 %v5471, %v5487
        %v5504 = vmax.f32 %v5472, %v5488
        %v5505 = vmax.f32 %v5473, %v5489
        %v5506 = vmax.f32 %v5474, %v5490
        %v5507 = vmax.f32 %v5475, %v5491
        %v5508 = vmax.f32 %v5476, %v5492
        %v5509 = vmax.f32 %v5477, %v5493
        %v5510 = vmax.f32 %v5478, %v5494
        %v5511 = vmax.f32 %v5479, %v5495
        %v5512 = vmax.f32 %v5480, %v5496
        %v5513 = vmax.f32 %v5481, %v5497
        %v5514 = vmax.f32 %v5482, %v5498
        %v5515 = vmax.f32 %v5483, %v5499
        %v5516 = vmax.f32 %v5484, %v5500
        %v5517 = vmax.f32 %v5485, %v5501
        %v5518 = vmax.f32 %v5486, %v5502
        %s5519 = sld [smem:[#allocation7 + $0x1d]]
        %v5520 = vstv %s5519
        %v5521 = vmul.f32 %v5520, %v5503
        %v5522 = vmul.f32 %v5520, %v5504
        %v5523 = vmul.f32 %v5520, %v5505
        %v5524 = vmul.f32 %v5520, %v5506
        %v5525 = vmul.f32 %v5520, %v5507
        %v5526 = vmul.f32 %v5520, %v5508
        %v5527 = vmul.f32 %v5520, %v5509
        %v5528 = vmul.f32 %v5520, %v5510
        %v5529 = vmul.f32 %v5520, %v5511
        %v5530 = vmul.f32 %v5520, %v5512
        %v5531 = vmul.f32 %v5520, %v5513
        %v5532 = vmul.f32 %v5520, %v5514
        %v5533 = vmul.f32 %v5520, %v5515
        %v5534 = vmul.f32 %v5520, %v5516
        %v5535 = vmul.f32 %v5520, %v5517
        %v5536 = vmul.f32 %v5520, %v5518
        %v5537 = vadd.f32 %v5386, %v5521
        %v5538 = vadd.f32 %v5387, %v5522
        %v5539 = vadd.f32 %v5388, %v5523
        %v5540 = vadd.f32 %v5389, %v5524
        %v5541 = vadd.f32 %v5390, %v5525
        %v5542 = vadd.f32 %v5391, %v5526
        %v5543 = vadd.f32 %v5392, %v5527
        %v5544 = vadd.f32 %v5393, %v5528
        %v5545 = vadd.f32 %v5394, %v5529
        %v5546 = vadd.f32 %v5395, %v5530
        %v5547 = vadd.f32 %v5396, %v5531
        %v5548 = vadd.f32 %v5397, %v5532
        %v5549 = vadd.f32 %v5398, %v5533
        %v5550 = vadd.f32 %v5399, %v5534
        %v5551 = vadd.f32 %v5400, %v5535
        %v5552 = vadd.f32 %v5401, %v5536
        %v5553 = vld [vmem:[#allocation3 + $0x1e] sm:$0x1]
        %5554 = vset.pattern.permute.xlu0 30
        %5555 = vperm.xlu0 %5554, %v991
        %v5556 = vpop.permute.xlu0 %5555
        %5558 = vset.pattern.permute.xlu0 30
        %5559 = vperm.xlu0 %5558, %v992
        %v5560 = vpop.permute.xlu0 %5559
        %5562 = vset.pattern.permute.xlu0 30
        %5563 = vperm.xlu0 %5562, %v993
        %v5564 = vpop.permute.xlu0 %5563
        %5566 = vset.pattern.permute.xlu0 30
        %5567 = vperm.xlu0 %5566, %v994
        %v5568 = vpop.permute.xlu0 %5567
        %5570 = vset.pattern.permute.xlu0 30
        %5571 = vperm.xlu0 %5570, %v995
        %v5572 = vpop.permute.xlu0 %5571
        %5574 = vset.pattern.permute.xlu0 30
        %5575 = vperm.xlu0 %5574, %v996
        %v5576 = vpop.permute.xlu0 %5575
        %5578 = vset.pattern.permute.xlu0 30
        %5579 = vperm.xlu0 %5578, %v997
        %v5580 = vpop.permute.xlu0 %5579
        %5582 = vset.pattern.permute.xlu0 30
        %5583 = vperm.xlu0 %5582, %v998
        %v5584 = vpop.permute.xlu0 %5583
        %5586 = vset.pattern.permute.xlu0 30
        %5587 = vperm.xlu0 %5586, %v999
        %v5588 = vpop.permute.xlu0 %5587
        %5590 = vset.pattern.permute.xlu0 30
        %5591 = vperm.xlu0 %5590, %v1000
        %v5592 = vpop.permute.xlu0 %5591
        %5594 = vset.pattern.permute.xlu0 30
        %5595 = vperm.xlu0 %5594, %v1001
        %v5596 = vpop.permute.xlu0 %5595
        %5598 = vset.pattern.permute.xlu0 30
        %5599 = vperm.xlu0 %5598, %v1002
        %v5600 = vpop.permute.xlu0 %5599
        %5602 = vset.pattern.permute.xlu0 30
        %5603 = vperm.xlu0 %5602, %v1003
        %v5604 = vpop.permute.xlu0 %5603
        %5606 = vset.pattern.permute.xlu0 30
        %5607 = vperm.xlu0 %5606, %v1004
        %v5608 = vpop.permute.xlu0 %5607
        %5610 = vset.pattern.permute.xlu0 30
        %5611 = vperm.xlu0 %5610, %v1005
        %v5612 = vpop.permute.xlu0 %5611
        %5614 = vset.pattern.permute.xlu0 30
        %5615 = vperm.xlu0 %5614, %v1006
        %v5616 = vpop.permute.xlu0 %5615
        %v5618 = vlaneseq
        %v5619 = vshrl.u32 %v5618, 7
        %v5620 = vsub.s32 0, %v5619
        %v5621 = vrot.slane %v5553, %v5620
        %v5622 = vadd.f32 %v5556, %v5621
        %v5623 = vadd.f32 %v5560, %v5621
        %v5624 = vadd.f32 %v5564, %v5621
        %v5625 = vadd.f32 %v5568, %v5621
        %v5626 = vadd.f32 %v5572, %v5621
        %v5627 = vadd.f32 %v5576, %v5621
        %v5628 = vadd.f32 %v5580, %v5621
        %v5629 = vadd.f32 %v5584, %v5621
        %v5630 = vadd.f32 %v5588, %v5621
        %v5631 = vadd.f32 %v5592, %v5621
        %v5632 = vadd.f32 %v5596, %v5621
        %v5633 = vadd.f32 %v5600, %v5621
        %v5634 = vadd.f32 %v5604, %v5621
        %v5635 = vadd.f32 %v5608, %v5621
        %v5636 = vadd.f32 %v5612, %v5621
        %v5637 = vadd.f32 %v5616, %v5621
        %v5638 = vmul.f32 %v5622, 0.2
        %v5639 = vmul.f32 %v5623, 0.2
        %v5640 = vmul.f32 %v5624, 0.2
        %v5641 = vmul.f32 %v5625, 0.2
        %v5642 = vmul.f32 %v5626, 0.2
        %v5643 = vmul.f32 %v5627, 0.2
        %v5644 = vmul.f32 %v5628, 0.2
        %v5645 = vmul.f32 %v5629, 0.2
        %v5646 = vmul.f32 %v5630, 0.2
        %v5647 = vmul.f32 %v5631, 0.2
        %v5648 = vmul.f32 %v5632, 0.2
        %v5649 = vmul.f32 %v5633, 0.2
        %v5650 = vmul.f32 %v5634, 0.2
        %v5651 = vmul.f32 %v5635, 0.2
        %v5652 = vmul.f32 %v5636, 0.2
        %v5653 = vmul.f32 %v5637, 0.2
        %v5654 = vmax.f32 %v5622, %v5638
        %v5655 = vmax.f32 %v5623, %v5639
        %v5656 = vmax.f32 %v5624, %v5640
        %v5657 = vmax.f32 %v5625, %v5641
        %v5658 = vmax.f32 %v5626, %v5642
        %v5659 = vmax.f32 %v5627, %v5643
        %v5660 = vmax.f32 %v5628, %v5644
        %v5661 = vmax.f32 %v5629, %v5645
        %v5662 = vmax.f32 %v5630, %v5646
        %v5663 = vmax.f32 %v5631, %v5647
        %v5664 = vmax.f32 %v5632, %v5648
        %v5665 = vmax.f32 %v5633, %v5649
        %v5666 = vmax.f32 %v5634, %v5650
        %v5667 = vmax.f32 %v5635, %v5651
        %v5668 = vmax.f32 %v5636, %v5652
        %v5669 = vmax.f32 %v5637, %v5653
        %s5670 = sld [smem:[#allocation7 + $0x1e]]
        %v5671 = vstv %s5670
        %v5672 = vmul.f32 %v5671, %v5654
        %v5673 = vmul.f32 %v5671, %v5655
        %v5674 = vmul.f32 %v5671, %v5656
        %v5675 = vmul.f32 %v5671, %v5657
        %v5676 = vmul.f32 %v5671, %v5658
        %v5677 = vmul.f32 %v5671, %v5659
        %v5678 = vmul.f32 %v5671, %v5660
        %v5679 = vmul.f32 %v5671, %v5661
        %v5680 = vmul.f32 %v5671, %v5662
        %v5681 = vmul.f32 %v5671, %v5663
        %v5682 = vmul.f32 %v5671, %v5664
        %v5683 = vmul.f32 %v5671, %v5665
        %v5684 = vmul.f32 %v5671, %v5666
        %v5685 = vmul.f32 %v5671, %v5667
        %v5686 = vmul.f32 %v5671, %v5668
        %v5687 = vmul.f32 %v5671, %v5669
        %v5688 = vadd.f32 %v5537, %v5672
        %v5689 = vadd.f32 %v5538, %v5673
        %v5690 = vadd.f32 %v5539, %v5674
        %v5691 = vadd.f32 %v5540, %v5675
        %v5692 = vadd.f32 %v5541, %v5676
        %v5693 = vadd.f32 %v5542, %v5677
        %v5694 = vadd.f32 %v5543, %v5678
        %v5695 = vadd.f32 %v5544, %v5679
        %v5696 = vadd.f32 %v5545, %v5680
        %v5697 = vadd.f32 %v5546, %v5681
        %v5698 = vadd.f32 %v5547, %v5682
        %v5699 = vadd.f32 %v5548, %v5683
        %v5700 = vadd.f32 %v5549, %v5684
        %v5701 = vadd.f32 %v5550, %v5685
        %v5702 = vadd.f32 %v5551, %v5686
        %v5703 = vadd.f32 %v5552, %v5687
        %v5704 = vld [vmem:[#allocation3 + $0x1f] sm:$0x1]
        %5705 = vset.pattern.permute.xlu0 31
        %5706 = vperm.xlu0 %5705, %v991
        %v5707 = vpop.permute.xlu0 %5706
        %5709 = vset.pattern.permute.xlu0 31
        %5710 = vperm.xlu0 %5709, %v992
        %v5711 = vpop.permute.xlu0 %5710
        %5713 = vset.pattern.permute.xlu0 31
        %5714 = vperm.xlu0 %5713, %v993
        %v5715 = vpop.permute.xlu0 %5714
        %5717 = vset.pattern.permute.xlu0 31
        %5718 = vperm.xlu0 %5717, %v994
        %v5719 = vpop.permute.xlu0 %5718
        %5721 = vset.pattern.permute.xlu0 31
        %5722 = vperm.xlu0 %5721, %v995
        %v5723 = vpop.permute.xlu0 %5722
        %5725 = vset.pattern.permute.xlu0 31
        %5726 = vperm.xlu0 %5725, %v996
        %v5727 = vpop.permute.xlu0 %5726
        %5729 = vset.pattern.permute.xlu0 31
        %5730 = vperm.xlu0 %5729, %v997
        %v5731 = vpop.permute.xlu0 %5730
        %5733 = vset.pattern.permute.xlu0 31
        %5734 = vperm.xlu0 %5733, %v998
        %v5735 = vpop.permute.xlu0 %5734
        %5737 = vset.pattern.permute.xlu0 31
        %5738 = vperm.xlu0 %5737, %v999
        %v5739 = vpop.permute.xlu0 %5738
        %5741 = vset.pattern.permute.xlu0 31
        %5742 = vperm.xlu0 %5741, %v1000
        %v5743 = vpop.permute.xlu0 %5742
        %5745 = vset.pattern.permute.xlu0 31
        %5746 = vperm.xlu0 %5745, %v1001
        %v5747 = vpop.permute.xlu0 %5746
        %5749 = vset.pattern.permute.xlu0 31
        %5750 = vperm.xlu0 %5749, %v1002
        %v5751 = vpop.permute.xlu0 %5750
        %5753 = vset.pattern.permute.xlu0 31
        %5754 = vperm.xlu0 %5753, %v1003
        %v5755 = vpop.permute.xlu0 %5754
        %5757 = vset.pattern.permute.xlu0 31
        %5758 = vperm.xlu0 %5757, %v1004
        %v5759 = vpop.permute.xlu0 %5758
        %5761 = vset.pattern.permute.xlu0 31
        %5762 = vperm.xlu0 %5761, %v1005
        %v5763 = vpop.permute.xlu0 %5762
        %5765 = vset.pattern.permute.xlu0 31
        %5766 = vperm.xlu0 %5765, %v1006
        %v5767 = vpop.permute.xlu0 %5766
        %v5769 = vlaneseq
        %v5770 = vshrl.u32 %v5769, 7
        %v5771 = vsub.s32 0, %v5770
        %v5772 = vrot.slane %v5704, %v5771
        %v5773 = vadd.f32 %v5707, %v5772
        %v5774 = vadd.f32 %v5711, %v5772
        %v5775 = vadd.f32 %v5715, %v5772
        %v5776 = vadd.f32 %v5719, %v5772
        %v5777 = vadd.f32 %v5723, %v5772
        %v5778 = vadd.f32 %v5727, %v5772
        %v5779 = vadd.f32 %v5731, %v5772
        %v5780 = vadd.f32 %v5735, %v5772
        %v5781 = vadd.f32 %v5739, %v5772
        %v5782 = vadd.f32 %v5743, %v5772
        %v5783 = vadd.f32 %v5747, %v5772
        %v5784 = vadd.f32 %v5751, %v5772
        %v5785 = vadd.f32 %v5755, %v5772
        %v5786 = vadd.f32 %v5759, %v5772
        %v5787 = vadd.f32 %v5763, %v5772
        %v5788 = vadd.f32 %v5767, %v5772
        %v5789 = vmul.f32 %v5773, 0.2
        %v5790 = vmul.f32 %v5774, 0.2
        %v5791 = vmul.f32 %v5775, 0.2
        %v5792 = vmul.f32 %v5776, 0.2
        %v5793 = vmul.f32 %v5777, 0.2
        %v5794 = vmul.f32 %v5778, 0.2
        %v5795 = vmul.f32 %v5779, 0.2
        %v5796 = vmul.f32 %v5780, 0.2
        %v5797 = vmul.f32 %v5781, 0.2
        %v5798 = vmul.f32 %v5782, 0.2
        %v5799 = vmul.f32 %v5783, 0.2
        %v5800 = vmul.f32 %v5784, 0.2
        %v5801 = vmul.f32 %v5785, 0.2
        %v5802 = vmul.f32 %v5786, 0.2
        %v5803 = vmul.f32 %v5787, 0.2
        %v5804 = vmul.f32 %v5788, 0.2
        %v5805 = vmax.f32 %v5773, %v5789
        %v5806 = vmax.f32 %v5774, %v5790
        %v5807 = vmax.f32 %v5775, %v5791
        %v5808 = vmax.f32 %v5776, %v5792
        %v5809 = vmax.f32 %v5777, %v5793
        %v5810 = vmax.f32 %v5778, %v5794
        %v5811 = vmax.f32 %v5779, %v5795
        %v5812 = vmax.f32 %v5780, %v5796
        %v5813 = vmax.f32 %v5781, %v5797
        %v5814 = vmax.f32 %v5782, %v5798
        %v5815 = vmax.f32 %v5783, %v5799
        %v5816 = vmax.f32 %v5784, %v5800
        %v5817 = vmax.f32 %v5785, %v5801
        %v5818 = vmax.f32 %v5786, %v5802
        %v5819 = vmax.f32 %v5787, %v5803
        %v5820 = vmax.f32 %v5788, %v5804
        %s5821 = sld [smem:[#allocation7 + $0x1f]]
        %v5822 = vstv %s5821
        %v5823 = vmul.f32 %v5822, %v5805
        %v5824 = vmul.f32 %v5822, %v5806
        %v5825 = vmul.f32 %v5822, %v5807
        %v5826 = vmul.f32 %v5822, %v5808
        %v5827 = vmul.f32 %v5822, %v5809
        %v5828 = vmul.f32 %v5822, %v5810
        %v5829 = vmul.f32 %v5822, %v5811
        %v5830 = vmul.f32 %v5822, %v5812
        %v5831 = vmul.f32 %v5822, %v5813
        %v5832 = vmul.f32 %v5822, %v5814
        %v5833 = vmul.f32 %v5822, %v5815
        %v5834 = vmul.f32 %v5822, %v5816
        %v5835 = vmul.f32 %v5822, %v5817
        %v5836 = vmul.f32 %v5822, %v5818
        %v5837 = vmul.f32 %v5822, %v5819
        %v5838 = vmul.f32 %v5822, %v5820
        %v5839 = vadd.f32 %v5688, %v5823
        %v5840 = vadd.f32 %v5689, %v5824
        %v5841 = vadd.f32 %v5690, %v5825
        %v5842 = vadd.f32 %v5691, %v5826
        %v5843 = vadd.f32 %v5692, %v5827
        %v5844 = vadd.f32 %v5693, %v5828
        %v5845 = vadd.f32 %v5694, %v5829
        %v5846 = vadd.f32 %v5695, %v5830
        %v5847 = vadd.f32 %v5696, %v5831
        %v5848 = vadd.f32 %v5697, %v5832
        %v5849 = vadd.f32 %v5698, %v5833
        %v5850 = vadd.f32 %v5699, %v5834
        %v5851 = vadd.f32 %v5700, %v5835
        %v5852 = vadd.f32 %v5701, %v5836
        %v5853 = vadd.f32 %v5702, %v5837
        %v5854 = vadd.f32 %v5703, %v5838
        %v5855 = vld [vmem:[%s431] sm:$0xff]
        %v5856 = vld [vmem:[%s431 + $0x8] sm:$0xff]
        %v5857 = vld [vmem:[%s431 + $0x10] sm:$0xff]
        %v5858 = vld [vmem:[%s431 + $0x18] sm:$0xff]
        %v5859 = vunpack.c.0.s8 %v5855
        %v5860 = vunpack.c.1.s8 %v5855
        %v5861 = vunpack.c.2.s8 %v5855
        %v5862 = vunpack.c.3.s8 %v5855
        %v5863 = vunpack.c.0.s8 %v5856
        %v5864 = vunpack.c.1.s8 %v5856
        %v5865 = vunpack.c.2.s8 %v5856
        %v5866 = vunpack.c.3.s8 %v5856
        %v5867 = vunpack.c.0.s8 %v5857
        %v5868 = vunpack.c.1.s8 %v5857
        %v5869 = vunpack.c.2.s8 %v5857
        %v5870 = vunpack.c.3.s8 %v5857
        %v5871 = vunpack.c.0.s8 %v5858
        %v5872 = vunpack.c.1.s8 %v5858
        %v5873 = vunpack.c.2.s8 %v5858
        %v5874 = vunpack.c.3.s8 %v5858
        %v5875 = vcvt.s32.f32 %v5859
        %v5876 = vcvt.s32.f32 %v5860
        %v5877 = vcvt.s32.f32 %v5861
        %v5878 = vcvt.s32.f32 %v5862
        %v5879 = vcvt.s32.f32 %v5863
        %v5880 = vcvt.s32.f32 %v5864
        %v5881 = vcvt.s32.f32 %v5865
        %v5882 = vcvt.s32.f32 %v5866
        %v5883 = vcvt.s32.f32 %v5867
        %v5884 = vcvt.s32.f32 %v5868
        %v5885 = vcvt.s32.f32 %v5869
        %v5886 = vcvt.s32.f32 %v5870
        %v5887 = vcvt.s32.f32 %v5871
        %v5888 = vcvt.s32.f32 %v5872
        %v5889 = vcvt.s32.f32 %v5873
        %v5890 = vcvt.s32.f32 %v5874
        %vm5891 = vcmp.ne.f32.partialorder %v5875, 0.0
        %vm5892 = vcmp.ne.f32.partialorder %v5876, 0.0
        %vm5893 = vcmp.ne.f32.partialorder %v5877, 0.0
        %vm5894 = vcmp.ne.f32.partialorder %v5878, 0.0
        %vm5895 = vcmp.ne.f32.partialorder %v5879, 0.0
        %vm5896 = vcmp.ne.f32.partialorder %v5880, 0.0
        %vm5897 = vcmp.ne.f32.partialorder %v5881, 0.0
        %vm5898 = vcmp.ne.f32.partialorder %v5882, 0.0
        %vm5899 = vcmp.ne.f32.partialorder %v5883, 0.0
        %vm5900 = vcmp.ne.f32.partialorder %v5884, 0.0
        %vm5901 = vcmp.ne.f32.partialorder %v5885, 0.0
        %vm5902 = vcmp.ne.f32.partialorder %v5886, 0.0
        %vm5903 = vcmp.ne.f32.partialorder %v5887, 0.0
        %vm5904 = vcmp.ne.f32.partialorder %v5888, 0.0
        %vm5905 = vcmp.ne.f32.partialorder %v5889, 0.0
        %vm5906 = vcmp.ne.f32.partialorder %v5890, 0.0
        %v5907 = vsel %vm5891, %v5839, -1e+30
        %v5908 = vsel %vm5892, %v5840, -1e+30
        %v5909 = vsel %vm5893, %v5841, -1e+30
        %v5910 = vsel %vm5894, %v5842, -1e+30
        %v5911 = vsel %vm5895, %v5843, -1e+30
        %v5912 = vsel %vm5896, %v5844, -1e+30
        %v5913 = vsel %vm5897, %v5845, -1e+30
        %v5914 = vsel %vm5898, %v5846, -1e+30
        %v5915 = vsel %vm5899, %v5847, -1e+30
        %v5916 = vsel %vm5900, %v5848, -1e+30
        %v5917 = vsel %vm5901, %v5849, -1e+30
        %v5918 = vsel %vm5902, %v5850, -1e+30
        %v5919 = vsel %vm5903, %v5851, -1e+30
        %v5920 = vsel %vm5904, %v5852, -1e+30
        %v5921 = vsel %vm5905, %v5853, -1e+30
        %v5922 = vsel %vm5906, %v5854, -1e+30
        %v5923 = vld [vmem:[#allocation4] sm:$0xff]
        %v5924 = vld [vmem:[#allocation4 + $0x8] sm:$0xff]
        %v5925 = vld [vmem:[#allocation4 + $0x10] sm:$0xff]
        %v5926 = vld [vmem:[#allocation4 + $0x18] sm:$0xff]
        %v5927 = vld [vmem:[#allocation4 + $0x20] sm:$0xff]
        %v5928 = vld [vmem:[#allocation4 + $0x28] sm:$0xff]
        %v5929 = vld [vmem:[#allocation4 + $0x30] sm:$0xff]
        %v5930 = vld [vmem:[#allocation4 + $0x38] sm:$0xff]
        %v5931 = vld [vmem:[#allocation4 + $0x40] sm:$0xff]
        %v5932 = vld [vmem:[#allocation4 + $0x48] sm:$0xff]
        %v5933 = vld [vmem:[#allocation4 + $0x50] sm:$0xff]
        %v5934 = vld [vmem:[#allocation4 + $0x58] sm:$0xff]
        %v5935 = vld [vmem:[#allocation4 + $0x60] sm:$0xff]
        %v5936 = vld [vmem:[#allocation4 + $0x68] sm:$0xff]
        %v5937 = vld [vmem:[#allocation4 + $0x70] sm:$0xff]
        %v5938 = vld [vmem:[#allocation4 + $0x78] sm:$0xff]
        %5939 = vmax.xlane.f32.xlu0 %v5907
        %v5940 = vpop.xlane.xlu0 %5939
        %5941 = vmax.xlane.f32.xlu0 %v5908
        %v5942 = vpop.xlane.xlu0 %5941
        %5943 = vmax.xlane.f32.xlu0 %v5909
        %v5944 = vpop.xlane.xlu0 %5943
        %5945 = vmax.xlane.f32.xlu0 %v5910
        %v5946 = vpop.xlane.xlu0 %5945
        %5947 = vmax.xlane.f32.xlu0 %v5911
        %v5948 = vpop.xlane.xlu0 %5947
        %5949 = vmax.xlane.f32.xlu0 %v5912
        %v5950 = vpop.xlane.xlu0 %5949
        %5951 = vmax.xlane.f32.xlu0 %v5913
        %v5952 = vpop.xlane.xlu0 %5951
        %5953 = vmax.xlane.f32.xlu0 %v5914
        %v5954 = vpop.xlane.xlu0 %5953
        %5955 = vmax.xlane.f32.xlu0 %v5915
        %v5956 = vpop.xlane.xlu0 %5955
        %5957 = vmax.xlane.f32.xlu0 %v5916
        %v5958 = vpop.xlane.xlu0 %5957
        %5959 = vmax.xlane.f32.xlu0 %v5917
        %v5960 = vpop.xlane.xlu0 %5959
        %5961 = vmax.xlane.f32.xlu0 %v5918
        %v5962 = vpop.xlane.xlu0 %5961
        %5963 = vmax.xlane.f32.xlu0 %v5919
        %v5964 = vpop.xlane.xlu0 %5963
        %5965 = vmax.xlane.f32.xlu0 %v5920
        %v5966 = vpop.xlane.xlu0 %5965
        %5967 = vmax.xlane.f32.xlu0 %v5921
        %v5968 = vpop.xlane.xlu0 %5967
        %5969 = vmax.xlane.f32.xlu0 %v5922
        %v5970 = vpop.xlane.xlu0 %5969
        %v5971 = vmax.f32 %v5923, %v5940
        %v5972 = vmax.f32 %v5924, %v5942
        %v5973 = vmax.f32 %v5925, %v5944
        %v5974 = vmax.f32 %v5926, %v5946
        %v5975 = vmax.f32 %v5927, %v5948
        %v5976 = vmax.f32 %v5928, %v5950
        %v5977 = vmax.f32 %v5929, %v5952
        %v5978 = vmax.f32 %v5930, %v5954
        %v5979 = vmax.f32 %v5931, %v5956
        %v5980 = vmax.f32 %v5932, %v5958
        %v5981 = vmax.f32 %v5933, %v5960
        %v5982 = vmax.f32 %v5934, %v5962
        %v5983 = vmax.f32 %v5935, %v5964
        %v5984 = vmax.f32 %v5936, %v5966
        %v5985 = vmax.f32 %v5937, %v5968
        %v5986 = vmax.f32 %v5938, %v5970
        %v5987 = vsub.f32 %v5923, %v5971
        %v5988 = vsub.f32 %v5924, %v5972
        %v5989 = vsub.f32 %v5925, %v5973
        %v5990 = vsub.f32 %v5926, %v5974
        %v5991 = vsub.f32 %v5927, %v5975
        %v5992 = vsub.f32 %v5928, %v5976
        %v5993 = vsub.f32 %v5929, %v5977
        %v5994 = vsub.f32 %v5930, %v5978
        %v5995 = vsub.f32 %v5931, %v5979
        %v5996 = vsub.f32 %v5932, %v5980
        %v5997 = vsub.f32 %v5933, %v5981
        %v5998 = vsub.f32 %v5934, %v5982
        %v5999 = vsub.f32 %v5935, %v5983
        %v6000 = vsub.f32 %v5936, %v5984
        %v6001 = vsub.f32 %v5937, %v5985
        %v6002 = vsub.f32 %v5938, %v5986
        %v6003 = vmul.f32 %v5987, 1.442695
        %v6004 = vpow.pop %v6003
        %v6005 = vmul.f32 %v5988, 1.442695
        %v6006 = vpow.pop %v6005
        %v6007 = vmul.f32 %v5989, 1.442695
        %v6008 = vpow.pop %v6007
        %v6009 = vmul.f32 %v5990, 1.442695
        %v6010 = vpow.pop %v6009
        %v6011 = vmul.f32 %v5991, 1.442695
        %v6012 = vpow.pop %v6011
        %v6013 = vmul.f32 %v5992, 1.442695
        %v6014 = vpow.pop %v6013
        %v6015 = vmul.f32 %v5993, 1.442695
        %v6016 = vpow.pop %v6015
        %v6017 = vmul.f32 %v5994, 1.442695
        %v6018 = vpow.pop %v6017
        %v6019 = vmul.f32 %v5995, 1.442695
        %v6020 = vpow.pop %v6019
        %v6021 = vmul.f32 %v5996, 1.442695
        %v6022 = vpow.pop %v6021
        %v6023 = vmul.f32 %v5997, 1.442695
        %v6024 = vpow.pop %v6023
        %v6025 = vmul.f32 %v5998, 1.442695
        %v6026 = vpow.pop %v6025
        %v6027 = vmul.f32 %v5999, 1.442695
        %v6028 = vpow.pop %v6027
        %v6029 = vmul.f32 %v6000, 1.442695
        %v6030 = vpow.pop %v6029
        %v6031 = vmul.f32 %v6001, 1.442695
        %v6032 = vpow.pop %v6031
        %v6033 = vmul.f32 %v6002, 1.442695
        %v6034 = vpow.pop %v6033
        %6036 = vset.pattern.permute.xlu0 0
        %6037 = vperm.xlu0 %6036, %v5971
        %v6038 = vpop.permute.xlu0 %6037
        %6041 = vset.pattern.permute.xlu0 0
        %6042 = vperm.xlu0 %6041, %v5972
        %v6043 = vpop.permute.xlu0 %6042
        %6046 = vset.pattern.permute.xlu0 0
        %6047 = vperm.xlu0 %6046, %v5973
        %v6048 = vpop.permute.xlu0 %6047
        %6051 = vset.pattern.permute.xlu0 0
        %6052 = vperm.xlu0 %6051, %v5974
        %v6053 = vpop.permute.xlu0 %6052
        %6056 = vset.pattern.permute.xlu0 0
        %6057 = vperm.xlu0 %6056, %v5975
        %v6058 = vpop.permute.xlu0 %6057
        %6061 = vset.pattern.permute.xlu0 0
        %6062 = vperm.xlu0 %6061, %v5976
        %v6063 = vpop.permute.xlu0 %6062
        %6066 = vset.pattern.permute.xlu0 0
        %6067 = vperm.xlu0 %6066, %v5977
        %v6068 = vpop.permute.xlu0 %6067
        %6071 = vset.pattern.permute.xlu0 0
        %6072 = vperm.xlu0 %6071, %v5978
        %v6073 = vpop.permute.xlu0 %6072
        %6076 = vset.pattern.permute.xlu0 0
        %6077 = vperm.xlu0 %6076, %v5979
        %v6078 = vpop.permute.xlu0 %6077
        %6081 = vset.pattern.permute.xlu0 0
        %6082 = vperm.xlu0 %6081, %v5980
        %v6083 = vpop.permute.xlu0 %6082
        %6086 = vset.pattern.permute.xlu0 0
        %6087 = vperm.xlu0 %6086, %v5981
        %v6088 = vpop.permute.xlu0 %6087
        %6091 = vset.pattern.permute.xlu0 0
        %6092 = vperm.xlu0 %6091, %v5982
        %v6093 = vpop.permute.xlu0 %6092
        %6096 = vset.pattern.permute.xlu0 0
        %6097 = vperm.xlu0 %6096, %v5983
        %v6098 = vpop.permute.xlu0 %6097
        %6101 = vset.pattern.permute.xlu0 0
        %6102 = vperm.xlu0 %6101, %v5984
        %v6103 = vpop.permute.xlu0 %6102
        %6106 = vset.pattern.permute.xlu0 0
        %6107 = vperm.xlu0 %6106, %v5985
        %v6108 = vpop.permute.xlu0 %6107
        %6111 = vset.pattern.permute.xlu0 0
        %6112 = vperm.xlu0 %6111, %v5986
        %v6113 = vpop.permute.xlu0 %6112
        %v6115 = vsub.f32 %v5907, %v6038
        %v6116 = vsub.f32 %v5908, %v6043
        %v6117 = vsub.f32 %v5909, %v6048
        %v6118 = vsub.f32 %v5910, %v6053
        %v6119 = vsub.f32 %v5911, %v6058
        %v6120 = vsub.f32 %v5912, %v6063
        %v6121 = vsub.f32 %v5913, %v6068
        %v6122 = vsub.f32 %v5914, %v6073
        %v6123 = vsub.f32 %v5915, %v6078
        %v6124 = vsub.f32 %v5916, %v6083
        %v6125 = vsub.f32 %v5917, %v6088
        %v6126 = vsub.f32 %v5918, %v6093
        %v6127 = vsub.f32 %v5919, %v6098
        %v6128 = vsub.f32 %v5920, %v6103
        %v6129 = vsub.f32 %v5921, %v6108
        %v6130 = vsub.f32 %v5922, %v6113
        %v6131 = vmul.f32 %v6115, 1.442695
        %v6132 = vpow.pop %v6131
        %v6133 = vmul.f32 %v6116, 1.442695
        %v6134 = vpow.pop %v6133
        %v6135 = vmul.f32 %v6117, 1.442695
        %v6136 = vpow.pop %v6135
        %v6137 = vmul.f32 %v6118, 1.442695
        %v6138 = vpow.pop %v6137
        %v6139 = vmul.f32 %v6119, 1.442695
        %v6140 = vpow.pop %v6139
        %v6141 = vmul.f32 %v6120, 1.442695
        %v6142 = vpow.pop %v6141
        %v6143 = vmul.f32 %v6121, 1.442695
        %v6144 = vpow.pop %v6143
        %v6145 = vmul.f32 %v6122, 1.442695
        %v6146 = vpow.pop %v6145
        %v6147 = vmul.f32 %v6123, 1.442695
        %v6148 = vpow.pop %v6147
        %v6149 = vmul.f32 %v6124, 1.442695
        %v6150 = vpow.pop %v6149
        %v6151 = vmul.f32 %v6125, 1.442695
        %v6152 = vpow.pop %v6151
        %v6153 = vmul.f32 %v6126, 1.442695
        %v6154 = vpow.pop %v6153
        %v6155 = vmul.f32 %v6127, 1.442695
        %v6156 = vpow.pop %v6155
        %v6157 = vmul.f32 %v6128, 1.442695
        %v6158 = vpow.pop %v6157
        %v6159 = vmul.f32 %v6129, 1.442695
        %v6160 = vpow.pop %v6159
        %v6161 = vmul.f32 %v6130, 1.442695
        %v6162 = vpow.pop %v6161
        %v6163 = vmul.f32 %v6132, %v5875
        %v6164 = vmul.f32 %v6134, %v5876
        %v6165 = vmul.f32 %v6136, %v5877
        %v6166 = vmul.f32 %v6138, %v5878
        %v6167 = vmul.f32 %v6140, %v5879
        %v6168 = vmul.f32 %v6142, %v5880
        %v6169 = vmul.f32 %v6144, %v5881
        %v6170 = vmul.f32 %v6146, %v5882
        %v6171 = vmul.f32 %v6148, %v5883
        %v6172 = vmul.f32 %v6150, %v5884
        %v6173 = vmul.f32 %v6152, %v5885
        %v6174 = vmul.f32 %v6154, %v5886
        %v6175 = vmul.f32 %v6156, %v5887
        %v6176 = vmul.f32 %v6158, %v5888
        %v6177 = vmul.f32 %v6160, %v5889
        %v6178 = vmul.f32 %v6162, %v5890
        %v6179 = vld [vmem:[#allocation5] sm:$0xff]
        %v6180 = vld [vmem:[#allocation5 + $0x8] sm:$0xff]
        %v6181 = vld [vmem:[#allocation5 + $0x10] sm:$0xff]
        %v6182 = vld [vmem:[#allocation5 + $0x18] sm:$0xff]
        %v6183 = vld [vmem:[#allocation5 + $0x20] sm:$0xff]
        %v6184 = vld [vmem:[#allocation5 + $0x28] sm:$0xff]
        %v6185 = vld [vmem:[#allocation5 + $0x30] sm:$0xff]
        %v6186 = vld [vmem:[#allocation5 + $0x38] sm:$0xff]
        %v6187 = vld [vmem:[#allocation5 + $0x40] sm:$0xff]
        %v6188 = vld [vmem:[#allocation5 + $0x48] sm:$0xff]
        %v6189 = vld [vmem:[#allocation5 + $0x50] sm:$0xff]
        %v6190 = vld [vmem:[#allocation5 + $0x58] sm:$0xff]
        %v6191 = vld [vmem:[#allocation5 + $0x60] sm:$0xff]
        %v6192 = vld [vmem:[#allocation5 + $0x68] sm:$0xff]
        %v6193 = vld [vmem:[#allocation5 + $0x70] sm:$0xff]
        %v6194 = vld [vmem:[#allocation5 + $0x78] sm:$0xff]
        %v6195 = vmul.f32 %v6004, %v6179
        %v6196 = vmul.f32 %v6006, %v6180
        %v6197 = vmul.f32 %v6008, %v6181
        %v6198 = vmul.f32 %v6010, %v6182
        %v6199 = vmul.f32 %v6012, %v6183
        %v6200 = vmul.f32 %v6014, %v6184
        %v6201 = vmul.f32 %v6016, %v6185
        %v6202 = vmul.f32 %v6018, %v6186
        %v6203 = vmul.f32 %v6020, %v6187
        %v6204 = vmul.f32 %v6022, %v6188
        %v6205 = vmul.f32 %v6024, %v6189
        %v6206 = vmul.f32 %v6026, %v6190
        %v6207 = vmul.f32 %v6028, %v6191
        %v6208 = vmul.f32 %v6030, %v6192
        %v6209 = vmul.f32 %v6032, %v6193
        %v6210 = vmul.f32 %v6034, %v6194
        %6211 = vadd.xlane.f32.xlu0 %v6163
        %v6212 = vpop.xlane.xlu0 %6211
        %6213 = vadd.xlane.f32.xlu0 %v6164
        %v6214 = vpop.xlane.xlu0 %6213
        %6215 = vadd.xlane.f32.xlu0 %v6165
        %v6216 = vpop.xlane.xlu0 %6215
        %6217 = vadd.xlane.f32.xlu0 %v6166
        %v6218 = vpop.xlane.xlu0 %6217
        %6219 = vadd.xlane.f32.xlu0 %v6167
        %v6220 = vpop.xlane.xlu0 %6219
        %6221 = vadd.xlane.f32.xlu0 %v6168
        %v6222 = vpop.xlane.xlu0 %6221
        %6223 = vadd.xlane.f32.xlu0 %v6169
        %v6224 = vpop.xlane.xlu0 %6223
        %6225 = vadd.xlane.f32.xlu0 %v6170
        %v6226 = vpop.xlane.xlu0 %6225
        %6227 = vadd.xlane.f32.xlu0 %v6171
        %v6228 = vpop.xlane.xlu0 %6227
        %6229 = vadd.xlane.f32.xlu0 %v6172
        %v6230 = vpop.xlane.xlu0 %6229
        %6231 = vadd.xlane.f32.xlu0 %v6173
        %v6232 = vpop.xlane.xlu0 %6231
        %6233 = vadd.xlane.f32.xlu0 %v6174
        %v6234 = vpop.xlane.xlu0 %6233
        %6235 = vadd.xlane.f32.xlu0 %v6175
        %v6236 = vpop.xlane.xlu0 %6235
        %6237 = vadd.xlane.f32.xlu0 %v6176
        %v6238 = vpop.xlane.xlu0 %6237
        %6239 = vadd.xlane.f32.xlu0 %v6177
        %v6240 = vpop.xlane.xlu0 %6239
        %6241 = vadd.xlane.f32.xlu0 %v6178
        %v6242 = vpop.xlane.xlu0 %6241
        %v6243 = vadd.f32 %v6195, %v6212
        %v6244 = vadd.f32 %v6196, %v6214
        %v6245 = vadd.f32 %v6197, %v6216
        %v6246 = vadd.f32 %v6198, %v6218
        %v6247 = vadd.f32 %v6199, %v6220
        %v6248 = vadd.f32 %v6200, %v6222
        %v6249 = vadd.f32 %v6201, %v6224
        %v6250 = vadd.f32 %v6202, %v6226
        %v6251 = vadd.f32 %v6203, %v6228
        %v6252 = vadd.f32 %v6204, %v6230
        %v6253 = vadd.f32 %v6205, %v6232
        %v6254 = vadd.f32 %v6206, %v6234
        %v6255 = vadd.f32 %v6207, %v6236
        %v6256 = vadd.f32 %v6208, %v6238
        %v6257 = vadd.f32 %v6209, %v6240
        %v6258 = vadd.f32 %v6210, %v6242
        %vm6259 = vcmask 7168
        %6260 = vst.msk [vmem:[#allocation5] sm:$0xff] %vm6259, %v6243
        %6261 = vst.msk [vmem:[#allocation5 + $0x8] sm:$0xff] %vm6259, %v6244
        %6262 = vst.msk [vmem:[#allocation5 + $0x10] sm:$0xff] %vm6259, %v6245
        %6263 = vst.msk [vmem:[#allocation5 + $0x18] sm:$0xff] %vm6259, %v6246
        %6264 = vst.msk [vmem:[#allocation5 + $0x20] sm:$0xff] %vm6259, %v6247
        %6265 = vst.msk [vmem:[#allocation5 + $0x28] sm:$0xff] %vm6259, %v6248
        %6266 = vst.msk [vmem:[#allocation5 + $0x30] sm:$0xff] %vm6259, %v6249
        %6267 = vst.msk [vmem:[#allocation5 + $0x38] sm:$0xff] %vm6259, %v6250
        %6268 = vst.msk [vmem:[#allocation5 + $0x40] sm:$0xff] %vm6259, %v6251
        %6269 = vst.msk [vmem:[#allocation5 + $0x48] sm:$0xff] %vm6259, %v6252
        %6270 = vst.msk [vmem:[#allocation5 + $0x50] sm:$0xff] %vm6259, %v6253
        %6271 = vst.msk [vmem:[#allocation5 + $0x58] sm:$0xff] %vm6259, %v6254
        %6272 = vst.msk [vmem:[#allocation5 + $0x60] sm:$0xff] %vm6259, %v6255
        %6273 = vst.msk [vmem:[#allocation5 + $0x68] sm:$0xff] %vm6259, %v6256
        %6274 = vst.msk [vmem:[#allocation5 + $0x70] sm:$0xff] %vm6259, %v6257
        %6275 = vst.msk [vmem:[#allocation5 + $0x78] sm:$0xff] %vm6259, %v6258
        %v6276 = vld [vmem:[#allocation6] sm:$0xff]
        %v6277 = vld [vmem:[#allocation6 + $0x8] sm:$0xff]
        %v6278 = vld [vmem:[#allocation6 + $0x10] sm:$0xff]
        %v6279 = vld [vmem:[#allocation6 + $0x18] sm:$0xff]
        %v6280 = vld [vmem:[#allocation6 + $0x20] sm:$0xff]
        %v6281 = vld [vmem:[#allocation6 + $0x28] sm:$0xff]
        %v6282 = vld [vmem:[#allocation6 + $0x30] sm:$0xff]
        %v6283 = vld [vmem:[#allocation6 + $0x38] sm:$0xff]
        %v6284 = vld [vmem:[#allocation6 + $0x40] sm:$0xff]
        %v6285 = vld [vmem:[#allocation6 + $0x48] sm:$0xff]
        %v6286 = vld [vmem:[#allocation6 + $0x50] sm:$0xff]
        %v6287 = vld [vmem:[#allocation6 + $0x58] sm:$0xff]
        %v6288 = vld [vmem:[#allocation6 + $0x60] sm:$0xff]
        %v6289 = vld [vmem:[#allocation6 + $0x68] sm:$0xff]
        %v6290 = vld [vmem:[#allocation6 + $0x70] sm:$0xff]
        %v6291 = vld [vmem:[#allocation6 + $0x78] sm:$0xff]
        %6293 = vset.pattern.permute.xlu0 0
        %6294 = vperm.xlu0 %6293, %v6004
        %v6295 = vpop.permute.xlu0 %6294
        %6298 = vset.pattern.permute.xlu0 0
        %6299 = vperm.xlu0 %6298, %v6006
        %v6300 = vpop.permute.xlu0 %6299
        %6303 = vset.pattern.permute.xlu0 0
        %6304 = vperm.xlu0 %6303, %v6008
        %v6305 = vpop.permute.xlu0 %6304
        %6308 = vset.pattern.permute.xlu0 0
        %6309 = vperm.xlu0 %6308, %v6010
        %v6310 = vpop.permute.xlu0 %6309
        %6313 = vset.pattern.permute.xlu0 0
        %6314 = vperm.xlu0 %6313, %v6012
        %v6315 = vpop.permute.xlu0 %6314
        %6318 = vset.pattern.permute.xlu0 0
        %6319 = vperm.xlu0 %6318, %v6014
        %v6320 = vpop.permute.xlu0 %6319
        %6323 = vset.pattern.permute.xlu0 0
        %6324 = vperm.xlu0 %6323, %v6016
        %v6325 = vpop.permute.xlu0 %6324
        %6328 = vset.pattern.permute.xlu0 0
        %6329 = vperm.xlu0 %6328, %v6018
        %v6330 = vpop.permute.xlu0 %6329
        %6333 = vset.pattern.permute.xlu0 0
        %6334 = vperm.xlu0 %6333, %v6020
        %v6335 = vpop.permute.xlu0 %6334
        %6338 = vset.pattern.permute.xlu0 0
        %6339 = vperm.xlu0 %6338, %v6022
        %v6340 = vpop.permute.xlu0 %6339
        %6343 = vset.pattern.permute.xlu0 0
        %6344 = vperm.xlu0 %6343, %v6024
        %v6345 = vpop.permute.xlu0 %6344
        %6348 = vset.pattern.permute.xlu0 0
        %6349 = vperm.xlu0 %6348, %v6026
        %v6350 = vpop.permute.xlu0 %6349
        %6353 = vset.pattern.permute.xlu0 0
        %6354 = vperm.xlu0 %6353, %v6028
        %v6355 = vpop.permute.xlu0 %6354
        %6358 = vset.pattern.permute.xlu0 0
        %6359 = vperm.xlu0 %6358, %v6030
        %v6360 = vpop.permute.xlu0 %6359
        %6363 = vset.pattern.permute.xlu0 0
        %6364 = vperm.xlu0 %6363, %v6032
        %v6365 = vpop.permute.xlu0 %6364
        %6368 = vset.pattern.permute.xlu0 0
        %6369 = vperm.xlu0 %6368, %v6034
        %v6370 = vpop.permute.xlu0 %6369
        %v6372 = vmul.f32 %v6295, %v6276
        %v6373 = vmul.f32 %v6300, %v6277
        %v6374 = vmul.f32 %v6305, %v6278
        %v6375 = vmul.f32 %v6310, %v6279
        %v6376 = vmul.f32 %v6315, %v6280
        %v6377 = vmul.f32 %v6320, %v6281
        %v6378 = vmul.f32 %v6325, %v6282
        %v6379 = vmul.f32 %v6330, %v6283
        %v6380 = vmul.f32 %v6335, %v6284
        %v6381 = vmul.f32 %v6340, %v6285
        %v6382 = vmul.f32 %v6345, %v6286
        %v6383 = vmul.f32 %v6350, %v6287
        %v6384 = vmul.f32 %v6355, %v6288
        %v6385 = vmul.f32 %v6360, %v6289
        %v6386 = vmul.f32 %v6365, %v6290
        %v6387 = vmul.f32 %v6370, %v6291
        %v6388 = vpack.c.bf16 %v6164, %v6163
        %v6389 = vpack.c.bf16 %v6166, %v6165
        %v6390 = vpack.c.bf16 %v6168, %v6167
        %v6391 = vpack.c.bf16 %v6170, %v6169
        %v6392 = vpack.c.bf16 %v6172, %v6171
        %v6393 = vpack.c.bf16 %v6174, %v6173
        %v6394 = vpack.c.bf16 %v6176, %v6175
        %v6395 = vpack.c.bf16 %v6178, %v6177
        %v6396 = vpack.c.bf16 %v884, %v881
        %v6397 = vpack.c.bf16 %v892, %v889
        %v6398 = vpack.c.bf16 %v900, %v897
        %v6399 = vpack.c.bf16 %v908, %v905
        %v6400 = vpack.c.bf16 %v916, %v913
        %v6401 = vpack.c.bf16 %v924, %v921
        %v6402 = vpack.c.bf16 %v932, %v929
        %v6403 = vpack.c.bf16 %v940, %v937
        %6404 = vmatprep.subr.bf16.mxu0 0
        %6405 = vmatpush1.bf16.msra.mxu0 %v6396
        %6406 = vmatprep.subr.bf16.mxu0 0
        %6407 = vmatpush1.bf16.msra.mxu0 %v6397
        %6408 = vmatprep.subr.bf16.mxu0 0
        %6409 = vmatpush1.bf16.msra.mxu0 %v6398
        %6410 = vmatprep.subr.bf16.mxu0 0
        %6411 = vmatpush1.bf16.msra.mxu0 %v6399
        %6412 = vmatprep.subr.bf16.mxu0 0
        %6413 = vmatpush1.bf16.msra.mxu0 %v6400
        %6414 = vmatprep.subr.bf16.mxu0 0
        %6415 = vmatpush1.bf16.msra.mxu0 %v6401
        %6416 = vmatprep.subr.bf16.mxu0 0
        %6417 = vmatpush1.bf16.msra.mxu0 %v6402
        %6418 = vmatprep.subr.bf16.mxu0 0
        %6419 = vmatpush1.bf16.msra.mxu0 %v6403
        %6420 = vmatprep.subr.bf16.mxu0 0
        %6421 = vmatpush1.bf16.msra.mxu0 0
        %6422 = vmatprep.subr.bf16.mxu0 0
        %6423 = vmatpush1.bf16.msra.mxu0 0
        %6424 = vmatprep.subr.bf16.mxu0 0
        %6425 = vmatpush1.bf16.msra.mxu0 0
        %6426 = vmatprep.subr.bf16.mxu0 0
        %6427 = vmatpush1.bf16.msra.mxu0 0
        %6428 = vmatprep.subr.bf16.mxu0 0
        %6429 = vmatpush1.bf16.msra.mxu0 0
        %6430 = vmatprep.subr.bf16.mxu0 0
        %6431 = vmatpush1.bf16.msra.mxu0 0
        %6432 = vmatprep.subr.bf16.mxu0 0
        %6433 = vmatpush1.bf16.msra.mxu0 0
        %6434 = vmatprep.subr.bf16.mxu0 0
        %6435 = vmatpush1.bf16.msra.mxu0 0
        %6436 = vmatprep.mubr.bf16.mxu0 0
        %6437 = vmatmul.mubr.bf16.gmra.mrb[0].mxu0 %v6388
        %v6438 = vpop.f32.mrb[0].mxu0
        %v6439 = vadd.f32 0.0, %v6438
        %v6440 = vpop.f32.mrb[0].mxu0
        %v6441 = vpop.f32.mrb[0].mxu0
        %v6442 = vadd.f32 0.0, %v6441
        %v6443 = vpop.f32.mrb[0].mxu0
        %6444 = vmatprep.mubr.bf16.mxu0 0
        %6445 = vmatmul.mubr.bf16.gmra.mrb[0].mxu0 %v6389
        %v6446 = vpop.f32.mrb[0].mxu0
        %v6447 = vadd.f32 0.0, %v6446
        %v6448 = vpop.f32.mrb[0].mxu0
        %v6449 = vpop.f32.mrb[0].mxu0
        %v6450 = vadd.f32 0.0, %v6449
        %v6451 = vpop.f32.mrb[0].mxu0
        %6452 = vmatprep.mubr.bf16.mxu0 0
        %6453 = vmatmul.mubr.bf16.gmra.mrb[0].mxu0 %v6390
        %v6454 = vpop.f32.mrb[0].mxu0
        %v6455 = vadd.f32 0.0, %v6454
        %v6456 = vpop.f32.mrb[0].mxu0
        %v6457 = vpop.f32.mrb[0].mxu0
        %v6458 = vadd.f32 0.0, %v6457
        %v6459 = vpop.f32.mrb[0].mxu0
        %6460 = vmatprep.mubr.bf16.mxu0 0
        %6461 = vmatmul.mubr.bf16.gmra.mrb[0].mxu0 %v6391
        %v6462 = vpop.f32.mrb[0].mxu0
        %v6463 = vadd.f32 0.0, %v6462
        %v6464 = vpop.f32.mrb[0].mxu0
        %v6465 = vpop.f32.mrb[0].mxu0
        %v6466 = vadd.f32 0.0, %v6465
        %v6467 = vpop.f32.mrb[0].mxu0
        %6468 = vmatprep.mubr.bf16.mxu0 0
        %6469 = vmatmul.mubr.bf16.gmra.mrb[0].mxu0 %v6392
        %v6470 = vpop.f32.mrb[0].mxu0
        %v6471 = vadd.f32 0.0, %v6470
        %v6472 = vpop.f32.mrb[0].mxu0
        %v6473 = vpop.f32.mrb[0].mxu0
        %v6474 = vadd.f32 0.0, %v6473
        %v6475 = vpop.f32.mrb[0].mxu0
        %6476 = vmatprep.mubr.bf16.mxu0 0
        %6477 = vmatmul.mubr.bf16.gmra.mrb[0].mxu0 %v6393
        %v6478 = vpop.f32.mrb[0].mxu0
        %v6479 = vadd.f32 0.0, %v6478
        %v6480 = vpop.f32.mrb[0].mxu0
        %v6481 = vpop.f32.mrb[0].mxu0
        %v6482 = vadd.f32 0.0, %v6481
        %v6483 = vpop.f32.mrb[0].mxu0
        %6484 = vmatprep.mubr.bf16.mxu0 0
        %6485 = vmatmul.mubr.bf16.gmra.mrb[0].mxu0 %v6394
        %v6486 = vpop.f32.mrb[0].mxu0
        %v6487 = vadd.f32 0.0, %v6486
        %v6488 = vpop.f32.mrb[0].mxu0
        %v6489 = vpop.f32.mrb[0].mxu0
        %v6490 = vadd.f32 0.0, %v6489
        %v6491 = vpop.f32.mrb[0].mxu0
        %6492 = vmatprep.mubr.bf16.mxu0 0
        %6493 = vmatmul.mubr.bf16.gmra.mrb[0].mxu0 %v6395
        %v6494 = vpop.f32.mrb[0].mxu0
        %v6495 = vadd.f32 0.0, %v6494
        %v6496 = vpop.f32.mrb[0].mxu0
        %v6497 = vpop.f32.mrb[0].mxu0
        %v6498 = vadd.f32 0.0, %v6497
        %v6499 = vpop.f32.mrb[0].mxu0
        %6500 = vdwg.mxu0
        %v6501 = vadd.f32 %v6372, %v6439
        %v6502 = vadd.f32 %v6373, %v6442
        %v6503 = vadd.f32 %v6374, %v6447
        %v6504 = vadd.f32 %v6375, %v6450
        %v6505 = vadd.f32 %v6376, %v6455
        %v6506 = vadd.f32 %v6377, %v6458
        %v6507 = vadd.f32 %v6378, %v6463
        %v6508 = vadd.f32 %v6379, %v6466
        %v6509 = vadd.f32 %v6380, %v6471
        %v6510 = vadd.f32 %v6381, %v6474
        %v6511 = vadd.f32 %v6382, %v6479
        %v6512 = vadd.f32 %v6383, %v6482
        %v6513 = vadd.f32 %v6384, %v6487
        %v6514 = vadd.f32 %v6385, %v6490
        %v6515 = vadd.f32 %v6386, %v6495
        %v6516 = vadd.f32 %v6387, %v6498
        %6517 = vst [vmem:[#allocation6] sm:$0xff] %v6501
        %6518 = vst [vmem:[#allocation6 + $0x8] sm:$0xff] %v6502
        %6519 = vst [vmem:[#allocation6 + $0x10] sm:$0xff] %v6503
        %6520 = vst [vmem:[#allocation6 + $0x18] sm:$0xff] %v6504
        %6521 = vst [vmem:[#allocation6 + $0x20] sm:$0xff] %v6505
        %6522 = vst [vmem:[#allocation6 + $0x28] sm:$0xff] %v6506
        %6523 = vst [vmem:[#allocation6 + $0x30] sm:$0xff] %v6507
        %6524 = vst [vmem:[#allocation6 + $0x38] sm:$0xff] %v6508
        %6525 = vst [vmem:[#allocation6 + $0x40] sm:$0xff] %v6509
        %6526 = vst [vmem:[#allocation6 + $0x48] sm:$0xff] %v6510
        %6527 = vst [vmem:[#allocation6 + $0x50] sm:$0xff] %v6511
        %6528 = vst [vmem:[#allocation6 + $0x58] sm:$0xff] %v6512
        %6529 = vst [vmem:[#allocation6 + $0x60] sm:$0xff] %v6513
        %6530 = vst [vmem:[#allocation6 + $0x68] sm:$0xff] %v6514
        %6531 = vst [vmem:[#allocation6 + $0x70] sm:$0xff] %v6515
        %6532 = vst [vmem:[#allocation6 + $0x78] sm:$0xff] %v6516
        %6533 = vst.msk [vmem:[#allocation4] sm:$0xff] %vm6259, %v5971
        %6534 = vst.msk [vmem:[#allocation4 + $0x8] sm:$0xff] %vm6259, %v5972
        %6535 = vst.msk [vmem:[#allocation4 + $0x10] sm:$0xff] %vm6259, %v5973
        %6536 = vst.msk [vmem:[#allocation4 + $0x18] sm:$0xff] %vm6259, %v5974
        %6537 = vst.msk [vmem:[#allocation4 + $0x20] sm:$0xff] %vm6259, %v5975
        %6538 = vst.msk [vmem:[#allocation4 + $0x28] sm:$0xff] %vm6259, %v5976
        %6539 = vst.msk [vmem:[#allocation4 + $0x30] sm:$0xff] %vm6259, %v5977
        %6540 = vst.msk [vmem:[#allocation4 + $0x38] sm:$0xff] %vm6259, %v5978
        %6541 = vst.msk [vmem:[#allocation4 + $0x40] sm:$0xff] %vm6259, %v5979
        %6542 = vst.msk [vmem:[#allocation4 + $0x48] sm:$0xff] %vm6259, %v5980
        %6543 = vst.msk [vmem:[#allocation4 + $0x50] sm:$0xff] %vm6259, %v5981
        %6544 = vst.msk [vmem:[#allocation4 + $0x58] sm:$0xff] %vm6259, %v5982
        %6545 = vst.msk [vmem:[#allocation4 + $0x60] sm:$0xff] %vm6259, %v5983
        %6546 = vst.msk [vmem:[#allocation4 + $0x68] sm:$0xff] %vm6259, %v5984
        %6547 = vst.msk [vmem:[#allocation4 + $0x70] sm:$0xff] %vm6259, %v5985
        %6548 = vst.msk [vmem:[#allocation4 + $0x78] sm:$0xff] %vm6259, %v5986
        %p6549 = scmp.eq.s32.totalorder %s36, 1
        // Predicated region
        $region85: #{tpu_custom_call.1} parent=55 // pred_check
          %p6550 = pneg %p6549
        $region86: #{tpu_custom_call.1} parent=55 // pred_check_branch
          %6552 = sbr.rel (%p6550) target = $region88
        $region87: #{tpu_custom_call.1} parent=55 // pred_region
          %v6553 = vld [vmem:[#allocation5] sm:$0xff]
          %v6554 = vld [vmem:[#allocation5 + $0x8] sm:$0xff]
          %v6555 = vld [vmem:[#allocation5 + $0x10] sm:$0xff]
          %v6556 = vld [vmem:[#allocation5 + $0x18] sm:$0xff]
          %v6557 = vld [vmem:[#allocation5 + $0x20] sm:$0xff]
          %v6558 = vld [vmem:[#allocation5 + $0x28] sm:$0xff]
          %v6559 = vld [vmem:[#allocation5 + $0x30] sm:$0xff]
          %v6560 = vld [vmem:[#allocation5 + $0x38] sm:$0xff]
          %v6561 = vld [vmem:[#allocation5 + $0x40] sm:$0xff]
          %v6562 = vld [vmem:[#allocation5 + $0x48] sm:$0xff]
          %v6563 = vld [vmem:[#allocation5 + $0x50] sm:$0xff]
          %v6564 = vld [vmem:[#allocation5 + $0x58] sm:$0xff]
          %v6565 = vld [vmem:[#allocation5 + $0x60] sm:$0xff]
          %v6566 = vld [vmem:[#allocation5 + $0x68] sm:$0xff]
          %v6567 = vld [vmem:[#allocation5 + $0x70] sm:$0xff]
          %v6568 = vld [vmem:[#allocation5 + $0x78] sm:$0xff]
          %v6569 = vmax.f32 %v6553, 1e-30
          %v6570 = vmax.f32 %v6554, 1e-30
          %v6571 = vmax.f32 %v6555, 1e-30
          %v6572 = vmax.f32 %v6556, 1e-30
          %v6573 = vmax.f32 %v6557, 1e-30
          %v6574 = vmax.f32 %v6558, 1e-30
          %v6575 = vmax.f32 %v6559, 1e-30
          %v6576 = vmax.f32 %v6560, 1e-30
          %v6577 = vmax.f32 %v6561, 1e-30
          %v6578 = vmax.f32 %v6562, 1e-30
          %v6579 = vmax.f32 %v6563, 1e-30
          %v6580 = vmax.f32 %v6564, 1e-30
          %v6581 = vmax.f32 %v6565, 1e-30
          %v6582 = vmax.f32 %v6566, 1e-30
          %v6583 = vmax.f32 %v6567, 1e-30
          %v6584 = vmax.f32 %v6568, 1e-30
          %v6585 = vrcp.pop %v6569
          %v6586 = vrcp.pop %v6570
          %v6587 = vrcp.pop %v6571
          %v6588 = vrcp.pop %v6572
          %v6589 = vrcp.pop %v6573
          %v6590 = vrcp.pop %v6574
          %v6591 = vrcp.pop %v6575
          %v6592 = vrcp.pop %v6576
          %v6593 = vrcp.pop %v6577
          %v6594 = vrcp.pop %v6578
          %v6595 = vrcp.pop %v6579
          %v6596 = vrcp.pop %v6580
          %v6597 = vrcp.pop %v6581
          %v6598 = vrcp.pop %v6582
          %v6599 = vrcp.pop %v6583
          %v6600 = vrcp.pop %v6584
          %v6601 = vld [vmem:[#allocation6] sm:$0xff]
          %v6602 = vld [vmem:[#allocation6 + $0x8] sm:$0xff]
          %v6603 = vld [vmem:[#allocation6 + $0x10] sm:$0xff]
          %v6604 = vld [vmem:[#allocation6 + $0x18] sm:$0xff]
          %v6605 = vld [vmem:[#allocation6 + $0x20] sm:$0xff]
          %v6606 = vld [vmem:[#allocation6 + $0x28] sm:$0xff]
          %v6607 = vld [vmem:[#allocation6 + $0x30] sm:$0xff]
          %v6608 = vld [vmem:[#allocation6 + $0x38] sm:$0xff]
          %v6609 = vld [vmem:[#allocation6 + $0x40] sm:$0xff]
          %v6610 = vld [vmem:[#allocation6 + $0x48] sm:$0xff]
          %v6611 = vld [vmem:[#allocation6 + $0x50] sm:$0xff]
          %v6612 = vld [vmem:[#allocation6 + $0x58] sm:$0xff]
          %v6613 = vld [vmem:[#allocation6 + $0x60] sm:$0xff]
          %v6614 = vld [vmem:[#allocation6 + $0x68] sm:$0xff]
          %v6615 = vld [vmem:[#allocation6 + $0x70] sm:$0xff]
          %v6616 = vld [vmem:[#allocation6 + $0x78] sm:$0xff]
          %6618 = vset.pattern.permute.xlu0 0
          %6619 = vperm.xlu0 %6618, %v6585
          %v6620 = vpop.permute.xlu0 %6619
          %6623 = vset.pattern.permute.xlu0 0
          %6624 = vperm.xlu0 %6623, %v6586
          %v6625 = vpop.permute.xlu0 %6624
          %6628 = vset.pattern.permute.xlu0 0
          %6629 = vperm.xlu0 %6628, %v6587
          %v6630 = vpop.permute.xlu0 %6629
          %6633 = vset.pattern.permute.xlu0 0
          %6634 = vperm.xlu0 %6633, %v6588
          %v6635 = vpop.permute.xlu0 %6634
          %6638 = vset.pattern.permute.xlu0 0
          %6639 = vperm.xlu0 %6638, %v6589
          %v6640 = vpop.permute.xlu0 %6639
          %6643 = vset.pattern.permute.xlu0 0
          %6644 = vperm.xlu0 %6643, %v6590
          %v6645 = vpop.permute.xlu0 %6644
          %6648 = vset.pattern.permute.xlu0 0
          %6649 = vperm.xlu0 %6648, %v6591
          %v6650 = vpop.permute.xlu0 %6649
          %6653 = vset.pattern.permute.xlu0 0
          %6654 = vperm.xlu0 %6653, %v6592
          %v6655 = vpop.permute.xlu0 %6654
          %6658 = vset.pattern.permute.xlu0 0
          %6659 = vperm.xlu0 %6658, %v6593
          %v6660 = vpop.permute.xlu0 %6659
          %6663 = vset.pattern.permute.xlu0 0
          %6664 = vperm.xlu0 %6663, %v6594
          %v6665 = vpop.permute.xlu0 %6664
          %6668 = vset.pattern.permute.xlu0 0
          %6669 = vperm.xlu0 %6668, %v6595
          %v6670 = vpop.permute.xlu0 %6669
          %6673 = vset.pattern.permute.xlu0 0
          %6674 = vperm.xlu0 %6673, %v6596
          %v6675 = vpop.permute.xlu0 %6674
          %6678 = vset.pattern.permute.xlu0 0
          %6679 = vperm.xlu0 %6678, %v6597
          %v6680 = vpop.permute.xlu0 %6679
          %6683 = vset.pattern.permute.xlu0 0
          %6684 = vperm.xlu0 %6683, %v6598
          %v6685 = vpop.permute.xlu0 %6684
          %6688 = vset.pattern.permute.xlu0 0
          %6689 = vperm.xlu0 %6688, %v6599
          %v6690 = vpop.permute.xlu0 %6689
          %6693 = vset.pattern.permute.xlu0 0
          %6694 = vperm.xlu0 %6693, %v6600
          %v6695 = vpop.permute.xlu0 %6694
          %v6697 = vmul.f32 %v6601, %v6620
          %v6698 = vmul.f32 %v6602, %v6625
          %v6699 = vmul.f32 %v6603, %v6630
          %v6700 = vmul.f32 %v6604, %v6635
          %v6701 = vmul.f32 %v6605, %v6640
          %v6702 = vmul.f32 %v6606, %v6645
          %v6703 = vmul.f32 %v6607, %v6650
          %v6704 = vmul.f32 %v6608, %v6655
          %v6705 = vmul.f32 %v6609, %v6660
          %v6706 = vmul.f32 %v6610, %v6665
          %v6707 = vmul.f32 %v6611, %v6670
          %v6708 = vmul.f32 %v6612, %v6675
          %v6709 = vmul.f32 %v6613, %v6680
          %v6710 = vmul.f32 %v6614, %v6685
          %v6711 = vmul.f32 %v6615, %v6690
          %v6712 = vmul.f32 %v6616, %v6695
          %v6713 = vld [vmem:[%s8] sm:$0x1]
          %v6715 = vlaneseq
          %v6716 = vshrl.u32 %v6715, 7
          %v6717 = vsub.s32 0, %v6716
          %v6718 = vrot.slane %v6713, %v6717
          %v6720 = vadd.f32 %v6697, %v6718
          %v6721 = vadd.f32 %v6698, %v6718
          %v6722 = vadd.f32 %v6699, %v6718
          %v6723 = vadd.f32 %v6700, %v6718
          %v6724 = vadd.f32 %v6701, %v6718
          %v6725 = vadd.f32 %v6702, %v6718
          %v6726 = vadd.f32 %v6703, %v6718
          %v6727 = vadd.f32 %v6704, %v6718
          %v6728 = vadd.f32 %v6705, %v6718
          %v6729 = vadd.f32 %v6706, %v6718
          %v6730 = vadd.f32 %v6707, %v6718
          %v6731 = vadd.f32 %v6708, %v6718
          %v6732 = vadd.f32 %v6709, %v6718
          %v6733 = vadd.f32 %v6710, %v6718
          %v6734 = vadd.f32 %v6711, %v6718
          %v6735 = vadd.f32 %v6712, %v6718
          %6736 = vst [vmem:[%s484] sm:$0xff] %v6720
          %6737 = vst [vmem:[%s484 + $0x8] sm:$0xff] %v6721
          %6738 = vst [vmem:[%s484 + $0x10] sm:$0xff] %v6722
          %6739 = vst [vmem:[%s484 + $0x18] sm:$0xff] %v6723
          %6740 = vst [vmem:[%s484 + $0x20] sm:$0xff] %v6724
          %6741 = vst [vmem:[%s484 + $0x28] sm:$0xff] %v6725
          %6742 = vst [vmem:[%s484 + $0x30] sm:$0xff] %v6726
          %6743 = vst [vmem:[%s484 + $0x38] sm:$0xff] %v6727
          %6744 = vst [vmem:[%s484 + $0x40] sm:$0xff] %v6728
          %6745 = vst [vmem:[%s484 + $0x48] sm:$0xff] %v6729
          %6746 = vst [vmem:[%s484 + $0x50] sm:$0xff] %v6730
          %6747 = vst [vmem:[%s484 + $0x58] sm:$0xff] %v6731
          %6748 = vst [vmem:[%s484 + $0x60] sm:$0xff] %v6732
          %6749 = vst [vmem:[%s484 + $0x68] sm:$0xff] %v6733
          %6750 = vst [vmem:[%s484 + $0x70] sm:$0xff] %v6734
          %6751 = vst [vmem:[%s484 + $0x78] sm:$0xff] %v6735
        $region88: #{tpu_custom_call.1} parent=55 // pred_fallthru
          _
        %s6752 = sand.u32 %s257, 1
        %s6753 = scalar_lea.sflag [#allocation9], %s6752
        %s6754 = sand.u32 %s257, 1
        %s6755 = smul.addr %s6754, 128
        %s6756 = scalar_lea.vmem [#allocation18], %s6755
        // Predicated region
        $region89: #{tpu_custom_call.1} parent=55 // pred_check
          %p6757 = pneg %p267
        $region90: #{tpu_custom_call.1} parent=55 // pred_check_branch
          %6759 = sbr.rel (%p6757) target = $region92
        $region91: #{tpu_custom_call.1} parent=55 // pred_region
          %s6760 = smul.u32 16, %s35
          %s6762 = ssub.s32 2048, 2048
          %6763 = vsyncadd %s6753, %s6762
          %s6764 = smul.addr %s6760, 128
          %s6765 = scalar_lea.hbm %s9, %s6764
          %s6766 = sshll.u32 %s6756, 4
          %s6767 = int_to_ptr.vmem [resolvable:$true] %s6766
          %6772 = dma.vmem_to_hbm [thread:$0]  %s6767, 2048, %s6765, %s6753, 128, 128, 8
        $region92: #{tpu_custom_call.1} parent=55 // pred_fallthru
          _
      $region56: #{tpu_custom_call.1} parent=5 // pred_fallthru
        _
      %p6773 = scmp.le.s32.totalorder 2, %s26
      // Predicated region
      $region93: #{tpu_custom_call.1} parent=5 // pred_check
        %p6774 = pneg %p6773
      $region94: #{tpu_custom_call.1} parent=5 // pred_check_branch
        %6776 = sbr.rel (%p6774) target = $region96
      $region95: #{tpu_custom_call.1} parent=5 // pred_region
        %s6777 = ssub.s32 %s26, 2
        // Predicated region
        $region97: #{tpu_custom_call.1} parent=95 // pred_check
          %p6778 = pneg %p273
        $region98: #{tpu_custom_call.1} parent=95 // pred_check_branch
          %6780 = sbr.rel (%p6778) target = $region100
        $region99: #{tpu_custom_call.1} parent=95 // pred_region
          %s6781 = sand.u32 %s258, 1
          %s6782 = scalar_lea.sflag [#allocation9], %s6781
          %s6783 = sand.u32 %s258, 1
          %s6784 = smul.addr %s6783, 128
          %s6785 = scalar_lea.vmem [#allocation18], %s6784
          %6786 = dma.done %s6782, 2048
        $region100: #{tpu_custom_call.1} parent=95 // pred_fallthru
          _
      $region96: #{tpu_custom_call.1} parent=5 // pred_fallthru
        _
    $region6: #{tpu_custom_call.1} parent=1 // loop_footer
      %s30 = sadd.s32 1, %s26
    $region7: #{tpu_custom_call.1} parent=1 // loop_footer_branch
      %25 = sbr.rel target = $region3
    $region8: #{tpu_custom_call.1} parent=1 // loop_exit
      _
    %6787 = vsyncpa [#allocation8], 1
    %s6788 = scalar_lea.sflag [#allocation8], 1
    %6789 = vsyncpa %s6788, 1
    %6790 = vsyncpa [#allocation13], 1
    %s6791 = scalar_lea.sflag [#allocation13], 1
    %6792 = vsyncpa %s6791, 1
    %6793 = vsyncpa [#allocation16], 1
    %6794 = vsyncpa [#allocation9], 1
    %s6795 = scalar_lea.sflag [#allocation9], 1
    %6796 = vsyncpa %s6795, 1
    %6797 = vsyncpa [#allocation10], 1
    %s6798 = scalar_lea.sflag [#allocation10], 1
    %6799 = vsyncpa %s6798, 1

</llo_original>
